<compile_context>
chip_gen: v5e
topology: v5e:2x2
jax: 0.10.0
libtpu: 0.0.40
codegen_flags: <defaults>
</compile_context>

<pallas_src>
import functools

import jax
import jax.numpy as jnp
from jax.experimental import pallas as pl
from jax.experimental.pallas import tpu as pltpu


# ------------------------------ fused kernel --------------------------------

def _inception_kernel(
    x_ref,                                   # (1, H, W, Cin)
    w1_ref, b1_ref,                          # (Cin, c1), (1, c1)
    w2a_ref, b2a_ref, w2b_ref, b2b_ref,      # (Cin, c2m), (1,c2m), (9, c2m, c2o), (1, c2o)
    w3a_ref, b3a_ref, w3b_ref, b3b_ref,      # (Cin, c3m), (1,c3m), (25, c3m, c3o), (1, c3o)
    w4_ref, b4_ref,                          # (Cin, c4), (1, c4)
    o_ref,                                   # (1, H, W, c1+c2o+c3o+c4)
    t2pad_ref,                               # VMEM (H+2, W+2, c2m) f32  (zero-padded t2)
    t3pad_ref,                               # VMEM (H+4, W+4, c3m) f32  (zero-padded t3)
    mpad_ref,                                # VMEM (H+2, W+2, Cin) f32  (-inf padded x)
    *, H, W,
):
    Cin = x_ref.shape[3]
    P = H * W

    x_hw = x_ref[0]                                   # (H, W, Cin)
    x2d = x_hw.reshape(P, Cin).astype(jnp.float32)    # (P, Cin)

    def dense_relu(inp, w_ref, b_ref):
        y = jnp.dot(inp, w_ref[...], preferred_element_type=jnp.float32)
        return jnp.maximum(y + b_ref[...], 0.0)

    def conv_same_from_pad(pad_ref, K, w_ref, b_ref):
        # pad_ref: (H+K-1, W+K-1, Cmid) zero-padded activation in VMEM
        # w_ref  : (K*K, Cmid, Cout) per-tap weight matrices
        Cmid = pad_ref.shape[2]
        Cout = w_ref.shape[2]
        acc = jnp.zeros((P, Cout), jnp.float32)
        for dy in range(K):
            for dx in range(K):
                patch = pad_ref[dy:dy + H, dx:dx + W, :].reshape(P, Cmid)
                acc = acc + jnp.dot(patch, w_ref[dy * K + dx],
                                    preferred_element_type=jnp.float32)
        return jnp.maximum(acc + b_ref[...], 0.0)

    # ---- branch 1: 1x1 conv + ReLU -----------------------------------------
    p1 = dense_relu(x2d, w1_ref, b1_ref)

    # ---- branch 2: 1x1 -> ReLU -> 3x3 -> ReLU (t2 stays in VMEM) -----------
    t2 = dense_relu(x2d, w2a_ref, b2a_ref)            # (P, c2m)
    t2pad_ref[...] = jnp.zeros(t2pad_ref.shape, t2pad_ref.dtype)
    t2pad_ref[1:1 + H, 1:1 + W, :] = t2.reshape(H, W, t2.shape[-1])
    p2 = conv_same_from_pad(t2pad_ref, 3, w2b_ref, b2b_ref)

    # ---- branch 3: 1x1 -> ReLU -> 5x5 -> ReLU (t3 stays in VMEM) -----------
    t3 = dense_relu(x2d, w3a_ref, b3a_ref)            # (P, c3m)
    t3pad_ref[...] = jnp.zeros(t3pad_ref.shape, t3pad_ref.dtype)
    t3pad_ref[2:2 + H, 2:2 + W, :] = t3.reshape(H, W, t3.shape[-1])
    p3 = conv_same_from_pad(t3pad_ref, 5, w3b_ref, b3b_ref)

    # ---- branch 4: MaxPool2d(3, stride=1, pad=1) -> 1x1 conv -> ReLU -------
    mpad_ref[...] = jnp.full(mpad_ref.shape, -jnp.inf, mpad_ref.dtype)
    mpad_ref[1:1 + H, 1:1 + W, :] = x_hw.astype(jnp.float32)
    m = mpad_ref[0:H, 0:W, :]
    for dy in range(3):
        for dx in range(3):
            if dy == 0 and dx == 0:
                continue
            m = jnp.maximum(m, mpad_ref[dy:dy + H, dx:dx + W, :])
    p4 = dense_relu(m.reshape(P, Cin), w4_ref, b4_ref)

    # ---- single concatenated (lane-denser) store ----------------------------
    out = jnp.concatenate([p1, p2, p3, p4], axis=-1)   # (P, Ctot)
    o_ref[0] = out.reshape(H, W, out.shape[-1]).astype(o_ref.dtype)


# --------------------------- parameter reshaping ------------------------------

def _w1x1(w_oihw):        # (Cout, Cin, 1, 1) -> (Cin, Cout)
    return jnp.transpose(w_oihw[:, :, 0, 0], (1, 0))


def _wtaps(w_oihw):       # (Cout, Cin, K, K) -> (K*K, Cin, Cout)
    cout, cin, K, _ = w_oihw.shape
    return jnp.transpose(w_oihw, (2, 3, 1, 0)).reshape(K * K, cin, cout)


# --------------------------- Inception module --------------------------------

def init_inception_params(key, in_channels, c1, c2, c3, c4, dtype=jnp.float32):
    """Deterministic synthetic params in PyTorch Conv2d layout (Cout, Cin, K, K)."""
    keys = jax.random.split(key, 12)
    def w(k, cout, cin, ksz):
        return (0.1 * jax.random.normal(k, (cout, cin, ksz, ksz))).astype(dtype)
    def b(k, cout):
        return (0.05 * jax.random.normal(k, (cout,))).astype(dtype)
    return {
        "p1_1_w": w(keys[0], c1, in_channels, 1),     "p1_1_b": b(keys[1], c1),
        "p2_1_w": w(keys[2], c2[0], in_channels, 1),  "p2_1_b": b(keys[3], c2[0]),
        "p2_2_w": w(keys[4], c2[1], c2[0], 3),        "p2_2_b": b(keys[5], c2[1]),
        "p3_1_w": w(keys[6], c3[0], in_channels, 1),  "p3_1_b": b(keys[7], c3[0]),
        "p3_2_w": w(keys[8], c3[1], c3[0], 5),        "p3_2_b": b(keys[9], c3[1]),
        "p4_2_w": w(keys[10], c4, in_channels, 1),    "p4_2_b": b(keys[11], c4),
    }


def inception_forward(x_nchw, params):
    x = jnp.transpose(x_nchw, (0, 2, 3, 1))            # NCHW -> NHWC
    N, H, W, Cin = x.shape

    w1 = _w1x1(params["p1_1_w"]);   b1 = params["p1_1_b"].reshape(1, -1)
    w2a = _w1x1(params["p2_1_w"]);  b2a = params["p2_1_b"].reshape(1, -1)
    w2b = _wtaps(params["p2_2_w"]); b2b = params["p2_2_b"].reshape(1, -1)
    w3a = _w1x1(params["p3_1_w"]);  b3a = params["p3_1_b"].reshape(1, -1)
    w3b = _wtaps(params["p3_2_w"]); b3b = params["p3_2_b"].reshape(1, -1)
    w4 = _w1x1(params["p4_2_w"]);   b4 = params["p4_2_b"].reshape(1, -1)

    c1 = w1.shape[1]
    c2m, c2o = w2b.shape[1], w2b.shape[2]
    c3m, c3o = w3b.shape[1], w3b.shape[2]
    c4 = w4.shape[1]
    Ctot = c1 + c2o + c3o + c4

    def _full(a):
        # whole-array block, constant index_map (fetched once, reused every step)
        return pl.BlockSpec(a.shape, lambda n, _nd=a.ndim: (0,) * _nd)

    kern = functools.partial(_inception_kernel, H=H, W=W)
    out = pl.pallas_call(
        kern,
        out_shape=jax.ShapeDtypeStruct((N, H, W, Ctot), x.dtype),
        grid=(N,),
        in_specs=[
            pl.BlockSpec((1, H, W, Cin), lambda n: (n, 0, 0, 0)),
            _full(w1), _full(b1),
            _full(w2a), _full(b2a), _full(w2b), _full(b2b),
            _full(w3a), _full(b3a), _full(w3b), _full(b3b),
            _full(w4), _full(b4),
        ],
        out_specs=pl.BlockSpec((1, H, W, Ctot), lambda n: (n, 0, 0, 0)),
        scratch_shapes=[
            pltpu.VMEM((H + 2, W + 2, c2m), jnp.float32),
            pltpu.VMEM((H + 4, W + 4, c3m), jnp.float32),
            pltpu.VMEM((H + 2, W + 2, Cin), jnp.float32),
        ],
        compiler_params=pltpu.CompilerParams(
            dimension_semantics=("parallel",)),
    )(x, w1, b1, w2a, b2a, w2b, b2b, w3a, b3a, w3b, b3b, w4, b4)

    return jnp.transpose(out, (0, 3, 1, 2))            # NHWC -> NCHW


# --------------------------- pure-JAX reference -------------------------------

def inception_reference(x_nchw, params):
    def conv(x, w, b, pad):
        y = jax.lax.conv_general_dilated(
            x, w, (1, 1), [(pad, pad), (pad, pad)],
            dimension_numbers=("NCHW", "OIHW", "NCHW"))
        return y + b.reshape(1, -1, 1, 1)
    relu = lambda v: jnp.maximum(v, 0.0)
    p1 = relu(conv(x_nchw, params["p1_1_w"], params["p1_1_b"], 0))
    p2 = relu(conv(relu(conv(x_nchw, params["p2_1_w"], params["p2_1_b"], 0)),
                   params["p2_2_w"], params["p2_2_b"], 1))
    p3 = relu(conv(relu(conv(x_nchw, params["p3_1_w"], params["p3_1_b"], 0)),
                   params["p3_2_w"], params["p3_2_b"], 2))
    mp = jax.lax.reduce_window(
        x_nchw, -jnp.inf, jax.lax.max,
        window_dimensions=(1, 1, 3, 3), window_strides=(1, 1, 1, 1),
        padding=[(0, 0), (0, 0), (1, 1), (1, 1)])
    p4 = relu(conv(mp, params["p4_2_w"], params["p4_2_b"], 0))
    return jnp.concatenate([p1, p2, p3, p4], axis=1)


# ------------------------------------ main ------------------------------------

if __name__ == "__main__":
    key = jax.random.PRNGKey(0)
    kx, kp = jax.random.split(key)

    # small shapes consistent with the module: NCHW input
    N, Cin, H, W = 2, 4, 16, 16
    c1, c2, c3, c4 = 4, (4, 8), (2, 4), 4

    x = jax.random.normal(kx, (N, Cin, H, W), dtype=jnp.float32)
    params = init_inception_params(kp, Cin, c1, c2, c3, c4)

    out = jax.jit(inception_forward)(x, params)
    out = jax.block_until_ready(out)

    assert out.shape == (N, c1 + c2[1] + c3[1] + c4, H, W), out.shape

    ref = inception_reference(x, params)
    max_err = float(jnp.max(jnp.abs(out - ref)))
    assert jnp.allclose(out, ref, atol=1e-4, rtol=1e-4), max_err

    print("KERNEL_OK")
</pallas_src>

<mosaic_0001>
module attributes {stable_mosaic.version = 11 : i64} {
  func.func @_inception_kernel(%arg0: i32, %arg1: memref<1x16x16x4xf32, #tpu.memory_space<vmem>>, %arg2: memref<4x4xf32, #tpu.memory_space<vmem>>, %arg3: memref<1x4xf32, #tpu.memory_space<vmem>>, %arg4: memref<4x4xf32, #tpu.memory_space<vmem>>, %arg5: memref<1x4xf32, #tpu.memory_space<vmem>>, %arg6: memref<9x4x8xf32, #tpu.memory_space<vmem>>, %arg7: memref<1x8xf32, #tpu.memory_space<vmem>>, %arg8: memref<4x2xf32, #tpu.memory_space<vmem>>, %arg9: memref<1x2xf32, #tpu.memory_space<vmem>>, %arg10: memref<25x2x4xf32, #tpu.memory_space<vmem>>, %arg11: memref<1x4xf32, #tpu.memory_space<vmem>>, %arg12: memref<4x4xf32, #tpu.memory_space<vmem>>, %arg13: memref<1x4xf32, #tpu.memory_space<vmem>>, %arg14: memref<1x16x16x20xf32, #tpu.memory_space<vmem>>, %arg15: memref<18x18x4xf32, #tpu.memory_space<vmem>>, %arg16: memref<20x20x2xf32, #tpu.memory_space<vmem>>, %arg17: memref<18x18x4xf32, #tpu.memory_space<vmem>>) attributes {dimension_semantics = [#tpu.dimension_semantics<parallel>], iteration_bounds = array<i64: 2>, scalar_prefetch = 0 : i64, scratch_operands = 3 : i64, tpu.core_type = #tpu.core_type<tc>, window_params = [{transform_indices = @transform_0, window_bounds = array<i64: 1, 16, 16, 4>}, {pipeline_mode = #tpu.pipeline_mode<synchronous>, transform_indices = @transform_1, window_bounds = array<i64: 4, 4>}, {pipeline_mode = #tpu.pipeline_mode<synchronous>, transform_indices = @transform_2, window_bounds = array<i64: 1, 4>}, {pipeline_mode = #tpu.pipeline_mode<synchronous>, transform_indices = @transform_3, window_bounds = array<i64: 4, 4>}, {pipeline_mode = #tpu.pipeline_mode<synchronous>, transform_indices = @transform_4, window_bounds = array<i64: 1, 4>}, {pipeline_mode = #tpu.pipeline_mode<synchronous>, transform_indices = @transform_5, window_bounds = array<i64: 9, 4, 8>}, {pipeline_mode = #tpu.pipeline_mode<synchronous>, transform_indices = @transform_6, window_bounds = array<i64: 1, 8>}, {pipeline_mode = #tpu.pipeline_mode<synchronous>, transform_indices = @transform_7, window_bounds = array<i64: 4, 2>}, {pipeline_mode = #tpu.pipeline_mode<synchronous>, transform_indices = @transform_8, window_bounds = array<i64: 1, 2>}, {pipeline_mode = #tpu.pipeline_mode<synchronous>, transform_indices = @transform_9, window_bounds = array<i64: 25, 2, 4>}, {pipeline_mode = #tpu.pipeline_mode<synchronous>, transform_indices = @transform_10, window_bounds = array<i64: 1, 4>}, {pipeline_mode = #tpu.pipeline_mode<synchronous>, transform_indices = @transform_11, window_bounds = array<i64: 4, 4>}, {pipeline_mode = #tpu.pipeline_mode<synchronous>, transform_indices = @transform_12, window_bounds = array<i64: 1, 4>}, {transform_indices = @transform_13, window_bounds = array<i64: 1, 16, 16, 20>}]} {
    %c0 = arith.constant 0 : index
    %c0_0 = arith.constant 0 : index
    %c0_1 = arith.constant 0 : index
    %c0_2 = arith.constant 0 : index
    %0 = vector.load %arg1[%c0, %c0_0, %c0_1, %c0_2] : memref<1x16x16x4xf32, #tpu.memory_space<vmem>>, vector<1x16x16x4xf32>
    %1 = vector.shape_cast %0 : vector<1x16x16x4xf32> to vector<16x16x4xf32>
    %2 = vector.shape_cast %1 : vector<16x16x4xf32> to vector<256x4xf32>
    %c0_3 = arith.constant 0 : index
    %c0_4 = arith.constant 0 : index
    %3 = vector.load %arg2[%c0_3, %c0_4] : memref<4x4xf32, #tpu.memory_space<vmem>>, vector<4x4xf32>
    %cst = arith.constant dense<0.000000e+00> : vector<256x4xf32>
    %4 = tpu.matmul %2, %3, %cst {dimension_numbers = #tpu.dot_dimension_numbers<[1], [0], [0], [1], [0, 0, 1, 1], [], []>} : vector<256x4xf32>, vector<4x4xf32>, vector<256x4xf32> -> vector<256x4xf32>
    %c0_5 = arith.constant 0 : index
    %c0_6 = arith.constant 0 : index
    %5 = vector.load %arg3[%c0_5, %c0_6] : memref<1x4xf32, #tpu.memory_space<vmem>>, vector<1x4xf32>
    %6 = vector.broadcast %5 : vector<1x4xf32> to vector<256x4xf32>
    %7 = arith.addf %4, %6 : vector<256x4xf32>
    %cst_7 = arith.constant 0.000000e+00 : f32
    %8 = vector.broadcast %cst_7 : f32 to vector<256x4xf32>
    %9 = arith.maximumf %7, %8 : vector<256x4xf32>
    %c0_8 = arith.constant 0 : index
    %c0_9 = arith.constant 0 : index
    %10 = vector.load %arg4[%c0_8, %c0_9] : memref<4x4xf32, #tpu.memory_space<vmem>>, vector<4x4xf32>
    %cst_10 = arith.constant dense<0.000000e+00> : vector<256x4xf32>
    %11 = tpu.matmul %2, %10, %cst_10 {dimension_numbers = #tpu.dot_dimension_numbers<[1], [0], [0], [1], [0, 0, 1, 1], [], []>} : vector<256x4xf32>, vector<4x4xf32>, vector<256x4xf32> -> vector<256x4xf32>
    %c0_11 = arith.constant 0 : index
    %c0_12 = arith.constant 0 : index
    %12 = vector.load %arg5[%c0_11, %c0_12] : memref<1x4xf32, #tpu.memory_space<vmem>>, vector<1x4xf32>
    %13 = vector.broadcast %12 : vector<1x4xf32> to vector<256x4xf32>
    %14 = arith.addf %11, %13 : vector<256x4xf32>
    %cst_13 = arith.constant 0.000000e+00 : f32
    %15 = vector.broadcast %cst_13 : f32 to vector<256x4xf32>
    %16 = arith.maximumf %14, %15 : vector<256x4xf32>
    %cst_14 = arith.constant 0.000000e+00 : f32
    %17 = vector.broadcast %cst_14 : f32 to vector<18x18x4xf32>
    %c0_15 = arith.constant 0 : index
    %c0_16 = arith.constant 0 : index
    %c0_17 = arith.constant 0 : index
    %18 = vector.load %arg15[%c0_15, %c0_16, %c0_17] : memref<18x18x4xf32, #tpu.memory_space<vmem>>, vector<18x18x4xf32>
    tpu.vector_store %arg15[%c0_15, %c0_16, %c0_17], %17 {strides = array<i32>} : memref<18x18x4xf32, #tpu.memory_space<vmem>>, vector<18x18x4xf32>,
    %19 = vector.shape_cast %16 : vector<256x4xf32> to vector<16x16x4xf32>
    %c1 = arith.constant 1 : index
    %c1_18 = arith.constant 1 : index
    %c0_19 = arith.constant 0 : index
    %20 = vector.load %arg15[%c1, %c1_18, %c0_19] : memref<18x18x4xf32, #tpu.memory_space<vmem>>, vector<16x16x4xf32>
    tpu.vector_store %arg15[%c1, %c1_18, %c0_19], %19 {strides = array<i32>} : memref<18x18x4xf32, #tpu.memory_space<vmem>>, vector<16x16x4xf32>,
    %cst_20 = arith.constant 0.000000e+00 : f32
    %21 = vector.broadcast %cst_20 : f32 to vector<256x8xf32>
    %c0_21 = arith.constant 0 : index
    %c0_22 = arith.constant 0 : index
    %c0_23 = arith.constant 0 : index
    %22 = vector.load %arg15[%c0_21, %c0_22, %c0_23] : memref<18x18x4xf32, #tpu.memory_space<vmem>>, vector<16x16x4xf32>
    %23 = vector.shape_cast %22 : vector<16x16x4xf32> to vector<256x4xf32>
    %c0_24 = arith.constant 0 : index
    %c0_25 = arith.constant 0 : index
    %c0_26 = arith.constant 0 : index
    %24 = vector.load %arg6[%c0_24, %c0_25, %c0_26] : memref<9x4x8xf32, #tpu.memory_space<vmem>>, vector<1x4x8xf32>
    %25 = vector.shape_cast %24 : vector<1x4x8xf32> to vector<4x8xf32>
    %cst_27 = arith.constant dense<0.000000e+00> : vector<256x8xf32>
    %26 = tpu.matmul %23, %25, %cst_27 {dimension_numbers = #tpu.dot_dimension_numbers<[1], [0], [0], [1], [0, 0, 1, 1], [], []>} : vector<256x4xf32>, vector<4x8xf32>, vector<256x8xf32> -> vector<256x8xf32>
    %27 = arith.addf %21, %26 : vector<256x8xf32>
    %c0_28 = arith.constant 0 : index
    %c1_29 = arith.constant 1 : index
    %c0_30 = arith.constant 0 : index
    %28 = vector.load %arg15[%c0_28, %c1_29, %c0_30] : memref<18x18x4xf32, #tpu.memory_space<vmem>>, vector<16x16x4xf32>
    %29 = vector.shape_cast %28 : vector<16x16x4xf32> to vector<256x4xf32>
    %c1_31 = arith.constant 1 : index
    %c0_32 = arith.constant 0 : index
    %c0_33 = arith.constant 0 : index
    %30 = vector.load %arg6[%c1_31, %c0_32, %c0_33] : memref<9x4x8xf32, #tpu.memory_space<vmem>>, vector<1x4x8xf32>
    %31 = vector.shape_cast %30 : vector<1x4x8xf32> to vector<4x8xf32>
    %cst_34 = arith.constant dense<0.000000e+00> : vector<256x8xf32>
    %32 = tpu.matmul %29, %31, %cst_34 {dimension_numbers = #tpu.dot_dimension_numbers<[1], [0], [0], [1], [0, 0, 1, 1], [], []>} : vector<256x4xf32>, vector<4x8xf32>, vector<256x8xf32> -> vector<256x8xf32>
    %33 = arith.addf %27, %32 : vector<256x8xf32>
    %c0_35 = arith.constant 0 : index
    %c2 = arith.constant 2 : index
    %c0_36 = arith.constant 0 : index
    %34 = vector.load %arg15[%c0_35, %c2, %c0_36] : memref<18x18x4xf32, #tpu.memory_space<vmem>>, vector<16x16x4xf32>
    %35 = vector.shape_cast %34 : vector<16x16x4xf32> to vector<256x4xf32>
    %c2_37 = arith.constant 2 : index
    %c0_38 = arith.constant 0 : index
    %c0_39 = arith.constant 0 : index
    %36 = vector.load %arg6[%c2_37, %c0_38, %c0_39] : memref<9x4x8xf32, #tpu.memory_space<vmem>>, vector<1x4x8xf32>
    %37 = vector.shape_cast %36 : vector<1x4x8xf32> to vector<4x8xf32>
    %cst_40 = arith.constant dense<0.000000e+00> : vector<256x8xf32>
    %38 = tpu.matmul %35, %37, %cst_40 {dimension_numbers = #tpu.dot_dimension_numbers<[1], [0], [0], [1], [0, 0, 1, 1], [], []>} : vector<256x4xf32>, vector<4x8xf32>, vector<256x8xf32> -> vector<256x8xf32>
    %39 = arith.addf %33, %38 : vector<256x8xf32>
    %c1_41 = arith.constant 1 : index
    %c0_42 = arith.constant 0 : index
    %c0_43 = arith.constant 0 : index
    %40 = vector.load %arg15[%c1_41, %c0_42, %c0_43] : memref<18x18x4xf32, #tpu.memory_space<vmem>>, vector<16x16x4xf32>
    %41 = vector.shape_cast %40 : vector<16x16x4xf32> to vector<256x4xf32>
    %c3 = arith.constant 3 : index
    %c0_44 = arith.constant 0 : index
    %c0_45 = arith.constant 0 : index
    %42 = vector.load %arg6[%c3, %c0_44, %c0_45] : memref<9x4x8xf32, #tpu.memory_space<vmem>>, vector<1x4x8xf32>
    %43 = vector.shape_cast %42 : vector<1x4x8xf32> to vector<4x8xf32>
    %cst_46 = arith.constant dense<0.000000e+00> : vector<256x8xf32>
    %44 = tpu.matmul %41, %43, %cst_46 {dimension_numbers = #tpu.dot_dimension_numbers<[1], [0], [0], [1], [0, 0, 1, 1], [], []>} : vector<256x4xf32>, vector<4x8xf32>, vector<256x8xf32> -> vector<256x8xf32>
    %45 = arith.addf %39, %44 : vector<256x8xf32>
    %c1_47 = arith.constant 1 : index
    %c1_48 = arith.constant 1 : index
    %c0_49 = arith.constant 0 : index
    %46 = vector.load %arg15[%c1_47, %c1_48, %c0_49] : memref<18x18x4xf32, #tpu.memory_space<vmem>>, vector<16x16x4xf32>
    %47 = vector.shape_cast %46 : vector<16x16x4xf32> to vector<256x4xf32>
    %c4 = arith.constant 4 : index
    %c0_50 = arith.constant 0 : index
    %c0_51 = arith.constant 0 : index
    %48 = vector.load %arg6[%c4, %c0_50, %c0_51] : memref<9x4x8xf32, #tpu.memory_space<vmem>>, vector<1x4x8xf32>
    %49 = vector.shape_cast %48 : vector<1x4x8xf32> to vector<4x8xf32>
    %cst_52 = arith.constant dense<0.000000e+00> : vector<256x8xf32>
    %50 = tpu.matmul %47, %49, %cst_52 {dimension_numbers = #tpu.dot_dimension_numbers<[1], [0], [0], [1], [0, 0, 1, 1], [], []>} : vector<256x4xf32>, vector<4x8xf32>, vector<256x8xf32> -> vector<256x8xf32>
    %51 = arith.addf %45, %50 : vector<256x8xf32>
    %c1_53 = arith.constant 1 : index
    %c2_54 = arith.constant 2 : index
    %c0_55 = arith.constant 0 : index
    %52 = vector.load %arg15[%c1_53, %c2_54, %c0_55] : memref<18x18x4xf32, #tpu.memory_space<vmem>>, vector<16x16x4xf32>
    %53 = vector.shape_cast %52 : vector<16x16x4xf32> to vector<256x4xf32>
    %c5 = arith.constant 5 : index
    %c0_56 = arith.constant 0 : index
    %c0_57 = arith.constant 0 : index
    %54 = vector.load %arg6[%c5, %c0_56, %c0_57] : memref<9x4x8xf32, #tpu.memory_space<vmem>>, vector<1x4x8xf32>
    %55 = vector.shape_cast %54 : vector<1x4x8xf32> to vector<4x8xf32>
    %cst_58 = arith.constant dense<0.000000e+00> : vector<256x8xf32>
    %56 = tpu.matmul %53, %55, %cst_58 {dimension_numbers = #tpu.dot_dimension_numbers<[1], [0], [0], [1], [0, 0, 1, 1], [], []>} : vector<256x4xf32>, vector<4x8xf32>, vector<256x8xf32> -> vector<256x8xf32>
    %57 = arith.addf %51, %56 : vector<256x8xf32>
    %c2_59 = arith.constant 2 : index
    %c0_60 = arith.constant 0 : index
    %c0_61 = arith.constant 0 : index
    %58 = vector.load %arg15[%c2_59, %c0_60, %c0_61] : memref<18x18x4xf32, #tpu.memory_space<vmem>>, vector<16x16x4xf32>
    %59 = vector.shape_cast %58 : vector<16x16x4xf32> to vector<256x4xf32>
    %c6 = arith.constant 6 : index
    %c0_62 = arith.constant 0 : index
    %c0_63 = arith.constant 0 : index
    %60 = vector.load %arg6[%c6, %c0_62, %c0_63] : memref<9x4x8xf32, #tpu.memory_space<vmem>>, vector<1x4x8xf32>
    %61 = vector.shape_cast %60 : vector<1x4x8xf32> to vector<4x8xf32>
    %cst_64 = arith.constant dense<0.000000e+00> : vector<256x8xf32>
    %62 = tpu.matmul %59, %61, %cst_64 {dimension_numbers = #tpu.dot_dimension_numbers<[1], [0], [0], [1], [0, 0, 1, 1], [], []>} : vector<256x4xf32>, vector<4x8xf32>, vector<256x8xf32> -> vector<256x8xf32>
    %63 = arith.addf %57, %62 : vector<256x8xf32>
    %c2_65 = arith.constant 2 : index
    %c1_66 = arith.constant 1 : index
    %c0_67 = arith.constant 0 : index
    %64 = vector.load %arg15[%c2_65, %c1_66, %c0_67] : memref<18x18x4xf32, #tpu.memory_space<vmem>>, vector<16x16x4xf32>
    %65 = vector.shape_cast %64 : vector<16x16x4xf32> to vector<256x4xf32>
    %c7 = arith.constant 7 : index
    %c0_68 = arith.constant 0 : index
    %c0_69 = arith.constant 0 : index
    %66 = vector.load %arg6[%c7, %c0_68, %c0_69] : memref<9x4x8xf32, #tpu.memory_space<vmem>>, vector<1x4x8xf32>
    %67 = vector.shape_cast %66 : vector<1x4x8xf32> to vector<4x8xf32>
    %cst_70 = arith.constant dense<0.000000e+00> : vector<256x8xf32>
    %68 = tpu.matmul %65, %67, %cst_70 {dimension_numbers = #tpu.dot_dimension_numbers<[1], [0], [0], [1], [0, 0, 1, 1], [], []>} : vector<256x4xf32>, vector<4x8xf32>, vector<256x8xf32> -> vector<256x8xf32>
    %69 = arith.addf %63, %68 : vector<256x8xf32>
    %c2_71 = arith.constant 2 : index
    %c2_72 = arith.constant 2 : index
    %c0_73 = arith.constant 0 : index
    %70 = vector.load %arg15[%c2_71, %c2_72, %c0_73] : memref<18x18x4xf32, #tpu.memory_space<vmem>>, vector<16x16x4xf32>
    %71 = vector.shape_cast %70 : vector<16x16x4xf32> to vector<256x4xf32>
    %c8 = arith.constant 8 : index
    %c0_74 = arith.constant 0 : index
    %c0_75 = arith.constant 0 : index
    %72 = vector.load %arg6[%c8, %c0_74, %c0_75] : memref<9x4x8xf32, #tpu.memory_space<vmem>>, vector<1x4x8xf32>
    %73 = vector.shape_cast %72 : vector<1x4x8xf32> to vector<4x8xf32>
    %cst_76 = arith.constant dense<0.000000e+00> : vector<256x8xf32>
    %74 = tpu.matmul %71, %73, %cst_76 {dimension_numbers = #tpu.dot_dimension_numbers<[1], [0], [0], [1], [0, 0, 1, 1], [], []>} : vector<256x4xf32>, vector<4x8xf32>, vector<256x8xf32> -> vector<256x8xf32>
    %75 = arith.addf %69, %74 : vector<256x8xf32>
    %c0_77 = arith.constant 0 : index
    %c0_78 = arith.constant 0 : index
    %76 = vector.load %arg7[%c0_77, %c0_78] : memref<1x8xf32, #tpu.memory_space<vmem>>, vector<1x8xf32>
    %77 = vector.broadcast %76 : vector<1x8xf32> to vector<256x8xf32>
    %78 = arith.addf %75, %77 : vector<256x8xf32>
    %cst_79 = arith.constant 0.000000e+00 : f32
    %79 = vector.broadcast %cst_79 : f32 to vector<256x8xf32>
    %80 = arith.maximumf %78, %79 : vector<256x8xf32>
    %c0_80 = arith.constant 0 : index
    %c0_81 = arith.constant 0 : index
    %81 = vector.load %arg8[%c0_80, %c0_81] : memref<4x2xf32, #tpu.memory_space<vmem>>, vector<4x2xf32>
    %cst_82 = arith.constant dense<0.000000e+00> : vector<256x2xf32>
    %82 = tpu.matmul %2, %81, %cst_82 {dimension_numbers = #tpu.dot_dimension_numbers<[1], [0], [0], [1], [0, 0, 1, 1], [], []>} : vector<256x4xf32>, vector<4x2xf32>, vector<256x2xf32> -> vector<256x2xf32>
    %c0_83 = arith.constant 0 : index
    %c0_84 = arith.constant 0 : index
    %83 = vector.load %arg9[%c0_83, %c0_84] : memref<1x2xf32, #tpu.memory_space<vmem>>, vector<1x2xf32>
    %84 = vector.broadcast %83 : vector<1x2xf32> to vector<256x2xf32>
    %85 = arith.addf %82, %84 : vector<256x2xf32>
    %cst_85 = arith.constant 0.000000e+00 : f32
    %86 = vector.broadcast %cst_85 : f32 to vector<256x2xf32>
    %87 = arith.maximumf %85, %86 : vector<256x2xf32>
    %cst_86 = arith.constant 0.000000e+00 : f32
    %88 = vector.broadcast %cst_86 : f32 to vector<20x20x2xf32>
    %c0_87 = arith.constant 0 : index
    %c0_88 = arith.constant 0 : index
    %c0_89 = arith.constant 0 : index
    %89 = vector.load %arg16[%c0_87, %c0_88, %c0_89] : memref<20x20x2xf32, #tpu.memory_space<vmem>>, vector<20x20x2xf32>
    tpu.vector_store %arg16[%c0_87, %c0_88, %c0_89], %88 {strides = array<i32>} : memref<20x20x2xf32, #tpu.memory_space<vmem>>, vector<20x20x2xf32>,
    %90 = vector.shape_cast %87 : vector<256x2xf32> to vector<16x16x2xf32>
    %c2_90 = arith.constant 2 : index
    %c2_91 = arith.constant 2 : index
    %c0_92 = arith.constant 0 : index
    %91 = vector.load %arg16[%c2_90, %c2_91, %c0_92] : memref<20x20x2xf32, #tpu.memory_space<vmem>>, vector<16x16x2xf32>
    tpu.vector_store %arg16[%c2_90, %c2_91, %c0_92], %90 {strides = array<i32>} : memref<20x20x2xf32, #tpu.memory_space<vmem>>, vector<16x16x2xf32>,
    %cst_93 = arith.constant 0.000000e+00 : f32
    %92 = vector.broadcast %cst_93 : f32 to vector<256x4xf32>
    %c0_94 = arith.constant 0 : index
    %c0_95 = arith.constant 0 : index
    %c0_96 = arith.constant 0 : index
    %93 = vector.load %arg16[%c0_94, %c0_95, %c0_96] : memref<20x20x2xf32, #tpu.memory_space<vmem>>, vector<16x16x2xf32>
    %94 = vector.shape_cast %93 : vector<16x16x2xf32> to vector<256x2xf32>
    %c0_97 = arith.constant 0 : index
    %c0_98 = arith.constant 0 : index
    %c0_99 = arith.constant 0 : index
    %95 = vector.load %arg10[%c0_97, %c0_98, %c0_99] : memref<25x2x4xf32, #tpu.memory_space<vmem>>, vector<1x2x4xf32>
    %96 = vector.shape_cast %95 : vector<1x2x4xf32> to vector<2x4xf32>
    %cst_100 = arith.constant dense<0.000000e+00> : vector<256x4xf32>
    %97 = tpu.matmul %94, %96, %cst_100 {dimension_numbers = #tpu.dot_dimension_numbers<[1], [0], [0], [1], [0, 0, 1, 1], [], []>} : vector<256x2xf32>, vector<2x4xf32>, vector<256x4xf32> -> vector<256x4xf32>
    %98 = arith.addf %92, %97 : vector<256x4xf32>
    %c0_101 = arith.constant 0 : index
    %c1_102 = arith.constant 1 : index
    %c0_103 = arith.constant 0 : index
    %99 = vector.load %arg16[%c0_101, %c1_102, %c0_103] : memref<20x20x2xf32, #tpu.memory_space<vmem>>, vector<16x16x2xf32>
    %100 = vector.shape_cast %99 : vector<16x16x2xf32> to vector<256x2xf32>
    %c1_104 = arith.constant 1 : index
    %c0_105 = arith.constant 0 : index
    %c0_106 = arith.constant 0 : index
    %101 = vector.load %arg10[%c1_104, %c0_105, %c0_106] : memref<25x2x4xf32, #tpu.memory_space<vmem>>, vector<1x2x4xf32>
    %102 = vector.shape_cast %101 : vector<1x2x4xf32> to vector<2x4xf32>
    %cst_107 = arith.constant dense<0.000000e+00> : vector<256x4xf32>
    %103 = tpu.matmul %100, %102, %cst_107 {dimension_numbers = #tpu.dot_dimension_numbers<[1], [0], [0], [1], [0, 0, 1, 1], [], []>} : vector<256x2xf32>, vector<2x4xf32>, vector<256x4xf32> -> vector<256x4xf32>
    %104 = arith.addf %98, %103 : vector<256x4xf32>
    %c0_108 = arith.constant 0 : index
    %c2_109 = arith.constant 2 : index
    %c0_110 = arith.constant 0 : index
    %105 = vector.load %arg16[%c0_108, %c2_109, %c0_110] : memref<20x20x2xf32, #tpu.memory_space<vmem>>, vector<16x16x2xf32>
    %106 = vector.shape_cast %105 : vector<16x16x2xf32> to vector<256x2xf32>
    %c2_111 = arith.constant 2 : index
    %c0_112 = arith.constant 0 : index
    %c0_113 = arith.constant 0 : index
    %107 = vector.load %arg10[%c2_111, %c0_112, %c0_113] : memref<25x2x4xf32, #tpu.memory_space<vmem>>, vector<1x2x4xf32>
    %108 = vector.shape_cast %107 : vector<1x2x4xf32> to vector<2x4xf32>
    %cst_114 = arith.constant dense<0.000000e+00> : vector<256x4xf32>
    %109 = tpu.matmul %106, %108, %cst_114 {dimension_numbers = #tpu.dot_dimension_numbers<[1], [0], [0], [1], [0, 0, 1, 1], [], []>} : vector<256x2xf32>, vector<2x4xf32>, vector<256x4xf32> -> vector<256x4xf32>
    %110 = arith.addf %104, %109 : vector<256x4xf32>
    %c0_115 = arith.constant 0 : index
    %c3_116 = arith.constant 3 : index
    %c0_117 = arith.constant 0 : index
    %111 = vector.load %arg16[%c0_115, %c3_116, %c0_117] : memref<20x20x2xf32, #tpu.memory_space<vmem>>, vector<16x16x2xf32>
    %112 = vector.shape_cast %111 : vector<16x16x2xf32> to vector<256x2xf32>
    %c3_118 = arith.constant 3 : index
    %c0_119 = arith.constant 0 : index
    %c0_120 = arith.constant 0 : index
    %113 = vector.load %arg10[%c3_118, %c0_119, %c0_120] : memref<25x2x4xf32, #tpu.memory_space<vmem>>, vector<1x2x4xf32>
    %114 = vector.shape_cast %113 : vector<1x2x4xf32> to vector<2x4xf32>
    %cst_121 = arith.constant dense<0.000000e+00> : vector<256x4xf32>
    %115 = tpu.matmul %112, %114, %cst_121 {dimension_numbers = #tpu.dot_dimension_numbers<[1], [0], [0], [1], [0, 0, 1, 1], [], []>} : vector<256x2xf32>, vector<2x4xf32>, vector<256x4xf32> -> vector<256x4xf32>
    %116 = arith.addf %110, %115 : vector<256x4xf32>
    %c0_122 = arith.constant 0 : index
    %c4_123 = arith.constant 4 : index
    %c0_124 = arith.constant 0 : index
    %117 = vector.load %arg16[%c0_122, %c4_123, %c0_124] : memref<20x20x2xf32, #tpu.memory_space<vmem>>, vector<16x16x2xf32>
    %118 = vector.shape_cast %117 : vector<16x16x2xf32> to vector<256x2xf32>
    %c4_125 = arith.constant 4 : index
    %c0_126 = arith.constant 0 : index
    %c0_127 = arith.constant 0 : index
    %119 = vector.load %arg10[%c4_125, %c0_126, %c0_127] : memref<25x2x4xf32, #tpu.memory_space<vmem>>, vector<1x2x4xf32>
    %120 = vector.shape_cast %119 : vector<1x2x4xf32> to vector<2x4xf32>
    %cst_128 = arith.constant dense<0.000000e+00> : vector<256x4xf32>
    %121 = tpu.matmul %118, %120, %cst_128 {dimension_numbers = #tpu.dot_dimension_numbers<[1], [0], [0], [1], [0, 0, 1, 1], [], []>} : vector<256x2xf32>, vector<2x4xf32>, vector<256x4xf32> -> vector<256x4xf32>
    %122 = arith.addf %116, %121 : vector<256x4xf32>
    %c1_129 = arith.constant 1 : index
    %c0_130 = arith.constant 0 : index
    %c0_131 = arith.constant 0 : index
    %123 = vector.load %arg16[%c1_129, %c0_130, %c0_131] : memref<20x20x2xf32, #tpu.memory_space<vmem>>, vector<16x16x2xf32>
    %124 = vector.shape_cast %123 : vector<16x16x2xf32> to vector<256x2xf32>
    %c5_132 = arith.constant 5 : index
    %c0_133 = arith.constant 0 : index
    %c0_134 = arith.constant 0 : index
    %125 = vector.load %arg10[%c5_132, %c0_133, %c0_134] : memref<25x2x4xf32, #tpu.memory_space<vmem>>, vector<1x2x4xf32>
    %126 = vector.shape_cast %125 : vector<1x2x4xf32> to vector<2x4xf32>
    %cst_135 = arith.constant dense<0.000000e+00> : vector<256x4xf32>
    %127 = tpu.matmul %124, %126, %cst_135 {dimension_numbers = #tpu.dot_dimension_numbers<[1], [0], [0], [1], [0, 0, 1, 1], [], []>} : vector<256x2xf32>, vector<2x4xf32>, vector<256x4xf32> -> vector<256x4xf32>
    %128 = arith.addf %122, %127 : vector<256x4xf32>
    %c1_136 = arith.constant 1 : index
    %c1_137 = arith.constant 1 : index
    %c0_138 = arith.constant 0 : index
    %129 = vector.load %arg16[%c1_136, %c1_137, %c0_138] : memref<20x20x2xf32, #tpu.memory_space<vmem>>, vector<16x16x2xf32>
    %130 = vector.shape_cast %129 : vector<16x16x2xf32> to vector<256x2xf32>
    %c6_139 = arith.constant 6 : index
    %c0_140 = arith.constant 0 : index
    %c0_141 = arith.constant 0 : index
    %131 = vector.load %arg10[%c6_139, %c0_140, %c0_141] : memref<25x2x4xf32, #tpu.memory_space<vmem>>, vector<1x2x4xf32>
    %132 = vector.shape_cast %131 : vector<1x2x4xf32> to vector<2x4xf32>
    %cst_142 = arith.constant dense<0.000000e+00> : vector<256x4xf32>
    %133 = tpu.matmul %130, %132, %cst_142 {dimension_numbers = #tpu.dot_dimension_numbers<[1], [0], [0], [1], [0, 0, 1, 1], [], []>} : vector<256x2xf32>, vector<2x4xf32>, vector<256x4xf32> -> vector<256x4xf32>
    %134 = arith.addf %128, %133 : vector<256x4xf32>
    %c1_143 = arith.constant 1 : index
    %c2_144 = arith.constant 2 : index
    %c0_145 = arith.constant 0 : index
    %135 = vector.load %arg16[%c1_143, %c2_144, %c0_145] : memref<20x20x2xf32, #tpu.memory_space<vmem>>, vector<16x16x2xf32>
    %136 = vector.shape_cast %135 : vector<16x16x2xf32> to vector<256x2xf32>
    %c7_146 = arith.constant 7 : index
    %c0_147 = arith.constant 0 : index
    %c0_148 = arith.constant 0 : index
    %137 = vector.load %arg10[%c7_146, %c0_147, %c0_148] : memref<25x2x4xf32, #tpu.memory_space<vmem>>, vector<1x2x4xf32>
    %138 = vector.shape_cast %137 : vector<1x2x4xf32> to vector<2x4xf32>
    %cst_149 = arith.constant dense<0.000000e+00> : vector<256x4xf32>
    %139 = tpu.matmul %136, %138, %cst_149 {dimension_numbers = #tpu.dot_dimension_numbers<[1], [0], [0], [1], [0, 0, 1, 1], [], []>} : vector<256x2xf32>, vector<2x4xf32>, vector<256x4xf32> -> vector<256x4xf32>
    %140 = arith.addf %134, %139 : vector<256x4xf32>
    %c1_150 = arith.constant 1 : index
    %c3_151 = arith.constant 3 : index
    %c0_152 = arith.constant 0 : index
    %141 = vector.load %arg16[%c1_150, %c3_151, %c0_152] : memref<20x20x2xf32, #tpu.memory_space<vmem>>, vector<16x16x2xf32>
    %142 = vector.shape_cast %141 : vector<16x16x2xf32> to vector<256x2xf32>
    %c8_153 = arith.constant 8 : index
    %c0_154 = arith.constant 0 : index
    %c0_155 = arith.constant 0 : index
    %143 = vector.load %arg10[%c8_153, %c0_154, %c0_155] : memref<25x2x4xf32, #tpu.memory_space<vmem>>, vector<1x2x4xf32>
    %144 = vector.shape_cast %143 : vector<1x2x4xf32> to vector<2x4xf32>
    %cst_156 = arith.constant dense<0.000000e+00> : vector<256x4xf32>
    %145 = tpu.matmul %142, %144, %cst_156 {dimension_numbers = #tpu.dot_dimension_numbers<[1], [0], [0], [1], [0, 0, 1, 1], [], []>} : vector<256x2xf32>, vector<2x4xf32>, vector<256x4xf32> -> vector<256x4xf32>
    %146 = arith.addf %140, %145 : vector<256x4xf32>
    %c1_157 = arith.constant 1 : index
    %c4_158 = arith.constant 4 : index
    %c0_159 = arith.constant 0 : index
    %147 = vector.load %arg16[%c1_157, %c4_158, %c0_159] : memref<20x20x2xf32, #tpu.memory_space<vmem>>, vector<16x16x2xf32>
    %148 = vector.shape_cast %147 : vector<16x16x2xf32> to vector<256x2xf32>
    %c9 = arith.constant 9 : index
    %c0_160 = arith.constant 0 : index
    %c0_161 = arith.constant 0 : index
    %149 = vector.load %arg10[%c9, %c0_160, %c0_161] : memref<25x2x4xf32, #tpu.memory_space<vmem>>, vector<1x2x4xf32>
    %150 = vector.shape_cast %149 : vector<1x2x4xf32> to vector<2x4xf32>
    %cst_162 = arith.constant dense<0.000000e+00> : vector<256x4xf32>
    %151 = tpu.matmul %148, %150, %cst_162 {dimension_numbers = #tpu.dot_dimension_numbers<[1], [0], [0], [1], [0, 0, 1, 1], [], []>} : vector<256x2xf32>, vector<2x4xf32>, vector<256x4xf32> -> vector<256x4xf32>
    %152 = arith.addf %146, %151 : vector<256x4xf32>
    %c2_163 = arith.constant 2 : index
    %c0_164 = arith.constant 0 : index
    %c0_165 = arith.constant 0 : index
    %153 = vector.load %arg16[%c2_163, %c0_164, %c0_165] : memref<20x20x2xf32, #tpu.memory_space<vmem>>, vector<16x16x2xf32>
    %154 = vector.shape_cast %153 : vector<16x16x2xf32> to vector<256x2xf32>
    %c10 = arith.constant 10 : index
    %c0_166 = arith.constant 0 : index
    %c0_167 = arith.constant 0 : index
    %155 = vector.load %arg10[%c10, %c0_166, %c0_167] : memref<25x2x4xf32, #tpu.memory_space<vmem>>, vector<1x2x4xf32>
    %156 = vector.shape_cast %155 : vector<1x2x4xf32> to vector<2x4xf32>
    %cst_168 = arith.constant dense<0.000000e+00> : vector<256x4xf32>
    %157 = tpu.matmul %154, %156, %cst_168 {dimension_numbers = #tpu.dot_dimension_numbers<[1], [0], [0], [1], [0, 0, 1, 1], [], []>} : vector<256x2xf32>, vector<2x4xf32>, vector<256x4xf32> -> vector<256x4xf32>
    %158 = arith.addf %152, %157 : vector<256x4xf32>
    %c2_169 = arith.constant 2 : index
    %c1_170 = arith.constant 1 : index
    %c0_171 = arith.constant 0 : index
    %159 = vector.load %arg16[%c2_169, %c1_170, %c0_171] : memref<20x20x2xf32, #tpu.memory_space<vmem>>, vector<16x16x2xf32>
    %160 = vector.shape_cast %159 : vector<16x16x2xf32> to vector<256x2xf32>
    %c11 = arith.constant 11 : index
    %c0_172 = arith.constant 0 : index
    %c0_173 = arith.constant 0 : index
    %161 = vector.load %arg10[%c11, %c0_172, %c0_173] : memref<25x2x4xf32, #tpu.memory_space<vmem>>, vector<1x2x4xf32>
    %162 = vector.shape_cast %161 : vector<1x2x4xf32> to vector<2x4xf32>
    %cst_174 = arith.constant dense<0.000000e+00> : vector<256x4xf32>
    %163 = tpu.matmul %160, %162, %cst_174 {dimension_numbers = #tpu.dot_dimension_numbers<[1], [0], [0], [1], [0, 0, 1, 1], [], []>} : vector<256x2xf32>, vector<2x4xf32>, vector<256x4xf32> -> vector<256x4xf32>
    %164 = arith.addf %158, %163 : vector<256x4xf32>
    %c2_175 = arith.constant 2 : index
    %c2_176 = arith.constant 2 : index
    %c0_177 = arith.constant 0 : index
    %165 = vector.load %arg16[%c2_175, %c2_176, %c0_177] : memref<20x20x2xf32, #tpu.memory_space<vmem>>, vector<16x16x2xf32>
    %166 = vector.shape_cast %165 : vector<16x16x2xf32> to vector<256x2xf32>
    %c12 = arith.constant 12 : index
    %c0_178 = arith.constant 0 : index
    %c0_179 = arith.constant 0 : index
    %167 = vector.load %arg10[%c12, %c0_178, %c0_179] : memref<25x2x4xf32, #tpu.memory_space<vmem>>, vector<1x2x4xf32>
    %168 = vector.shape_cast %167 : vector<1x2x4xf32> to vector<2x4xf32>
    %cst_180 = arith.constant dense<0.000000e+00> : vector<256x4xf32>
    %169 = tpu.matmul %166, %168, %cst_180 {dimension_numbers = #tpu.dot_dimension_numbers<[1], [0], [0], [1], [0, 0, 1, 1], [], []>} : vector<256x2xf32>, vector<2x4xf32>, vector<256x4xf32> -> vector<256x4xf32>
    %170 = arith.addf %164, %169 : vector<256x4xf32>
    %c2_181 = arith.constant 2 : index
    %c3_182 = arith.constant 3 : index
    %c0_183 = arith.constant 0 : index
    %171 = vector.load %arg16[%c2_181, %c3_182, %c0_183] : memref<20x20x2xf32, #tpu.memory_space<vmem>>, vector<16x16x2xf32>
    %172 = vector.shape_cast %171 : vector<16x16x2xf32> to vector<256x2xf32>
    %c13 = arith.constant 13 : index
    %c0_184 = arith.constant 0 : index
    %c0_185 = arith.constant 0 : index
    %173 = vector.load %arg10[%c13, %c0_184, %c0_185] : memref<25x2x4xf32, #tpu.memory_space<vmem>>, vector<1x2x4xf32>
    %174 = vector.shape_cast %173 : vector<1x2x4xf32> to vector<2x4xf32>
    %cst_186 = arith.constant dense<0.000000e+00> : vector<256x4xf32>
    %175 = tpu.matmul %172, %174, %cst_186 {dimension_numbers = #tpu.dot_dimension_numbers<[1], [0], [0], [1], [0, 0, 1, 1], [], []>} : vector<256x2xf32>, vector<2x4xf32>, vector<256x4xf32> -> vector<256x4xf32>
    %176 = arith.addf %170, %175 : vector<256x4xf32>
    %c2_187 = arith.constant 2 : index
    %c4_188 = arith.constant 4 : index
    %c0_189 = arith.constant 0 : index
    %177 = vector.load %arg16[%c2_187, %c4_188, %c0_189] : memref<20x20x2xf32, #tpu.memory_space<vmem>>, vector<16x16x2xf32>
    %178 = vector.shape_cast %177 : vector<16x16x2xf32> to vector<256x2xf32>
    %c14 = arith.constant 14 : index
    %c0_190 = arith.constant 0 : index
    %c0_191 = arith.constant 0 : index
    %179 = vector.load %arg10[%c14, %c0_190, %c0_191] : memref<25x2x4xf32, #tpu.memory_space<vmem>>, vector<1x2x4xf32>
    %180 = vector.shape_cast %179 : vector<1x2x4xf32> to vector<2x4xf32>
    %cst_192 = arith.constant dense<0.000000e+00> : vector<256x4xf32>
    %181 = tpu.matmul %178, %180, %cst_192 {dimension_numbers = #tpu.dot_dimension_numbers<[1], [0], [0], [1], [0, 0, 1, 1], [], []>} : vector<256x2xf32>, vector<2x4xf32>, vector<256x4xf32> -> vector<256x4xf32>
    %182 = arith.addf %176, %181 : vector<256x4xf32>
    %c3_193 = arith.constant 3 : index
    %c0_194 = arith.constant 0 : index
    %c0_195 = arith.constant 0 : index
    %183 = vector.load %arg16[%c3_193, %c0_194, %c0_195] : memref<20x20x2xf32, #tpu.memory_space<vmem>>, vector<16x16x2xf32>
    %184 = vector.shape_cast %183 : vector<16x16x2xf32> to vector<256x2xf32>
    %c15 = arith.constant 15 : index
    %c0_196 = arith.constant 0 : index
    %c0_197 = arith.constant 0 : index
    %185 = vector.load %arg10[%c15, %c0_196, %c0_197] : memref<25x2x4xf32, #tpu.memory_space<vmem>>, vector<1x2x4xf32>
    %186 = vector.shape_cast %185 : vector<1x2x4xf32> to vector<2x4xf32>
    %cst_198 = arith.constant dense<0.000000e+00> : vector<256x4xf32>
    %187 = tpu.matmul %184, %186, %cst_198 {dimension_numbers = #tpu.dot_dimension_numbers<[1], [0], [0], [1], [0, 0, 1, 1], [], []>} : vector<256x2xf32>, vector<2x4xf32>, vector<256x4xf32> -> vector<256x4xf32>
    %188 = arith.addf %182, %187 : vector<256x4xf32>
    %c3_199 = arith.constant 3 : index
    %c1_200 = arith.constant 1 : index
    %c0_201 = arith.constant 0 : index
    %189 = vector.load %arg16[%c3_199, %c1_200, %c0_201] : memref<20x20x2xf32, #tpu.memory_space<vmem>>, vector<16x16x2xf32>
    %190 = vector.shape_cast %189 : vector<16x16x2xf32> to vector<256x2xf32>
    %c16 = arith.constant 16 : index
    %c0_202 = arith.constant 0 : index
    %c0_203 = arith.constant 0 : index
    %191 = vector.load %arg10[%c16, %c0_202, %c0_203] : memref<25x2x4xf32, #tpu.memory_space<vmem>>, vector<1x2x4xf32>
    %192 = vector.shape_cast %191 : vector<1x2x4xf32> to vector<2x4xf32>
    %cst_204 = arith.constant dense<0.000000e+00> : vector<256x4xf32>
    %193 = tpu.matmul %190, %192, %cst_204 {dimension_numbers = #tpu.dot_dimension_numbers<[1], [0], [0], [1], [0, 0, 1, 1], [], []>} : vector<256x2xf32>, vector<2x4xf32>, vector<256x4xf32> -> vector<256x4xf32>
    %194 = arith.addf %188, %193 : vector<256x4xf32>
    %c3_205 = arith.constant 3 : index
    %c2_206 = arith.constant 2 : index
    %c0_207 = arith.constant 0 : index
    %195 = vector.load %arg16[%c3_205, %c2_206, %c0_207] : memref<20x20x2xf32, #tpu.memory_space<vmem>>, vector<16x16x2xf32>
    %196 = vector.shape_cast %195 : vector<16x16x2xf32> to vector<256x2xf32>
    %c17 = arith.constant 17 : index
    %c0_208 = arith.constant 0 : index
    %c0_209 = arith.constant 0 : index
    %197 = vector.load %arg10[%c17, %c0_208, %c0_209] : memref<25x2x4xf32, #tpu.memory_space<vmem>>, vector<1x2x4xf32>
    %198 = vector.shape_cast %197 : vector<1x2x4xf32> to vector<2x4xf32>
    %cst_210 = arith.constant dense<0.000000e+00> : vector<256x4xf32>
    %199 = tpu.matmul %196, %198, %cst_210 {dimension_numbers = #tpu.dot_dimension_numbers<[1], [0], [0], [1], [0, 0, 1, 1], [], []>} : vector<256x2xf32>, vector<2x4xf32>, vector<256x4xf32> -> vector<256x4xf32>
    %200 = arith.addf %194, %199 : vector<256x4xf32>
    %c3_211 = arith.constant 3 : index
    %c3_212 = arith.constant 3 : index
    %c0_213 = arith.constant 0 : index
    %201 = vector.load %arg16[%c3_211, %c3_212, %c0_213] : memref<20x20x2xf32, #tpu.memory_space<vmem>>, vector<16x16x2xf32>
    %202 = vector.shape_cast %201 : vector<16x16x2xf32> to vector<256x2xf32>
    %c18 = arith.constant 18 : index
    %c0_214 = arith.constant 0 : index
    %c0_215 = arith.constant 0 : index
    %203 = vector.load %arg10[%c18, %c0_214, %c0_215] : memref<25x2x4xf32, #tpu.memory_space<vmem>>, vector<1x2x4xf32>
    %204 = vector.shape_cast %203 : vector<1x2x4xf32> to vector<2x4xf32>
    %cst_216 = arith.constant dense<0.000000e+00> : vector<256x4xf32>
    %205 = tpu.matmul %202, %204, %cst_216 {dimension_numbers = #tpu.dot_dimension_numbers<[1], [0], [0], [1], [0, 0, 1, 1], [], []>} : vector<256x2xf32>, vector<2x4xf32>, vector<256x4xf32> -> vector<256x4xf32>
    %206 = arith.addf %200, %205 : vector<256x4xf32>
    %c3_217 = arith.constant 3 : index
    %c4_218 = arith.constant 4 : index
    %c0_219 = arith.constant 0 : index
    %207 = vector.load %arg16[%c3_217, %c4_218, %c0_219] : memref<20x20x2xf32, #tpu.memory_space<vmem>>, vector<16x16x2xf32>
    %208 = vector.shape_cast %207 : vector<16x16x2xf32> to vector<256x2xf32>
    %c19 = arith.constant 19 : index
    %c0_220 = arith.constant 0 : index
    %c0_221 = arith.constant 0 : index
    %209 = vector.load %arg10[%c19, %c0_220, %c0_221] : memref<25x2x4xf32, #tpu.memory_space<vmem>>, vector<1x2x4xf32>
    %210 = vector.shape_cast %209 : vector<1x2x4xf32> to vector<2x4xf32>
    %cst_222 = arith.constant dense<0.000000e+00> : vector<256x4xf32>
    %211 = tpu.matmul %208, %210, %cst_222 {dimension_numbers = #tpu.dot_dimension_numbers<[1], [0], [0], [1], [0, 0, 1, 1], [], []>} : vector<256x2xf32>, vector<2x4xf32>, vector<256x4xf32> -> vector<256x4xf32>
    %212 = arith.addf %206, %211 : vector<256x4xf32>
    %c4_223 = arith.constant 4 : index
    %c0_224 = arith.constant 0 : index
    %c0_225 = arith.constant 0 : index
    %213 = vector.load %arg16[%c4_223, %c0_224, %c0_225] : memref<20x20x2xf32, #tpu.memory_space<vmem>>, vector<16x16x2xf32>
    %214 = vector.shape_cast %213 : vector<16x16x2xf32> to vector<256x2xf32>
    %c20 = arith.constant 20 : index
    %c0_226 = arith.constant 0 : index
    %c0_227 = arith.constant 0 : index
    %215 = vector.load %arg10[%c20, %c0_226, %c0_227] : memref<25x2x4xf32, #tpu.memory_space<vmem>>, vector<1x2x4xf32>
    %216 = vector.shape_cast %215 : vector<1x2x4xf32> to vector<2x4xf32>
    %cst_228 = arith.constant dense<0.000000e+00> : vector<256x4xf32>
    %217 = tpu.matmul %214, %216, %cst_228 {dimension_numbers = #tpu.dot_dimension_numbers<[1], [0], [0], [1], [0, 0, 1, 1], [], []>} : vector<256x2xf32>, vector<2x4xf32>, vector<256x4xf32> -> vector<256x4xf32>
    %218 = arith.addf %212, %217 : vector<256x4xf32>
    %c4_229 = arith.constant 4 : index
    %c1_230 = arith.constant 1 : index
    %c0_231 = arith.constant 0 : index
    %219 = vector.load %arg16[%c4_229, %c1_230, %c0_231] : memref<20x20x2xf32, #tpu.memory_space<vmem>>, vector<16x16x2xf32>
    %220 = vector.shape_cast %219 : vector<16x16x2xf32> to vector<256x2xf32>
    %c21 = arith.constant 21 : index
    %c0_232 = arith.constant 0 : index
    %c0_233 = arith.constant 0 : index
    %221 = vector.load %arg10[%c21, %c0_232, %c0_233] : memref<25x2x4xf32, #tpu.memory_space<vmem>>, vector<1x2x4xf32>
    %222 = vector.shape_cast %221 : vector<1x2x4xf32> to vector<2x4xf32>
    %cst_234 = arith.constant dense<0.000000e+00> : vector<256x4xf32>
    %223 = tpu.matmul %220, %222, %cst_234 {dimension_numbers = #tpu.dot_dimension_numbers<[1], [0], [0], [1], [0, 0, 1, 1], [], []>} : vector<256x2xf32>, vector<2x4xf32>, vector<256x4xf32> -> vector<256x4xf32>
    %224 = arith.addf %218, %223 : vector<256x4xf32>
    %c4_235 = arith.constant 4 : index
    %c2_236 = arith.constant 2 : index
    %c0_237 = arith.constant 0 : index
    %225 = vector.load %arg16[%c4_235, %c2_236, %c0_237] : memref<20x20x2xf32, #tpu.memory_space<vmem>>, vector<16x16x2xf32>
    %226 = vector.shape_cast %225 : vector<16x16x2xf32> to vector<256x2xf32>
    %c22 = arith.constant 22 : index
    %c0_238 = arith.constant 0 : index
    %c0_239 = arith.constant 0 : index
    %227 = vector.load %arg10[%c22, %c0_238, %c0_239] : memref<25x2x4xf32, #tpu.memory_space<vmem>>, vector<1x2x4xf32>
    %228 = vector.shape_cast %227 : vector<1x2x4xf32> to vector<2x4xf32>
    %cst_240 = arith.constant dense<0.000000e+00> : vector<256x4xf32>
    %229 = tpu.matmul %226, %228, %cst_240 {dimension_numbers = #tpu.dot_dimension_numbers<[1], [0], [0], [1], [0, 0, 1, 1], [], []>} : vector<256x2xf32>, vector<2x4xf32>, vector<256x4xf32> -> vector<256x4xf32>
    %230 = arith.addf %224, %229 : vector<256x4xf32>
    %c4_241 = arith.constant 4 : index
    %c3_242 = arith.constant 3 : index
    %c0_243 = arith.constant 0 : index
    %231 = vector.load %arg16[%c4_241, %c3_242, %c0_243] : memref<20x20x2xf32, #tpu.memory_space<vmem>>, vector<16x16x2xf32>
    %232 = vector.shape_cast %231 : vector<16x16x2xf32> to vector<256x2xf32>
    %c23 = arith.constant 23 : index
    %c0_244 = arith.constant 0 : index
    %c0_245 = arith.constant 0 : index
    %233 = vector.load %arg10[%c23, %c0_244, %c0_245] : memref<25x2x4xf32, #tpu.memory_space<vmem>>, vector<1x2x4xf32>
    %234 = vector.shape_cast %233 : vector<1x2x4xf32> to vector<2x4xf32>
    %cst_246 = arith.constant dense<0.000000e+00> : vector<256x4xf32>
    %235 = tpu.matmul %232, %234, %cst_246 {dimension_numbers = #tpu.dot_dimension_numbers<[1], [0], [0], [1], [0, 0, 1, 1], [], []>} : vector<256x2xf32>, vector<2x4xf32>, vector<256x4xf32> -> vector<256x4xf32>
    %236 = arith.addf %230, %235 : vector<256x4xf32>
    %c4_247 = arith.constant 4 : index
    %c4_248 = arith.constant 4 : index
    %c0_249 = arith.constant 0 : index
    %237 = vector.load %arg16[%c4_247, %c4_248, %c0_249] : memref<20x20x2xf32, #tpu.memory_space<vmem>>, vector<16x16x2xf32>
    %238 = vector.shape_cast %237 : vector<16x16x2xf32> to vector<256x2xf32>
    %c24 = arith.constant 24 : index
    %c0_250 = arith.constant 0 : index
    %c0_251 = arith.constant 0 : index
    %239 = vector.load %arg10[%c24, %c0_250, %c0_251] : memref<25x2x4xf32, #tpu.memory_space<vmem>>, vector<1x2x4xf32>
    %240 = vector.shape_cast %239 : vector<1x2x4xf32> to vector<2x4xf32>
    %cst_252 = arith.constant dense<0.000000e+00> : vector<256x4xf32>
    %241 = tpu.matmul %238, %240, %cst_252 {dimension_numbers = #tpu.dot_dimension_numbers<[1], [0], [0], [1], [0, 0, 1, 1], [], []>} : vector<256x2xf32>, vector<2x4xf32>, vector<256x4xf32> -> vector<256x4xf32>
    %242 = arith.addf %236, %241 : vector<256x4xf32>
    %c0_253 = arith.constant 0 : index
    %c0_254 = arith.constant 0 : index
    %243 = vector.load %arg11[%c0_253, %c0_254] : memref<1x4xf32, #tpu.memory_space<vmem>>, vector<1x4xf32>
    %244 = vector.broadcast %243 : vector<1x4xf32> to vector<256x4xf32>
    %245 = arith.addf %242, %244 : vector<256x4xf32>
    %cst_255 = arith.constant 0.000000e+00 : f32
    %246 = vector.broadcast %cst_255 : f32 to vector<256x4xf32>
    %247 = arith.maximumf %245, %246 : vector<256x4xf32>
    %cst_256 = arith.constant 0xFF800000 : f32
    %248 = vector.broadcast %cst_256 : f32 to vector<18x18x4xf32>
    %c0_257 = arith.constant 0 : index
    %c0_258 = arith.constant 0 : index
    %c0_259 = arith.constant 0 : index
    %249 = vector.load %arg17[%c0_257, %c0_258, %c0_259] : memref<18x18x4xf32, #tpu.memory_space<vmem>>, vector<18x18x4xf32>
    tpu.vector_store %arg17[%c0_257, %c0_258, %c0_259], %248 {strides = array<i32>} : memref<18x18x4xf32, #tpu.memory_space<vmem>>, vector<18x18x4xf32>,
    %c1_260 = arith.constant 1 : index
    %c1_261 = arith.constant 1 : index
    %c0_262 = arith.constant 0 : index
    %250 = vector.load %arg17[%c1_260, %c1_261, %c0_262] : memref<18x18x4xf32, #tpu.memory_space<vmem>>, vector<16x16x4xf32>
    tpu.vector_store %arg17[%c1_260, %c1_261, %c0_262], %1 {strides = array<i32>} : memref<18x18x4xf32, #tpu.memory_space<vmem>>, vector<16x16x4xf32>,
    %c0_263 = arith.constant 0 : index
    %c0_264 = arith.constant 0 : index
    %c0_265 = arith.constant 0 : index
    %251 = vector.load %arg17[%c0_263, %c0_264, %c0_265] : memref<18x18x4xf32, #tpu.memory_space<vmem>>, vector<16x16x4xf32>
    %c0_266 = arith.constant 0 : index
    %c1_267 = arith.constant 1 : index
    %c0_268 = arith.constant 0 : index
    %252 = vector.load %arg17[%c0_266, %c1_267, %c0_268] : memref<18x18x4xf32, #tpu.memory_space<vmem>>, vector<16x16x4xf32>
    %253 = arith.maximumf %251, %252 : vector<16x16x4xf32>
    %c0_269 = arith.constant 0 : index
    %c2_270 = arith.constant 2 : index
    %c0_271 = arith.constant 0 : index
    %254 = vector.load %arg17[%c0_269, %c2_270, %c0_271] : memref<18x18x4xf32, #tpu.memory_space<vmem>>, vector<16x16x4xf32>
    %255 = arith.maximumf %253, %254 : vector<16x16x4xf32>
    %c1_272 = arith.constant 1 : index
    %c0_273 = arith.constant 0 : index
    %c0_274 = arith.constant 0 : index
    %256 = vector.load %arg17[%c1_272, %c0_273, %c0_274] : memref<18x18x4xf32, #tpu.memory_space<vmem>>, vector<16x16x4xf32>
    %257 = arith.maximumf %255, %256 : vector<16x16x4xf32>
    %c1_275 = arith.constant 1 : index
    %c1_276 = arith.constant 1 : index
    %c0_277 = arith.constant 0 : index
    %258 = vector.load %arg17[%c1_275, %c1_276, %c0_277] : memref<18x18x4xf32, #tpu.memory_space<vmem>>, vector<16x16x4xf32>
    %259 = arith.maximumf %257, %258 : vector<16x16x4xf32>
    %c1_278 = arith.constant 1 : index
    %c2_279 = arith.constant 2 : index
    %c0_280 = arith.constant 0 : index
    %260 = vector.load %arg17[%c1_278, %c2_279, %c0_280] : memref<18x18x4xf32, #tpu.memory_space<vmem>>, vector<16x16x4xf32>
    %261 = arith.maximumf %259, %260 : vector<16x16x4xf32>
    %c2_281 = arith.constant 2 : index
    %c0_282 = arith.constant 0 : index
    %c0_283 = arith.constant 0 : index
    %262 = vector.load %arg17[%c2_281, %c0_282, %c0_283] : memref<18x18x4xf32, #tpu.memory_space<vmem>>, vector<16x16x4xf32>
    %263 = arith.maximumf %261, %262 : vector<16x16x4xf32>
    %c2_284 = arith.constant 2 : index
    %c1_285 = arith.constant 1 : index
    %c0_286 = arith.constant 0 : index
    %264 = vector.load %arg17[%c2_284, %c1_285, %c0_286] : memref<18x18x4xf32, #tpu.memory_space<vmem>>, vector<16x16x4xf32>
    %265 = arith.maximumf %263, %264 : vector<16x16x4xf32>
    %c2_287 = arith.constant 2 : index
    %c2_288 = arith.constant 2 : index
    %c0_289 = arith.constant 0 : index
    %266 = vector.load %arg17[%c2_287, %c2_288, %c0_289] : memref<18x18x4xf32, #tpu.memory_space<vmem>>, vector<16x16x4xf32>
    %267 = arith.maximumf %265, %266 : vector<16x16x4xf32>
    %268 = vector.shape_cast %267 : vector<16x16x4xf32> to vector<256x4xf32>
    %c0_290 = arith.constant 0 : index
    %c0_291 = arith.constant 0 : index
    %269 = vector.load %arg12[%c0_290, %c0_291] : memref<4x4xf32, #tpu.memory_space<vmem>>, vector<4x4xf32>
    %cst_292 = arith.constant dense<0.000000e+00> : vector<256x4xf32>
    %270 = tpu.matmul %268, %269, %cst_292 {dimension_numbers = #tpu.dot_dimension_numbers<[1], [0], [0], [1], [0, 0, 1, 1], [], []>} : vector<256x4xf32>, vector<4x4xf32>, vector<256x4xf32> -> vector<256x4xf32>
    %c0_293 = arith.constant 0 : index
    %c0_294 = arith.constant 0 : index
    %271 = vector.load %arg13[%c0_293, %c0_294] : memref<1x4xf32, #tpu.memory_space<vmem>>, vector<1x4xf32>
    %272 = vector.broadcast %271 : vector<1x4xf32> to vector<256x4xf32>
    %273 = arith.addf %270, %272 : vector<256x4xf32>
    %cst_295 = arith.constant 0.000000e+00 : f32
    %274 = vector.broadcast %cst_295 : f32 to vector<256x4xf32>
    %275 = arith.maximumf %273, %274 : vector<256x4xf32>
    %276 = tpu.concatenate %9, %80, %247, %275 in 1 : vector<256x4xf32>, vector<256x8xf32>, vector<256x4xf32>, vector<256x4xf32> -> vector<256x20xf32>
    %277 = vector.shape_cast %276 : vector<256x20xf32> to vector<16x16x20xf32>
    %c0_296 = arith.constant 0 : index
    %c0_297 = arith.constant 0 : index
    %c0_298 = arith.constant 0 : index
    %c0_299 = arith.constant 0 : index
    %278 = vector.load %arg14[%c0_296, %c0_297, %c0_298, %c0_299] : memref<1x16x16x20xf32, #tpu.memory_space<vmem>>, vector<1x16x16x20xf32>
    %279 = vector.shape_cast %278 : vector<1x16x16x20xf32> to vector<16x16x20xf32>
    %280 = vector.shape_cast %277 : vector<16x16x20xf32> to vector<1x16x16x20xf32>
    tpu.vector_store %arg14[%c0_296, %c0_297, %c0_298, %c0_299], %280 {strides = array<i32>} : memref<1x16x16x20xf32, #tpu.memory_space<vmem>>, vector<1x16x16x20xf32>,
    return
  }
  func.func @transform_0(%arg0: i32) -> (i32, i32, i32, i32) {
    %c0_i32 = arith.constant 0 : i32
    %c0_i32_0 = arith.constant 0 : i32
    %c0_i32_1 = arith.constant 0 : i32
    %c0_i32_2 = arith.constant 0 : i32
    return %arg0, %c0_i32, %c0_i32_0, %c0_i32_1 : i32, i32, i32, i32
  }
  func.func @transform_1(%arg0: i32) -> (i32, i32) {
    %c0_i32 = arith.constant 0 : i32
    %c0_i32_0 = arith.constant 0 : i32
    %c0_i32_1 = arith.constant 0 : i32
    return %c0_i32, %c0_i32_0 : i32, i32
  }
  func.func @transform_2(%arg0: i32) -> (i32, i32) {
    %c0_i32 = arith.constant 0 : i32
    %c0_i32_0 = arith.constant 0 : i32
    %c0_i32_1 = arith.constant 0 : i32
    return %c0_i32, %c0_i32_0 : i32, i32
  }
  func.func @transform_3(%arg0: i32) -> (i32, i32) {
    %c0_i32 = arith.constant 0 : i32
    %c0_i32_0 = arith.constant 0 : i32
    %c0_i32_1 = arith.constant 0 : i32
    return %c0_i32, %c0_i32_0 : i32, i32
  }
  func.func @transform_4(%arg0: i32) -> (i32, i32) {
    %c0_i32 = arith.constant 0 : i32
    %c0_i32_0 = arith.constant 0 : i32
    %c0_i32_1 = arith.constant 0 : i32
    return %c0_i32, %c0_i32_0 : i32, i32
  }
  func.func @transform_5(%arg0: i32) -> (i32, i32, i32) {
    %c0_i32 = arith.constant 0 : i32
    %c0_i32_0 = arith.constant 0 : i32
    %c0_i32_1 = arith.constant 0 : i32
    %c0_i32_2 = arith.constant 0 : i32
    return %c0_i32, %c0_i32_0, %c0_i32_1 : i32, i32, i32
  }
  func.func @transform_6(%arg0: i32) -> (i32, i32) {
    %c0_i32 = arith.constant 0 : i32
    %c0_i32_0 = arith.constant 0 : i32
    %c0_i32_1 = arith.constant 0 : i32
    return %c0_i32, %c0_i32_0 : i32, i32
  }
  func.func @transform_7(%arg0: i32) -> (i32, i32) {
    %c0_i32 = arith.constant 0 : i32
    %c0_i32_0 = arith.constant 0 : i32
    %c0_i32_1 = arith.constant 0 : i32
    return %c0_i32, %c0_i32_0 : i32, i32
  }
  func.func @transform_8(%arg0: i32) -> (i32, i32) {
    %c0_i32 = arith.constant 0 : i32
    %c0_i32_0 = arith.constant 0 : i32
    %c0_i32_1 = arith.constant 0 : i32
    return %c0_i32, %c0_i32_0 : i32, i32
  }
  func.func @transform_9(%arg0: i32) -> (i32, i32, i32) {
    %c0_i32 = arith.constant 0 : i32
    %c0_i32_0 = arith.constant 0 : i32
    %c0_i32_1 = arith.constant 0 : i32
    %c0_i32_2 = arith.constant 0 : i32
    return %c0_i32, %c0_i32_0, %c0_i32_1 : i32, i32, i32
  }
  func.func @transform_10(%arg0: i32) -> (i32, i32) {
    %c0_i32 = arith.constant 0 : i32
    %c0_i32_0 = arith.constant 0 : i32
    %c0_i32_1 = arith.constant 0 : i32
    return %c0_i32, %c0_i32_0 : i32, i32
  }
  func.func @transform_11(%arg0: i32) -> (i32, i32) {
    %c0_i32 = arith.constant 0 : i32
    %c0_i32_0 = arith.constant 0 : i32
    %c0_i32_1 = arith.constant 0 : i32
    return %c0_i32, %c0_i32_0 : i32, i32
  }
  func.func @transform_12(%arg0: i32) -> (i32, i32) {
    %c0_i32 = arith.constant 0 : i32
    %c0_i32_0 = arith.constant 0 : i32
    %c0_i32_1 = arith.constant 0 : i32
    return %c0_i32, %c0_i32_0 : i32, i32
  }
  func.func @transform_13(%arg0: i32) -> (i32, i32, i32, i32) {
    %c0_i32 = arith.constant 0 : i32
    %c0_i32_0 = arith.constant 0 : i32
    %c0_i32_1 = arith.constant 0 : i32
    %c0_i32_2 = arith.constant 0 : i32
    return %arg0, %c0_i32, %c0_i32_0, %c0_i32_1 : i32, i32, i32, i32
  }
}

</mosaic_0001>

<llo_original>
// kernel: inception_forward.1
$region0: #{inception_forward.1}
  #allocation0 [shape = 'u32[]', space=smem, size = 0x4, offset = 0x4, fixed_abs, tag = 'smem constant byte address 0x4 - core index']
  #allocation1 [shape = 'u32[72,128]{1,0:T(1,128)}', space=vmem, size = 0x9000, scoped, tag = 'internal scratch']
  #allocation2 [shape = 'f32[18,18,4]{2,1,0:T(8,128)}', space=vmem, size = 0x36000, scoped, tag = 'scratch operand']
  #allocation3 [shape = 'f32[20,20,2]{2,1,0:T(8,128)}', space=vmem, size = 0x3c000, scoped, tag = 'scratch operand']
  #allocation4 [shape = 'f32[18,18,4]{2,1,0:T(8,128)}', space=vmem, size = 0x36000, scoped, tag = 'scratch operand']
  %s0 = inlined_call_operand.vmem [shape: f32[2,16,16,4], index: 0, kind: input, shape index: {}]
  %s1 = inlined_call_operand.vmem [shape: f32[4,4], index: 1, kind: input, shape index: {}]
  %s2 = inlined_call_operand.vmem [shape: f32[1,4], index: 2, kind: input, shape index: {}]
  %s3 = inlined_call_operand.vmem [shape: f32[4,4], index: 3, kind: input, shape index: {}]
  %s4 = inlined_call_operand.vmem [shape: f32[1,4], index: 4, kind: input, shape index: {}]
  %s5 = inlined_call_operand.vmem [shape: f32[9,4,8], index: 5, kind: input, shape index: {}]
  %s6 = inlined_call_operand.vmem [shape: f32[1,8], index: 6, kind: input, shape index: {}]
  %s7 = inlined_call_operand.vmem [shape: f32[4,2], index: 7, kind: input, shape index: {}]
  %s8 = inlined_call_operand.vmem [shape: f32[1,2], index: 8, kind: input, shape index: {}]
  %s9 = inlined_call_operand.vmem [shape: f32[25,2,4], index: 9, kind: input, shape index: {}]
  %s10 = inlined_call_operand.vmem [shape: f32[1,4], index: 10, kind: input, shape index: {}]
  %s11 = inlined_call_operand.vmem [shape: f32[4,4], index: 11, kind: input, shape index: {}]
  %s12 = inlined_call_operand.vmem [shape: f32[1,4], index: 12, kind: input, shape index: {}]
  %s13 = inlined_call_operand.hbm [shape: f32[2,16,16,20], index: 13, kind: output, shape index: {}]
  %s14 = sld [smem:[#allocation0]]
  $region85: #{inception_forward.1} parent=0
    _
  %s16 = ssub.s32 1, %s14
  %s17 = scalar_select 0, %s16, %s14
  $region1: #{inception_forward.1} parent=0
    #allocation5 [shape = 'u8[262144]{0}', space=vmem, size = 0x40000, scoped, tag = 'output window, operand 0']
    #allocation6 [shape = 's32[2]{0}', space=sflag, size = 0x8, scoped, tag = 'scoped memory for inception_forward.1']
    %18 = vsyncpa [#allocation6], 0
    %s19 = scalar_lea.sflag [#allocation6], 1
    %20 = vsyncpa %s19, 0
    loop: start=0, step=1, limit=4
    $region2: #{inception_forward.1} parent=1 // loop_pre_header
      _
    $region3: #{inception_forward.1} parent=1 // loop_header
      %s22 = sphi 0, %s26
      %p23 = scmp.ge.s32.totalorder %s22, 4
      %s32 = sphi 0, %s34
      %s35 = sphi 0, %s32
      %s36 = sphi 0, %s35
      %s52 = sphi 0, %s36
      %s56 = sphi 0, %s56
      %s58 = sphi 0, %s56
      %s59 = sphi 0, %s58
      %s73 = sphi 0, %s59
      %s77 = sphi 0, %s77
      %s79 = sphi 0, %s77
      %s80 = sphi 0, %s79
      %s94 = sphi 0, %s80
      %s98 = sphi 0, %s98
      %s100 = sphi 0, %s98
      %s101 = sphi 0, %s100
      %s115 = sphi 0, %s101
      %s119 = sphi 0, %s119
      %s121 = sphi 0, %s119
      %s122 = sphi 0, %s121
      %s136 = sphi 0, %s122
      %s140 = sphi 0, %s140
      %s142 = sphi 0, %s140
      %s143 = sphi 0, %s142
      %s157 = sphi 0, %s143
      %s161 = sphi 0, %s161
      %s163 = sphi 0, %s161
      %s164 = sphi 0, %s163
      %s178 = sphi 0, %s164
      %s182 = sphi 0, %s182
      %s184 = sphi 0, %s182
      %s185 = sphi 0, %s184
      %s199 = sphi 0, %s185
      %s203 = sphi 0, %s203
      %s205 = sphi 0, %s203
      %s206 = sphi 0, %s205
      %s220 = sphi 0, %s206
      %s224 = sphi 0, %s224
      %s226 = sphi 0, %s224
      %s227 = sphi 0, %s226
      %s241 = sphi 0, %s227
      %s245 = sphi 0, %s245
      %s247 = sphi 0, %s245
      %s248 = sphi 0, %s247
      %s262 = sphi 0, %s248
      %s266 = sphi 0, %s266
      %s268 = sphi 0, %s266
      %s269 = sphi 0, %s268
      %s283 = sphi 0, %s269
      %s287 = sphi 0, %s287
      %s289 = sphi 0, %s287
      %s290 = sphi 0, %s289
      %s304 = sphi 0, %s290
      %s310 = sphi 0, %s312
      %s313 = sphi 0, %s310
      %s314 = sphi 0, %s313
      %s330 = sphi 0, %s314
    $region4: #{inception_forward.1} parent=1 // loop_header_branch
      %25 = sbr.rel (%p23) target = $region8
    $region5: #{inception_forward.1} parent=1 // loop_body
      %s27 = ssub.s32 %s22, 1
      %s28 = ssub.s32 %s22, 2
      %s29 = sadd.s32 %s22, 1
      %s30 = ssub.s32 %s22, %s29
      %p31 = scmp.eq.s32.totalorder %s30, 0
      %s33 = sadd.s32 %s32, 1
      %s34 = scalar_select %p31, %s32, %s33
      %p37 = pneg %p31
      %p38 = scmp.eq.s32.totalorder %s22, 1
      %p39 = por %p37, %p38
      %p40 = scmp.ne.s32.totalorder %s32, %s35
      %p41 = scmp.eq.s32.totalorder %s22, 0
      %p42 = por %p40, %p41
      %p43 = scmp.ne.s32.totalorder %s32, %s35
      %p44 = scmp.eq.s32.totalorder %s27, 1
      %p45 = por %p43, %p44
      %p46 = scmp.ne.s32.totalorder %s35, %s36
      %p47 = scmp.eq.s32.totalorder %s27, 0
      %p48 = por %p46, %p47
      %p49 = scmp.ne.s32.totalorder %s35, %s36
      %p50 = scmp.eq.s32.totalorder %s28, 1
      %p51 = por %p49, %p50
      %p53 = scmp.ne.s32.totalorder %s36, %s52
      %p54 = scmp.eq.s32.totalorder %s28, 0
      %p55 = por %p53, %p54
      %s57 = sadd.s32 %s56, 1
      %p60 = scmp.eq.s32.totalorder %s22, 1
      %p61 = scmp.ne.s32.totalorder %s56, %s58
      %p62 = scmp.eq.s32.totalorder %s22, 0
      %p63 = por %p61, %p62
      %p64 = scmp.ne.s32.totalorder %s56, %s58
      %p65 = scmp.eq.s32.totalorder %s27, 1
      %p66 = por %p64, %p65
      %p67 = scmp.ne.s32.totalorder %s58, %s59
      %p68 = scmp.eq.s32.totalorder %s27, 0
      %p69 = por %p67, %p68
      %p70 = scmp.ne.s32.totalorder %s58, %s59
      %p71 = scmp.eq.s32.totalorder %s28, 1
      %p72 = por %p70, %p71
      %p74 = scmp.ne.s32.totalorder %s59, %s73
      %p75 = scmp.eq.s32.totalorder %s28, 0
      %p76 = por %p74, %p75
      %s78 = sadd.s32 %s77, 1
      %p81 = scmp.eq.s32.totalorder %s22, 1
      %p82 = scmp.ne.s32.totalorder %s77, %s79
      %p83 = scmp.eq.s32.totalorder %s22, 0
      %p84 = por %p82, %p83
      %p85 = scmp.ne.s32.totalorder %s77, %s79
      %p86 = scmp.eq.s32.totalorder %s27, 1
      %p87 = por %p85, %p86
      %p88 = scmp.ne.s32.totalorder %s79, %s80
      %p89 = scmp.eq.s32.totalorder %s27, 0
      %p90 = por %p88, %p89
      %p91 = scmp.ne.s32.totalorder %s79, %s80
      %p92 = scmp.eq.s32.totalorder %s28, 1
      %p93 = por %p91, %p92
      %p95 = scmp.ne.s32.totalorder %s80, %s94
      %p96 = scmp.eq.s32.totalorder %s28, 0
      %p97 = por %p95, %p96
      %s99 = sadd.s32 %s98, 1
      %p102 = scmp.eq.s32.totalorder %s22, 1
      %p103 = scmp.ne.s32.totalorder %s98, %s100
      %p104 = scmp.eq.s32.totalorder %s22, 0
      %p105 = por %p103, %p104
      %p106 = scmp.ne.s32.totalorder %s98, %s100
      %p107 = scmp.eq.s32.totalorder %s27, 1
      %p108 = por %p106, %p107
      %p109 = scmp.ne.s32.totalorder %s100, %s101
      %p110 = scmp.eq.s32.totalorder %s27, 0
      %p111 = por %p109, %p110
      %p112 = scmp.ne.s32.totalorder %s100, %s101
      %p113 = scmp.eq.s32.totalorder %s28, 1
      %p114 = por %p112, %p113
      %p116 = scmp.ne.s32.totalorder %s101, %s115
      %p117 = scmp.eq.s32.totalorder %s28, 0
      %p118 = por %p116, %p117
      %s120 = sadd.s32 %s119, 1
      %p123 = scmp.eq.s32.totalorder %s22, 1
      %p124 = scmp.ne.s32.totalorder %s119, %s121
      %p125 = scmp.eq.s32.totalorder %s22, 0
      %p126 = por %p124, %p125
      %p127 = scmp.ne.s32.totalorder %s119, %s121
      %p128 = scmp.eq.s32.totalorder %s27, 1
      %p129 = por %p127, %p128
      %p130 = scmp.ne.s32.totalorder %s121, %s122
      %p131 = scmp.eq.s32.totalorder %s27, 0
      %p132 = por %p130, %p131
      %p133 = scmp.ne.s32.totalorder %s121, %s122
      %p134 = scmp.eq.s32.totalorder %s28, 1
      %p135 = por %p133, %p134
      %p137 = scmp.ne.s32.totalorder %s122, %s136
      %p138 = scmp.eq.s32.totalorder %s28, 0
      %p139 = por %p137, %p138
      %s141 = sadd.s32 %s140, 1
      %p144 = scmp.eq.s32.totalorder %s22, 1
      %p145 = scmp.ne.s32.totalorder %s140, %s142
      %p146 = scmp.eq.s32.totalorder %s22, 0
      %p147 = por %p145, %p146
      %p148 = scmp.ne.s32.totalorder %s140, %s142
      %p149 = scmp.eq.s32.totalorder %s27, 1
      %p150 = por %p148, %p149
      %p151 = scmp.ne.s32.totalorder %s142, %s143
      %p152 = scmp.eq.s32.totalorder %s27, 0
      %p153 = por %p151, %p152
      %p154 = scmp.ne.s32.totalorder %s142, %s143
      %p155 = scmp.eq.s32.totalorder %s28, 1
      %p156 = por %p154, %p155
      %p158 = scmp.ne.s32.totalorder %s143, %s157
      %p159 = scmp.eq.s32.totalorder %s28, 0
      %p160 = por %p158, %p159
      %s162 = sadd.s32 %s161, 1
      %p165 = scmp.eq.s32.totalorder %s22, 1
      %p166 = scmp.ne.s32.totalorder %s161, %s163
      %p167 = scmp.eq.s32.totalorder %s22, 0
      %p168 = por %p166, %p167
      %p169 = scmp.ne.s32.totalorder %s161, %s163
      %p170 = scmp.eq.s32.totalorder %s27, 1
      %p171 = por %p169, %p170
      %p172 = scmp.ne.s32.totalorder %s163, %s164
      %p173 = scmp.eq.s32.totalorder %s27, 0
      %p174 = por %p172, %p173
      %p175 = scmp.ne.s32.totalorder %s163, %s164
      %p176 = scmp.eq.s32.totalorder %s28, 1
      %p177 = por %p175, %p176
      %p179 = scmp.ne.s32.totalorder %s164, %s178
      %p180 = scmp.eq.s32.totalorder %s28, 0
      %p181 = por %p179, %p180
      %s183 = sadd.s32 %s182, 1
      %p186 = scmp.eq.s32.totalorder %s22, 1
      %p187 = scmp.ne.s32.totalorder %s182, %s184
      %p188 = scmp.eq.s32.totalorder %s22, 0
      %p189 = por %p187, %p188
      %p190 = scmp.ne.s32.totalorder %s182, %s184
      %p191 = scmp.eq.s32.totalorder %s27, 1
      %p192 = por %p190, %p191
      %p193 = scmp.ne.s32.totalorder %s184, %s185
      %p194 = scmp.eq.s32.totalorder %s27, 0
      %p195 = por %p193, %p194
      %p196 = scmp.ne.s32.totalorder %s184, %s185
      %p197 = scmp.eq.s32.totalorder %s28, 1
      %p198 = por %p196, %p197
      %p200 = scmp.ne.s32.totalorder %s185, %s199
      %p201 = scmp.eq.s32.totalorder %s28, 0
      %p202 = por %p200, %p201
      %s204 = sadd.s32 %s203, 1
      %p207 = scmp.eq.s32.totalorder %s22, 1
      %p208 = scmp.ne.s32.totalorder %s203, %s205
      %p209 = scmp.eq.s32.totalorder %s22, 0
      %p210 = por %p208, %p209
      %p211 = scmp.ne.s32.totalorder %s203, %s205
      %p212 = scmp.eq.s32.totalorder %s27, 1
      %p213 = por %p211, %p212
      %p214 = scmp.ne.s32.totalorder %s205, %s206
      %p215 = scmp.eq.s32.totalorder %s27, 0
      %p216 = por %p214, %p215
      %p217 = scmp.ne.s32.totalorder %s205, %s206
      %p218 = scmp.eq.s32.totalorder %s28, 1
      %p219 = por %p217, %p218
      %p221 = scmp.ne.s32.totalorder %s206, %s220
      %p222 = scmp.eq.s32.totalorder %s28, 0
      %p223 = por %p221, %p222
      %s225 = sadd.s32 %s224, 1
      %p228 = scmp.eq.s32.totalorder %s22, 1
      %p229 = scmp.ne.s32.totalorder %s224, %s226
      %p230 = scmp.eq.s32.totalorder %s22, 0
      %p231 = por %p229, %p230
      %p232 = scmp.ne.s32.totalorder %s224, %s226
      %p233 = scmp.eq.s32.totalorder %s27, 1
      %p234 = por %p232, %p233
      %p235 = scmp.ne.s32.totalorder %s226, %s227
      %p236 = scmp.eq.s32.totalorder %s27, 0
      %p237 = por %p235, %p236
      %p238 = scmp.ne.s32.totalorder %s226, %s227
      %p239 = scmp.eq.s32.totalorder %s28, 1
      %p240 = por %p238, %p239
      %p242 = scmp.ne.s32.totalorder %s227, %s241
      %p243 = scmp.eq.s32.totalorder %s28, 0
      %p244 = por %p242, %p243
      %s246 = sadd.s32 %s245, 1
      %p249 = scmp.eq.s32.totalorder %s22, 1
      %p250 = scmp.ne.s32.totalorder %s245, %s247
      %p251 = scmp.eq.s32.totalorder %s22, 0
      %p252 = por %p250, %p251
      %p253 = scmp.ne.s32.totalorder %s245, %s247
      %p254 = scmp.eq.s32.totalorder %s27, 1
      %p255 = por %p253, %p254
      %p256 = scmp.ne.s32.totalorder %s247, %s248
      %p257 = scmp.eq.s32.totalorder %s27, 0
      %p258 = por %p256, %p257
      %p259 = scmp.ne.s32.totalorder %s247, %s248
      %p260 = scmp.eq.s32.totalorder %s28, 1
      %p261 = por %p259, %p260
      %p263 = scmp.ne.s32.totalorder %s248, %s262
      %p264 = scmp.eq.s32.totalorder %s28, 0
      %p265 = por %p263, %p264
      %s267 = sadd.s32 %s266, 1
      %p270 = scmp.eq.s32.totalorder %s22, 1
      %p271 = scmp.ne.s32.totalorder %s266, %s268
      %p272 = scmp.eq.s32.totalorder %s22, 0
      %p273 = por %p271, %p272
      %p274 = scmp.ne.s32.totalorder %s266, %s268
      %p275 = scmp.eq.s32.totalorder %s27, 1
      %p276 = por %p274, %p275
      %p277 = scmp.ne.s32.totalorder %s268, %s269
      %p278 = scmp.eq.s32.totalorder %s27, 0
      %p279 = por %p277, %p278
      %p280 = scmp.ne.s32.totalorder %s268, %s269
      %p281 = scmp.eq.s32.totalorder %s28, 1
      %p282 = por %p280, %p281
      %p284 = scmp.ne.s32.totalorder %s269, %s283
      %p285 = scmp.eq.s32.totalorder %s28, 0
      %p286 = por %p284, %p285
      %s288 = sadd.s32 %s287, 1
      %p291 = scmp.eq.s32.totalorder %s22, 1
      %p292 = scmp.ne.s32.totalorder %s287, %s289
      %p293 = scmp.eq.s32.totalorder %s22, 0
      %p294 = por %p292, %p293
      %p295 = scmp.ne.s32.totalorder %s287, %s289
      %p296 = scmp.eq.s32.totalorder %s27, 1
      %p297 = por %p295, %p296
      %p298 = scmp.ne.s32.totalorder %s289, %s290
      %p299 = scmp.eq.s32.totalorder %s27, 0
      %p300 = por %p298, %p299
      %p301 = scmp.ne.s32.totalorder %s289, %s290
      %p302 = scmp.eq.s32.totalorder %s28, 1
      %p303 = por %p301, %p302
      %p305 = scmp.ne.s32.totalorder %s290, %s304
      %p306 = scmp.eq.s32.totalorder %s28, 0
      %p307 = por %p305, %p306
      %s308 = ssub.s32 %s22, %s29
      %p309 = scmp.eq.s32.totalorder %s308, 0
      %s311 = sadd.s32 %s310, 1
      %s312 = scalar_select %p309, %s310, %s311
      %p315 = pneg %p309
      %p316 = scmp.eq.s32.totalorder %s22, 1
      %p317 = por %p315, %p316
      %p318 = scmp.ne.s32.totalorder %s310, %s313
      %p319 = scmp.eq.s32.totalorder %s22, 0
      %p320 = por %p318, %p319
      %p321 = scmp.ne.s32.totalorder %s310, %s313
      %p322 = scmp.eq.s32.totalorder %s27, 1
      %p323 = por %p321, %p322
      %p324 = scmp.ne.s32.totalorder %s313, %s314
      %p325 = scmp.eq.s32.totalorder %s27, 0
      %p326 = por %p324, %p325
      %p327 = scmp.ne.s32.totalorder %s313, %s314
      %p328 = scmp.eq.s32.totalorder %s28, 1
      %p329 = por %p327, %p328
      %p331 = scmp.ne.s32.totalorder %s314, %s330
      %p332 = scmp.eq.s32.totalorder %s28, 0
      %p333 = por %p331, %p332
      %p334 = scmp.le.s32.totalorder 1, %s22
      %p335 = scmp.lt.s32.totalorder %s22, 3
      %p336 = pnand %p334, %p335
      %p337 = pneg %p336
      // Predicated region
      $region9: #{inception_forward.1} parent=5 // pred_check
        _
      $region10: #{inception_forward.1} parent=5 // pred_check_branch
        %339 = sbr.rel (%p336) target = $region12
      $region11: #{inception_forward.1} parent=5 // pred_region
        %s340 = ssub.s32 %s22, 1
        // Predicated region
        $region13: #{inception_forward.1} parent=11 // pred_check
          %p341 = pneg %p69
        $region14: #{inception_forward.1} parent=11 // pred_check_branch
          %343 = sbr.rel (%p341) target = $region16
        $region15: #{inception_forward.1} parent=11 // pred_region
          _
        $region16: #{inception_forward.1} parent=11 // pred_fallthru
          _
        // Predicated region
        $region17: #{inception_forward.1} parent=11 // pred_check
          %p344 = pneg %p90
        $region18: #{inception_forward.1} parent=11 // pred_check_branch
          %346 = sbr.rel (%p344) target = $region20
        $region19: #{inception_forward.1} parent=11 // pred_region
          _
        $region20: #{inception_forward.1} parent=11 // pred_fallthru
          _
        // Predicated region
        $region21: #{inception_forward.1} parent=11 // pred_check
          %p347 = pneg %p111
        $region22: #{inception_forward.1} parent=11 // pred_check_branch
          %349 = sbr.rel (%p347) target = $region24
        $region23: #{inception_forward.1} parent=11 // pred_region
          _
        $region24: #{inception_forward.1} parent=11 // pred_fallthru
          _
        // Predicated region
        $region25: #{inception_forward.1} parent=11 // pred_check
          %p350 = pneg %p132
        $region26: #{inception_forward.1} parent=11 // pred_check_branch
          %352 = sbr.rel (%p350) target = $region28
        $region27: #{inception_forward.1} parent=11 // pred_region
          _
        $region28: #{inception_forward.1} parent=11 // pred_fallthru
          _
        // Predicated region
        $region29: #{inception_forward.1} parent=11 // pred_check
          %p353 = pneg %p153
        $region30: #{inception_forward.1} parent=11 // pred_check_branch
          %355 = sbr.rel (%p353) target = $region32
        $region31: #{inception_forward.1} parent=11 // pred_region
          _
        $region32: #{inception_forward.1} parent=11 // pred_fallthru
          _
        // Predicated region
        $region33: #{inception_forward.1} parent=11 // pred_check
          %p356 = pneg %p174
        $region34: #{inception_forward.1} parent=11 // pred_check_branch
          %358 = sbr.rel (%p356) target = $region36
        $region35: #{inception_forward.1} parent=11 // pred_region
          _
        $region36: #{inception_forward.1} parent=11 // pred_fallthru
          _
        // Predicated region
        $region37: #{inception_forward.1} parent=11 // pred_check
          %p359 = pneg %p195
        $region38: #{inception_forward.1} parent=11 // pred_check_branch
          %361 = sbr.rel (%p359) target = $region40
        $region39: #{inception_forward.1} parent=11 // pred_region
          _
        $region40: #{inception_forward.1} parent=11 // pred_fallthru
          _
        // Predicated region
        $region41: #{inception_forward.1} parent=11 // pred_check
          %p362 = pneg %p216
        $region42: #{inception_forward.1} parent=11 // pred_check_branch
          %364 = sbr.rel (%p362) target = $region44
        $region43: #{inception_forward.1} parent=11 // pred_region
          _
        $region44: #{inception_forward.1} parent=11 // pred_fallthru
          _
        // Predicated region
        $region45: #{inception_forward.1} parent=11 // pred_check
          %p365 = pneg %p237
        $region46: #{inception_forward.1} parent=11 // pred_check_branch
          %367 = sbr.rel (%p365) target = $region48
        $region47: #{inception_forward.1} parent=11 // pred_region
          _
        $region48: #{inception_forward.1} parent=11 // pred_fallthru
          _
        // Predicated region
        $region49: #{inception_forward.1} parent=11 // pred_check
          %p368 = pneg %p258
        $region50: #{inception_forward.1} parent=11 // pred_check_branch
          %370 = sbr.rel (%p368) target = $region52
        $region51: #{inception_forward.1} parent=11 // pred_region
          _
        $region52: #{inception_forward.1} parent=11 // pred_fallthru
          _
        // Predicated region
        $region53: #{inception_forward.1} parent=11 // pred_check
          %p371 = pneg %p279
        $region54: #{inception_forward.1} parent=11 // pred_check_branch
          %373 = sbr.rel (%p371) target = $region56
        $region55: #{inception_forward.1} parent=11 // pred_region
          _
        $region56: #{inception_forward.1} parent=11 // pred_fallthru
          _
        // Predicated region
        $region57: #{inception_forward.1} parent=11 // pred_check
          %p374 = pneg %p300
        $region58: #{inception_forward.1} parent=11 // pred_check_branch
          %376 = sbr.rel (%p374) target = $region60
        $region59: #{inception_forward.1} parent=11 // pred_region
          _
        $region60: #{inception_forward.1} parent=11 // pred_fallthru
          _
      $region12: #{inception_forward.1} parent=5 // pred_fallthru
        _
      %p377 = scmp.lt.s32.totalorder %s22, 2
      // Predicated region
      $region61: #{inception_forward.1} parent=5 // pred_check
        %p378 = pneg %p377
      $region62: #{inception_forward.1} parent=5 // pred_check_branch
        %380 = sbr.rel (%p378) target = $region64
      $region63: #{inception_forward.1} parent=5 // pred_region
        // Predicated region
        $region65: #{inception_forward.1} parent=63 // pred_check
          %p381 = pneg %p42
        $region66: #{inception_forward.1} parent=63 // pred_check_branch
          %383 = sbr.rel (%p381) target = $region68
        $region67: #{inception_forward.1} parent=63 // pred_region
          %p384 = scmp.lt.s32.totalorder %s22, 1
          %s385 = scalar_select %p384, %s22, 1
          %s386 = smul.addr %s385, 32
          %s387 = smul.addr %s386, 8
          %s388 = scalar_lea.vmem %s0, %s387
        $region68: #{inception_forward.1} parent=63 // pred_fallthru
          _
      $region64: #{inception_forward.1} parent=5 // pred_fallthru
        _
      %p389 = scmp.le.s32.totalorder 1, %s22
      %p390 = scmp.lt.s32.totalorder %s22, 3
      %p391 = pnand %p389, %p390
      %p392 = pneg %p391
      // Predicated region
      $region69: #{inception_forward.1} parent=5 // pred_check
        _
      $region70: #{inception_forward.1} parent=5 // pred_check_branch
        %394 = sbr.rel (%p391) target = $region72
      $region71: #{inception_forward.1} parent=5 // pred_region
        %s395 = ssub.s32 %s22, 1
        %p396 = scmp.lt.s32.totalorder %s27, 1
        %s397 = scalar_select %p396, %s27, 1
        %s398 = smul.addr %s397, 32
        %s399 = smul.addr %s398, 8
        %s400 = scalar_lea.vmem %s0, %s399
        %p401 = pneg %p48
        %p402 = pneg %p45
        %p403 = pneg %p69
        %p404 = pneg %p66
        %p405 = pneg %p90
        %p406 = pneg %p87
        %p407 = pneg %p111
        %p408 = pneg %p108
        %p409 = pneg %p132
        %p410 = pneg %p129
        %p411 = pneg %p153
        %p412 = pneg %p150
        %p413 = pneg %p174
        %p414 = pneg %p171
        %p415 = pneg %p195
        %p416 = pneg %p192
        %p417 = pneg %p216
        %p418 = pneg %p213
        %p419 = pneg %p237
        %p420 = pneg %p234
        %p421 = pneg %p258
        %p422 = pneg %p255
        %p423 = pneg %p279
        %p424 = pneg %p276
        %p425 = pneg %p300
        %p426 = pneg %p297
        %p427 = pneg %p326
        %p428 = pneg %p323
        %s429 = sand.u32 %s313, 1
        %s430 = scalar_lea.sflag [#allocation6], %s429
        %s431 = sand.u32 %s313, 1
        %s432 = smul.addr %s431, 256
        %s433 = scalar_lea.vmem [#allocation5], %s432
        %p434 = scmp.lt.s32.totalorder %s27, 1
        %s435 = scalar_select %p434, %s27, 1
        %s436 = smul.addr %s435, 32
        %s437 = smul.addr %s436, 8
        %s438 = scalar_lea.vmem %s0, %s437
        %v439 = vld [vmem:[%s438] sm:$0xff]
        %v440 = vld [vmem:[%s438 + $0x8] sm:$0xff]
        %v441 = vld [vmem:[%s438 + $0x10] sm:$0xff]
        %v442 = vld [vmem:[%s438 + $0x18] sm:$0xff]
        %v443 = vld [vmem:[%s438 + $0x20] sm:$0xff]
        %v444 = vld [vmem:[%s438 + $0x28] sm:$0xff]
        %v445 = vld [vmem:[%s438 + $0x30] sm:$0xff]
        %v446 = vld [vmem:[%s438 + $0x38] sm:$0xff]
        %v447 = vld [vmem:[%s438 + $0x40] sm:$0xff]
        %v448 = vld [vmem:[%s438 + $0x48] sm:$0xff]
        %v449 = vld [vmem:[%s438 + $0x50] sm:$0xff]
        %v450 = vld [vmem:[%s438 + $0x58] sm:$0xff]
        %v451 = vld [vmem:[%s438 + $0x60] sm:$0xff]
        %v452 = vld [vmem:[%s438 + $0x68] sm:$0xff]
        %v453 = vld [vmem:[%s438 + $0x70] sm:$0xff]
        %v454 = vld [vmem:[%s438 + $0x78] sm:$0xff]
        %v455 = vld [vmem:[%s438 + $0x80] sm:$0xff]
        %v456 = vld [vmem:[%s438 + $0x88] sm:$0xff]
        %v457 = vld [vmem:[%s438 + $0x90] sm:$0xff]
        %v458 = vld [vmem:[%s438 + $0x98] sm:$0xff]
        %v459 = vld [vmem:[%s438 + $0xa0] sm:$0xff]
        %v460 = vld [vmem:[%s438 + $0xa8] sm:$0xff]
        %v461 = vld [vmem:[%s438 + $0xb0] sm:$0xff]
        %v462 = vld [vmem:[%s438 + $0xb8] sm:$0xff]
        %v463 = vld [vmem:[%s438 + $0xc0] sm:$0xff]
        %v464 = vld [vmem:[%s438 + $0xc8] sm:$0xff]
        %v465 = vld [vmem:[%s438 + $0xd0] sm:$0xff]
        %v466 = vld [vmem:[%s438 + $0xd8] sm:$0xff]
        %v467 = vld [vmem:[%s438 + $0xe0] sm:$0xff]
        %v468 = vld [vmem:[%s438 + $0xe8] sm:$0xff]
        %v469 = vld [vmem:[%s438 + $0xf0] sm:$0xff]
        %v470 = vld [vmem:[%s438 + $0xf8] sm:$0xff]
        %v471 = vld [vmem:[%s1] sm:$0xf]
        %v472 = vld [vmem:[%s2] sm:$0x1]
        %v474 = vperm.slane %v472, 0
        %vm476 = vcmask 31744
        %v478 = vsel %vm476, %v439, 0
        %v481 = vsel %vm476, %v440, 0
        %v484 = vsel %vm476, %v441, 0
        %v487 = vsel %vm476, %v442, 0
        %v490 = vsel %vm476, %v443, 0
        %v493 = vsel %vm476, %v444, 0
        %v496 = vsel %vm476, %v445, 0
        %v499 = vsel %vm476, %v446, 0
        %v502 = vsel %vm476, %v447, 0
        %v505 = vsel %vm476, %v448, 0
        %v508 = vsel %vm476, %v449, 0
        %v511 = vsel %vm476, %v450, 0
        %v514 = vsel %vm476, %v451, 0
        %v517 = vsel %vm476, %v452, 0
        %v520 = vsel %vm476, %v453, 0
        %v523 = vsel %vm476, %v454, 0
        %v526 = vsel %vm476, %v455, 0
        %v529 = vsel %vm476, %v456, 0
        %v532 = vsel %vm476, %v457, 0
        %v535 = vsel %vm476, %v458, 0
        %v538 = vsel %vm476, %v459, 0
        %v541 = vsel %vm476, %v460, 0
        %v544 = vsel %vm476, %v461, 0
        %v547 = vsel %vm476, %v462, 0
        %v550 = vsel %vm476, %v463, 0
        %v553 = vsel %vm476, %v464, 0
        %v556 = vsel %vm476, %v465, 0
        %v559 = vsel %vm476, %v466, 0
        %v562 = vsel %vm476, %v467, 0
        %v565 = vsel %vm476, %v468, 0
        %v568 = vsel %vm476, %v469, 0
        %v571 = vsel %vm476, %v470, 0
        %vm573 = vcmask 1043456
        %v575 = vsel %vm573, %v471, 0
        %577 = vmatpush.msra.mxu0 0.0
        %578 = vmatpush.msra.mxu0 0.0
        %579 = vmatpush.msra.mxu0 0.0
        %580 = vmatpush.msra.mxu0 0.0
        %581 = vmatpush.msra.mxu0 0.0
        %582 = vmatpush.msra.mxu0 0.0
        %583 = vmatpush.msra.mxu0 0.0
        %584 = vmatpush.msra.mxu0 0.0
        %585 = vmatpush.msra.mxu0 0.0
        %586 = vmatpush.msra.mxu0 0.0
        %587 = vmatpush.msra.mxu0 0.0
        %588 = vmatpush.msra.mxu0 0.0
        %589 = vmatpush.msra.mxu0 0.0
        %590 = vmatpush.msra.mxu0 0.0
        %591 = vmatpush.msra.mxu0 0.0
        %592 = vmatpush.msra.mxu0 %v575
        %593 = vmatmul.f32.gmra.mxu0 %v478
        %v594 = vpop.f32.mrf.mxu0
        %v595 = vadd.f32 %v474, %v594
        %596 = vmatmul.f32.gmra.mxu0 %v481
        %v597 = vpop.f32.mrf.mxu0
        %v598 = vadd.f32 %v474, %v597
        %599 = vmatmul.f32.gmra.mxu0 %v484
        %v600 = vpop.f32.mrf.mxu0
        %v601 = vadd.f32 %v474, %v600
        %602 = vmatmul.f32.gmra.mxu0 %v487
        %v603 = vpop.f32.mrf.mxu0
        %v604 = vadd.f32 %v474, %v603
        %605 = vmatmul.f32.gmra.mxu0 %v490
        %v606 = vpop.f32.mrf.mxu0
        %v607 = vadd.f32 %v474, %v606
        %608 = vmatmul.f32.gmra.mxu0 %v493
        %v609 = vpop.f32.mrf.mxu0
        %v610 = vadd.f32 %v474, %v609
        %611 = vmatmul.f32.gmra.mxu0 %v496
        %v612 = vpop.f32.mrf.mxu0
        %v613 = vadd.f32 %v474, %v612
        %614 = vmatmul.f32.gmra.mxu0 %v499
        %v615 = vpop.f32.mrf.mxu0
        %v616 = vadd.f32 %v474, %v615
        %617 = vmatmul.f32.gmra.mxu0 %v502
        %v618 = vpop.f32.mrf.mxu0
        %v619 = vadd.f32 %v474, %v618
        %620 = vmatmul.f32.gmra.mxu0 %v505
        %v621 = vpop.f32.mrf.mxu0
        %v622 = vadd.f32 %v474, %v621
        %623 = vmatmul.f32.gmra.mxu0 %v508
        %v624 = vpop.f32.mrf.mxu0
        %v625 = vadd.f32 %v474, %v624
        %626 = vmatmul.f32.gmra.mxu0 %v511
        %v627 = vpop.f32.mrf.mxu0
        %v628 = vadd.f32 %v474, %v627
        %629 = vmatmul.f32.gmra.mxu0 %v514
        %v630 = vpop.f32.mrf.mxu0
        %v631 = vadd.f32 %v474, %v630
        %632 = vmatmul.f32.gmra.mxu0 %v517
        %v633 = vpop.f32.mrf.mxu0
        %v634 = vadd.f32 %v474, %v633
        %635 = vmatmul.f32.gmra.mxu0 %v520
        %v636 = vpop.f32.mrf.mxu0
        %v637 = vadd.f32 %v474, %v636
        %638 = vmatmul.f32.gmra.mxu0 %v523
        %v639 = vpop.f32.mrf.mxu0
        %v640 = vadd.f32 %v474, %v639
        %641 = vmatmul.f32.gmra.mxu0 %v526
        %v642 = vpop.f32.mrf.mxu0
        %v643 = vadd.f32 %v474, %v642
        %644 = vmatmul.f32.gmra.mxu0 %v529
        %v645 = vpop.f32.mrf.mxu0
        %v646 = vadd.f32 %v474, %v645
        %647 = vmatmul.f32.gmra.mxu0 %v532
        %v648 = vpop.f32.mrf.mxu0
        %v649 = vadd.f32 %v474, %v648
        %650 = vmatmul.f32.gmra.mxu0 %v535
        %v651 = vpop.f32.mrf.mxu0
        %v652 = vadd.f32 %v474, %v651
        %653 = vmatmul.f32.gmra.mxu0 %v538
        %v654 = vpop.f32.mrf.mxu0
        %v655 = vadd.f32 %v474, %v654
        %656 = vmatmul.f32.gmra.mxu0 %v541
        %v657 = vpop.f32.mrf.mxu0
        %v658 = vadd.f32 %v474, %v657
        %659 = vmatmul.f32.gmra.mxu0 %v544
        %v660 = vpop.f32.mrf.mxu0
        %v661 = vadd.f32 %v474, %v660
        %662 = vmatmul.f32.gmra.mxu0 %v547
        %v663 = vpop.f32.mrf.mxu0
        %v664 = vadd.f32 %v474, %v663
        %665 = vmatmul.f32.gmra.mxu0 %v550
        %v666 = vpop.f32.mrf.mxu0
        %v667 = vadd.f32 %v474, %v666
        %668 = vmatmul.f32.gmra.mxu0 %v553
        %v669 = vpop.f32.mrf.mxu0
        %v670 = vadd.f32 %v474, %v669
        %671 = vmatmul.f32.gmra.mxu0 %v556
        %v672 = vpop.f32.mrf.mxu0
        %v673 = vadd.f32 %v474, %v672
        %674 = vmatmul.f32.gmra.mxu0 %v559
        %v675 = vpop.f32.mrf.mxu0
        %v676 = vadd.f32 %v474, %v675
        %677 = vmatmul.f32.gmra.mxu0 %v562
        %v678 = vpop.f32.mrf.mxu0
        %v679 = vadd.f32 %v474, %v678
        %680 = vmatmul.f32.gmra.mxu0 %v565
        %v681 = vpop.f32.mrf.mxu0
        %v682 = vadd.f32 %v474, %v681
        %683 = vmatmul.f32.gmra.mxu0 %v568
        %v684 = vpop.f32.mrf.mxu0
        %v685 = vadd.f32 %v474, %v684
        %686 = vmatmul.f32.gmra.mxu0 %v571
        %v687 = vpop.f32.mrf.mxu0
        %v688 = vadd.f32 %v474, %v687
        %689 = vdwg.mxu0
        %v690 = vmax.f32 %v595, 0.0
        %v691 = vmax.f32 %v598, 0.0
        %v692 = vmax.f32 %v601, 0.0
        %v693 = vmax.f32 %v604, 0.0
        %v694 = vmax.f32 %v607, 0.0
        %v695 = vmax.f32 %v610, 0.0
        %v696 = vmax.f32 %v613, 0.0
        %v697 = vmax.f32 %v616, 0.0
        %v698 = vmax.f32 %v619, 0.0
        %v699 = vmax.f32 %v622, 0.0
        %v700 = vmax.f32 %v625, 0.0
        %v701 = vmax.f32 %v628, 0.0
        %v702 = vmax.f32 %v631, 0.0
        %v703 = vmax.f32 %v634, 0.0
        %v704 = vmax.f32 %v637, 0.0
        %v705 = vmax.f32 %v640, 0.0
        %v706 = vmax.f32 %v643, 0.0
        %v707 = vmax.f32 %v646, 0.0
        %v708 = vmax.f32 %v649, 0.0
        %v709 = vmax.f32 %v652, 0.0
        %v710 = vmax.f32 %v655, 0.0
        %v711 = vmax.f32 %v658, 0.0
        %v712 = vmax.f32 %v661, 0.0
        %v713 = vmax.f32 %v664, 0.0
        %v714 = vmax.f32 %v667, 0.0
        %v715 = vmax.f32 %v670, 0.0
        %v716 = vmax.f32 %v673, 0.0
        %v717 = vmax.f32 %v676, 0.0
        %v718 = vmax.f32 %v679, 0.0
        %v719 = vmax.f32 %v682, 0.0
        %v720 = vmax.f32 %v685, 0.0
        %v721 = vmax.f32 %v688, 0.0
        %v722 = vld [vmem:[%s3] sm:$0xf]
        %v723 = vld [vmem:[%s4] sm:$0x1]
        %v725 = vperm.slane %v723, 0
        %v728 = vsel %vm573, %v722, 0
        %730 = vmatpush.msra.mxu0 0.0
        %731 = vmatpush.msra.mxu0 0.0
        %732 = vmatpush.msra.mxu0 0.0
        %733 = vmatpush.msra.mxu0 0.0
        %734 = vmatpush.msra.mxu0 0.0
        %735 = vmatpush.msra.mxu0 0.0
        %736 = vmatpush.msra.mxu0 0.0
        %737 = vmatpush.msra.mxu0 0.0
        %738 = vmatpush.msra.mxu0 0.0
        %739 = vmatpush.msra.mxu0 0.0
        %740 = vmatpush.msra.mxu0 0.0
        %741 = vmatpush.msra.mxu0 0.0
        %742 = vmatpush.msra.mxu0 0.0
        %743 = vmatpush.msra.mxu0 0.0
        %744 = vmatpush.msra.mxu0 0.0
        %745 = vmatpush.msra.mxu0 %v728
        %746 = vmatmul.f32.gmra.mxu0 %v478
        %v747 = vpop.f32.mrf.mxu0
        %v748 = vadd.f32 %v725, %v747
        %749 = vmatmul.f32.gmra.mxu0 %v481
        %v750 = vpop.f32.mrf.mxu0
        %v751 = vadd.f32 %v725, %v750
        %752 = vmatmul.f32.gmra.mxu0 %v484
        %v753 = vpop.f32.mrf.mxu0
        %v754 = vadd.f32 %v725, %v753
        %755 = vmatmul.f32.gmra.mxu0 %v487
        %v756 = vpop.f32.mrf.mxu0
        %v757 = vadd.f32 %v725, %v756
        %758 = vmatmul.f32.gmra.mxu0 %v490
        %v759 = vpop.f32.mrf.mxu0
        %v760 = vadd.f32 %v725, %v759
        %761 = vmatmul.f32.gmra.mxu0 %v493
        %v762 = vpop.f32.mrf.mxu0
        %v763 = vadd.f32 %v725, %v762
        %764 = vmatmul.f32.gmra.mxu0 %v496
        %v765 = vpop.f32.mrf.mxu0
        %v766 = vadd.f32 %v725, %v765
        %767 = vmatmul.f32.gmra.mxu0 %v499
        %v768 = vpop.f32.mrf.mxu0
        %v769 = vadd.f32 %v725, %v768
        %770 = vmatmul.f32.gmra.mxu0 %v502
        %v771 = vpop.f32.mrf.mxu0
        %v772 = vadd.f32 %v725, %v771
        %773 = vmatmul.f32.gmra.mxu0 %v505
        %v774 = vpop.f32.mrf.mxu0
        %v775 = vadd.f32 %v725, %v774
        %776 = vmatmul.f32.gmra.mxu0 %v508
        %v777 = vpop.f32.mrf.mxu0
        %v778 = vadd.f32 %v725, %v777
        %779 = vmatmul.f32.gmra.mxu0 %v511
        %v780 = vpop.f32.mrf.mxu0
        %v781 = vadd.f32 %v725, %v780
        %782 = vmatmul.f32.gmra.mxu0 %v514
        %v783 = vpop.f32.mrf.mxu0
        %v784 = vadd.f32 %v725, %v783
        %785 = vmatmul.f32.gmra.mxu0 %v517
        %v786 = vpop.f32.mrf.mxu0
        %v787 = vadd.f32 %v725, %v786
        %788 = vmatmul.f32.gmra.mxu0 %v520
        %v789 = vpop.f32.mrf.mxu0
        %v790 = vadd.f32 %v725, %v789
        %791 = vmatmul.f32.gmra.mxu0 %v523
        %v792 = vpop.f32.mrf.mxu0
        %v793 = vadd.f32 %v725, %v792
        %794 = vmatmul.f32.gmra.mxu0 %v526
        %v795 = vpop.f32.mrf.mxu0
        %v796 = vadd.f32 %v725, %v795
        %797 = vmatmul.f32.gmra.mxu0 %v529
        %v798 = vpop.f32.mrf.mxu0
        %v799 = vadd.f32 %v725, %v798
        %800 = vmatmul.f32.gmra.mxu0 %v532
        %v801 = vpop.f32.mrf.mxu0
        %v802 = vadd.f32 %v725, %v801
        %803 = vmatmul.f32.gmra.mxu0 %v535
        %v804 = vpop.f32.mrf.mxu0
        %v805 = vadd.f32 %v725, %v804
        %806 = vmatmul.f32.gmra.mxu0 %v538
        %v807 = vpop.f32.mrf.mxu0
        %v808 = vadd.f32 %v725, %v807
        %809 = vmatmul.f32.gmra.mxu0 %v541
        %v810 = vpop.f32.mrf.mxu0
        %v811 = vadd.f32 %v725, %v810
        %812 = vmatmul.f32.gmra.mxu0 %v544
        %v813 = vpop.f32.mrf.mxu0
        %v814 = vadd.f32 %v725, %v813
        %815 = vmatmul.f32.gmra.mxu0 %v547
        %v816 = vpop.f32.mrf.mxu0
        %v817 = vadd.f32 %v725, %v816
        %818 = vmatmul.f32.gmra.mxu0 %v550
        %v819 = vpop.f32.mrf.mxu0
        %v820 = vadd.f32 %v725, %v819
        %821 = vmatmul.f32.gmra.mxu0 %v553
        %v822 = vpop.f32.mrf.mxu0
        %v823 = vadd.f32 %v725, %v822
        %824 = vmatmul.f32.gmra.mxu0 %v556
        %v825 = vpop.f32.mrf.mxu0
        %v826 = vadd.f32 %v725, %v825
        %827 = vmatmul.f32.gmra.mxu0 %v559
        %v828 = vpop.f32.mrf.mxu0
        %v829 = vadd.f32 %v725, %v828
        %830 = vmatmul.f32.gmra.mxu0 %v562
        %v831 = vpop.f32.mrf.mxu0
        %v832 = vadd.f32 %v725, %v831
        %833 = vmatmul.f32.gmra.mxu0 %v565
        %v834 = vpop.f32.mrf.mxu0
        %v835 = vadd.f32 %v725, %v834
        %836 = vmatmul.f32.gmra.mxu0 %v568
        %v837 = vpop.f32.mrf.mxu0
        %v838 = vadd.f32 %v725, %v837
        %839 = vmatmul.f32.gmra.mxu0 %v571
        %v840 = vpop.f32.mrf.mxu0
        %v841 = vadd.f32 %v725, %v840
        %842 = vdwg.mxu0
        %v843 = vmax.f32 %v748, 0.0
        %v844 = vmax.f32 %v751, 0.0
        %v845 = vmax.f32 %v754, 0.0
        %v846 = vmax.f32 %v757, 0.0
        %v847 = vmax.f32 %v760, 0.0
        %v848 = vmax.f32 %v763, 0.0
        %v849 = vmax.f32 %v766, 0.0
        %v850 = vmax.f32 %v769, 0.0
        %v851 = vmax.f32 %v772, 0.0
        %v852 = vmax.f32 %v775, 0.0
        %v853 = vmax.f32 %v778, 0.0
        %v854 = vmax.f32 %v781, 0.0
        %v855 = vmax.f32 %v784, 0.0
        %v856 = vmax.f32 %v787, 0.0
        %v857 = vmax.f32 %v790, 0.0
        %v858 = vmax.f32 %v793, 0.0
        %v859 = vmax.f32 %v796, 0.0
        %v860 = vmax.f32 %v799, 0.0
        %v861 = vmax.f32 %v802, 0.0
        %v862 = vmax.f32 %v805, 0.0
        %v863 = vmax.f32 %v808, 0.0
        %v864 = vmax.f32 %v811, 0.0
        %v865 = vmax.f32 %v814, 0.0
        %v866 = vmax.f32 %v817, 0.0
        %v867 = vmax.f32 %v820, 0.0
        %v868 = vmax.f32 %v823, 0.0
        %v869 = vmax.f32 %v826, 0.0
        %v870 = vmax.f32 %v829, 0.0
        %v871 = vmax.f32 %v832, 0.0
        %v872 = vmax.f32 %v835, 0.0
        %v873 = vmax.f32 %v838, 0.0
        %v874 = vmax.f32 %v841, 0.0
        %875 = vst.msk [vmem:[#allocation2] sm:$0xff] %vm476, 0.0
        %876 = vst.msk [vmem:[#allocation2 + $0x8] sm:$0xff] %vm476, 0.0
        %vm877 = vcmask 25600
        %878 = vst.msk [vmem:[#allocation2 + $0x10] sm:$0x3] %vm877, 0.0
        %879 = vst.msk [vmem:[#allocation2 + $0x18] sm:$0xff] %vm476, 0.0
        %880 = vst.msk [vmem:[#allocation2 + $0x20] sm:$0xff] %vm476, 0.0
        %881 = vst.msk [vmem:[#allocation2 + $0x28] sm:$0x3] %vm877, 0.0
        %882 = vst.msk [vmem:[#allocation2 + $0x30] sm:$0xff] %vm476, 0.0
        %883 = vst.msk [vmem:[#allocation2 + $0x38] sm:$0xff] %vm476, 0.0
        %884 = vst.msk [vmem:[#allocation2 + $0x40] sm:$0x3] %vm877, 0.0
        %885 = vst.msk [vmem:[#allocation2 + $0x48] sm:$0xff] %vm476, 0.0
        %886 = vst.msk [vmem:[#allocation2 + $0x50] sm:$0xff] %vm476, 0.0
        %887 = vst.msk [vmem:[#allocation2 + $0x58] sm:$0x3] %vm877, 0.0
        %888 = vst.msk [vmem:[#allocation2 + $0x60] sm:$0xff] %vm476, 0.0
        %889 = vst.msk [vmem:[#allocation2 + $0x68] sm:$0xff] %vm476, 0.0
        %890 = vst.msk [vmem:[#allocation2 + $0x70] sm:$0x3] %vm877, 0.0
        %891 = vst.msk [vmem:[#allocation2 + $0x78] sm:$0xff] %vm476, 0.0
        %892 = vst.msk [vmem:[#allocation2 + $0x80] sm:$0xff] %vm476, 0.0
        %893 = vst.msk [vmem:[#allocation2 + $0x88] sm:$0x3] %vm877, 0.0
        %894 = vst.msk [vmem:[#allocation2 + $0x90] sm:$0xff] %vm476, 0.0
        %895 = vst.msk [vmem:[#allocation2 + $0x98] sm:$0xff] %vm476, 0.0
        %896 = vst.msk [vmem:[#allocation2 + $0xa0] sm:$0x3] %vm877, 0.0
        %897 = vst.msk [vmem:[#allocation2 + $0xa8] sm:$0xff] %vm476, 0.0
        %898 = vst.msk [vmem:[#allocation2 + $0xb0] sm:$0xff] %vm476, 0.0
        %899 = vst.msk [vmem:[#allocation2 + $0xb8] sm:$0x3] %vm877, 0.0
        %900 = vst.msk [vmem:[#allocation2 + $0xc0] sm:$0xff] %vm476, 0.0
        %901 = vst.msk [vmem:[#allocation2 + $0xc8] sm:$0xff] %vm476, 0.0
        %902 = vst.msk [vmem:[#allocation2 + $0xd0] sm:$0x3] %vm877, 0.0
        %903 = vst.msk [vmem:[#allocation2 + $0xd8] sm:$0xff] %vm476, 0.0
        %904 = vst.msk [vmem:[#allocation2 + $0xe0] sm:$0xff] %vm476, 0.0
        %905 = vst.msk [vmem:[#allocation2 + $0xe8] sm:$0x3] %vm877, 0.0
        %906 = vst.msk [vmem:[#allocation2 + $0xf0] sm:$0xff] %vm476, 0.0
        %907 = vst.msk [vmem:[#allocation2 + $0xf8] sm:$0xff] %vm476, 0.0
        %908 = vst.msk [vmem:[#allocation2 + $0x100] sm:$0x3] %vm877, 0.0
        %909 = vst.msk [vmem:[#allocation2 + $0x108] sm:$0xff] %vm476, 0.0
        %910 = vst.msk [vmem:[#allocation2 + $0x110] sm:$0xff] %vm476, 0.0
        %911 = vst.msk [vmem:[#allocation2 + $0x118] sm:$0x3] %vm877, 0.0
        %912 = vst.msk [vmem:[#allocation2 + $0x120] sm:$0xff] %vm476, 0.0
        %913 = vst.msk [vmem:[#allocation2 + $0x128] sm:$0xff] %vm476, 0.0
        %914 = vst.msk [vmem:[#allocation2 + $0x130] sm:$0x3] %vm877, 0.0
        %915 = vst.msk [vmem:[#allocation2 + $0x138] sm:$0xff] %vm476, 0.0
        %916 = vst.msk [vmem:[#allocation2 + $0x140] sm:$0xff] %vm476, 0.0
        %917 = vst.msk [vmem:[#allocation2 + $0x148] sm:$0x3] %vm877, 0.0
        %918 = vst.msk [vmem:[#allocation2 + $0x150] sm:$0xff] %vm476, 0.0
        %919 = vst.msk [vmem:[#allocation2 + $0x158] sm:$0xff] %vm476, 0.0
        %920 = vst.msk [vmem:[#allocation2 + $0x160] sm:$0x3] %vm877, 0.0
        %921 = vst.msk [vmem:[#allocation2 + $0x168] sm:$0xff] %vm476, 0.0
        %922 = vst.msk [vmem:[#allocation2 + $0x170] sm:$0xff] %vm476, 0.0
        %923 = vst.msk [vmem:[#allocation2 + $0x178] sm:$0x3] %vm877, 0.0
        %924 = vst.msk [vmem:[#allocation2 + $0x180] sm:$0xff] %vm476, 0.0
        %925 = vst.msk [vmem:[#allocation2 + $0x188] sm:$0xff] %vm476, 0.0
        %926 = vst.msk [vmem:[#allocation2 + $0x190] sm:$0x3] %vm877, 0.0
        %927 = vst.msk [vmem:[#allocation2 + $0x198] sm:$0xff] %vm476, 0.0
        %928 = vst.msk [vmem:[#allocation2 + $0x1a0] sm:$0xff] %vm476, 0.0
        %929 = vst.msk [vmem:[#allocation2 + $0x1a8] sm:$0x3] %vm877, 0.0
        %s930 = scalar_lea.vmem [#allocation2], 24
        %931 = vst.msk [vmem:[%s930 + $0x1] sm:$0xff] %vm476, %v843
        %932 = vst.msk [vmem:[%s930 + $0x9] sm:$0xff] %vm476, %v844
        %933 = vst.msk [vmem:[%s930 + $0x19] sm:$0xff] %vm476, %v845
        %934 = vst.msk [vmem:[%s930 + $0x21] sm:$0xff] %vm476, %v846
        %935 = vst.msk [vmem:[%s930 + $0x31] sm:$0xff] %vm476, %v847
        %936 = vst.msk [vmem:[%s930 + $0x39] sm:$0xff] %vm476, %v848
        %937 = vst.msk [vmem:[%s930 + $0x49] sm:$0xff] %vm476, %v849
        %938 = vst.msk [vmem:[%s930 + $0x51] sm:$0xff] %vm476, %v850
        %939 = vst.msk [vmem:[%s930 + $0x61] sm:$0xff] %vm476, %v851
        %940 = vst.msk [vmem:[%s930 + $0x69] sm:$0xff] %vm476, %v852
        %941 = vst.msk [vmem:[%s930 + $0x79] sm:$0xff] %vm476, %v853
        %942 = vst.msk [vmem:[%s930 + $0x81] sm:$0xff] %vm476, %v854
        %943 = vst.msk [vmem:[%s930 + $0x91] sm:$0xff] %vm476, %v855
        %944 = vst.msk [vmem:[%s930 + $0x99] sm:$0xff] %vm476, %v856
        %945 = vst.msk [vmem:[%s930 + $0xa9] sm:$0xff] %vm476, %v857
        %946 = vst.msk [vmem:[%s930 + $0xb1] sm:$0xff] %vm476, %v858
        %947 = vst.msk [vmem:[%s930 + $0xc1] sm:$0xff] %vm476, %v859
        %948 = vst.msk [vmem:[%s930 + $0xc9] sm:$0xff] %vm476, %v860
        %949 = vst.msk [vmem:[%s930 + $0xd9] sm:$0xff] %vm476, %v861
        %950 = vst.msk [vmem:[%s930 + $0xe1] sm:$0xff] %vm476, %v862
        %951 = vst.msk [vmem:[%s930 + $0xf1] sm:$0xff] %vm476, %v863
        %952 = vst.msk [vmem:[%s930 + $0xf9] sm:$0xff] %vm476, %v864
        %953 = vst.msk [vmem:[%s930 + $0x109] sm:$0xff] %vm476, %v865
        %954 = vst.msk [vmem:[%s930 + $0x111] sm:$0xff] %vm476, %v866
        %955 = vst.msk [vmem:[%s930 + $0x121] sm:$0xff] %vm476, %v867
        %956 = vst.msk [vmem:[%s930 + $0x129] sm:$0xff] %vm476, %v868
        %957 = vst.msk [vmem:[%s930 + $0x139] sm:$0xff] %vm476, %v869
        %958 = vst.msk [vmem:[%s930 + $0x141] sm:$0xff] %vm476, %v870
        %959 = vst.msk [vmem:[%s930 + $0x151] sm:$0xff] %vm476, %v871
        %960 = vst.msk [vmem:[%s930 + $0x159] sm:$0xff] %vm476, %v872
        %961 = vst.msk [vmem:[%s930 + $0x169] sm:$0xff] %vm476, %v873
        %962 = vst.msk [vmem:[%s930 + $0x171] sm:$0xff] %vm476, %v874
        %v963 = vld [vmem:[#allocation2] sm:$0xff]
        %v964 = vld [vmem:[#allocation2 + $0x8] sm:$0xff]
        %v965 = vld [vmem:[#allocation2 + $0x18] sm:$0xff]
        %v966 = vld [vmem:[#allocation2 + $0x20] sm:$0xff]
        %v967 = vld [vmem:[#allocation2 + $0x30] sm:$0xff]
        %v968 = vld [vmem:[#allocation2 + $0x38] sm:$0xff]
        %v969 = vld [vmem:[#allocation2 + $0x48] sm:$0xff]
        %v970 = vld [vmem:[#allocation2 + $0x50] sm:$0xff]
        %v971 = vld [vmem:[#allocation2 + $0x60] sm:$0xff]
        %v972 = vld [vmem:[#allocation2 + $0x68] sm:$0xff]
        %v973 = vld [vmem:[#allocation2 + $0x78] sm:$0xff]
        %v974 = vld [vmem:[#allocation2 + $0x80] sm:$0xff]
        %v975 = vld [vmem:[#allocation2 + $0x90] sm:$0xff]
        %v976 = vld [vmem:[#allocation2 + $0x98] sm:$0xff]
        %v977 = vld [vmem:[#allocation2 + $0xa8] sm:$0xff]
        %v978 = vld [vmem:[#allocation2 + $0xb0] sm:$0xff]
        %v979 = vld [vmem:[#allocation2 + $0xc0] sm:$0xff]
        %v980 = vld [vmem:[#allocation2 + $0xc8] sm:$0xff]
        %v981 = vld [vmem:[#allocation2 + $0xd8] sm:$0xff]
        %v982 = vld [vmem:[#allocation2 + $0xe0] sm:$0xff]
        %v983 = vld [vmem:[#allocation2 + $0xf0] sm:$0xff]
        %v984 = vld [vmem:[#allocation2 + $0xf8] sm:$0xff]
        %v985 = vld [vmem:[#allocation2 + $0x108] sm:$0xff]
        %v986 = vld [vmem:[#allocation2 + $0x110] sm:$0xff]
        %v987 = vld [vmem:[#allocation2 + $0x120] sm:$0xff]
        %v988 = vld [vmem:[#allocation2 + $0x128] sm:$0xff]
        %v989 = vld [vmem:[#allocation2 + $0x138] sm:$0xff]
        %v990 = vld [vmem:[#allocation2 + $0x140] sm:$0xff]
        %v991 = vld [vmem:[#allocation2 + $0x150] sm:$0xff]
        %v992 = vld [vmem:[#allocation2 + $0x158] sm:$0xff]
        %v993 = vld [vmem:[#allocation2 + $0x168] sm:$0xff]
        %v994 = vld [vmem:[#allocation2 + $0x170] sm:$0xff]
        %v995 = vld [vmem:[%s5] sm:$0xf]
        %v996 = vld [vmem:[#allocation2 + $0x1] sm:$0xff]
        %v997 = vld [vmem:[#allocation2 + $0x9] sm:$0xff]
        %v998 = vld [vmem:[#allocation2 + $0x19] sm:$0xff]
        %v999 = vld [vmem:[#allocation2 + $0x21] sm:$0xff]
        %v1000 = vld [vmem:[#allocation2 + $0x31] sm:$0xff]
        %v1001 = vld [vmem:[#allocation2 + $0x39] sm:$0xff]
        %v1002 = vld [vmem:[#allocation2 + $0x49] sm:$0xff]
        %v1003 = vld [vmem:[#allocation2 + $0x51] sm:$0xff]
        %v1004 = vld [vmem:[#allocation2 + $0x61] sm:$0xff]
        %v1005 = vld [vmem:[#allocation2 + $0x69] sm:$0xff]
        %v1006 = vld [vmem:[#allocation2 + $0x79] sm:$0xff]
        %v1007 = vld [vmem:[#allocation2 + $0x81] sm:$0xff]
        %v1008 = vld [vmem:[#allocation2 + $0x91] sm:$0xff]
        %v1009 = vld [vmem:[#allocation2 + $0x99] sm:$0xff]
        %v1010 = vld [vmem:[#allocation2 + $0xa9] sm:$0xff]
        %v1011 = vld [vmem:[#allocation2 + $0xb1] sm:$0xff]
        %v1012 = vld [vmem:[#allocation2 + $0xc1] sm:$0xff]
        %v1013 = vld [vmem:[#allocation2 + $0xc9] sm:$0xff]
        %v1014 = vld [vmem:[#allocation2 + $0xd9] sm:$0xff]
        %v1015 = vld [vmem:[#allocation2 + $0xe1] sm:$0xff]
        %v1016 = vld [vmem:[#allocation2 + $0xf1] sm:$0xff]
        %v1017 = vld [vmem:[#allocation2 + $0xf9] sm:$0xff]
        %v1018 = vld [vmem:[#allocation2 + $0x109] sm:$0xff]
        %v1019 = vld [vmem:[#allocation2 + $0x111] sm:$0xff]
        %v1020 = vld [vmem:[#allocation2 + $0x121] sm:$0xff]
        %v1021 = vld [vmem:[#allocation2 + $0x129] sm:$0xff]
        %v1022 = vld [vmem:[#allocation2 + $0x139] sm:$0xff]
        %v1023 = vld [vmem:[#allocation2 + $0x141] sm:$0xff]
        %v1024 = vld [vmem:[#allocation2 + $0x151] sm:$0xff]
        %v1025 = vld [vmem:[#allocation2 + $0x159] sm:$0xff]
        %v1026 = vld [vmem:[#allocation2 + $0x169] sm:$0xff]
        %v1027 = vld [vmem:[#allocation2 + $0x171] sm:$0xff]
        %s1028 = scalar_lea.vmem %s5, 4
        %v1029 = vld [vmem:[%s1028] sm:$0xf]
        %v1031 = vsel %vm476, %v996, 0
        %v1034 = vsel %vm476, %v997, 0
        %v1037 = vsel %vm476, %v998, 0
        %v1040 = vsel %vm476, %v999, 0
        %v1043 = vsel %vm476, %v1000, 0
        %v1046 = vsel %vm476, %v1001, 0
        %v1049 = vsel %vm476, %v1002, 0
        %v1052 = vsel %vm476, %v1003, 0
        %v1055 = vsel %vm476, %v1004, 0
        %v1058 = vsel %vm476, %v1005, 0
        %v1061 = vsel %vm476, %v1006, 0
        %v1064 = vsel %vm476, %v1007, 0
        %v1067 = vsel %vm476, %v1008, 0
        %v1070 = vsel %vm476, %v1009, 0
        %v1073 = vsel %vm476, %v1010, 0
        %v1076 = vsel %vm476, %v1011, 0
        %v1079 = vsel %vm476, %v1012, 0
        %v1082 = vsel %vm476, %v1013, 0
        %v1085 = vsel %vm476, %v1014, 0
        %v1088 = vsel %vm476, %v1015, 0
        %v1091 = vsel %vm476, %v1016, 0
        %v1094 = vsel %vm476, %v1017, 0
        %v1097 = vsel %vm476, %v1018, 0
        %v1100 = vsel %vm476, %v1019, 0
        %v1103 = vsel %vm476, %v1020, 0
        %v1106 = vsel %vm476, %v1021, 0
        %v1109 = vsel %vm476, %v1022, 0
        %v1112 = vsel %vm476, %v1023, 0
        %v1115 = vsel %vm476, %v1024, 0
        %v1118 = vsel %vm476, %v1025, 0
        %v1121 = vsel %vm476, %v1026, 0
        %v1124 = vsel %vm476, %v1027, 0
        %v1127 = vsel %vm573, %v1029, 0
        %1129 = vmatpush.msra.mxu0 0.0
        %1130 = vmatpush.msra.mxu0 0.0
        %1131 = vmatpush.msra.mxu0 0.0
        %1132 = vmatpush.msra.mxu0 0.0
        %1133 = vmatpush.msra.mxu0 0.0
        %1134 = vmatpush.msra.mxu0 0.0
        %1135 = vmatpush.msra.mxu0 0.0
        %1136 = vmatpush.msra.mxu0 0.0
        %1137 = vmatpush.msra.mxu0 0.0
        %1138 = vmatpush.msra.mxu0 0.0
        %1139 = vmatpush.msra.mxu0 0.0
        %1140 = vmatpush.msra.mxu0 0.0
        %1141 = vmatpush.msra.mxu0 0.0
        %1142 = vmatpush.msra.mxu0 0.0
        %1143 = vmatpush.msra.mxu0 0.0
        %1144 = vmatpush.msra.mxu0 %v1127
        %1145 = vmatmul.f32.gmra.mxu0 %v1031
        %v1146 = vpop.f32.mrf.mxu0
        %v1147 = vadd.f32 0.0, %v1146
        %1148 = vmatmul.f32.gmra.mxu0 %v1034
        %v1149 = vpop.f32.mrf.mxu0
        %v1150 = vadd.f32 0.0, %v1149
        %1151 = vmatmul.f32.gmra.mxu0 %v1037
        %v1152 = vpop.f32.mrf.mxu0
        %v1153 = vadd.f32 0.0, %v1152
        %1154 = vmatmul.f32.gmra.mxu0 %v1040
        %v1155 = vpop.f32.mrf.mxu0
        %v1156 = vadd.f32 0.0, %v1155
        %1157 = vmatmul.f32.gmra.mxu0 %v1043
        %v1158 = vpop.f32.mrf.mxu0
        %v1159 = vadd.f32 0.0, %v1158
        %1160 = vmatmul.f32.gmra.mxu0 %v1046
        %v1161 = vpop.f32.mrf.mxu0
        %v1162 = vadd.f32 0.0, %v1161
        %1163 = vmatmul.f32.gmra.mxu0 %v1049
        %v1164 = vpop.f32.mrf.mxu0
        %v1165 = vadd.f32 0.0, %v1164
        %1166 = vmatmul.f32.gmra.mxu0 %v1052
        %v1167 = vpop.f32.mrf.mxu0
        %v1168 = vadd.f32 0.0, %v1167
        %1169 = vmatmul.f32.gmra.mxu0 %v1055
        %v1170 = vpop.f32.mrf.mxu0
        %v1171 = vadd.f32 0.0, %v1170
        %1172 = vmatmul.f32.gmra.mxu0 %v1058
        %v1173 = vpop.f32.mrf.mxu0
        %v1174 = vadd.f32 0.0, %v1173
        %1175 = vmatmul.f32.gmra.mxu0 %v1061
        %v1176 = vpop.f32.mrf.mxu0
        %v1177 = vadd.f32 0.0, %v1176
        %1178 = vmatmul.f32.gmra.mxu0 %v1064
        %v1179 = vpop.f32.mrf.mxu0
        %v1180 = vadd.f32 0.0, %v1179
        %1181 = vmatmul.f32.gmra.mxu0 %v1067
        %v1182 = vpop.f32.mrf.mxu0
        %v1183 = vadd.f32 0.0, %v1182
        %1184 = vmatmul.f32.gmra.mxu0 %v1070
        %v1185 = vpop.f32.mrf.mxu0
        %v1186 = vadd.f32 0.0, %v1185
        %1187 = vmatmul.f32.gmra.mxu0 %v1073
        %v1188 = vpop.f32.mrf.mxu0
        %v1189 = vadd.f32 0.0, %v1188
        %1190 = vmatmul.f32.gmra.mxu0 %v1076
        %v1191 = vpop.f32.mrf.mxu0
        %v1192 = vadd.f32 0.0, %v1191
        %1193 = vmatmul.f32.gmra.mxu0 %v1079
        %v1194 = vpop.f32.mrf.mxu0
        %v1195 = vadd.f32 0.0, %v1194
        %1196 = vmatmul.f32.gmra.mxu0 %v1082
        %v1197 = vpop.f32.mrf.mxu0
        %v1198 = vadd.f32 0.0, %v1197
        %1199 = vmatmul.f32.gmra.mxu0 %v1085
        %v1200 = vpop.f32.mrf.mxu0
        %v1201 = vadd.f32 0.0, %v1200
        %1202 = vmatmul.f32.gmra.mxu0 %v1088
        %v1203 = vpop.f32.mrf.mxu0
        %v1204 = vadd.f32 0.0, %v1203
        %1205 = vmatmul.f32.gmra.mxu0 %v1091
        %v1206 = vpop.f32.mrf.mxu0
        %v1207 = vadd.f32 0.0, %v1206
        %1208 = vmatmul.f32.gmra.mxu0 %v1094
        %v1209 = vpop.f32.mrf.mxu0
        %v1210 = vadd.f32 0.0, %v1209
        %1211 = vmatmul.f32.gmra.mxu0 %v1097
        %v1212 = vpop.f32.mrf.mxu0
        %v1213 = vadd.f32 0.0, %v1212
        %1214 = vmatmul.f32.gmra.mxu0 %v1100
        %v1215 = vpop.f32.mrf.mxu0
        %v1216 = vadd.f32 0.0, %v1215
        %1217 = vmatmul.f32.gmra.mxu0 %v1103
        %v1218 = vpop.f32.mrf.mxu0
        %v1219 = vadd.f32 0.0, %v1218
        %1220 = vmatmul.f32.gmra.mxu0 %v1106
        %v1221 = vpop.f32.mrf.mxu0
        %v1222 = vadd.f32 0.0, %v1221
        %1223 = vmatmul.f32.gmra.mxu0 %v1109
        %v1224 = vpop.f32.mrf.mxu0
        %v1225 = vadd.f32 0.0, %v1224
        %1226 = vmatmul.f32.gmra.mxu0 %v1112
        %v1227 = vpop.f32.mrf.mxu0
        %v1228 = vadd.f32 0.0, %v1227
        %1229 = vmatmul.f32.gmra.mxu0 %v1115
        %v1230 = vpop.f32.mrf.mxu0
        %v1231 = vadd.f32 0.0, %v1230
        %1232 = vmatmul.f32.gmra.mxu0 %v1118
        %v1233 = vpop.f32.mrf.mxu0
        %v1234 = vadd.f32 0.0, %v1233
        %1235 = vmatmul.f32.gmra.mxu0 %v1121
        %v1236 = vpop.f32.mrf.mxu0
        %v1237 = vadd.f32 0.0, %v1236
        %1238 = vmatmul.f32.gmra.mxu0 %v1124
        %v1239 = vpop.f32.mrf.mxu0
        %v1240 = vadd.f32 0.0, %v1239
        %1241 = vdwg.mxu0
        %v1243 = vsel %vm476, %v963, 0
        %v1246 = vsel %vm476, %v964, 0
        %v1249 = vsel %vm476, %v965, 0
        %v1252 = vsel %vm476, %v966, 0
        %v1255 = vsel %vm476, %v967, 0
        %v1258 = vsel %vm476, %v968, 0
        %v1261 = vsel %vm476, %v969, 0
        %v1264 = vsel %vm476, %v970, 0
        %v1267 = vsel %vm476, %v971, 0
        %v1270 = vsel %vm476, %v972, 0
        %v1273 = vsel %vm476, %v973, 0
        %v1276 = vsel %vm476, %v974, 0
        %v1279 = vsel %vm476, %v975, 0
        %v1282 = vsel %vm476, %v976, 0
        %v1285 = vsel %vm476, %v977, 0
        %v1288 = vsel %vm476, %v978, 0
        %v1291 = vsel %vm476, %v979, 0
        %v1294 = vsel %vm476, %v980, 0
        %v1297 = vsel %vm476, %v981, 0
        %v1300 = vsel %vm476, %v982, 0
        %v1303 = vsel %vm476, %v983, 0
        %v1306 = vsel %vm476, %v984, 0
        %v1309 = vsel %vm476, %v985, 0
        %v1312 = vsel %vm476, %v986, 0
        %v1315 = vsel %vm476, %v987, 0
        %v1318 = vsel %vm476, %v988, 0
        %v1321 = vsel %vm476, %v989, 0
        %v1324 = vsel %vm476, %v990, 0
        %v1327 = vsel %vm476, %v991, 0
        %v1330 = vsel %vm476, %v992, 0
        %v1333 = vsel %vm476, %v993, 0
        %v1336 = vsel %vm476, %v994, 0
        %v1339 = vsel %vm573, %v995, 0
        %1341 = vmatpush.msra.mxu0 0.0
        %1342 = vmatpush.msra.mxu0 0.0
        %1343 = vmatpush.msra.mxu0 0.0
        %1344 = vmatpush.msra.mxu0 0.0
        %1345 = vmatpush.msra.mxu0 0.0
        %1346 = vmatpush.msra.mxu0 0.0
        %1347 = vmatpush.msra.mxu0 0.0
        %1348 = vmatpush.msra.mxu0 0.0
        %1349 = vmatpush.msra.mxu0 0.0
        %1350 = vmatpush.msra.mxu0 0.0
        %1351 = vmatpush.msra.mxu0 0.0
        %1352 = vmatpush.msra.mxu0 0.0
        %1353 = vmatpush.msra.mxu0 0.0
        %1354 = vmatpush.msra.mxu0 0.0
        %1355 = vmatpush.msra.mxu0 0.0
        %1356 = vmatpush.msra.mxu0 %v1339
        %1357 = vmatmul.f32.gmra.mxu0 %v1243
        %v1358 = vpop.f32.mrf.mxu0
        %v1359 = vadd.f32 %v1147, %v1358
        %1360 = vmatmul.f32.gmra.mxu0 %v1246
        %v1361 = vpop.f32.mrf.mxu0
        %v1362 = vadd.f32 %v1150, %v1361
        %1363 = vmatmul.f32.gmra.mxu0 %v1249
        %v1364 = vpop.f32.mrf.mxu0
        %v1365 = vadd.f32 %v1153, %v1364
        %1366 = vmatmul.f32.gmra.mxu0 %v1252
        %v1367 = vpop.f32.mrf.mxu0
        %v1368 = vadd.f32 %v1156, %v1367
        %1369 = vmatmul.f32.gmra.mxu0 %v1255
        %v1370 = vpop.f32.mrf.mxu0
        %v1371 = vadd.f32 %v1159, %v1370
        %1372 = vmatmul.f32.gmra.mxu0 %v1258
        %v1373 = vpop.f32.mrf.mxu0
        %v1374 = vadd.f32 %v1162, %v1373
        %1375 = vmatmul.f32.gmra.mxu0 %v1261
        %v1376 = vpop.f32.mrf.mxu0
        %v1377 = vadd.f32 %v1165, %v1376
        %1378 = vmatmul.f32.gmra.mxu0 %v1264
        %v1379 = vpop.f32.mrf.mxu0
        %v1380 = vadd.f32 %v1168, %v1379
        %1381 = vmatmul.f32.gmra.mxu0 %v1267
        %v1382 = vpop.f32.mrf.mxu0
        %v1383 = vadd.f32 %v1171, %v1382
        %1384 = vmatmul.f32.gmra.mxu0 %v1270
        %v1385 = vpop.f32.mrf.mxu0
        %v1386 = vadd.f32 %v1174, %v1385
        %1387 = vmatmul.f32.gmra.mxu0 %v1273
        %v1388 = vpop.f32.mrf.mxu0
        %v1389 = vadd.f32 %v1177, %v1388
        %1390 = vmatmul.f32.gmra.mxu0 %v1276
        %v1391 = vpop.f32.mrf.mxu0
        %v1392 = vadd.f32 %v1180, %v1391
        %1393 = vmatmul.f32.gmra.mxu0 %v1279
        %v1394 = vpop.f32.mrf.mxu0
        %v1395 = vadd.f32 %v1183, %v1394
        %1396 = vmatmul.f32.gmra.mxu0 %v1282
        %v1397 = vpop.f32.mrf.mxu0
        %v1398 = vadd.f32 %v1186, %v1397
        %1399 = vmatmul.f32.gmra.mxu0 %v1285
        %v1400 = vpop.f32.mrf.mxu0
        %v1401 = vadd.f32 %v1189, %v1400
        %1402 = vmatmul.f32.gmra.mxu0 %v1288
        %v1403 = vpop.f32.mrf.mxu0
        %v1404 = vadd.f32 %v1192, %v1403
        %1405 = vmatmul.f32.gmra.mxu0 %v1291
        %v1406 = vpop.f32.mrf.mxu0
        %v1407 = vadd.f32 %v1195, %v1406
        %1408 = vmatmul.f32.gmra.mxu0 %v1294
        %v1409 = vpop.f32.mrf.mxu0
        %v1410 = vadd.f32 %v1198, %v1409
        %1411 = vmatmul.f32.gmra.mxu0 %v1297
        %v1412 = vpop.f32.mrf.mxu0
        %v1413 = vadd.f32 %v1201, %v1412
        %1414 = vmatmul.f32.gmra.mxu0 %v1300
        %v1415 = vpop.f32.mrf.mxu0
        %v1416 = vadd.f32 %v1204, %v1415
        %1417 = vmatmul.f32.gmra.mxu0 %v1303
        %v1418 = vpop.f32.mrf.mxu0
        %v1419 = vadd.f32 %v1207, %v1418
        %1420 = vmatmul.f32.gmra.mxu0 %v1306
        %v1421 = vpop.f32.mrf.mxu0
        %v1422 = vadd.f32 %v1210, %v1421
        %1423 = vmatmul.f32.gmra.mxu0 %v1309
        %v1424 = vpop.f32.mrf.mxu0
        %v1425 = vadd.f32 %v1213, %v1424
        %1426 = vmatmul.f32.gmra.mxu0 %v1312
        %v1427 = vpop.f32.mrf.mxu0
        %v1428 = vadd.f32 %v1216, %v1427
        %1429 = vmatmul.f32.gmra.mxu0 %v1315
        %v1430 = vpop.f32.mrf.mxu0
        %v1431 = vadd.f32 %v1219, %v1430
        %1432 = vmatmul.f32.gmra.mxu0 %v1318
        %v1433 = vpop.f32.mrf.mxu0
        %v1434 = vadd.f32 %v1222, %v1433
        %1435 = vmatmul.f32.gmra.mxu0 %v1321
        %v1436 = vpop.f32.mrf.mxu0
        %v1437 = vadd.f32 %v1225, %v1436
        %1438 = vmatmul.f32.gmra.mxu0 %v1324
        %v1439 = vpop.f32.mrf.mxu0
        %v1440 = vadd.f32 %v1228, %v1439
        %1441 = vmatmul.f32.gmra.mxu0 %v1327
        %v1442 = vpop.f32.mrf.mxu0
        %v1443 = vadd.f32 %v1231, %v1442
        %1444 = vmatmul.f32.gmra.mxu0 %v1330
        %v1445 = vpop.f32.mrf.mxu0
        %v1446 = vadd.f32 %v1234, %v1445
        %1447 = vmatmul.f32.gmra.mxu0 %v1333
        %v1448 = vpop.f32.mrf.mxu0
        %v1449 = vadd.f32 %v1237, %v1448
        %1450 = vmatmul.f32.gmra.mxu0 %v1336
        %v1451 = vpop.f32.mrf.mxu0
        %v1452 = vadd.f32 %v1240, %v1451
        %1453 = vdwg.mxu0
        %v1454 = vld [vmem:[#allocation2 + $0x2] sm:$0xff]
        %v1455 = vld [vmem:[#allocation2 + $0xa] sm:$0xff]
        %v1456 = vld [vmem:[#allocation2 + $0x1a] sm:$0xff]
        %v1457 = vld [vmem:[#allocation2 + $0x22] sm:$0xff]
        %v1458 = vld [vmem:[#allocation2 + $0x32] sm:$0xff]
        %v1459 = vld [vmem:[#allocation2 + $0x3a] sm:$0xff]
        %v1460 = vld [vmem:[#allocation2 + $0x4a] sm:$0xff]
        %v1461 = vld [vmem:[#allocation2 + $0x52] sm:$0xff]
        %v1462 = vld [vmem:[#allocation2 + $0x62] sm:$0xff]
        %v1463 = vld [vmem:[#allocation2 + $0x6a] sm:$0xff]
        %v1464 = vld [vmem:[#allocation2 + $0x7a] sm:$0xff]
        %v1465 = vld [vmem:[#allocation2 + $0x82] sm:$0xff]
        %v1466 = vld [vmem:[#allocation2 + $0x92] sm:$0xff]
        %v1467 = vld [vmem:[#allocation2 + $0x9a] sm:$0xff]
        %v1468 = vld [vmem:[#allocation2 + $0xaa] sm:$0xff]
        %v1469 = vld [vmem:[#allocation2 + $0xb2] sm:$0xff]
        %v1470 = vld [vmem:[#allocation2 + $0xc2] sm:$0xff]
        %v1471 = vld [vmem:[#allocation2 + $0xca] sm:$0xff]
        %v1472 = vld [vmem:[#allocation2 + $0xda] sm:$0xff]
        %v1473 = vld [vmem:[#allocation2 + $0xe2] sm:$0xff]
        %v1474 = vld [vmem:[#allocation2 + $0xf2] sm:$0xff]
        %v1475 = vld [vmem:[#allocation2 + $0xfa] sm:$0xff]
        %v1476 = vld [vmem:[#allocation2 + $0x10a] sm:$0xff]
        %v1477 = vld [vmem:[#allocation2 + $0x112] sm:$0xff]
        %v1478 = vld [vmem:[#allocation2 + $0x122] sm:$0xff]
        %v1479 = vld [vmem:[#allocation2 + $0x12a] sm:$0xff]
        %v1480 = vld [vmem:[#allocation2 + $0x13a] sm:$0xff]
        %v1481 = vld [vmem:[#allocation2 + $0x142] sm:$0xff]
        %v1482 = vld [vmem:[#allocation2 + $0x152] sm:$0xff]
        %v1483 = vld [vmem:[#allocation2 + $0x15a] sm:$0xff]
        %v1484 = vld [vmem:[#allocation2 + $0x16a] sm:$0xff]
        %v1485 = vld [vmem:[#allocation2 + $0x172] sm:$0xff]
        %s1486 = scalar_lea.vmem %s5, 8
        %v1487 = vld [vmem:[%s1486] sm:$0xf]
        %v1489 = vsel %vm476, %v1454, 0
        %v1492 = vsel %vm476, %v1455, 0
        %v1495 = vsel %vm476, %v1456, 0
        %v1498 = vsel %vm476, %v1457, 0
        %v1501 = vsel %vm476, %v1458, 0
        %v1504 = vsel %vm476, %v1459, 0
        %v1507 = vsel %vm476, %v1460, 0
        %v1510 = vsel %vm476, %v1461, 0
        %v1513 = vsel %vm476, %v1462, 0
        %v1516 = vsel %vm476, %v1463, 0
        %v1519 = vsel %vm476, %v1464, 0
        %v1522 = vsel %vm476, %v1465, 0
        %v1525 = vsel %vm476, %v1466, 0
        %v1528 = vsel %vm476, %v1467, 0
        %v1531 = vsel %vm476, %v1468, 0
        %v1534 = vsel %vm476, %v1469, 0
        %v1537 = vsel %vm476, %v1470, 0
        %v1540 = vsel %vm476, %v1471, 0
        %v1543 = vsel %vm476, %v1472, 0
        %v1546 = vsel %vm476, %v1473, 0
        %v1549 = vsel %vm476, %v1474, 0
        %v1552 = vsel %vm476, %v1475, 0
        %v1555 = vsel %vm476, %v1476, 0
        %v1558 = vsel %vm476, %v1477, 0
        %v1561 = vsel %vm476, %v1478, 0
        %v1564 = vsel %vm476, %v1479, 0
        %v1567 = vsel %vm476, %v1480, 0
        %v1570 = vsel %vm476, %v1481, 0
        %v1573 = vsel %vm476, %v1482, 0
        %v1576 = vsel %vm476, %v1483, 0
        %v1579 = vsel %vm476, %v1484, 0
        %v1582 = vsel %vm476, %v1485, 0
        %v1585 = vsel %vm573, %v1487, 0
        %1587 = vmatpush.msra.mxu0 0.0
        %1588 = vmatpush.msra.mxu0 0.0
        %1589 = vmatpush.msra.mxu0 0.0
        %1590 = vmatpush.msra.mxu0 0.0
        %1591 = vmatpush.msra.mxu0 0.0
        %1592 = vmatpush.msra.mxu0 0.0
        %1593 = vmatpush.msra.mxu0 0.0
        %1594 = vmatpush.msra.mxu0 0.0
        %1595 = vmatpush.msra.mxu0 0.0
        %1596 = vmatpush.msra.mxu0 0.0
        %1597 = vmatpush.msra.mxu0 0.0
        %1598 = vmatpush.msra.mxu0 0.0
        %1599 = vmatpush.msra.mxu0 0.0
        %1600 = vmatpush.msra.mxu0 0.0
        %1601 = vmatpush.msra.mxu0 0.0
        %1602 = vmatpush.msra.mxu0 %v1585
        %1603 = vmatmul.f32.gmra.mxu0 %v1489
        %v1604 = vpop.f32.mrf.mxu0
        %v1605 = vadd.f32 0.0, %v1604
        %1606 = vmatmul.f32.gmra.mxu0 %v1492
        %v1607 = vpop.f32.mrf.mxu0
        %v1608 = vadd.f32 0.0, %v1607
        %1609 = vmatmul.f32.gmra.mxu0 %v1495
        %v1610 = vpop.f32.mrf.mxu0
        %v1611 = vadd.f32 0.0, %v1610
        %1612 = vmatmul.f32.gmra.mxu0 %v1498
        %v1613 = vpop.f32.mrf.mxu0
        %v1614 = vadd.f32 0.0, %v1613
        %1615 = vmatmul.f32.gmra.mxu0 %v1501
        %v1616 = vpop.f32.mrf.mxu0
        %v1617 = vadd.f32 0.0, %v1616
        %1618 = vmatmul.f32.gmra.mxu0 %v1504
        %v1619 = vpop.f32.mrf.mxu0
        %v1620 = vadd.f32 0.0, %v1619
        %1621 = vmatmul.f32.gmra.mxu0 %v1507
        %v1622 = vpop.f32.mrf.mxu0
        %v1623 = vadd.f32 0.0, %v1622
        %1624 = vmatmul.f32.gmra.mxu0 %v1510
        %v1625 = vpop.f32.mrf.mxu0
        %v1626 = vadd.f32 0.0, %v1625
        %1627 = vmatmul.f32.gmra.mxu0 %v1513
        %v1628 = vpop.f32.mrf.mxu0
        %v1629 = vadd.f32 0.0, %v1628
        %1630 = vmatmul.f32.gmra.mxu0 %v1516
        %v1631 = vpop.f32.mrf.mxu0
        %v1632 = vadd.f32 0.0, %v1631
        %1633 = vmatmul.f32.gmra.mxu0 %v1519
        %v1634 = vpop.f32.mrf.mxu0
        %v1635 = vadd.f32 0.0, %v1634
        %1636 = vmatmul.f32.gmra.mxu0 %v1522
        %v1637 = vpop.f32.mrf.mxu0
        %v1638 = vadd.f32 0.0, %v1637
        %1639 = vmatmul.f32.gmra.mxu0 %v1525
        %v1640 = vpop.f32.mrf.mxu0
        %v1641 = vadd.f32 0.0, %v1640
        %1642 = vmatmul.f32.gmra.mxu0 %v1528
        %v1643 = vpop.f32.mrf.mxu0
        %v1644 = vadd.f32 0.0, %v1643
        %1645 = vmatmul.f32.gmra.mxu0 %v1531
        %v1646 = vpop.f32.mrf.mxu0
        %v1647 = vadd.f32 0.0, %v1646
        %1648 = vmatmul.f32.gmra.mxu0 %v1534
        %v1649 = vpop.f32.mrf.mxu0
        %v1650 = vadd.f32 0.0, %v1649
        %1651 = vmatmul.f32.gmra.mxu0 %v1537
        %v1652 = vpop.f32.mrf.mxu0
        %v1653 = vadd.f32 0.0, %v1652
        %1654 = vmatmul.f32.gmra.mxu0 %v1540
        %v1655 = vpop.f32.mrf.mxu0
        %v1656 = vadd.f32 0.0, %v1655
        %1657 = vmatmul.f32.gmra.mxu0 %v1543
        %v1658 = vpop.f32.mrf.mxu0
        %v1659 = vadd.f32 0.0, %v1658
        %1660 = vmatmul.f32.gmra.mxu0 %v1546
        %v1661 = vpop.f32.mrf.mxu0
        %v1662 = vadd.f32 0.0, %v1661
        %1663 = vmatmul.f32.gmra.mxu0 %v1549
        %v1664 = vpop.f32.mrf.mxu0
        %v1665 = vadd.f32 0.0, %v1664
        %1666 = vmatmul.f32.gmra.mxu0 %v1552
        %v1667 = vpop.f32.mrf.mxu0
        %v1668 = vadd.f32 0.0, %v1667
        %1669 = vmatmul.f32.gmra.mxu0 %v1555
        %v1670 = vpop.f32.mrf.mxu0
        %v1671 = vadd.f32 0.0, %v1670
        %1672 = vmatmul.f32.gmra.mxu0 %v1558
        %v1673 = vpop.f32.mrf.mxu0
        %v1674 = vadd.f32 0.0, %v1673
        %1675 = vmatmul.f32.gmra.mxu0 %v1561
        %v1676 = vpop.f32.mrf.mxu0
        %v1677 = vadd.f32 0.0, %v1676
        %1678 = vmatmul.f32.gmra.mxu0 %v1564
        %v1679 = vpop.f32.mrf.mxu0
        %v1680 = vadd.f32 0.0, %v1679
        %1681 = vmatmul.f32.gmra.mxu0 %v1567
        %v1682 = vpop.f32.mrf.mxu0
        %v1683 = vadd.f32 0.0, %v1682
        %1684 = vmatmul.f32.gmra.mxu0 %v1570
        %v1685 = vpop.f32.mrf.mxu0
        %v1686 = vadd.f32 0.0, %v1685
        %1687 = vmatmul.f32.gmra.mxu0 %v1573
        %v1688 = vpop.f32.mrf.mxu0
        %v1689 = vadd.f32 0.0, %v1688
        %1690 = vmatmul.f32.gmra.mxu0 %v1576
        %v1691 = vpop.f32.mrf.mxu0
        %v1692 = vadd.f32 0.0, %v1691
        %1693 = vmatmul.f32.gmra.mxu0 %v1579
        %v1694 = vpop.f32.mrf.mxu0
        %v1695 = vadd.f32 0.0, %v1694
        %1696 = vmatmul.f32.gmra.mxu0 %v1582
        %v1697 = vpop.f32.mrf.mxu0
        %v1698 = vadd.f32 0.0, %v1697
        %1699 = vdwg.mxu0
        %v1700 = vadd.f32 %v1359, %v1605
        %v1701 = vadd.f32 %v1362, %v1608
        %v1702 = vadd.f32 %v1365, %v1611
        %v1703 = vadd.f32 %v1368, %v1614
        %v1704 = vadd.f32 %v1371, %v1617
        %v1705 = vadd.f32 %v1374, %v1620
        %v1706 = vadd.f32 %v1377, %v1623
        %v1707 = vadd.f32 %v1380, %v1626
        %v1708 = vadd.f32 %v1383, %v1629
        %v1709 = vadd.f32 %v1386, %v1632
        %v1710 = vadd.f32 %v1389, %v1635
        %v1711 = vadd.f32 %v1392, %v1638
        %v1712 = vadd.f32 %v1395, %v1641
        %v1713 = vadd.f32 %v1398, %v1644
        %v1714 = vadd.f32 %v1401, %v1647
        %v1715 = vadd.f32 %v1404, %v1650
        %v1716 = vadd.f32 %v1407, %v1653
        %v1717 = vadd.f32 %v1410, %v1656
        %v1718 = vadd.f32 %v1413, %v1659
        %v1719 = vadd.f32 %v1416, %v1662
        %v1720 = vadd.f32 %v1419, %v1665
        %v1721 = vadd.f32 %v1422, %v1668
        %v1722 = vadd.f32 %v1425, %v1671
        %v1723 = vadd.f32 %v1428, %v1674
        %v1724 = vadd.f32 %v1431, %v1677
        %v1725 = vadd.f32 %v1434, %v1680
        %v1726 = vadd.f32 %v1437, %v1683
        %v1727 = vadd.f32 %v1440, %v1686
        %v1728 = vadd.f32 %v1443, %v1689
        %v1729 = vadd.f32 %v1446, %v1692
        %v1730 = vadd.f32 %v1449, %v1695
        %v1731 = vadd.f32 %v1452, %v1698
        %v1732 = vld [vmem:[%s930] sm:$0xff]
        %v1733 = vld [vmem:[%s930 + $0x8] sm:$0xff]
        %v1734 = vld [vmem:[%s930 + $0x18] sm:$0xff]
        %v1735 = vld [vmem:[%s930 + $0x20] sm:$0xff]
        %v1736 = vld [vmem:[%s930 + $0x30] sm:$0xff]
        %v1737 = vld [vmem:[%s930 + $0x38] sm:$0xff]
        %v1738 = vld [vmem:[%s930 + $0x48] sm:$0xff]
        %v1739 = vld [vmem:[%s930 + $0x50] sm:$0xff]
        %v1740 = vld [vmem:[%s930 + $0x60] sm:$0xff]
        %v1741 = vld [vmem:[%s930 + $0x68] sm:$0xff]
        %v1742 = vld [vmem:[%s930 + $0x78] sm:$0xff]
        %v1743 = vld [vmem:[%s930 + $0x80] sm:$0xff]
        %v1744 = vld [vmem:[%s930 + $0x90] sm:$0xff]
        %v1745 = vld [vmem:[%s930 + $0x98] sm:$0xff]
        %v1746 = vld [vmem:[%s930 + $0xa8] sm:$0xff]
        %v1747 = vld [vmem:[%s930 + $0xb0] sm:$0xff]
        %v1748 = vld [vmem:[%s930 + $0xc0] sm:$0xff]
        %v1749 = vld [vmem:[%s930 + $0xc8] sm:$0xff]
        %v1750 = vld [vmem:[%s930 + $0xd8] sm:$0xff]
        %v1751 = vld [vmem:[%s930 + $0xe0] sm:$0xff]
        %v1752 = vld [vmem:[%s930 + $0xf0] sm:$0xff]
        %v1753 = vld [vmem:[%s930 + $0xf8] sm:$0xff]
        %v1754 = vld [vmem:[%s930 + $0x108] sm:$0xff]
        %v1755 = vld [vmem:[%s930 + $0x110] sm:$0xff]
        %v1756 = vld [vmem:[%s930 + $0x120] sm:$0xff]
        %v1757 = vld [vmem:[%s930 + $0x128] sm:$0xff]
        %v1758 = vld [vmem:[%s930 + $0x138] sm:$0xff]
        %v1759 = vld [vmem:[%s930 + $0x140] sm:$0xff]
        %v1760 = vld [vmem:[%s930 + $0x150] sm:$0xff]
        %v1761 = vld [vmem:[%s930 + $0x158] sm:$0xff]
        %v1762 = vld [vmem:[%s930 + $0x168] sm:$0xff]
        %v1763 = vld [vmem:[%s930 + $0x170] sm:$0xff]
        %s1764 = scalar_lea.vmem %s5, 12
        %v1765 = vld [vmem:[%s1764] sm:$0xf]
        %v1767 = vsel %vm476, %v1732, 0
        %v1770 = vsel %vm476, %v1733, 0
        %v1773 = vsel %vm476, %v1734, 0
        %v1776 = vsel %vm476, %v1735, 0
        %v1779 = vsel %vm476, %v1736, 0
        %v1782 = vsel %vm476, %v1737, 0
        %v1785 = vsel %vm476, %v1738, 0
        %v1788 = vsel %vm476, %v1739, 0
        %v1791 = vsel %vm476, %v1740, 0
        %v1794 = vsel %vm476, %v1741, 0
        %v1797 = vsel %vm476, %v1742, 0
        %v1800 = vsel %vm476, %v1743, 0
        %v1803 = vsel %vm476, %v1744, 0
        %v1806 = vsel %vm476, %v1745, 0
        %v1809 = vsel %vm476, %v1746, 0
        %v1812 = vsel %vm476, %v1747, 0
        %v1815 = vsel %vm476, %v1748, 0
        %v1818 = vsel %vm476, %v1749, 0
        %v1821 = vsel %vm476, %v1750, 0
        %v1824 = vsel %vm476, %v1751, 0
        %v1827 = vsel %vm476, %v1752, 0
        %v1830 = vsel %vm476, %v1753, 0
        %v1833 = vsel %vm476, %v1754, 0
        %v1836 = vsel %vm476, %v1755, 0
        %v1839 = vsel %vm476, %v1756, 0
        %v1842 = vsel %vm476, %v1757, 0
        %v1845 = vsel %vm476, %v1758, 0
        %v1848 = vsel %vm476, %v1759, 0
        %v1851 = vsel %vm476, %v1760, 0
        %v1854 = vsel %vm476, %v1761, 0
        %v1857 = vsel %vm476, %v1762, 0
        %v1860 = vsel %vm476, %v1763, 0
        %v1863 = vsel %vm573, %v1765, 0
        %1865 = vmatpush.msra.mxu0 0.0
        %1866 = vmatpush.msra.mxu0 0.0
        %1867 = vmatpush.msra.mxu0 0.0
        %1868 = vmatpush.msra.mxu0 0.0
        %1869 = vmatpush.msra.mxu0 0.0
        %1870 = vmatpush.msra.mxu0 0.0
        %1871 = vmatpush.msra.mxu0 0.0
        %1872 = vmatpush.msra.mxu0 0.0
        %1873 = vmatpush.msra.mxu0 0.0
        %1874 = vmatpush.msra.mxu0 0.0
        %1875 = vmatpush.msra.mxu0 0.0
        %1876 = vmatpush.msra.mxu0 0.0
        %1877 = vmatpush.msra.mxu0 0.0
        %1878 = vmatpush.msra.mxu0 0.0
        %1879 = vmatpush.msra.mxu0 0.0
        %1880 = vmatpush.msra.mxu0 %v1863
        %1881 = vmatmul.f32.gmra.mxu0 %v1767
        %v1882 = vpop.f32.mrf.mxu0
        %v1883 = vadd.f32 0.0, %v1882
        %1884 = vmatmul.f32.gmra.mxu0 %v1770
        %v1885 = vpop.f32.mrf.mxu0
        %v1886 = vadd.f32 0.0, %v1885
        %1887 = vmatmul.f32.gmra.mxu0 %v1773
        %v1888 = vpop.f32.mrf.mxu0
        %v1889 = vadd.f32 0.0, %v1888
        %1890 = vmatmul.f32.gmra.mxu0 %v1776
        %v1891 = vpop.f32.mrf.mxu0
        %v1892 = vadd.f32 0.0, %v1891
        %1893 = vmatmul.f32.gmra.mxu0 %v1779
        %v1894 = vpop.f32.mrf.mxu0
        %v1895 = vadd.f32 0.0, %v1894
        %1896 = vmatmul.f32.gmra.mxu0 %v1782
        %v1897 = vpop.f32.mrf.mxu0
        %v1898 = vadd.f32 0.0, %v1897
        %1899 = vmatmul.f32.gmra.mxu0 %v1785
        %v1900 = vpop.f32.mrf.mxu0
        %v1901 = vadd.f32 0.0, %v1900
        %1902 = vmatmul.f32.gmra.mxu0 %v1788
        %v1903 = vpop.f32.mrf.mxu0
        %v1904 = vadd.f32 0.0, %v1903
        %1905 = vmatmul.f32.gmra.mxu0 %v1791
        %v1906 = vpop.f32.mrf.mxu0
        %v1907 = vadd.f32 0.0, %v1906
        %1908 = vmatmul.f32.gmra.mxu0 %v1794
        %v1909 = vpop.f32.mrf.mxu0
        %v1910 = vadd.f32 0.0, %v1909
        %1911 = vmatmul.f32.gmra.mxu0 %v1797
        %v1912 = vpop.f32.mrf.mxu0
        %v1913 = vadd.f32 0.0, %v1912
        %1914 = vmatmul.f32.gmra.mxu0 %v1800
        %v1915 = vpop.f32.mrf.mxu0
        %v1916 = vadd.f32 0.0, %v1915
        %1917 = vmatmul.f32.gmra.mxu0 %v1803
        %v1918 = vpop.f32.mrf.mxu0
        %v1919 = vadd.f32 0.0, %v1918
        %1920 = vmatmul.f32.gmra.mxu0 %v1806
        %v1921 = vpop.f32.mrf.mxu0
        %v1922 = vadd.f32 0.0, %v1921
        %1923 = vmatmul.f32.gmra.mxu0 %v1809
        %v1924 = vpop.f32.mrf.mxu0
        %v1925 = vadd.f32 0.0, %v1924
        %1926 = vmatmul.f32.gmra.mxu0 %v1812
        %v1927 = vpop.f32.mrf.mxu0
        %v1928 = vadd.f32 0.0, %v1927
        %1929 = vmatmul.f32.gmra.mxu0 %v1815
        %v1930 = vpop.f32.mrf.mxu0
        %v1931 = vadd.f32 0.0, %v1930
        %1932 = vmatmul.f32.gmra.mxu0 %v1818
        %v1933 = vpop.f32.mrf.mxu0
        %v1934 = vadd.f32 0.0, %v1933
        %1935 = vmatmul.f32.gmra.mxu0 %v1821
        %v1936 = vpop.f32.mrf.mxu0
        %v1937 = vadd.f32 0.0, %v1936
        %1938 = vmatmul.f32.gmra.mxu0 %v1824
        %v1939 = vpop.f32.mrf.mxu0
        %v1940 = vadd.f32 0.0, %v1939
        %1941 = vmatmul.f32.gmra.mxu0 %v1827
        %v1942 = vpop.f32.mrf.mxu0
        %v1943 = vadd.f32 0.0, %v1942
        %1944 = vmatmul.f32.gmra.mxu0 %v1830
        %v1945 = vpop.f32.mrf.mxu0
        %v1946 = vadd.f32 0.0, %v1945
        %1947 = vmatmul.f32.gmra.mxu0 %v1833
        %v1948 = vpop.f32.mrf.mxu0
        %v1949 = vadd.f32 0.0, %v1948
        %1950 = vmatmul.f32.gmra.mxu0 %v1836
        %v1951 = vpop.f32.mrf.mxu0
        %v1952 = vadd.f32 0.0, %v1951
        %1953 = vmatmul.f32.gmra.mxu0 %v1839
        %v1954 = vpop.f32.mrf.mxu0
        %v1955 = vadd.f32 0.0, %v1954
        %1956 = vmatmul.f32.gmra.mxu0 %v1842
        %v1957 = vpop.f32.mrf.mxu0
        %v1958 = vadd.f32 0.0, %v1957
        %1959 = vmatmul.f32.gmra.mxu0 %v1845
        %v1960 = vpop.f32.mrf.mxu0
        %v1961 = vadd.f32 0.0, %v1960
        %1962 = vmatmul.f32.gmra.mxu0 %v1848
        %v1963 = vpop.f32.mrf.mxu0
        %v1964 = vadd.f32 0.0, %v1963
        %1965 = vmatmul.f32.gmra.mxu0 %v1851
        %v1966 = vpop.f32.mrf.mxu0
        %v1967 = vadd.f32 0.0, %v1966
        %1968 = vmatmul.f32.gmra.mxu0 %v1854
        %v1969 = vpop.f32.mrf.mxu0
        %v1970 = vadd.f32 0.0, %v1969
        %1971 = vmatmul.f32.gmra.mxu0 %v1857
        %v1972 = vpop.f32.mrf.mxu0
        %v1973 = vadd.f32 0.0, %v1972
        %1974 = vmatmul.f32.gmra.mxu0 %v1860
        %v1975 = vpop.f32.mrf.mxu0
        %v1976 = vadd.f32 0.0, %v1975
        %1977 = vdwg.mxu0
        %v1978 = vadd.f32 %v1700, %v1883
        %v1979 = vadd.f32 %v1701, %v1886
        %v1980 = vadd.f32 %v1702, %v1889
        %v1981 = vadd.f32 %v1703, %v1892
        %v1982 = vadd.f32 %v1704, %v1895
        %v1983 = vadd.f32 %v1705, %v1898
        %v1984 = vadd.f32 %v1706, %v1901
        %v1985 = vadd.f32 %v1707, %v1904
        %v1986 = vadd.f32 %v1708, %v1907
        %v1987 = vadd.f32 %v1709, %v1910
        %v1988 = vadd.f32 %v1710, %v1913
        %v1989 = vadd.f32 %v1711, %v1916
        %v1990 = vadd.f32 %v1712, %v1919
        %v1991 = vadd.f32 %v1713, %v1922
        %v1992 = vadd.f32 %v1714, %v1925
        %v1993 = vadd.f32 %v1715, %v1928
        %v1994 = vadd.f32 %v1716, %v1931
        %v1995 = vadd.f32 %v1717, %v1934
        %v1996 = vadd.f32 %v1718, %v1937
        %v1997 = vadd.f32 %v1719, %v1940
        %v1998 = vadd.f32 %v1720, %v1943
        %v1999 = vadd.f32 %v1721, %v1946
        %v2000 = vadd.f32 %v1722, %v1949
        %v2001 = vadd.f32 %v1723, %v1952
        %v2002 = vadd.f32 %v1724, %v1955
        %v2003 = vadd.f32 %v1725, %v1958
        %v2004 = vadd.f32 %v1726, %v1961
        %v2005 = vadd.f32 %v1727, %v1964
        %v2006 = vadd.f32 %v1728, %v1967
        %v2007 = vadd.f32 %v1729, %v1970
        %v2008 = vadd.f32 %v1730, %v1973
        %v2009 = vadd.f32 %v1731, %v1976
        %v2010 = vld [vmem:[%s930 + $0x1] sm:$0xff]
        %v2011 = vld [vmem:[%s930 + $0x9] sm:$0xff]
        %v2012 = vld [vmem:[%s930 + $0x19] sm:$0xff]
        %v2013 = vld [vmem:[%s930 + $0x21] sm:$0xff]
        %v2014 = vld [vmem:[%s930 + $0x31] sm:$0xff]
        %v2015 = vld [vmem:[%s930 + $0x39] sm:$0xff]
        %v2016 = vld [vmem:[%s930 + $0x49] sm:$0xff]
        %v2017 = vld [vmem:[%s930 + $0x51] sm:$0xff]
        %v2018 = vld [vmem:[%s930 + $0x61] sm:$0xff]
        %v2019 = vld [vmem:[%s930 + $0x69] sm:$0xff]
        %v2020 = vld [vmem:[%s930 + $0x79] sm:$0xff]
        %v2021 = vld [vmem:[%s930 + $0x81] sm:$0xff]
        %v2022 = vld [vmem:[%s930 + $0x91] sm:$0xff]
        %v2023 = vld [vmem:[%s930 + $0x99] sm:$0xff]
        %v2024 = vld [vmem:[%s930 + $0xa9] sm:$0xff]
        %v2025 = vld [vmem:[%s930 + $0xb1] sm:$0xff]
        %v2026 = vld [vmem:[%s930 + $0xc1] sm:$0xff]
        %v2027 = vld [vmem:[%s930 + $0xc9] sm:$0xff]
        %v2028 = vld [vmem:[%s930 + $0xd9] sm:$0xff]
        %v2029 = vld [vmem:[%s930 + $0xe1] sm:$0xff]
        %v2030 = vld [vmem:[%s930 + $0xf1] sm:$0xff]
        %v2031 = vld [vmem:[%s930 + $0xf9] sm:$0xff]
        %v2032 = vld [vmem:[%s930 + $0x109] sm:$0xff]
        %v2033 = vld [vmem:[%s930 + $0x111] sm:$0xff]
        %v2034 = vld [vmem:[%s930 + $0x121] sm:$0xff]
        %v2035 = vld [vmem:[%s930 + $0x129] sm:$0xff]
        %v2036 = vld [vmem:[%s930 + $0x139] sm:$0xff]
        %v2037 = vld [vmem:[%s930 + $0x141] sm:$0xff]
        %v2038 = vld [vmem:[%s930 + $0x151] sm:$0xff]
        %v2039 = vld [vmem:[%s930 + $0x159] sm:$0xff]
        %v2040 = vld [vmem:[%s930 + $0x169] sm:$0xff]
        %v2041 = vld [vmem:[%s930 + $0x171] sm:$0xff]
        %s2042 = scalar_lea.vmem %s5, 16
        %v2043 = vld [vmem:[%s2042] sm:$0xf]
        %v2045 = vsel %vm476, %v2010, 0
        %v2048 = vsel %vm476, %v2011, 0
        %v2051 = vsel %vm476, %v2012, 0
        %v2054 = vsel %vm476, %v2013, 0
        %v2057 = vsel %vm476, %v2014, 0
        %v2060 = vsel %vm476, %v2015, 0
        %v2063 = vsel %vm476, %v2016, 0
        %v2066 = vsel %vm476, %v2017, 0
        %v2069 = vsel %vm476, %v2018, 0
        %v2072 = vsel %vm476, %v2019, 0
        %v2075 = vsel %vm476, %v2020, 0
        %v2078 = vsel %vm476, %v2021, 0
        %v2081 = vsel %vm476, %v2022, 0
        %v2084 = vsel %vm476, %v2023, 0
        %v2087 = vsel %vm476, %v2024, 0
        %v2090 = vsel %vm476, %v2025, 0
        %v2093 = vsel %vm476, %v2026, 0
        %v2096 = vsel %vm476, %v2027, 0
        %v2099 = vsel %vm476, %v2028, 0
        %v2102 = vsel %vm476, %v2029, 0
        %v2105 = vsel %vm476, %v2030, 0
        %v2108 = vsel %vm476, %v2031, 0
        %v2111 = vsel %vm476, %v2032, 0
        %v2114 = vsel %vm476, %v2033, 0
        %v2117 = vsel %vm476, %v2034, 0
        %v2120 = vsel %vm476, %v2035, 0
        %v2123 = vsel %vm476, %v2036, 0
        %v2126 = vsel %vm476, %v2037, 0
        %v2129 = vsel %vm476, %v2038, 0
        %v2132 = vsel %vm476, %v2039, 0
        %v2135 = vsel %vm476, %v2040, 0
        %v2138 = vsel %vm476, %v2041, 0
        %v2141 = vsel %vm573, %v2043, 0
        %2143 = vmatpush.msra.mxu0 0.0
        %2144 = vmatpush.msra.mxu0 0.0
        %2145 = vmatpush.msra.mxu0 0.0
        %2146 = vmatpush.msra.mxu0 0.0
        %2147 = vmatpush.msra.mxu0 0.0
        %2148 = vmatpush.msra.mxu0 0.0
        %2149 = vmatpush.msra.mxu0 0.0
        %2150 = vmatpush.msra.mxu0 0.0
        %2151 = vmatpush.msra.mxu0 0.0
        %2152 = vmatpush.msra.mxu0 0.0
        %2153 = vmatpush.msra.mxu0 0.0
        %2154 = vmatpush.msra.mxu0 0.0
        %2155 = vmatpush.msra.mxu0 0.0
        %2156 = vmatpush.msra.mxu0 0.0
        %2157 = vmatpush.msra.mxu0 0.0
        %2158 = vmatpush.msra.mxu0 %v2141
        %2159 = vmatmul.f32.gmra.mxu0 %v2045
        %v2160 = vpop.f32.mrf.mxu0
        %v2161 = vadd.f32 0.0, %v2160
        %2162 = vmatmul.f32.gmra.mxu0 %v2048
        %v2163 = vpop.f32.mrf.mxu0
        %v2164 = vadd.f32 0.0, %v2163
        %2165 = vmatmul.f32.gmra.mxu0 %v2051
        %v2166 = vpop.f32.mrf.mxu0
        %v2167 = vadd.f32 0.0, %v2166
        %2168 = vmatmul.f32.gmra.mxu0 %v2054
        %v2169 = vpop.f32.mrf.mxu0
        %v2170 = vadd.f32 0.0, %v2169
        %2171 = vmatmul.f32.gmra.mxu0 %v2057
        %v2172 = vpop.f32.mrf.mxu0
        %v2173 = vadd.f32 0.0, %v2172
        %2174 = vmatmul.f32.gmra.mxu0 %v2060
        %v2175 = vpop.f32.mrf.mxu0
        %v2176 = vadd.f32 0.0, %v2175
        %2177 = vmatmul.f32.gmra.mxu0 %v2063
        %v2178 = vpop.f32.mrf.mxu0
        %v2179 = vadd.f32 0.0, %v2178
        %2180 = vmatmul.f32.gmra.mxu0 %v2066
        %v2181 = vpop.f32.mrf.mxu0
        %v2182 = vadd.f32 0.0, %v2181
        %2183 = vmatmul.f32.gmra.mxu0 %v2069
        %v2184 = vpop.f32.mrf.mxu0
        %v2185 = vadd.f32 0.0, %v2184
        %2186 = vmatmul.f32.gmra.mxu0 %v2072
        %v2187 = vpop.f32.mrf.mxu0
        %v2188 = vadd.f32 0.0, %v2187
        %2189 = vmatmul.f32.gmra.mxu0 %v2075
        %v2190 = vpop.f32.mrf.mxu0
        %v2191 = vadd.f32 0.0, %v2190
        %2192 = vmatmul.f32.gmra.mxu0 %v2078
        %v2193 = vpop.f32.mrf.mxu0
        %v2194 = vadd.f32 0.0, %v2193
        %2195 = vmatmul.f32.gmra.mxu0 %v2081
        %v2196 = vpop.f32.mrf.mxu0
        %v2197 = vadd.f32 0.0, %v2196
        %2198 = vmatmul.f32.gmra.mxu0 %v2084
        %v2199 = vpop.f32.mrf.mxu0
        %v2200 = vadd.f32 0.0, %v2199
        %2201 = vmatmul.f32.gmra.mxu0 %v2087
        %v2202 = vpop.f32.mrf.mxu0
        %v2203 = vadd.f32 0.0, %v2202
        %2204 = vmatmul.f32.gmra.mxu0 %v2090
        %v2205 = vpop.f32.mrf.mxu0
        %v2206 = vadd.f32 0.0, %v2205
        %2207 = vmatmul.f32.gmra.mxu0 %v2093
        %v2208 = vpop.f32.mrf.mxu0
        %v2209 = vadd.f32 0.0, %v2208
        %2210 = vmatmul.f32.gmra.mxu0 %v2096
        %v2211 = vpop.f32.mrf.mxu0
        %v2212 = vadd.f32 0.0, %v2211
        %2213 = vmatmul.f32.gmra.mxu0 %v2099
        %v2214 = vpop.f32.mrf.mxu0
        %v2215 = vadd.f32 0.0, %v2214
        %2216 = vmatmul.f32.gmra.mxu0 %v2102
        %v2217 = vpop.f32.mrf.mxu0
        %v2218 = vadd.f32 0.0, %v2217
        %2219 = vmatmul.f32.gmra.mxu0 %v2105
        %v2220 = vpop.f32.mrf.mxu0
        %v2221 = vadd.f32 0.0, %v2220
        %2222 = vmatmul.f32.gmra.mxu0 %v2108
        %v2223 = vpop.f32.mrf.mxu0
        %v2224 = vadd.f32 0.0, %v2223
        %2225 = vmatmul.f32.gmra.mxu0 %v2111
        %v2226 = vpop.f32.mrf.mxu0
        %v2227 = vadd.f32 0.0, %v2226
        %2228 = vmatmul.f32.gmra.mxu0 %v2114
        %v2229 = vpop.f32.mrf.mxu0
        %v2230 = vadd.f32 0.0, %v2229
        %2231 = vmatmul.f32.gmra.mxu0 %v2117
        %v2232 = vpop.f32.mrf.mxu0
        %v2233 = vadd.f32 0.0, %v2232
        %2234 = vmatmul.f32.gmra.mxu0 %v2120
        %v2235 = vpop.f32.mrf.mxu0
        %v2236 = vadd.f32 0.0, %v2235
        %2237 = vmatmul.f32.gmra.mxu0 %v2123
        %v2238 = vpop.f32.mrf.mxu0
        %v2239 = vadd.f32 0.0, %v2238
        %2240 = vmatmul.f32.gmra.mxu0 %v2126
        %v2241 = vpop.f32.mrf.mxu0
        %v2242 = vadd.f32 0.0, %v2241
        %2243 = vmatmul.f32.gmra.mxu0 %v2129
        %v2244 = vpop.f32.mrf.mxu0
        %v2245 = vadd.f32 0.0, %v2244
        %2246 = vmatmul.f32.gmra.mxu0 %v2132
        %v2247 = vpop.f32.mrf.mxu0
        %v2248 = vadd.f32 0.0, %v2247
        %2249 = vmatmul.f32.gmra.mxu0 %v2135
        %v2250 = vpop.f32.mrf.mxu0
        %v2251 = vadd.f32 0.0, %v2250
        %2252 = vmatmul.f32.gmra.mxu0 %v2138
        %v2253 = vpop.f32.mrf.mxu0
        %v2254 = vadd.f32 0.0, %v2253
        %2255 = vdwg.mxu0
        %v2256 = vadd.f32 %v1978, %v2161
        %v2257 = vadd.f32 %v1979, %v2164
        %v2258 = vadd.f32 %v1980, %v2167
        %v2259 = vadd.f32 %v1981, %v2170
        %v2260 = vadd.f32 %v1982, %v2173
        %v2261 = vadd.f32 %v1983, %v2176
        %v2262 = vadd.f32 %v1984, %v2179
        %v2263 = vadd.f32 %v1985, %v2182
        %v2264 = vadd.f32 %v1986, %v2185
        %v2265 = vadd.f32 %v1987, %v2188
        %v2266 = vadd.f32 %v1988, %v2191
        %v2267 = vadd.f32 %v1989, %v2194
        %v2268 = vadd.f32 %v1990, %v2197
        %v2269 = vadd.f32 %v1991, %v2200
        %v2270 = vadd.f32 %v1992, %v2203
        %v2271 = vadd.f32 %v1993, %v2206
        %v2272 = vadd.f32 %v1994, %v2209
        %v2273 = vadd.f32 %v1995, %v2212
        %v2274 = vadd.f32 %v1996, %v2215
        %v2275 = vadd.f32 %v1997, %v2218
        %v2276 = vadd.f32 %v1998, %v2221
        %v2277 = vadd.f32 %v1999, %v2224
        %v2278 = vadd.f32 %v2000, %v2227
        %v2279 = vadd.f32 %v2001, %v2230
        %v2280 = vadd.f32 %v2002, %v2233
        %v2281 = vadd.f32 %v2003, %v2236
        %v2282 = vadd.f32 %v2004, %v2239
        %v2283 = vadd.f32 %v2005, %v2242
        %v2284 = vadd.f32 %v2006, %v2245
        %v2285 = vadd.f32 %v2007, %v2248
        %v2286 = vadd.f32 %v2008, %v2251
        %v2287 = vadd.f32 %v2009, %v2254
        %v2288 = vld [vmem:[%s930 + $0x2] sm:$0xff]
        %v2289 = vld [vmem:[%s930 + $0xa] sm:$0xff]
        %v2290 = vld [vmem:[%s930 + $0x1a] sm:$0xff]
        %v2291 = vld [vmem:[%s930 + $0x22] sm:$0xff]
        %v2292 = vld [vmem:[%s930 + $0x32] sm:$0xff]
        %v2293 = vld [vmem:[%s930 + $0x3a] sm:$0xff]
        %v2294 = vld [vmem:[%s930 + $0x4a] sm:$0xff]
        %v2295 = vld [vmem:[%s930 + $0x52] sm:$0xff]
        %v2296 = vld [vmem:[%s930 + $0x62] sm:$0xff]
        %v2297 = vld [vmem:[%s930 + $0x6a] sm:$0xff]
        %v2298 = vld [vmem:[%s930 + $0x7a] sm:$0xff]
        %v2299 = vld [vmem:[%s930 + $0x82] sm:$0xff]
        %v2300 = vld [vmem:[%s930 + $0x92] sm:$0xff]
        %v2301 = vld [vmem:[%s930 + $0x9a] sm:$0xff]
        %v2302 = vld [vmem:[%s930 + $0xaa] sm:$0xff]
        %v2303 = vld [vmem:[%s930 + $0xb2] sm:$0xff]
        %v2304 = vld [vmem:[%s930 + $0xc2] sm:$0xff]
        %v2305 = vld [vmem:[%s930 + $0xca] sm:$0xff]
        %v2306 = vld [vmem:[%s930 + $0xda] sm:$0xff]
        %v2307 = vld [vmem:[%s930 + $0xe2] sm:$0xff]
        %v2308 = vld [vmem:[%s930 + $0xf2] sm:$0xff]
        %v2309 = vld [vmem:[%s930 + $0xfa] sm:$0xff]
        %v2310 = vld [vmem:[%s930 + $0x10a] sm:$0xff]
        %v2311 = vld [vmem:[%s930 + $0x112] sm:$0xff]
        %v2312 = vld [vmem:[%s930 + $0x122] sm:$0xff]
        %v2313 = vld [vmem:[%s930 + $0x12a] sm:$0xff]
        %v2314 = vld [vmem:[%s930 + $0x13a] sm:$0xff]
        %v2315 = vld [vmem:[%s930 + $0x142] sm:$0xff]
        %v2316 = vld [vmem:[%s930 + $0x152] sm:$0xff]
        %v2317 = vld [vmem:[%s930 + $0x15a] sm:$0xff]
        %v2318 = vld [vmem:[%s930 + $0x16a] sm:$0xff]
        %v2319 = vld [vmem:[%s930 + $0x172] sm:$0xff]
        %s2320 = scalar_lea.vmem %s5, 20
        %v2321 = vld [vmem:[%s2320] sm:$0xf]
        %v2323 = vsel %vm476, %v2288, 0
        %v2326 = vsel %vm476, %v2289, 0
        %v2329 = vsel %vm476, %v2290, 0
        %v2332 = vsel %vm476, %v2291, 0
        %v2335 = vsel %vm476, %v2292, 0
        %v2338 = vsel %vm476, %v2293, 0
        %v2341 = vsel %vm476, %v2294, 0
        %v2344 = vsel %vm476, %v2295, 0
        %v2347 = vsel %vm476, %v2296, 0
        %v2350 = vsel %vm476, %v2297, 0
        %v2353 = vsel %vm476, %v2298, 0
        %v2356 = vsel %vm476, %v2299, 0
        %v2359 = vsel %vm476, %v2300, 0
        %v2362 = vsel %vm476, %v2301, 0
        %v2365 = vsel %vm476, %v2302, 0
        %v2368 = vsel %vm476, %v2303, 0
        %v2371 = vsel %vm476, %v2304, 0
        %v2374 = vsel %vm476, %v2305, 0
        %v2377 = vsel %vm476, %v2306, 0
        %v2380 = vsel %vm476, %v2307, 0
        %v2383 = vsel %vm476, %v2308, 0
        %v2386 = vsel %vm476, %v2309, 0
        %v2389 = vsel %vm476, %v2310, 0
        %v2392 = vsel %vm476, %v2311, 0
        %v2395 = vsel %vm476, %v2312, 0
        %v2398 = vsel %vm476, %v2313, 0
        %v2401 = vsel %vm476, %v2314, 0
        %v2404 = vsel %vm476, %v2315, 0
        %v2407 = vsel %vm476, %v2316, 0
        %v2410 = vsel %vm476, %v2317, 0
        %v2413 = vsel %vm476, %v2318, 0
        %v2416 = vsel %vm476, %v2319, 0
        %v2419 = vsel %vm573, %v2321, 0
        %2421 = vmatpush.msra.mxu0 0.0
        %2422 = vmatpush.msra.mxu0 0.0
        %2423 = vmatpush.msra.mxu0 0.0
        %2424 = vmatpush.msra.mxu0 0.0
        %2425 = vmatpush.msra.mxu0 0.0
        %2426 = vmatpush.msra.mxu0 0.0
        %2427 = vmatpush.msra.mxu0 0.0
        %2428 = vmatpush.msra.mxu0 0.0
        %2429 = vmatpush.msra.mxu0 0.0
        %2430 = vmatpush.msra.mxu0 0.0
        %2431 = vmatpush.msra.mxu0 0.0
        %2432 = vmatpush.msra.mxu0 0.0
        %2433 = vmatpush.msra.mxu0 0.0
        %2434 = vmatpush.msra.mxu0 0.0
        %2435 = vmatpush.msra.mxu0 0.0
        %2436 = vmatpush.msra.mxu0 %v2419
        %2437 = vmatmul.f32.gmra.mxu0 %v2323
        %v2438 = vpop.f32.mrf.mxu0
        %v2439 = vadd.f32 0.0, %v2438
        %2440 = vmatmul.f32.gmra.mxu0 %v2326
        %v2441 = vpop.f32.mrf.mxu0
        %v2442 = vadd.f32 0.0, %v2441
        %2443 = vmatmul.f32.gmra.mxu0 %v2329
        %v2444 = vpop.f32.mrf.mxu0
        %v2445 = vadd.f32 0.0, %v2444
        %2446 = vmatmul.f32.gmra.mxu0 %v2332
        %v2447 = vpop.f32.mrf.mxu0
        %v2448 = vadd.f32 0.0, %v2447
        %2449 = vmatmul.f32.gmra.mxu0 %v2335
        %v2450 = vpop.f32.mrf.mxu0
        %v2451 = vadd.f32 0.0, %v2450
        %2452 = vmatmul.f32.gmra.mxu0 %v2338
        %v2453 = vpop.f32.mrf.mxu0
        %v2454 = vadd.f32 0.0, %v2453
        %2455 = vmatmul.f32.gmra.mxu0 %v2341
        %v2456 = vpop.f32.mrf.mxu0
        %v2457 = vadd.f32 0.0, %v2456
        %2458 = vmatmul.f32.gmra.mxu0 %v2344
        %v2459 = vpop.f32.mrf.mxu0
        %v2460 = vadd.f32 0.0, %v2459
        %2461 = vmatmul.f32.gmra.mxu0 %v2347
        %v2462 = vpop.f32.mrf.mxu0
        %v2463 = vadd.f32 0.0, %v2462
        %2464 = vmatmul.f32.gmra.mxu0 %v2350
        %v2465 = vpop.f32.mrf.mxu0
        %v2466 = vadd.f32 0.0, %v2465
        %2467 = vmatmul.f32.gmra.mxu0 %v2353
        %v2468 = vpop.f32.mrf.mxu0
        %v2469 = vadd.f32 0.0, %v2468
        %2470 = vmatmul.f32.gmra.mxu0 %v2356
        %v2471 = vpop.f32.mrf.mxu0
        %v2472 = vadd.f32 0.0, %v2471
        %2473 = vmatmul.f32.gmra.mxu0 %v2359
        %v2474 = vpop.f32.mrf.mxu0
        %v2475 = vadd.f32 0.0, %v2474
        %2476 = vmatmul.f32.gmra.mxu0 %v2362
        %v2477 = vpop.f32.mrf.mxu0
        %v2478 = vadd.f32 0.0, %v2477
        %2479 = vmatmul.f32.gmra.mxu0 %v2365
        %v2480 = vpop.f32.mrf.mxu0
        %v2481 = vadd.f32 0.0, %v2480
        %2482 = vmatmul.f32.gmra.mxu0 %v2368
        %v2483 = vpop.f32.mrf.mxu0
        %v2484 = vadd.f32 0.0, %v2483
        %2485 = vmatmul.f32.gmra.mxu0 %v2371
        %v2486 = vpop.f32.mrf.mxu0
        %v2487 = vadd.f32 0.0, %v2486
        %2488 = vmatmul.f32.gmra.mxu0 %v2374
        %v2489 = vpop.f32.mrf.mxu0
        %v2490 = vadd.f32 0.0, %v2489
        %2491 = vmatmul.f32.gmra.mxu0 %v2377
        %v2492 = vpop.f32.mrf.mxu0
        %v2493 = vadd.f32 0.0, %v2492
        %2494 = vmatmul.f32.gmra.mxu0 %v2380
        %v2495 = vpop.f32.mrf.mxu0
        %v2496 = vadd.f32 0.0, %v2495
        %2497 = vmatmul.f32.gmra.mxu0 %v2383
        %v2498 = vpop.f32.mrf.mxu0
        %v2499 = vadd.f32 0.0, %v2498
        %2500 = vmatmul.f32.gmra.mxu0 %v2386
        %v2501 = vpop.f32.mrf.mxu0
        %v2502 = vadd.f32 0.0, %v2501
        %2503 = vmatmul.f32.gmra.mxu0 %v2389
        %v2504 = vpop.f32.mrf.mxu0
        %v2505 = vadd.f32 0.0, %v2504
        %2506 = vmatmul.f32.gmra.mxu0 %v2392
        %v2507 = vpop.f32.mrf.mxu0
        %v2508 = vadd.f32 0.0, %v2507
        %2509 = vmatmul.f32.gmra.mxu0 %v2395
        %v2510 = vpop.f32.mrf.mxu0
        %v2511 = vadd.f32 0.0, %v2510
        %2512 = vmatmul.f32.gmra.mxu0 %v2398
        %v2513 = vpop.f32.mrf.mxu0
        %v2514 = vadd.f32 0.0, %v2513
        %2515 = vmatmul.f32.gmra.mxu0 %v2401
        %v2516 = vpop.f32.mrf.mxu0
        %v2517 = vadd.f32 0.0, %v2516
        %2518 = vmatmul.f32.gmra.mxu0 %v2404
        %v2519 = vpop.f32.mrf.mxu0
        %v2520 = vadd.f32 0.0, %v2519
        %2521 = vmatmul.f32.gmra.mxu0 %v2407
        %v2522 = vpop.f32.mrf.mxu0
        %v2523 = vadd.f32 0.0, %v2522
        %2524 = vmatmul.f32.gmra.mxu0 %v2410
        %v2525 = vpop.f32.mrf.mxu0
        %v2526 = vadd.f32 0.0, %v2525
        %2527 = vmatmul.f32.gmra.mxu0 %v2413
        %v2528 = vpop.f32.mrf.mxu0
        %v2529 = vadd.f32 0.0, %v2528
        %2530 = vmatmul.f32.gmra.mxu0 %v2416
        %v2531 = vpop.f32.mrf.mxu0
        %v2532 = vadd.f32 0.0, %v2531
        %2533 = vdwg.mxu0
        %v2534 = vadd.f32 %v2256, %v2439
        %v2535 = vadd.f32 %v2257, %v2442
        %v2536 = vadd.f32 %v2258, %v2445
        %v2537 = vadd.f32 %v2259, %v2448
        %v2538 = vadd.f32 %v2260, %v2451
        %v2539 = vadd.f32 %v2261, %v2454
        %v2540 = vadd.f32 %v2262, %v2457
        %v2541 = vadd.f32 %v2263, %v2460
        %v2542 = vadd.f32 %v2264, %v2463
        %v2543 = vadd.f32 %v2265, %v2466
        %v2544 = vadd.f32 %v2266, %v2469
        %v2545 = vadd.f32 %v2267, %v2472
        %v2546 = vadd.f32 %v2268, %v2475
        %v2547 = vadd.f32 %v2269, %v2478
        %v2548 = vadd.f32 %v2270, %v2481
        %v2549 = vadd.f32 %v2271, %v2484
        %v2550 = vadd.f32 %v2272, %v2487
        %v2551 = vadd.f32 %v2273, %v2490
        %v2552 = vadd.f32 %v2274, %v2493
        %v2553 = vadd.f32 %v2275, %v2496
        %v2554 = vadd.f32 %v2276, %v2499
        %v2555 = vadd.f32 %v2277, %v2502
        %v2556 = vadd.f32 %v2278, %v2505
        %v2557 = vadd.f32 %v2279, %v2508
        %v2558 = vadd.f32 %v2280, %v2511
        %v2559 = vadd.f32 %v2281, %v2514
        %v2560 = vadd.f32 %v2282, %v2517
        %v2561 = vadd.f32 %v2283, %v2520
        %v2562 = vadd.f32 %v2284, %v2523
        %v2563 = vadd.f32 %v2285, %v2526
        %v2564 = vadd.f32 %v2286, %v2529
        %v2565 = vadd.f32 %v2287, %v2532
        %s2566 = scalar_lea.vmem [#allocation2], 48
        %v2567 = vld [vmem:[%s2566] sm:$0xff]
        %v2568 = vld [vmem:[%s2566 + $0x8] sm:$0xff]
        %v2569 = vld [vmem:[%s2566 + $0x18] sm:$0xff]
        %v2570 = vld [vmem:[%s2566 + $0x20] sm:$0xff]
        %v2571 = vld [vmem:[%s2566 + $0x30] sm:$0xff]
        %v2572 = vld [vmem:[%s2566 + $0x38] sm:$0xff]
        %v2573 = vld [vmem:[%s2566 + $0x48] sm:$0xff]
        %v2574 = vld [vmem:[%s2566 + $0x50] sm:$0xff]
        %v2575 = vld [vmem:[%s2566 + $0x60] sm:$0xff]
        %v2576 = vld [vmem:[%s2566 + $0x68] sm:$0xff]
        %v2577 = vld [vmem:[%s2566 + $0x78] sm:$0xff]
        %v2578 = vld [vmem:[%s2566 + $0x80] sm:$0xff]
        %v2579 = vld [vmem:[%s2566 + $0x90] sm:$0xff]
        %v2580 = vld [vmem:[%s2566 + $0x98] sm:$0xff]
        %v2581 = vld [vmem:[%s2566 + $0xa8] sm:$0xff]
        %v2582 = vld [vmem:[%s2566 + $0xb0] sm:$0xff]
        %v2583 = vld [vmem:[%s2566 + $0xc0] sm:$0xff]
        %v2584 = vld [vmem:[%s2566 + $0xc8] sm:$0xff]
        %v2585 = vld [vmem:[%s2566 + $0xd8] sm:$0xff]
        %v2586 = vld [vmem:[%s2566 + $0xe0] sm:$0xff]
        %v2587 = vld [vmem:[%s2566 + $0xf0] sm:$0xff]
        %v2588 = vld [vmem:[%s2566 + $0xf8] sm:$0xff]
        %v2589 = vld [vmem:[%s2566 + $0x108] sm:$0xff]
        %v2590 = vld [vmem:[%s2566 + $0x110] sm:$0xff]
        %v2591 = vld [vmem:[%s2566 + $0x120] sm:$0xff]
        %v2592 = vld [vmem:[%s2566 + $0x128] sm:$0xff]
        %v2593 = vld [vmem:[%s2566 + $0x138] sm:$0xff]
        %v2594 = vld [vmem:[%s2566 + $0x140] sm:$0xff]
        %v2595 = vld [vmem:[%s2566 + $0x150] sm:$0xff]
        %v2596 = vld [vmem:[%s2566 + $0x158] sm:$0xff]
        %v2597 = vld [vmem:[%s2566 + $0x168] sm:$0xff]
        %v2598 = vld [vmem:[%s2566 + $0x170] sm:$0xff]
        %s2599 = scalar_lea.vmem %s5, 24
        %v2600 = vld [vmem:[%s2599] sm:$0xf]
        %v2602 = vsel %vm476, %v2567, 0
        %v2605 = vsel %vm476, %v2568, 0
        %v2608 = vsel %vm476, %v2569, 0
        %v2611 = vsel %vm476, %v2570, 0
        %v2614 = vsel %vm476, %v2571, 0
        %v2617 = vsel %vm476, %v2572, 0
        %v2620 = vsel %vm476, %v2573, 0
        %v2623 = vsel %vm476, %v2574, 0
        %v2626 = vsel %vm476, %v2575, 0
        %v2629 = vsel %vm476, %v2576, 0
        %v2632 = vsel %vm476, %v2577, 0
        %v2635 = vsel %vm476, %v2578, 0
        %v2638 = vsel %vm476, %v2579, 0
        %v2641 = vsel %vm476, %v2580, 0
        %v2644 = vsel %vm476, %v2581, 0
        %v2647 = vsel %vm476, %v2582, 0
        %v2650 = vsel %vm476, %v2583, 0
        %v2653 = vsel %vm476, %v2584, 0
        %v2656 = vsel %vm476, %v2585, 0
        %v2659 = vsel %vm476, %v2586, 0
        %v2662 = vsel %vm476, %v2587, 0
        %v2665 = vsel %vm476, %v2588, 0
        %v2668 = vsel %vm476, %v2589, 0
        %v2671 = vsel %vm476, %v2590, 0
        %v2674 = vsel %vm476, %v2591, 0
        %v2677 = vsel %vm476, %v2592, 0
        %v2680 = vsel %vm476, %v2593, 0
        %v2683 = vsel %vm476, %v2594, 0
        %v2686 = vsel %vm476, %v2595, 0
        %v2689 = vsel %vm476, %v2596, 0
        %v2692 = vsel %vm476, %v2597, 0
        %v2695 = vsel %vm476, %v2598, 0
        %v2698 = vsel %vm573, %v2600, 0
        %2700 = vmatpush.msra.mxu0 0.0
        %2701 = vmatpush.msra.mxu0 0.0
        %2702 = vmatpush.msra.mxu0 0.0
        %2703 = vmatpush.msra.mxu0 0.0
        %2704 = vmatpush.msra.mxu0 0.0
        %2705 = vmatpush.msra.mxu0 0.0
        %2706 = vmatpush.msra.mxu0 0.0
        %2707 = vmatpush.msra.mxu0 0.0
        %2708 = vmatpush.msra.mxu0 0.0
        %2709 = vmatpush.msra.mxu0 0.0
        %2710 = vmatpush.msra.mxu0 0.0
        %2711 = vmatpush.msra.mxu0 0.0
        %2712 = vmatpush.msra.mxu0 0.0
        %2713 = vmatpush.msra.mxu0 0.0
        %2714 = vmatpush.msra.mxu0 0.0
        %2715 = vmatpush.msra.mxu0 %v2698
        %2716 = vmatmul.f32.gmra.mxu0 %v2602
        %v2717 = vpop.f32.mrf.mxu0
        %v2718 = vadd.f32 0.0, %v2717
        %2719 = vmatmul.f32.gmra.mxu0 %v2605
        %v2720 = vpop.f32.mrf.mxu0
        %v2721 = vadd.f32 0.0, %v2720
        %2722 = vmatmul.f32.gmra.mxu0 %v2608
        %v2723 = vpop.f32.mrf.mxu0
        %v2724 = vadd.f32 0.0, %v2723
        %2725 = vmatmul.f32.gmra.mxu0 %v2611
        %v2726 = vpop.f32.mrf.mxu0
        %v2727 = vadd.f32 0.0, %v2726
        %2728 = vmatmul.f32.gmra.mxu0 %v2614
        %v2729 = vpop.f32.mrf.mxu0
        %v2730 = vadd.f32 0.0, %v2729
        %2731 = vmatmul.f32.gmra.mxu0 %v2617
        %v2732 = vpop.f32.mrf.mxu0
        %v2733 = vadd.f32 0.0, %v2732
        %2734 = vmatmul.f32.gmra.mxu0 %v2620
        %v2735 = vpop.f32.mrf.mxu0
        %v2736 = vadd.f32 0.0, %v2735
        %2737 = vmatmul.f32.gmra.mxu0 %v2623
        %v2738 = vpop.f32.mrf.mxu0
        %v2739 = vadd.f32 0.0, %v2738
        %2740 = vmatmul.f32.gmra.mxu0 %v2626
        %v2741 = vpop.f32.mrf.mxu0
        %v2742 = vadd.f32 0.0, %v2741
        %2743 = vmatmul.f32.gmra.mxu0 %v2629
        %v2744 = vpop.f32.mrf.mxu0
        %v2745 = vadd.f32 0.0, %v2744
        %2746 = vmatmul.f32.gmra.mxu0 %v2632
        %v2747 = vpop.f32.mrf.mxu0
        %v2748 = vadd.f32 0.0, %v2747
        %2749 = vmatmul.f32.gmra.mxu0 %v2635
        %v2750 = vpop.f32.mrf.mxu0
        %v2751 = vadd.f32 0.0, %v2750
        %2752 = vmatmul.f32.gmra.mxu0 %v2638
        %v2753 = vpop.f32.mrf.mxu0
        %v2754 = vadd.f32 0.0, %v2753
        %2755 = vmatmul.f32.gmra.mxu0 %v2641
        %v2756 = vpop.f32.mrf.mxu0
        %v2757 = vadd.f32 0.0, %v2756
        %2758 = vmatmul.f32.gmra.mxu0 %v2644
        %v2759 = vpop.f32.mrf.mxu0
        %v2760 = vadd.f32 0.0, %v2759
        %2761 = vmatmul.f32.gmra.mxu0 %v2647
        %v2762 = vpop.f32.mrf.mxu0
        %v2763 = vadd.f32 0.0, %v2762
        %2764 = vmatmul.f32.gmra.mxu0 %v2650
        %v2765 = vpop.f32.mrf.mxu0
        %v2766 = vadd.f32 0.0, %v2765
        %2767 = vmatmul.f32.gmra.mxu0 %v2653
        %v2768 = vpop.f32.mrf.mxu0
        %v2769 = vadd.f32 0.0, %v2768
        %2770 = vmatmul.f32.gmra.mxu0 %v2656
        %v2771 = vpop.f32.mrf.mxu0
        %v2772 = vadd.f32 0.0, %v2771
        %2773 = vmatmul.f32.gmra.mxu0 %v2659
        %v2774 = vpop.f32.mrf.mxu0
        %v2775 = vadd.f32 0.0, %v2774
        %2776 = vmatmul.f32.gmra.mxu0 %v2662
        %v2777 = vpop.f32.mrf.mxu0
        %v2778 = vadd.f32 0.0, %v2777
        %2779 = vmatmul.f32.gmra.mxu0 %v2665
        %v2780 = vpop.f32.mrf.mxu0
        %v2781 = vadd.f32 0.0, %v2780
        %2782 = vmatmul.f32.gmra.mxu0 %v2668
        %v2783 = vpop.f32.mrf.mxu0
        %v2784 = vadd.f32 0.0, %v2783
        %2785 = vmatmul.f32.gmra.mxu0 %v2671
        %v2786 = vpop.f32.mrf.mxu0
        %v2787 = vadd.f32 0.0, %v2786
        %2788 = vmatmul.f32.gmra.mxu0 %v2674
        %v2789 = vpop.f32.mrf.mxu0
        %v2790 = vadd.f32 0.0, %v2789
        %2791 = vmatmul.f32.gmra.mxu0 %v2677
        %v2792 = vpop.f32.mrf.mxu0
        %v2793 = vadd.f32 0.0, %v2792
        %2794 = vmatmul.f32.gmra.mxu0 %v2680
        %v2795 = vpop.f32.mrf.mxu0
        %v2796 = vadd.f32 0.0, %v2795
        %2797 = vmatmul.f32.gmra.mxu0 %v2683
        %v2798 = vpop.f32.mrf.mxu0
        %v2799 = vadd.f32 0.0, %v2798
        %2800 = vmatmul.f32.gmra.mxu0 %v2686
        %v2801 = vpop.f32.mrf.mxu0
        %v2802 = vadd.f32 0.0, %v2801
        %2803 = vmatmul.f32.gmra.mxu0 %v2689
        %v2804 = vpop.f32.mrf.mxu0
        %v2805 = vadd.f32 0.0, %v2804
        %2806 = vmatmul.f32.gmra.mxu0 %v2692
        %v2807 = vpop.f32.mrf.mxu0
        %v2808 = vadd.f32 0.0, %v2807
        %2809 = vmatmul.f32.gmra.mxu0 %v2695
        %v2810 = vpop.f32.mrf.mxu0
        %v2811 = vadd.f32 0.0, %v2810
        %2812 = vdwg.mxu0
        %v2813 = vadd.f32 %v2534, %v2718
        %v2814 = vadd.f32 %v2535, %v2721
        %v2815 = vadd.f32 %v2536, %v2724
        %v2816 = vadd.f32 %v2537, %v2727
        %v2817 = vadd.f32 %v2538, %v2730
        %v2818 = vadd.f32 %v2539, %v2733
        %v2819 = vadd.f32 %v2540, %v2736
        %v2820 = vadd.f32 %v2541, %v2739
        %v2821 = vadd.f32 %v2542, %v2742
        %v2822 = vadd.f32 %v2543, %v2745
        %v2823 = vadd.f32 %v2544, %v2748
        %v2824 = vadd.f32 %v2545, %v2751
        %v2825 = vadd.f32 %v2546, %v2754
        %v2826 = vadd.f32 %v2547, %v2757
        %v2827 = vadd.f32 %v2548, %v2760
        %v2828 = vadd.f32 %v2549, %v2763
        %v2829 = vadd.f32 %v2550, %v2766
        %v2830 = vadd.f32 %v2551, %v2769
        %v2831 = vadd.f32 %v2552, %v2772
        %v2832 = vadd.f32 %v2553, %v2775
        %v2833 = vadd.f32 %v2554, %v2778
        %v2834 = vadd.f32 %v2555, %v2781
        %v2835 = vadd.f32 %v2556, %v2784
        %v2836 = vadd.f32 %v2557, %v2787
        %v2837 = vadd.f32 %v2558, %v2790
        %v2838 = vadd.f32 %v2559, %v2793
        %v2839 = vadd.f32 %v2560, %v2796
        %v2840 = vadd.f32 %v2561, %v2799
        %v2841 = vadd.f32 %v2562, %v2802
        %v2842 = vadd.f32 %v2563, %v2805
        %v2843 = vadd.f32 %v2564, %v2808
        %v2844 = vadd.f32 %v2565, %v2811
        %v2845 = vld [vmem:[%s2566 + $0x1] sm:$0xff]
        %v2846 = vld [vmem:[%s2566 + $0x9] sm:$0xff]
        %v2847 = vld [vmem:[%s2566 + $0x19] sm:$0xff]
        %v2848 = vld [vmem:[%s2566 + $0x21] sm:$0xff]
        %v2849 = vld [vmem:[%s2566 + $0x31] sm:$0xff]
        %v2850 = vld [vmem:[%s2566 + $0x39] sm:$0xff]
        %v2851 = vld [vmem:[%s2566 + $0x49] sm:$0xff]
        %v2852 = vld [vmem:[%s2566 + $0x51] sm:$0xff]
        %v2853 = vld [vmem:[%s2566 + $0x61] sm:$0xff]
        %v2854 = vld [vmem:[%s2566 + $0x69] sm:$0xff]
        %v2855 = vld [vmem:[%s2566 + $0x79] sm:$0xff]
        %v2856 = vld [vmem:[%s2566 + $0x81] sm:$0xff]
        %v2857 = vld [vmem:[%s2566 + $0x91] sm:$0xff]
        %v2858 = vld [vmem:[%s2566 + $0x99] sm:$0xff]
        %v2859 = vld [vmem:[%s2566 + $0xa9] sm:$0xff]
        %v2860 = vld [vmem:[%s2566 + $0xb1] sm:$0xff]
        %v2861 = vld [vmem:[%s2566 + $0xc1] sm:$0xff]
        %v2862 = vld [vmem:[%s2566 + $0xc9] sm:$0xff]
        %v2863 = vld [vmem:[%s2566 + $0xd9] sm:$0xff]
        %v2864 = vld [vmem:[%s2566 + $0xe1] sm:$0xff]
        %v2865 = vld [vmem:[%s2566 + $0xf1] sm:$0xff]
        %v2866 = vld [vmem:[%s2566 + $0xf9] sm:$0xff]
        %v2867 = vld [vmem:[%s2566 + $0x109] sm:$0xff]
        %v2868 = vld [vmem:[%s2566 + $0x111] sm:$0xff]
        %v2869 = vld [vmem:[%s2566 + $0x121] sm:$0xff]
        %v2870 = vld [vmem:[%s2566 + $0x129] sm:$0xff]
        %v2871 = vld [vmem:[%s2566 + $0x139] sm:$0xff]
        %v2872 = vld [vmem:[%s2566 + $0x141] sm:$0xff]
        %v2873 = vld [vmem:[%s2566 + $0x151] sm:$0xff]
        %v2874 = vld [vmem:[%s2566 + $0x159] sm:$0xff]
        %v2875 = vld [vmem:[%s2566 + $0x169] sm:$0xff]
        %v2876 = vld [vmem:[%s2566 + $0x171] sm:$0xff]
        %s2877 = scalar_lea.vmem %s5, 28
        %v2878 = vld [vmem:[%s2877] sm:$0xf]
        %v2880 = vsel %vm476, %v2845, 0
        %v2883 = vsel %vm476, %v2846, 0
        %v2886 = vsel %vm476, %v2847, 0
        %v2889 = vsel %vm476, %v2848, 0
        %v2892 = vsel %vm476, %v2849, 0
        %v2895 = vsel %vm476, %v2850, 0
        %v2898 = vsel %vm476, %v2851, 0
        %v2901 = vsel %vm476, %v2852, 0
        %v2904 = vsel %vm476, %v2853, 0
        %v2907 = vsel %vm476, %v2854, 0
        %v2910 = vsel %vm476, %v2855, 0
        %v2913 = vsel %vm476, %v2856, 0
        %v2916 = vsel %vm476, %v2857, 0
        %v2919 = vsel %vm476, %v2858, 0
        %v2922 = vsel %vm476, %v2859, 0
        %v2925 = vsel %vm476, %v2860, 0
        %v2928 = vsel %vm476, %v2861, 0
        %v2931 = vsel %vm476, %v2862, 0
        %v2934 = vsel %vm476, %v2863, 0
        %v2937 = vsel %vm476, %v2864, 0
        %v2940 = vsel %vm476, %v2865, 0
        %v2943 = vsel %vm476, %v2866, 0
        %v2946 = vsel %vm476, %v2867, 0
        %v2949 = vsel %vm476, %v2868, 0
        %v2952 = vsel %vm476, %v2869, 0
        %v2955 = vsel %vm476, %v2870, 0
        %v2958 = vsel %vm476, %v2871, 0
        %v2961 = vsel %vm476, %v2872, 0
        %v2964 = vsel %vm476, %v2873, 0
        %v2967 = vsel %vm476, %v2874, 0
        %v2970 = vsel %vm476, %v2875, 0
        %v2973 = vsel %vm476, %v2876, 0
        %v2976 = vsel %vm573, %v2878, 0
        %2978 = vmatpush.msra.mxu0 0.0
        %2979 = vmatpush.msra.mxu0 0.0
        %2980 = vmatpush.msra.mxu0 0.0
        %2981 = vmatpush.msra.mxu0 0.0
        %2982 = vmatpush.msra.mxu0 0.0
        %2983 = vmatpush.msra.mxu0 0.0
        %2984 = vmatpush.msra.mxu0 0.0
        %2985 = vmatpush.msra.mxu0 0.0
        %2986 = vmatpush.msra.mxu0 0.0
        %2987 = vmatpush.msra.mxu0 0.0
        %2988 = vmatpush.msra.mxu0 0.0
        %2989 = vmatpush.msra.mxu0 0.0
        %2990 = vmatpush.msra.mxu0 0.0
        %2991 = vmatpush.msra.mxu0 0.0
        %2992 = vmatpush.msra.mxu0 0.0
        %2993 = vmatpush.msra.mxu0 %v2976
        %2994 = vmatmul.f32.gmra.mxu0 %v2880
        %v2995 = vpop.f32.mrf.mxu0
        %v2996 = vadd.f32 0.0, %v2995
        %2997 = vmatmul.f32.gmra.mxu0 %v2883
        %v2998 = vpop.f32.mrf.mxu0
        %v2999 = vadd.f32 0.0, %v2998
        %3000 = vmatmul.f32.gmra.mxu0 %v2886
        %v3001 = vpop.f32.mrf.mxu0
        %v3002 = vadd.f32 0.0, %v3001
        %3003 = vmatmul.f32.gmra.mxu0 %v2889
        %v3004 = vpop.f32.mrf.mxu0
        %v3005 = vadd.f32 0.0, %v3004
        %3006 = vmatmul.f32.gmra.mxu0 %v2892
        %v3007 = vpop.f32.mrf.mxu0
        %v3008 = vadd.f32 0.0, %v3007
        %3009 = vmatmul.f32.gmra.mxu0 %v2895
        %v3010 = vpop.f32.mrf.mxu0
        %v3011 = vadd.f32 0.0, %v3010
        %3012 = vmatmul.f32.gmra.mxu0 %v2898
        %v3013 = vpop.f32.mrf.mxu0
        %v3014 = vadd.f32 0.0, %v3013
        %3015 = vmatmul.f32.gmra.mxu0 %v2901
        %v3016 = vpop.f32.mrf.mxu0
        %v3017 = vadd.f32 0.0, %v3016
        %3018 = vmatmul.f32.gmra.mxu0 %v2904
        %v3019 = vpop.f32.mrf.mxu0
        %v3020 = vadd.f32 0.0, %v3019
        %3021 = vmatmul.f32.gmra.mxu0 %v2907
        %v3022 = vpop.f32.mrf.mxu0
        %v3023 = vadd.f32 0.0, %v3022
        %3024 = vmatmul.f32.gmra.mxu0 %v2910
        %v3025 = vpop.f32.mrf.mxu0
        %v3026 = vadd.f32 0.0, %v3025
        %3027 = vmatmul.f32.gmra.mxu0 %v2913
        %v3028 = vpop.f32.mrf.mxu0
        %v3029 = vadd.f32 0.0, %v3028
        %3030 = vmatmul.f32.gmra.mxu0 %v2916
        %v3031 = vpop.f32.mrf.mxu0
        %v3032 = vadd.f32 0.0, %v3031
        %3033 = vmatmul.f32.gmra.mxu0 %v2919
        %v3034 = vpop.f32.mrf.mxu0
        %v3035 = vadd.f32 0.0, %v3034
        %3036 = vmatmul.f32.gmra.mxu0 %v2922
        %v3037 = vpop.f32.mrf.mxu0
        %v3038 = vadd.f32 0.0, %v3037
        %3039 = vmatmul.f32.gmra.mxu0 %v2925
        %v3040 = vpop.f32.mrf.mxu0
        %v3041 = vadd.f32 0.0, %v3040
        %3042 = vmatmul.f32.gmra.mxu0 %v2928
        %v3043 = vpop.f32.mrf.mxu0
        %v3044 = vadd.f32 0.0, %v3043
        %3045 = vmatmul.f32.gmra.mxu0 %v2931
        %v3046 = vpop.f32.mrf.mxu0
        %v3047 = vadd.f32 0.0, %v3046
        %3048 = vmatmul.f32.gmra.mxu0 %v2934
        %v3049 = vpop.f32.mrf.mxu0
        %v3050 = vadd.f32 0.0, %v3049
        %3051 = vmatmul.f32.gmra.mxu0 %v2937
        %v3052 = vpop.f32.mrf.mxu0
        %v3053 = vadd.f32 0.0, %v3052
        %3054 = vmatmul.f32.gmra.mxu0 %v2940
        %v3055 = vpop.f32.mrf.mxu0
        %v3056 = vadd.f32 0.0, %v3055
        %3057 = vmatmul.f32.gmra.mxu0 %v2943
        %v3058 = vpop.f32.mrf.mxu0
        %v3059 = vadd.f32 0.0, %v3058
        %3060 = vmatmul.f32.gmra.mxu0 %v2946
        %v3061 = vpop.f32.mrf.mxu0
        %v3062 = vadd.f32 0.0, %v3061
        %3063 = vmatmul.f32.gmra.mxu0 %v2949
        %v3064 = vpop.f32.mrf.mxu0
        %v3065 = vadd.f32 0.0, %v3064
        %3066 = vmatmul.f32.gmra.mxu0 %v2952
        %v3067 = vpop.f32.mrf.mxu0
        %v3068 = vadd.f32 0.0, %v3067
        %3069 = vmatmul.f32.gmra.mxu0 %v2955
        %v3070 = vpop.f32.mrf.mxu0
        %v3071 = vadd.f32 0.0, %v3070
        %3072 = vmatmul.f32.gmra.mxu0 %v2958
        %v3073 = vpop.f32.mrf.mxu0
        %v3074 = vadd.f32 0.0, %v3073
        %3075 = vmatmul.f32.gmra.mxu0 %v2961
        %v3076 = vpop.f32.mrf.mxu0
        %v3077 = vadd.f32 0.0, %v3076
        %3078 = vmatmul.f32.gmra.mxu0 %v2964
        %v3079 = vpop.f32.mrf.mxu0
        %v3080 = vadd.f32 0.0, %v3079
        %3081 = vmatmul.f32.gmra.mxu0 %v2967
        %v3082 = vpop.f32.mrf.mxu0
        %v3083 = vadd.f32 0.0, %v3082
        %3084 = vmatmul.f32.gmra.mxu0 %v2970
        %v3085 = vpop.f32.mrf.mxu0
        %v3086 = vadd.f32 0.0, %v3085
        %3087 = vmatmul.f32.gmra.mxu0 %v2973
        %v3088 = vpop.f32.mrf.mxu0
        %v3089 = vadd.f32 0.0, %v3088
        %3090 = vdwg.mxu0
        %v3091 = vadd.f32 %v2813, %v2996
        %v3092 = vadd.f32 %v2814, %v2999
        %v3093 = vadd.f32 %v2815, %v3002
        %v3094 = vadd.f32 %v2816, %v3005
        %v3095 = vadd.f32 %v2817, %v3008
        %v3096 = vadd.f32 %v2818, %v3011
        %v3097 = vadd.f32 %v2819, %v3014
        %v3098 = vadd.f32 %v2820, %v3017
        %v3099 = vadd.f32 %v2821, %v3020
        %v3100 = vadd.f32 %v2822, %v3023
        %v3101 = vadd.f32 %v2823, %v3026
        %v3102 = vadd.f32 %v2824, %v3029
        %v3103 = vadd.f32 %v2825, %v3032
        %v3104 = vadd.f32 %v2826, %v3035
        %v3105 = vadd.f32 %v2827, %v3038
        %v3106 = vadd.f32 %v2828, %v3041
        %v3107 = vadd.f32 %v2829, %v3044
        %v3108 = vadd.f32 %v2830, %v3047
        %v3109 = vadd.f32 %v2831, %v3050
        %v3110 = vadd.f32 %v2832, %v3053
        %v3111 = vadd.f32 %v2833, %v3056
        %v3112 = vadd.f32 %v2834, %v3059
        %v3113 = vadd.f32 %v2835, %v3062
        %v3114 = vadd.f32 %v2836, %v3065
        %v3115 = vadd.f32 %v2837, %v3068
        %v3116 = vadd.f32 %v2838, %v3071
        %v3117 = vadd.f32 %v2839, %v3074
        %v3118 = vadd.f32 %v2840, %v3077
        %v3119 = vadd.f32 %v2841, %v3080
        %v3120 = vadd.f32 %v2842, %v3083
        %v3121 = vadd.f32 %v2843, %v3086
        %v3122 = vadd.f32 %v2844, %v3089
        %v3123 = vld [vmem:[%s2566 + $0x2] sm:$0xff]
        %v3124 = vld [vmem:[%s2566 + $0xa] sm:$0xff]
        %v3125 = vld [vmem:[%s2566 + $0x1a] sm:$0xff]
        %v3126 = vld [vmem:[%s2566 + $0x22] sm:$0xff]
        %v3127 = vld [vmem:[%s2566 + $0x32] sm:$0xff]
        %v3128 = vld [vmem:[%s2566 + $0x3a] sm:$0xff]
        %v3129 = vld [vmem:[%s2566 + $0x4a] sm:$0xff]
        %v3130 = vld [vmem:[%s2566 + $0x52] sm:$0xff]
        %v3131 = vld [vmem:[%s2566 + $0x62] sm:$0xff]
        %v3132 = vld [vmem:[%s2566 + $0x6a] sm:$0xff]
        %v3133 = vld [vmem:[%s2566 + $0x7a] sm:$0xff]
        %v3134 = vld [vmem:[%s2566 + $0x82] sm:$0xff]
        %v3135 = vld [vmem:[%s2566 + $0x92] sm:$0xff]
        %v3136 = vld [vmem:[%s2566 + $0x9a] sm:$0xff]
        %v3137 = vld [vmem:[%s2566 + $0xaa] sm:$0xff]
        %v3138 = vld [vmem:[%s2566 + $0xb2] sm:$0xff]
        %v3139 = vld [vmem:[%s2566 + $0xc2] sm:$0xff]
        %v3140 = vld [vmem:[%s2566 + $0xca] sm:$0xff]
        %v3141 = vld [vmem:[%s2566 + $0xda] sm:$0xff]
        %v3142 = vld [vmem:[%s2566 + $0xe2] sm:$0xff]
        %v3143 = vld [vmem:[%s2566 + $0xf2] sm:$0xff]
        %v3144 = vld [vmem:[%s2566 + $0xfa] sm:$0xff]
        %v3145 = vld [vmem:[%s2566 + $0x10a] sm:$0xff]
        %v3146 = vld [vmem:[%s2566 + $0x112] sm:$0xff]
        %v3147 = vld [vmem:[%s2566 + $0x122] sm:$0xff]
        %v3148 = vld [vmem:[%s2566 + $0x12a] sm:$0xff]
        %v3149 = vld [vmem:[%s2566 + $0x13a] sm:$0xff]
        %v3150 = vld [vmem:[%s2566 + $0x142] sm:$0xff]
        %v3151 = vld [vmem:[%s2566 + $0x152] sm:$0xff]
        %v3152 = vld [vmem:[%s2566 + $0x15a] sm:$0xff]
        %v3153 = vld [vmem:[%s2566 + $0x16a] sm:$0xff]
        %v3154 = vld [vmem:[%s2566 + $0x172] sm:$0xff]
        %s3155 = scalar_lea.vmem %s5, 32
        %v3156 = vld [vmem:[%s3155] sm:$0xf]
        %v3158 = vsel %vm476, %v3123, 0
        %v3161 = vsel %vm476, %v3124, 0
        %v3164 = vsel %vm476, %v3125, 0
        %v3167 = vsel %vm476, %v3126, 0
        %v3170 = vsel %vm476, %v3127, 0
        %v3173 = vsel %vm476, %v3128, 0
        %v3176 = vsel %vm476, %v3129, 0
        %v3179 = vsel %vm476, %v3130, 0
        %v3182 = vsel %vm476, %v3131, 0
        %v3185 = vsel %vm476, %v3132, 0
        %v3188 = vsel %vm476, %v3133, 0
        %v3191 = vsel %vm476, %v3134, 0
        %v3194 = vsel %vm476, %v3135, 0
        %v3197 = vsel %vm476, %v3136, 0
        %v3200 = vsel %vm476, %v3137, 0
        %v3203 = vsel %vm476, %v3138, 0
        %v3206 = vsel %vm476, %v3139, 0
        %v3209 = vsel %vm476, %v3140, 0
        %v3212 = vsel %vm476, %v3141, 0
        %v3215 = vsel %vm476, %v3142, 0
        %v3218 = vsel %vm476, %v3143, 0
        %v3221 = vsel %vm476, %v3144, 0
        %v3224 = vsel %vm476, %v3145, 0
        %v3227 = vsel %vm476, %v3146, 0
        %v3230 = vsel %vm476, %v3147, 0
        %v3233 = vsel %vm476, %v3148, 0
        %v3236 = vsel %vm476, %v3149, 0
        %v3239 = vsel %vm476, %v3150, 0
        %v3242 = vsel %vm476, %v3151, 0
        %v3245 = vsel %vm476, %v3152, 0
        %v3248 = vsel %vm476, %v3153, 0
        %v3251 = vsel %vm476, %v3154, 0
        %v3254 = vsel %vm573, %v3156, 0
        %3256 = vmatpush.msra.mxu0 0.0
        %3257 = vmatpush.msra.mxu0 0.0
        %3258 = vmatpush.msra.mxu0 0.0
        %3259 = vmatpush.msra.mxu0 0.0
        %3260 = vmatpush.msra.mxu0 0.0
        %3261 = vmatpush.msra.mxu0 0.0
        %3262 = vmatpush.msra.mxu0 0.0
        %3263 = vmatpush.msra.mxu0 0.0
        %3264 = vmatpush.msra.mxu0 0.0
        %3265 = vmatpush.msra.mxu0 0.0
        %3266 = vmatpush.msra.mxu0 0.0
        %3267 = vmatpush.msra.mxu0 0.0
        %3268 = vmatpush.msra.mxu0 0.0
        %3269 = vmatpush.msra.mxu0 0.0
        %3270 = vmatpush.msra.mxu0 0.0
        %3271 = vmatpush.msra.mxu0 %v3254
        %3272 = vmatmul.f32.gmra.mxu0 %v3158
        %v3273 = vpop.f32.mrf.mxu0
        %v3274 = vadd.f32 0.0, %v3273
        %3275 = vmatmul.f32.gmra.mxu0 %v3161
        %v3276 = vpop.f32.mrf.mxu0
        %v3277 = vadd.f32 0.0, %v3276
        %3278 = vmatmul.f32.gmra.mxu0 %v3164
        %v3279 = vpop.f32.mrf.mxu0
        %v3280 = vadd.f32 0.0, %v3279
        %3281 = vmatmul.f32.gmra.mxu0 %v3167
        %v3282 = vpop.f32.mrf.mxu0
        %v3283 = vadd.f32 0.0, %v3282
        %3284 = vmatmul.f32.gmra.mxu0 %v3170
        %v3285 = vpop.f32.mrf.mxu0
        %v3286 = vadd.f32 0.0, %v3285
        %3287 = vmatmul.f32.gmra.mxu0 %v3173
        %v3288 = vpop.f32.mrf.mxu0
        %v3289 = vadd.f32 0.0, %v3288
        %3290 = vmatmul.f32.gmra.mxu0 %v3176
        %v3291 = vpop.f32.mrf.mxu0
        %v3292 = vadd.f32 0.0, %v3291
        %3293 = vmatmul.f32.gmra.mxu0 %v3179
        %v3294 = vpop.f32.mrf.mxu0
        %v3295 = vadd.f32 0.0, %v3294
        %3296 = vmatmul.f32.gmra.mxu0 %v3182
        %v3297 = vpop.f32.mrf.mxu0
        %v3298 = vadd.f32 0.0, %v3297
        %3299 = vmatmul.f32.gmra.mxu0 %v3185
        %v3300 = vpop.f32.mrf.mxu0
        %v3301 = vadd.f32 0.0, %v3300
        %3302 = vmatmul.f32.gmra.mxu0 %v3188
        %v3303 = vpop.f32.mrf.mxu0
        %v3304 = vadd.f32 0.0, %v3303
        %3305 = vmatmul.f32.gmra.mxu0 %v3191
        %v3306 = vpop.f32.mrf.mxu0
        %v3307 = vadd.f32 0.0, %v3306
        %3308 = vmatmul.f32.gmra.mxu0 %v3194
        %v3309 = vpop.f32.mrf.mxu0
        %v3310 = vadd.f32 0.0, %v3309
        %3311 = vmatmul.f32.gmra.mxu0 %v3197
        %v3312 = vpop.f32.mrf.mxu0
        %v3313 = vadd.f32 0.0, %v3312
        %3314 = vmatmul.f32.gmra.mxu0 %v3200
        %v3315 = vpop.f32.mrf.mxu0
        %v3316 = vadd.f32 0.0, %v3315
        %3317 = vmatmul.f32.gmra.mxu0 %v3203
        %v3318 = vpop.f32.mrf.mxu0
        %v3319 = vadd.f32 0.0, %v3318
        %3320 = vmatmul.f32.gmra.mxu0 %v3206
        %v3321 = vpop.f32.mrf.mxu0
        %v3322 = vadd.f32 0.0, %v3321
        %3323 = vmatmul.f32.gmra.mxu0 %v3209
        %v3324 = vpop.f32.mrf.mxu0
        %v3325 = vadd.f32 0.0, %v3324
        %3326 = vmatmul.f32.gmra.mxu0 %v3212
        %v3327 = vpop.f32.mrf.mxu0
        %v3328 = vadd.f32 0.0, %v3327
        %3329 = vmatmul.f32.gmra.mxu0 %v3215
        %v3330 = vpop.f32.mrf.mxu0
        %v3331 = vadd.f32 0.0, %v3330
        %3332 = vmatmul.f32.gmra.mxu0 %v3218
        %v3333 = vpop.f32.mrf.mxu0
        %v3334 = vadd.f32 0.0, %v3333
        %3335 = vmatmul.f32.gmra.mxu0 %v3221
        %v3336 = vpop.f32.mrf.mxu0
        %v3337 = vadd.f32 0.0, %v3336
        %3338 = vmatmul.f32.gmra.mxu0 %v3224
        %v3339 = vpop.f32.mrf.mxu0
        %v3340 = vadd.f32 0.0, %v3339
        %3341 = vmatmul.f32.gmra.mxu0 %v3227
        %v3342 = vpop.f32.mrf.mxu0
        %v3343 = vadd.f32 0.0, %v3342
        %3344 = vmatmul.f32.gmra.mxu0 %v3230
        %v3345 = vpop.f32.mrf.mxu0
        %v3346 = vadd.f32 0.0, %v3345
        %3347 = vmatmul.f32.gmra.mxu0 %v3233
        %v3348 = vpop.f32.mrf.mxu0
        %v3349 = vadd.f32 0.0, %v3348
        %3350 = vmatmul.f32.gmra.mxu0 %v3236
        %v3351 = vpop.f32.mrf.mxu0
        %v3352 = vadd.f32 0.0, %v3351
        %3353 = vmatmul.f32.gmra.mxu0 %v3239
        %v3354 = vpop.f32.mrf.mxu0
        %v3355 = vadd.f32 0.0, %v3354
        %3356 = vmatmul.f32.gmra.mxu0 %v3242
        %v3357 = vpop.f32.mrf.mxu0
        %v3358 = vadd.f32 0.0, %v3357
        %3359 = vmatmul.f32.gmra.mxu0 %v3245
        %v3360 = vpop.f32.mrf.mxu0
        %v3361 = vadd.f32 0.0, %v3360
        %3362 = vmatmul.f32.gmra.mxu0 %v3248
        %v3363 = vpop.f32.mrf.mxu0
        %v3364 = vadd.f32 0.0, %v3363
        %3365 = vmatmul.f32.gmra.mxu0 %v3251
        %v3366 = vpop.f32.mrf.mxu0
        %v3367 = vadd.f32 0.0, %v3366
        %3368 = vdwg.mxu0
        %v3369 = vadd.f32 %v3091, %v3274
        %v3370 = vadd.f32 %v3092, %v3277
        %v3371 = vadd.f32 %v3093, %v3280
        %v3372 = vadd.f32 %v3094, %v3283
        %v3373 = vadd.f32 %v3095, %v3286
        %v3374 = vadd.f32 %v3096, %v3289
        %v3375 = vadd.f32 %v3097, %v3292
        %v3376 = vadd.f32 %v3098, %v3295
        %v3377 = vadd.f32 %v3099, %v3298
        %v3378 = vadd.f32 %v3100, %v3301
        %v3379 = vadd.f32 %v3101, %v3304
        %v3380 = vadd.f32 %v3102, %v3307
        %v3381 = vadd.f32 %v3103, %v3310
        %v3382 = vadd.f32 %v3104, %v3313
        %v3383 = vadd.f32 %v3105, %v3316
        %v3384 = vadd.f32 %v3106, %v3319
        %v3385 = vadd.f32 %v3107, %v3322
        %v3386 = vadd.f32 %v3108, %v3325
        %v3387 = vadd.f32 %v3109, %v3328
        %v3388 = vadd.f32 %v3110, %v3331
        %v3389 = vadd.f32 %v3111, %v3334
        %v3390 = vadd.f32 %v3112, %v3337
        %v3391 = vadd.f32 %v3113, %v3340
        %v3392 = vadd.f32 %v3114, %v3343
        %v3393 = vadd.f32 %v3115, %v3346
        %v3394 = vadd.f32 %v3116, %v3349
        %v3395 = vadd.f32 %v3117, %v3352
        %v3396 = vadd.f32 %v3118, %v3355
        %v3397 = vadd.f32 %v3119, %v3358
        %v3398 = vadd.f32 %v3120, %v3361
        %v3399 = vadd.f32 %v3121, %v3364
        %v3400 = vadd.f32 %v3122, %v3367
        %v3401 = vld [vmem:[%s6] sm:$0x1]
        %v3403 = vperm.slane %v3401, 0
        %v3405 = vadd.f32 %v3369, %v3403
        %v3406 = vadd.f32 %v3370, %v3403
        %v3407 = vadd.f32 %v3371, %v3403
        %v3408 = vadd.f32 %v3372, %v3403
        %v3409 = vadd.f32 %v3373, %v3403
        %v3410 = vadd.f32 %v3374, %v3403
        %v3411 = vadd.f32 %v3375, %v3403
        %v3412 = vadd.f32 %v3376, %v3403
        %v3413 = vadd.f32 %v3377, %v3403
        %v3414 = vadd.f32 %v3378, %v3403
        %v3415 = vadd.f32 %v3379, %v3403
        %v3416 = vadd.f32 %v3380, %v3403
        %v3417 = vadd.f32 %v3381, %v3403
        %v3418 = vadd.f32 %v3382, %v3403
        %v3419 = vadd.f32 %v3383, %v3403
        %v3420 = vadd.f32 %v3384, %v3403
        %v3421 = vadd.f32 %v3385, %v3403
        %v3422 = vadd.f32 %v3386, %v3403
        %v3423 = vadd.f32 %v3387, %v3403
        %v3424 = vadd.f32 %v3388, %v3403
        %v3425 = vadd.f32 %v3389, %v3403
        %v3426 = vadd.f32 %v3390, %v3403
        %v3427 = vadd.f32 %v3391, %v3403
        %v3428 = vadd.f32 %v3392, %v3403
        %v3429 = vadd.f32 %v3393, %v3403
        %v3430 = vadd.f32 %v3394, %v3403
        %v3431 = vadd.f32 %v3395, %v3403
        %v3432 = vadd.f32 %v3396, %v3403
        %v3433 = vadd.f32 %v3397, %v3403
        %v3434 = vadd.f32 %v3398, %v3403
        %v3435 = vadd.f32 %v3399, %v3403
        %v3436 = vadd.f32 %v3400, %v3403
        %v3437 = vmax.f32 %v3405, 0.0
        %v3438 = vmax.f32 %v3406, 0.0
        %v3439 = vmax.f32 %v3407, 0.0
        %v3440 = vmax.f32 %v3408, 0.0
        %v3441 = vmax.f32 %v3409, 0.0
        %v3442 = vmax.f32 %v3410, 0.0
        %v3443 = vmax.f32 %v3411, 0.0
        %v3444 = vmax.f32 %v3412, 0.0
        %v3445 = vmax.f32 %v3413, 0.0
        %v3446 = vmax.f32 %v3414, 0.0
        %v3447 = vmax.f32 %v3415, 0.0
        %v3448 = vmax.f32 %v3416, 0.0
        %v3449 = vmax.f32 %v3417, 0.0
        %v3450 = vmax.f32 %v3418, 0.0
        %v3451 = vmax.f32 %v3419, 0.0
        %v3452 = vmax.f32 %v3420, 0.0
        %v3453 = vmax.f32 %v3421, 0.0
        %v3454 = vmax.f32 %v3422, 0.0
        %v3455 = vmax.f32 %v3423, 0.0
        %v3456 = vmax.f32 %v3424, 0.0
        %v3457 = vmax.f32 %v3425, 0.0
        %v3458 = vmax.f32 %v3426, 0.0
        %v3459 = vmax.f32 %v3427, 0.0
        %v3460 = vmax.f32 %v3428, 0.0
        %v3461 = vmax.f32 %v3429, 0.0
        %v3462 = vmax.f32 %v3430, 0.0
        %v3463 = vmax.f32 %v3431, 0.0
        %v3464 = vmax.f32 %v3432, 0.0
        %v3465 = vmax.f32 %v3433, 0.0
        %v3466 = vmax.f32 %v3434, 0.0
        %v3467 = vmax.f32 %v3435, 0.0
        %v3468 = vmax.f32 %v3436, 0.0
        %v3469 = vld [vmem:[%s7] sm:$0xf]
        %v3470 = vld [vmem:[%s8] sm:$0x1]
        %v3472 = vperm.slane %v3470, 0
        %v3475 = vsel %vm573, %v3469, 0
        %3477 = vmatpush.msra.mxu0 0.0
        %3478 = vmatpush.msra.mxu0 0.0
        %3479 = vmatpush.msra.mxu0 0.0
        %3480 = vmatpush.msra.mxu0 0.0
        %3481 = vmatpush.msra.mxu0 0.0
        %3482 = vmatpush.msra.mxu0 0.0
        %3483 = vmatpush.msra.mxu0 0.0
        %3484 = vmatpush.msra.mxu0 0.0
        %3485 = vmatpush.msra.mxu0 0.0
        %3486 = vmatpush.msra.mxu0 0.0
        %3487 = vmatpush.msra.mxu0 0.0
        %3488 = vmatpush.msra.mxu0 0.0
        %3489 = vmatpush.msra.mxu0 0.0
        %3490 = vmatpush.msra.mxu0 0.0
        %3491 = vmatpush.msra.mxu0 0.0
        %3492 = vmatpush.msra.mxu0 %v3475
        %3493 = vmatmul.f32.gmra.mxu0 %v478
        %v3494 = vpop.f32.mrf.mxu0
        %v3495 = vadd.f32 %v3472, %v3494
        %3496 = vmatmul.f32.gmra.mxu0 %v481
        %v3497 = vpop.f32.mrf.mxu0
        %v3498 = vadd.f32 %v3472, %v3497
        %3499 = vmatmul.f32.gmra.mxu0 %v484
        %v3500 = vpop.f32.mrf.mxu0
        %v3501 = vadd.f32 %v3472, %v3500
        %3502 = vmatmul.f32.gmra.mxu0 %v487
        %v3503 = vpop.f32.mrf.mxu0
        %v3504 = vadd.f32 %v3472, %v3503
        %3505 = vmatmul.f32.gmra.mxu0 %v490
        %v3506 = vpop.f32.mrf.mxu0
        %v3507 = vadd.f32 %v3472, %v3506
        %3508 = vmatmul.f32.gmra.mxu0 %v493
        %v3509 = vpop.f32.mrf.mxu0
        %v3510 = vadd.f32 %v3472, %v3509
        %3511 = vmatmul.f32.gmra.mxu0 %v496
        %v3512 = vpop.f32.mrf.mxu0
        %v3513 = vadd.f32 %v3472, %v3512
        %3514 = vmatmul.f32.gmra.mxu0 %v499
        %v3515 = vpop.f32.mrf.mxu0
        %v3516 = vadd.f32 %v3472, %v3515
        %3517 = vmatmul.f32.gmra.mxu0 %v502
        %v3518 = vpop.f32.mrf.mxu0
        %v3519 = vadd.f32 %v3472, %v3518
        %3520 = vmatmul.f32.gmra.mxu0 %v505
        %v3521 = vpop.f32.mrf.mxu0
        %v3522 = vadd.f32 %v3472, %v3521
        %3523 = vmatmul.f32.gmra.mxu0 %v508
        %v3524 = vpop.f32.mrf.mxu0
        %v3525 = vadd.f32 %v3472, %v3524
        %3526 = vmatmul.f32.gmra.mxu0 %v511
        %v3527 = vpop.f32.mrf.mxu0
        %v3528 = vadd.f32 %v3472, %v3527
        %3529 = vmatmul.f32.gmra.mxu0 %v514
        %v3530 = vpop.f32.mrf.mxu0
        %v3531 = vadd.f32 %v3472, %v3530
        %3532 = vmatmul.f32.gmra.mxu0 %v517
        %v3533 = vpop.f32.mrf.mxu0
        %v3534 = vadd.f32 %v3472, %v3533
        %3535 = vmatmul.f32.gmra.mxu0 %v520
        %v3536 = vpop.f32.mrf.mxu0
        %v3537 = vadd.f32 %v3472, %v3536
        %3538 = vmatmul.f32.gmra.mxu0 %v523
        %v3539 = vpop.f32.mrf.mxu0
        %v3540 = vadd.f32 %v3472, %v3539
        %3541 = vmatmul.f32.gmra.mxu0 %v526
        %v3542 = vpop.f32.mrf.mxu0
        %v3543 = vadd.f32 %v3472, %v3542
        %3544 = vmatmul.f32.gmra.mxu0 %v529
        %v3545 = vpop.f32.mrf.mxu0
        %v3546 = vadd.f32 %v3472, %v3545
        %3547 = vmatmul.f32.gmra.mxu0 %v532
        %v3548 = vpop.f32.mrf.mxu0
        %v3549 = vadd.f32 %v3472, %v3548
        %3550 = vmatmul.f32.gmra.mxu0 %v535
        %v3551 = vpop.f32.mrf.mxu0
        %v3552 = vadd.f32 %v3472, %v3551
        %3553 = vmatmul.f32.gmra.mxu0 %v538
        %v3554 = vpop.f32.mrf.mxu0
        %v3555 = vadd.f32 %v3472, %v3554
        %3556 = vmatmul.f32.gmra.mxu0 %v541
        %v3557 = vpop.f32.mrf.mxu0
        %v3558 = vadd.f32 %v3472, %v3557
        %3559 = vmatmul.f32.gmra.mxu0 %v544
        %v3560 = vpop.f32.mrf.mxu0
        %v3561 = vadd.f32 %v3472, %v3560
        %3562 = vmatmul.f32.gmra.mxu0 %v547
        %v3563 = vpop.f32.mrf.mxu0
        %v3564 = vadd.f32 %v3472, %v3563
        %3565 = vmatmul.f32.gmra.mxu0 %v550
        %v3566 = vpop.f32.mrf.mxu0
        %v3567 = vadd.f32 %v3472, %v3566
        %3568 = vmatmul.f32.gmra.mxu0 %v553
        %v3569 = vpop.f32.mrf.mxu0
        %v3570 = vadd.f32 %v3472, %v3569
        %3571 = vmatmul.f32.gmra.mxu0 %v556
        %v3572 = vpop.f32.mrf.mxu0
        %v3573 = vadd.f32 %v3472, %v3572
        %3574 = vmatmul.f32.gmra.mxu0 %v559
        %v3575 = vpop.f32.mrf.mxu0
        %v3576 = vadd.f32 %v3472, %v3575
        %3577 = vmatmul.f32.gmra.mxu0 %v562
        %v3578 = vpop.f32.mrf.mxu0
        %v3579 = vadd.f32 %v3472, %v3578
        %3580 = vmatmul.f32.gmra.mxu0 %v565
        %v3581 = vpop.f32.mrf.mxu0
        %v3582 = vadd.f32 %v3472, %v3581
        %3583 = vmatmul.f32.gmra.mxu0 %v568
        %v3584 = vpop.f32.mrf.mxu0
        %v3585 = vadd.f32 %v3472, %v3584
        %3586 = vmatmul.f32.gmra.mxu0 %v571
        %v3587 = vpop.f32.mrf.mxu0
        %v3588 = vadd.f32 %v3472, %v3587
        %3589 = vdwg.mxu0
        %v3590 = vmax.f32 %v3495, 0.0
        %v3591 = vmax.f32 %v3498, 0.0
        %v3592 = vmax.f32 %v3501, 0.0
        %v3593 = vmax.f32 %v3504, 0.0
        %v3594 = vmax.f32 %v3507, 0.0
        %v3595 = vmax.f32 %v3510, 0.0
        %v3596 = vmax.f32 %v3513, 0.0
        %v3597 = vmax.f32 %v3516, 0.0
        %v3598 = vmax.f32 %v3519, 0.0
        %v3599 = vmax.f32 %v3522, 0.0
        %v3600 = vmax.f32 %v3525, 0.0
        %v3601 = vmax.f32 %v3528, 0.0
        %v3602 = vmax.f32 %v3531, 0.0
        %v3603 = vmax.f32 %v3534, 0.0
        %v3604 = vmax.f32 %v3537, 0.0
        %v3605 = vmax.f32 %v3540, 0.0
        %v3606 = vmax.f32 %v3543, 0.0
        %v3607 = vmax.f32 %v3546, 0.0
        %v3608 = vmax.f32 %v3549, 0.0
        %v3609 = vmax.f32 %v3552, 0.0
        %v3610 = vmax.f32 %v3555, 0.0
        %v3611 = vmax.f32 %v3558, 0.0
        %v3612 = vmax.f32 %v3561, 0.0
        %v3613 = vmax.f32 %v3564, 0.0
        %v3614 = vmax.f32 %v3567, 0.0
        %v3615 = vmax.f32 %v3570, 0.0
        %v3616 = vmax.f32 %v3573, 0.0
        %v3617 = vmax.f32 %v3576, 0.0
        %v3618 = vmax.f32 %v3579, 0.0
        %v3619 = vmax.f32 %v3582, 0.0
        %v3620 = vmax.f32 %v3585, 0.0
        %v3621 = vmax.f32 %v3588, 0.0
        %vm3622 = vcmask 15360
        %3623 = vst.msk [vmem:[#allocation3] sm:$0xff] %vm3622, 0.0
        %3624 = vst.msk [vmem:[#allocation3 + $0x8] sm:$0xff] %vm3622, 0.0
        %vm3625 = vcmask 11264
        %3626 = vst.msk [vmem:[#allocation3 + $0x10] sm:$0xf] %vm3625, 0.0
        %3627 = vst.msk [vmem:[#allocation3 + $0x18] sm:$0xff] %vm3622, 0.0
        %3628 = vst.msk [vmem:[#allocation3 + $0x20] sm:$0xff] %vm3622, 0.0
        %3629 = vst.msk [vmem:[#allocation3 + $0x28] sm:$0xf] %vm3625, 0.0
        %3630 = vst.msk [vmem:[#allocation3 + $0x30] sm:$0xff] %vm3622, 0.0
        %3631 = vst.msk [vmem:[#allocation3 + $0x38] sm:$0xff] %vm3622, 0.0
        %3632 = vst.msk [vmem:[#allocation3 + $0x40] sm:$0xf] %vm3625, 0.0
        %3633 = vst.msk [vmem:[#allocation3 + $0x48] sm:$0xff] %vm3622, 0.0
        %3634 = vst.msk [vmem:[#allocation3 + $0x50] sm:$0xff] %vm3622, 0.0
        %3635 = vst.msk [vmem:[#allocation3 + $0x58] sm:$0xf] %vm3625, 0.0
        %3636 = vst.msk [vmem:[#allocation3 + $0x60] sm:$0xff] %vm3622, 0.0
        %3637 = vst.msk [vmem:[#allocation3 + $0x68] sm:$0xff] %vm3622, 0.0
        %3638 = vst.msk [vmem:[#allocation3 + $0x70] sm:$0xf] %vm3625, 0.0
        %3639 = vst.msk [vmem:[#allocation3 + $0x78] sm:$0xff] %vm3622, 0.0
        %3640 = vst.msk [vmem:[#allocation3 + $0x80] sm:$0xff] %vm3622, 0.0
        %3641 = vst.msk [vmem:[#allocation3 + $0x88] sm:$0xf] %vm3625, 0.0
        %3642 = vst.msk [vmem:[#allocation3 + $0x90] sm:$0xff] %vm3622, 0.0
        %3643 = vst.msk [vmem:[#allocation3 + $0x98] sm:$0xff] %vm3622, 0.0
        %3644 = vst.msk [vmem:[#allocation3 + $0xa0] sm:$0xf] %vm3625, 0.0
        %3645 = vst.msk [vmem:[#allocation3 + $0xa8] sm:$0xff] %vm3622, 0.0
        %3646 = vst.msk [vmem:[#allocation3 + $0xb0] sm:$0xff] %vm3622, 0.0
        %3647 = vst.msk [vmem:[#allocation3 + $0xb8] sm:$0xf] %vm3625, 0.0
        %3648 = vst.msk [vmem:[#allocation3 + $0xc0] sm:$0xff] %vm3622, 0.0
        %3649 = vst.msk [vmem:[#allocation3 + $0xc8] sm:$0xff] %vm3622, 0.0
        %3650 = vst.msk [vmem:[#allocation3 + $0xd0] sm:$0xf] %vm3625, 0.0
        %3651 = vst.msk [vmem:[#allocation3 + $0xd8] sm:$0xff] %vm3622, 0.0
        %3652 = vst.msk [vmem:[#allocation3 + $0xe0] sm:$0xff] %vm3622, 0.0
        %3653 = vst.msk [vmem:[#allocation3 + $0xe8] sm:$0xf] %vm3625, 0.0
        %3654 = vst.msk [vmem:[#allocation3 + $0xf0] sm:$0xff] %vm3622, 0.0
        %3655 = vst.msk [vmem:[#allocation3 + $0xf8] sm:$0xff] %vm3622, 0.0
        %3656 = vst.msk [vmem:[#allocation3 + $0x100] sm:$0xf] %vm3625, 0.0
        %3657 = vst.msk [vmem:[#allocation3 + $0x108] sm:$0xff] %vm3622, 0.0
        %3658 = vst.msk [vmem:[#allocation3 + $0x110] sm:$0xff] %vm3622, 0.0
        %3659 = vst.msk [vmem:[#allocation3 + $0x118] sm:$0xf] %vm3625, 0.0
        %3660 = vst.msk [vmem:[#allocation3 + $0x120] sm:$0xff] %vm3622, 0.0
        %3661 = vst.msk [vmem:[#allocation3 + $0x128] sm:$0xff] %vm3622, 0.0
        %3662 = vst.msk [vmem:[#allocation3 + $0x130] sm:$0xf] %vm3625, 0.0
        %3663 = vst.msk [vmem:[#allocation3 + $0x138] sm:$0xff] %vm3622, 0.0
        %3664 = vst.msk [vmem:[#allocation3 + $0x140] sm:$0xff] %vm3622, 0.0
        %3665 = vst.msk [vmem:[#allocation3 + $0x148] sm:$0xf] %vm3625, 0.0
        %3666 = vst.msk [vmem:[#allocation3 + $0x150] sm:$0xff] %vm3622, 0.0
        %3667 = vst.msk [vmem:[#allocation3 + $0x158] sm:$0xff] %vm3622, 0.0
        %3668 = vst.msk [vmem:[#allocation3 + $0x160] sm:$0xf] %vm3625, 0.0
        %3669 = vst.msk [vmem:[#allocation3 + $0x168] sm:$0xff] %vm3622, 0.0
        %3670 = vst.msk [vmem:[#allocation3 + $0x170] sm:$0xff] %vm3622, 0.0
        %3671 = vst.msk [vmem:[#allocation3 + $0x178] sm:$0xf] %vm3625, 0.0
        %3672 = vst.msk [vmem:[#allocation3 + $0x180] sm:$0xff] %vm3622, 0.0
        %3673 = vst.msk [vmem:[#allocation3 + $0x188] sm:$0xff] %vm3622, 0.0
        %3674 = vst.msk [vmem:[#allocation3 + $0x190] sm:$0xf] %vm3625, 0.0
        %3675 = vst.msk [vmem:[#allocation3 + $0x198] sm:$0xff] %vm3622, 0.0
        %3676 = vst.msk [vmem:[#allocation3 + $0x1a0] sm:$0xff] %vm3622, 0.0
        %3677 = vst.msk [vmem:[#allocation3 + $0x1a8] sm:$0xf] %vm3625, 0.0
        %3678 = vst.msk [vmem:[#allocation3 + $0x1b0] sm:$0xff] %vm3622, 0.0
        %3679 = vst.msk [vmem:[#allocation3 + $0x1b8] sm:$0xff] %vm3622, 0.0
        %3680 = vst.msk [vmem:[#allocation3 + $0x1c0] sm:$0xf] %vm3625, 0.0
        %3681 = vst.msk [vmem:[#allocation3 + $0x1c8] sm:$0xff] %vm3622, 0.0
        %3682 = vst.msk [vmem:[#allocation3 + $0x1d0] sm:$0xff] %vm3622, 0.0
        %3683 = vst.msk [vmem:[#allocation3 + $0x1d8] sm:$0xf] %vm3625, 0.0
        %s3684 = scalar_lea.vmem [#allocation3], 48
        %3685 = vst.msk [vmem:[%s3684 + $0x2] sm:$0xff] %vm3622, %v3590
        %3686 = vst.msk [vmem:[%s3684 + $0xa] sm:$0xff] %vm3622, %v3591
        %3687 = vst.msk [vmem:[%s3684 + $0x1a] sm:$0xff] %vm3622, %v3592
        %3688 = vst.msk [vmem:[%s3684 + $0x22] sm:$0xff] %vm3622, %v3593
        %3689 = vst.msk [vmem:[%s3684 + $0x32] sm:$0xff] %vm3622, %v3594
        %3690 = vst.msk [vmem:[%s3684 + $0x3a] sm:$0xff] %vm3622, %v3595
        %3691 = vst.msk [vmem:[%s3684 + $0x4a] sm:$0xff] %vm3622, %v3596
        %3692 = vst.msk [vmem:[%s3684 + $0x52] sm:$0xff] %vm3622, %v3597
        %3693 = vst.msk [vmem:[%s3684 + $0x62] sm:$0xff] %vm3622, %v3598
        %3694 = vst.msk [vmem:[%s3684 + $0x6a] sm:$0xff] %vm3622, %v3599
        %3695 = vst.msk [vmem:[%s3684 + $0x7a] sm:$0xff] %vm3622, %v3600
        %3696 = vst.msk [vmem:[%s3684 + $0x82] sm:$0xff] %vm3622, %v3601
        %3697 = vst.msk [vmem:[%s3684 + $0x92] sm:$0xff] %vm3622, %v3602
        %3698 = vst.msk [vmem:[%s3684 + $0x9a] sm:$0xff] %vm3622, %v3603
        %3699 = vst.msk [vmem:[%s3684 + $0xaa] sm:$0xff] %vm3622, %v3604
        %3700 = vst.msk [vmem:[%s3684 + $0xb2] sm:$0xff] %vm3622, %v3605
        %3701 = vst.msk [vmem:[%s3684 + $0xc2] sm:$0xff] %vm3622, %v3606
        %3702 = vst.msk [vmem:[%s3684 + $0xca] sm:$0xff] %vm3622, %v3607
        %3703 = vst.msk [vmem:[%s3684 + $0xda] sm:$0xff] %vm3622, %v3608
        %3704 = vst.msk [vmem:[%s3684 + $0xe2] sm:$0xff] %vm3622, %v3609
        %3705 = vst.msk [vmem:[%s3684 + $0xf2] sm:$0xff] %vm3622, %v3610
        %3706 = vst.msk [vmem:[%s3684 + $0xfa] sm:$0xff] %vm3622, %v3611
        %3707 = vst.msk [vmem:[%s3684 + $0x10a] sm:$0xff] %vm3622, %v3612
        %3708 = vst.msk [vmem:[%s3684 + $0x112] sm:$0xff] %vm3622, %v3613
        %3709 = vst.msk [vmem:[%s3684 + $0x122] sm:$0xff] %vm3622, %v3614
        %3710 = vst.msk [vmem:[%s3684 + $0x12a] sm:$0xff] %vm3622, %v3615
        %3711 = vst.msk [vmem:[%s3684 + $0x13a] sm:$0xff] %vm3622, %v3616
        %3712 = vst.msk [vmem:[%s3684 + $0x142] sm:$0xff] %vm3622, %v3617
        %3713 = vst.msk [vmem:[%s3684 + $0x152] sm:$0xff] %vm3622, %v3618
        %3714 = vst.msk [vmem:[%s3684 + $0x15a] sm:$0xff] %vm3622, %v3619
        %3715 = vst.msk [vmem:[%s3684 + $0x16a] sm:$0xff] %vm3622, %v3620
        %3716 = vst.msk [vmem:[%s3684 + $0x172] sm:$0xff] %vm3622, %v3621
        %v3717 = vld [vmem:[#allocation3] sm:$0xff]
        %v3718 = vld [vmem:[#allocation3 + $0x8] sm:$0xff]
        %v3719 = vld [vmem:[#allocation3 + $0x18] sm:$0xff]
        %v3720 = vld [vmem:[#allocation3 + $0x20] sm:$0xff]
        %v3721 = vld [vmem:[#allocation3 + $0x30] sm:$0xff]
        %v3722 = vld [vmem:[#allocation3 + $0x38] sm:$0xff]
        %v3723 = vld [vmem:[#allocation3 + $0x48] sm:$0xff]
        %v3724 = vld [vmem:[#allocation3 + $0x50] sm:$0xff]
        %v3725 = vld [vmem:[#allocation3 + $0x60] sm:$0xff]
        %v3726 = vld [vmem:[#allocation3 + $0x68] sm:$0xff]
        %v3727 = vld [vmem:[#allocation3 + $0x78] sm:$0xff]
        %v3728 = vld [vmem:[#allocation3 + $0x80] sm:$0xff]
        %v3729 = vld [vmem:[#allocation3 + $0x90] sm:$0xff]
        %v3730 = vld [vmem:[#allocation3 + $0x98] sm:$0xff]
        %v3731 = vld [vmem:[#allocation3 + $0xa8] sm:$0xff]
        %v3732 = vld [vmem:[#allocation3 + $0xb0] sm:$0xff]
        %v3733 = vld [vmem:[#allocation3 + $0xc0] sm:$0xff]
        %v3734 = vld [vmem:[#allocation3 + $0xc8] sm:$0xff]
        %v3735 = vld [vmem:[#allocation3 + $0xd8] sm:$0xff]
        %v3736 = vld [vmem:[#allocation3 + $0xe0] sm:$0xff]
        %v3737 = vld [vmem:[#allocation3 + $0xf0] sm:$0xff]
        %v3738 = vld [vmem:[#allocation3 + $0xf8] sm:$0xff]
        %v3739 = vld [vmem:[#allocation3 + $0x108] sm:$0xff]
        %v3740 = vld [vmem:[#allocation3 + $0x110] sm:$0xff]
        %v3741 = vld [vmem:[#allocation3 + $0x120] sm:$0xff]
        %v3742 = vld [vmem:[#allocation3 + $0x128] sm:$0xff]
        %v3743 = vld [vmem:[#allocation3 + $0x138] sm:$0xff]
        %v3744 = vld [vmem:[#allocation3 + $0x140] sm:$0xff]
        %v3745 = vld [vmem:[#allocation3 + $0x150] sm:$0xff]
        %v3746 = vld [vmem:[#allocation3 + $0x158] sm:$0xff]
        %v3747 = vld [vmem:[#allocation3 + $0x168] sm:$0xff]
        %v3748 = vld [vmem:[#allocation3 + $0x170] sm:$0xff]
        %v3749 = vld [vmem:[%s9] sm:$0x3]
        %v3750 = vld [vmem:[#allocation3 + $0x1] sm:$0xff]
        %v3751 = vld [vmem:[#allocation3 + $0x9] sm:$0xff]
        %v3752 = vld [vmem:[#allocation3 + $0x19] sm:$0xff]
        %v3753 = vld [vmem:[#allocation3 + $0x21] sm:$0xff]
        %v3754 = vld [vmem:[#allocation3 + $0x31] sm:$0xff]
        %v3755 = vld [vmem:[#allocation3 + $0x39] sm:$0xff]
        %v3756 = vld [vmem:[#allocation3 + $0x49] sm:$0xff]
        %v3757 = vld [vmem:[#allocation3 + $0x51] sm:$0xff]
        %v3758 = vld [vmem:[#allocation3 + $0x61] sm:$0xff]
        %v3759 = vld [vmem:[#allocation3 + $0x69] sm:$0xff]
        %v3760 = vld [vmem:[#allocation3 + $0x79] sm:$0xff]
        %v3761 = vld [vmem:[#allocation3 + $0x81] sm:$0xff]
        %v3762 = vld [vmem:[#allocation3 + $0x91] sm:$0xff]
        %v3763 = vld [vmem:[#allocation3 + $0x99] sm:$0xff]
        %v3764 = vld [vmem:[#allocation3 + $0xa9] sm:$0xff]
        %v3765 = vld [vmem:[#allocation3 + $0xb1] sm:$0xff]
        %v3766 = vld [vmem:[#allocation3 + $0xc1] sm:$0xff]
        %v3767 = vld [vmem:[#allocation3 + $0xc9] sm:$0xff]
        %v3768 = vld [vmem:[#allocation3 + $0xd9] sm:$0xff]
        %v3769 = vld [vmem:[#allocation3 + $0xe1] sm:$0xff]
        %v3770 = vld [vmem:[#allocation3 + $0xf1] sm:$0xff]
        %v3771 = vld [vmem:[#allocation3 + $0xf9] sm:$0xff]
        %v3772 = vld [vmem:[#allocation3 + $0x109] sm:$0xff]
        %v3773 = vld [vmem:[#allocation3 + $0x111] sm:$0xff]
        %v3774 = vld [vmem:[#allocation3 + $0x121] sm:$0xff]
        %v3775 = vld [vmem:[#allocation3 + $0x129] sm:$0xff]
        %v3776 = vld [vmem:[#allocation3 + $0x139] sm:$0xff]
        %v3777 = vld [vmem:[#allocation3 + $0x141] sm:$0xff]
        %v3778 = vld [vmem:[#allocation3 + $0x151] sm:$0xff]
        %v3779 = vld [vmem:[#allocation3 + $0x159] sm:$0xff]
        %v3780 = vld [vmem:[#allocation3 + $0x169] sm:$0xff]
        %v3781 = vld [vmem:[#allocation3 + $0x171] sm:$0xff]
        %s3782 = scalar_lea.vmem %s9, 2
        %v3783 = vld [vmem:[%s3782] sm:$0x3]
        %v3785 = vsel %vm3622, %v3750, 0
        %v3788 = vsel %vm3622, %v3751, 0
        %v3791 = vsel %vm3622, %v3752, 0
        %v3794 = vsel %vm3622, %v3753, 0
        %v3797 = vsel %vm3622, %v3754, 0
        %v3800 = vsel %vm3622, %v3755, 0
        %v3803 = vsel %vm3622, %v3756, 0
        %v3806 = vsel %vm3622, %v3757, 0
        %v3809 = vsel %vm3622, %v3758, 0
        %v3812 = vsel %vm3622, %v3759, 0
        %v3815 = vsel %vm3622, %v3760, 0
        %v3818 = vsel %vm3622, %v3761, 0
        %v3821 = vsel %vm3622, %v3762, 0
        %v3824 = vsel %vm3622, %v3763, 0
        %v3827 = vsel %vm3622, %v3764, 0
        %v3830 = vsel %vm3622, %v3765, 0
        %v3833 = vsel %vm3622, %v3766, 0
        %v3836 = vsel %vm3622, %v3767, 0
        %v3839 = vsel %vm3622, %v3768, 0
        %v3842 = vsel %vm3622, %v3769, 0
        %v3845 = vsel %vm3622, %v3770, 0
        %v3848 = vsel %vm3622, %v3771, 0
        %v3851 = vsel %vm3622, %v3772, 0
        %v3854 = vsel %vm3622, %v3773, 0
        %v3857 = vsel %vm3622, %v3774, 0
        %v3860 = vsel %vm3622, %v3775, 0
        %v3863 = vsel %vm3622, %v3776, 0
        %v3866 = vsel %vm3622, %v3777, 0
        %v3869 = vsel %vm3622, %v3778, 0
        %v3872 = vsel %vm3622, %v3779, 0
        %v3875 = vsel %vm3622, %v3780, 0
        %v3878 = vsel %vm3622, %v3781, 0
        %vm3880 = vcmask 1041408
        %v3882 = vsel %vm3880, %v3783, 0
        %3884 = vmatpush.msra.mxu0 0.0
        %3885 = vmatpush.msra.mxu0 0.0
        %3886 = vmatpush.msra.mxu0 0.0
        %3887 = vmatpush.msra.mxu0 0.0
        %3888 = vmatpush.msra.mxu0 0.0
        %3889 = vmatpush.msra.mxu0 0.0
        %3890 = vmatpush.msra.mxu0 0.0
        %3891 = vmatpush.msra.mxu0 0.0
        %3892 = vmatpush.msra.mxu0 0.0
        %3893 = vmatpush.msra.mxu0 0.0
        %3894 = vmatpush.msra.mxu0 0.0
        %3895 = vmatpush.msra.mxu0 0.0
        %3896 = vmatpush.msra.mxu0 0.0
        %3897 = vmatpush.msra.mxu0 0.0
        %3898 = vmatpush.msra.mxu0 0.0
        %3899 = vmatpush.msra.mxu0 %v3882
        %3900 = vmatmul.f32.gmra.mxu0 %v3785
        %v3901 = vpop.f32.mrf.mxu0
        %v3902 = vadd.f32 0.0, %v3901
        %3903 = vmatmul.f32.gmra.mxu0 %v3788
        %v3904 = vpop.f32.mrf.mxu0
        %v3905 = vadd.f32 0.0, %v3904
        %3906 = vmatmul.f32.gmra.mxu0 %v3791
        %v3907 = vpop.f32.mrf.mxu0
        %v3908 = vadd.f32 0.0, %v3907
        %3909 = vmatmul.f32.gmra.mxu0 %v3794
        %v3910 = vpop.f32.mrf.mxu0
        %v3911 = vadd.f32 0.0, %v3910
        %3912 = vmatmul.f32.gmra.mxu0 %v3797
        %v3913 = vpop.f32.mrf.mxu0
        %v3914 = vadd.f32 0.0, %v3913
        %3915 = vmatmul.f32.gmra.mxu0 %v3800
        %v3916 = vpop.f32.mrf.mxu0
        %v3917 = vadd.f32 0.0, %v3916
        %3918 = vmatmul.f32.gmra.mxu0 %v3803
        %v3919 = vpop.f32.mrf.mxu0
        %v3920 = vadd.f32 0.0, %v3919
        %3921 = vmatmul.f32.gmra.mxu0 %v3806
        %v3922 = vpop.f32.mrf.mxu0
        %v3923 = vadd.f32 0.0, %v3922
        %3924 = vmatmul.f32.gmra.mxu0 %v3809
        %v3925 = vpop.f32.mrf.mxu0
        %v3926 = vadd.f32 0.0, %v3925
        %3927 = vmatmul.f32.gmra.mxu0 %v3812
        %v3928 = vpop.f32.mrf.mxu0
        %v3929 = vadd.f32 0.0, %v3928
        %3930 = vmatmul.f32.gmra.mxu0 %v3815
        %v3931 = vpop.f32.mrf.mxu0
        %v3932 = vadd.f32 0.0, %v3931
        %3933 = vmatmul.f32.gmra.mxu0 %v3818
        %v3934 = vpop.f32.mrf.mxu0
        %v3935 = vadd.f32 0.0, %v3934
        %3936 = vmatmul.f32.gmra.mxu0 %v3821
        %v3937 = vpop.f32.mrf.mxu0
        %v3938 = vadd.f32 0.0, %v3937
        %3939 = vmatmul.f32.gmra.mxu0 %v3824
        %v3940 = vpop.f32.mrf.mxu0
        %v3941 = vadd.f32 0.0, %v3940
        %3942 = vmatmul.f32.gmra.mxu0 %v3827
        %v3943 = vpop.f32.mrf.mxu0
        %v3944 = vadd.f32 0.0, %v3943
        %3945 = vmatmul.f32.gmra.mxu0 %v3830
        %v3946 = vpop.f32.mrf.mxu0
        %v3947 = vadd.f32 0.0, %v3946
        %3948 = vmatmul.f32.gmra.mxu0 %v3833
        %v3949 = vpop.f32.mrf.mxu0
        %v3950 = vadd.f32 0.0, %v3949
        %3951 = vmatmul.f32.gmra.mxu0 %v3836
        %v3952 = vpop.f32.mrf.mxu0
        %v3953 = vadd.f32 0.0, %v3952
        %3954 = vmatmul.f32.gmra.mxu0 %v3839
        %v3955 = vpop.f32.mrf.mxu0
        %v3956 = vadd.f32 0.0, %v3955
        %3957 = vmatmul.f32.gmra.mxu0 %v3842
        %v3958 = vpop.f32.mrf.mxu0
        %v3959 = vadd.f32 0.0, %v3958
        %3960 = vmatmul.f32.gmra.mxu0 %v3845
        %v3961 = vpop.f32.mrf.mxu0
        %v3962 = vadd.f32 0.0, %v3961
        %3963 = vmatmul.f32.gmra.mxu0 %v3848
        %v3964 = vpop.f32.mrf.mxu0
        %v3965 = vadd.f32 0.0, %v3964
        %3966 = vmatmul.f32.gmra.mxu0 %v3851
        %v3967 = vpop.f32.mrf.mxu0
        %v3968 = vadd.f32 0.0, %v3967
        %3969 = vmatmul.f32.gmra.mxu0 %v3854
        %v3970 = vpop.f32.mrf.mxu0
        %v3971 = vadd.f32 0.0, %v3970
        %3972 = vmatmul.f32.gmra.mxu0 %v3857
        %v3973 = vpop.f32.mrf.mxu0
        %v3974 = vadd.f32 0.0, %v3973
        %3975 = vmatmul.f32.gmra.mxu0 %v3860
        %v3976 = vpop.f32.mrf.mxu0
        %v3977 = vadd.f32 0.0, %v3976
        %3978 = vmatmul.f32.gmra.mxu0 %v3863
        %v3979 = vpop.f32.mrf.mxu0
        %v3980 = vadd.f32 0.0, %v3979
        %3981 = vmatmul.f32.gmra.mxu0 %v3866
        %v3982 = vpop.f32.mrf.mxu0
        %v3983 = vadd.f32 0.0, %v3982
        %3984 = vmatmul.f32.gmra.mxu0 %v3869
        %v3985 = vpop.f32.mrf.mxu0
        %v3986 = vadd.f32 0.0, %v3985
        %3987 = vmatmul.f32.gmra.mxu0 %v3872
        %v3988 = vpop.f32.mrf.mxu0
        %v3989 = vadd.f32 0.0, %v3988
        %3990 = vmatmul.f32.gmra.mxu0 %v3875
        %v3991 = vpop.f32.mrf.mxu0
        %v3992 = vadd.f32 0.0, %v3991
        %3993 = vmatmul.f32.gmra.mxu0 %v3878
        %v3994 = vpop.f32.mrf.mxu0
        %v3995 = vadd.f32 0.0, %v3994
        %3996 = vdwg.mxu0
        %v3998 = vsel %vm3622, %v3717, 0
        %v4001 = vsel %vm3622, %v3718, 0
        %v4004 = vsel %vm3622, %v3719, 0
        %v4007 = vsel %vm3622, %v3720, 0
        %v4010 = vsel %vm3622, %v3721, 0
        %v4013 = vsel %vm3622, %v3722, 0
        %v4016 = vsel %vm3622, %v3723, 0
        %v4019 = vsel %vm3622, %v3724, 0
        %v4022 = vsel %vm3622, %v3725, 0
        %v4025 = vsel %vm3622, %v3726, 0
        %v4028 = vsel %vm3622, %v3727, 0
        %v4031 = vsel %vm3622, %v3728, 0
        %v4034 = vsel %vm3622, %v3729, 0
        %v4037 = vsel %vm3622, %v3730, 0
        %v4040 = vsel %vm3622, %v3731, 0
        %v4043 = vsel %vm3622, %v3732, 0
        %v4046 = vsel %vm3622, %v3733, 0
        %v4049 = vsel %vm3622, %v3734, 0
        %v4052 = vsel %vm3622, %v3735, 0
        %v4055 = vsel %vm3622, %v3736, 0
        %v4058 = vsel %vm3622, %v3737, 0
        %v4061 = vsel %vm3622, %v3738, 0
        %v4064 = vsel %vm3622, %v3739, 0
        %v4067 = vsel %vm3622, %v3740, 0
        %v4070 = vsel %vm3622, %v3741, 0
        %v4073 = vsel %vm3622, %v3742, 0
        %v4076 = vsel %vm3622, %v3743, 0
        %v4079 = vsel %vm3622, %v3744, 0
        %v4082 = vsel %vm3622, %v3745, 0
        %v4085 = vsel %vm3622, %v3746, 0
        %v4088 = vsel %vm3622, %v3747, 0
        %v4091 = vsel %vm3622, %v3748, 0
        %v4094 = vsel %vm3880, %v3749, 0
        %4096 = vmatpush.msra.mxu0 0.0
        %4097 = vmatpush.msra.mxu0 0.0
        %4098 = vmatpush.msra.mxu0 0.0
        %4099 = vmatpush.msra.mxu0 0.0
        %4100 = vmatpush.msra.mxu0 0.0
        %4101 = vmatpush.msra.mxu0 0.0
        %4102 = vmatpush.msra.mxu0 0.0
        %4103 = vmatpush.msra.mxu0 0.0
        %4104 = vmatpush.msra.mxu0 0.0
        %4105 = vmatpush.msra.mxu0 0.0
        %4106 = vmatpush.msra.mxu0 0.0
        %4107 = vmatpush.msra.mxu0 0.0
        %4108 = vmatpush.msra.mxu0 0.0
        %4109 = vmatpush.msra.mxu0 0.0
        %4110 = vmatpush.msra.mxu0 0.0
        %4111 = vmatpush.msra.mxu0 %v4094
        %4112 = vmatmul.f32.gmra.mxu0 %v3998
        %v4113 = vpop.f32.mrf.mxu0
        %v4114 = vadd.f32 %v3902, %v4113
        %4115 = vmatmul.f32.gmra.mxu0 %v4001
        %v4116 = vpop.f32.mrf.mxu0
        %v4117 = vadd.f32 %v3905, %v4116
        %4118 = vmatmul.f32.gmra.mxu0 %v4004
        %v4119 = vpop.f32.mrf.mxu0
        %v4120 = vadd.f32 %v3908, %v4119
        %4121 = vmatmul.f32.gmra.mxu0 %v4007
        %v4122 = vpop.f32.mrf.mxu0
        %v4123 = vadd.f32 %v3911, %v4122
        %4124 = vmatmul.f32.gmra.mxu0 %v4010
        %v4125 = vpop.f32.mrf.mxu0
        %v4126 = vadd.f32 %v3914, %v4125
        %4127 = vmatmul.f32.gmra.mxu0 %v4013
        %v4128 = vpop.f32.mrf.mxu0
        %v4129 = vadd.f32 %v3917, %v4128
        %4130 = vmatmul.f32.gmra.mxu0 %v4016
        %v4131 = vpop.f32.mrf.mxu0
        %v4132 = vadd.f32 %v3920, %v4131
        %4133 = vmatmul.f32.gmra.mxu0 %v4019
        %v4134 = vpop.f32.mrf.mxu0
        %v4135 = vadd.f32 %v3923, %v4134
        %4136 = vmatmul.f32.gmra.mxu0 %v4022
        %v4137 = vpop.f32.mrf.mxu0
        %v4138 = vadd.f32 %v3926, %v4137
        %4139 = vmatmul.f32.gmra.mxu0 %v4025
        %v4140 = vpop.f32.mrf.mxu0
        %v4141 = vadd.f32 %v3929, %v4140
        %4142 = vmatmul.f32.gmra.mxu0 %v4028
        %v4143 = vpop.f32.mrf.mxu0
        %v4144 = vadd.f32 %v3932, %v4143
        %4145 = vmatmul.f32.gmra.mxu0 %v4031
        %v4146 = vpop.f32.mrf.mxu0
        %v4147 = vadd.f32 %v3935, %v4146
        %4148 = vmatmul.f32.gmra.mxu0 %v4034
        %v4149 = vpop.f32.mrf.mxu0
        %v4150 = vadd.f32 %v3938, %v4149
        %4151 = vmatmul.f32.gmra.mxu0 %v4037
        %v4152 = vpop.f32.mrf.mxu0
        %v4153 = vadd.f32 %v3941, %v4152
        %4154 = vmatmul.f32.gmra.mxu0 %v4040
        %v4155 = vpop.f32.mrf.mxu0
        %v4156 = vadd.f32 %v3944, %v4155
        %4157 = vmatmul.f32.gmra.mxu0 %v4043
        %v4158 = vpop.f32.mrf.mxu0
        %v4159 = vadd.f32 %v3947, %v4158
        %4160 = vmatmul.f32.gmra.mxu0 %v4046
        %v4161 = vpop.f32.mrf.mxu0
        %v4162 = vadd.f32 %v3950, %v4161
        %4163 = vmatmul.f32.gmra.mxu0 %v4049
        %v4164 = vpop.f32.mrf.mxu0
        %v4165 = vadd.f32 %v3953, %v4164
        %4166 = vmatmul.f32.gmra.mxu0 %v4052
        %v4167 = vpop.f32.mrf.mxu0
        %v4168 = vadd.f32 %v3956, %v4167
        %4169 = vmatmul.f32.gmra.mxu0 %v4055
        %v4170 = vpop.f32.mrf.mxu0
        %v4171 = vadd.f32 %v3959, %v4170
        %4172 = vmatmul.f32.gmra.mxu0 %v4058
        %v4173 = vpop.f32.mrf.mxu0
        %v4174 = vadd.f32 %v3962, %v4173
        %4175 = vmatmul.f32.gmra.mxu0 %v4061
        %v4176 = vpop.f32.mrf.mxu0
        %v4177 = vadd.f32 %v3965, %v4176
        %4178 = vmatmul.f32.gmra.mxu0 %v4064
        %v4179 = vpop.f32.mrf.mxu0
        %v4180 = vadd.f32 %v3968, %v4179
        %4181 = vmatmul.f32.gmra.mxu0 %v4067
        %v4182 = vpop.f32.mrf.mxu0
        %v4183 = vadd.f32 %v3971, %v4182
        %4184 = vmatmul.f32.gmra.mxu0 %v4070
        %v4185 = vpop.f32.mrf.mxu0
        %v4186 = vadd.f32 %v3974, %v4185
        %4187 = vmatmul.f32.gmra.mxu0 %v4073
        %v4188 = vpop.f32.mrf.mxu0
        %v4189 = vadd.f32 %v3977, %v4188
        %4190 = vmatmul.f32.gmra.mxu0 %v4076
        %v4191 = vpop.f32.mrf.mxu0
        %v4192 = vadd.f32 %v3980, %v4191
        %4193 = vmatmul.f32.gmra.mxu0 %v4079
        %v4194 = vpop.f32.mrf.mxu0
        %v4195 = vadd.f32 %v3983, %v4194
        %4196 = vmatmul.f32.gmra.mxu0 %v4082
        %v4197 = vpop.f32.mrf.mxu0
        %v4198 = vadd.f32 %v3986, %v4197
        %4199 = vmatmul.f32.gmra.mxu0 %v4085
        %v4200 = vpop.f32.mrf.mxu0
        %v4201 = vadd.f32 %v3989, %v4200
        %4202 = vmatmul.f32.gmra.mxu0 %v4088
        %v4203 = vpop.f32.mrf.mxu0
        %v4204 = vadd.f32 %v3992, %v4203
        %4205 = vmatmul.f32.gmra.mxu0 %v4091
        %v4206 = vpop.f32.mrf.mxu0
        %v4207 = vadd.f32 %v3995, %v4206
        %4208 = vdwg.mxu0
        %v4209 = vld [vmem:[#allocation3 + $0x2] sm:$0xff]
        %v4210 = vld [vmem:[#allocation3 + $0xa] sm:$0xff]
        %v4211 = vld [vmem:[#allocation3 + $0x1a] sm:$0xff]
        %v4212 = vld [vmem:[#allocation3 + $0x22] sm:$0xff]
        %v4213 = vld [vmem:[#allocation3 + $0x32] sm:$0xff]
        %v4214 = vld [vmem:[#allocation3 + $0x3a] sm:$0xff]
        %v4215 = vld [vmem:[#allocation3 + $0x4a] sm:$0xff]
        %v4216 = vld [vmem:[#allocation3 + $0x52] sm:$0xff]
        %v4217 = vld [vmem:[#allocation3 + $0x62] sm:$0xff]
        %v4218 = vld [vmem:[#allocation3 + $0x6a] sm:$0xff]
        %v4219 = vld [vmem:[#allocation3 + $0x7a] sm:$0xff]
        %v4220 = vld [vmem:[#allocation3 + $0x82] sm:$0xff]
        %v4221 = vld [vmem:[#allocation3 + $0x92] sm:$0xff]
        %v4222 = vld [vmem:[#allocation3 + $0x9a] sm:$0xff]
        %v4223 = vld [vmem:[#allocation3 + $0xaa] sm:$0xff]
        %v4224 = vld [vmem:[#allocation3 + $0xb2] sm:$0xff]
        %v4225 = vld [vmem:[#allocation3 + $0xc2] sm:$0xff]
        %v4226 = vld [vmem:[#allocation3 + $0xca] sm:$0xff]
        %v4227 = vld [vmem:[#allocation3 + $0xda] sm:$0xff]
        %v4228 = vld [vmem:[#allocation3 + $0xe2] sm:$0xff]
        %v4229 = vld [vmem:[#allocation3 + $0xf2] sm:$0xff]
        %v4230 = vld [vmem:[#allocation3 + $0xfa] sm:$0xff]
        %v4231 = vld [vmem:[#allocation3 + $0x10a] sm:$0xff]
        %v4232 = vld [vmem:[#allocation3 + $0x112] sm:$0xff]
        %v4233 = vld [vmem:[#allocation3 + $0x122] sm:$0xff]
        %v4234 = vld [vmem:[#allocation3 + $0x12a] sm:$0xff]
        %v4235 = vld [vmem:[#allocation3 + $0x13a] sm:$0xff]
        %v4236 = vld [vmem:[#allocation3 + $0x142] sm:$0xff]
        %v4237 = vld [vmem:[#allocation3 + $0x152] sm:$0xff]
        %v4238 = vld [vmem:[#allocation3 + $0x15a] sm:$0xff]
        %v4239 = vld [vmem:[#allocation3 + $0x16a] sm:$0xff]
        %v4240 = vld [vmem:[#allocation3 + $0x172] sm:$0xff]
        %s4241 = scalar_lea.vmem %s9, 4
        %v4242 = vld [vmem:[%s4241] sm:$0x3]
        %v4244 = vsel %vm3622, %v4209, 0
        %v4247 = vsel %vm3622, %v4210, 0
        %v4250 = vsel %vm3622, %v4211, 0
        %v4253 = vsel %vm3622, %v4212, 0
        %v4256 = vsel %vm3622, %v4213, 0
        %v4259 = vsel %vm3622, %v4214, 0
        %v4262 = vsel %vm3622, %v4215, 0
        %v4265 = vsel %vm3622, %v4216, 0
        %v4268 = vsel %vm3622, %v4217, 0
        %v4271 = vsel %vm3622, %v4218, 0
        %v4274 = vsel %vm3622, %v4219, 0
        %v4277 = vsel %vm3622, %v4220, 0
        %v4280 = vsel %vm3622, %v4221, 0
        %v4283 = vsel %vm3622, %v4222, 0
        %v4286 = vsel %vm3622, %v4223, 0
        %v4289 = vsel %vm3622, %v4224, 0
        %v4292 = vsel %vm3622, %v4225, 0
        %v4295 = vsel %vm3622, %v4226, 0
        %v4298 = vsel %vm3622, %v4227, 0
        %v4301 = vsel %vm3622, %v4228, 0
        %v4304 = vsel %vm3622, %v4229, 0
        %v4307 = vsel %vm3622, %v4230, 0
        %v4310 = vsel %vm3622, %v4231, 0
        %v4313 = vsel %vm3622, %v4232, 0
        %v4316 = vsel %vm3622, %v4233, 0
        %v4319 = vsel %vm3622, %v4234, 0
        %v4322 = vsel %vm3622, %v4235, 0
        %v4325 = vsel %vm3622, %v4236, 0
        %v4328 = vsel %vm3622, %v4237, 0
        %v4331 = vsel %vm3622, %v4238, 0
        %v4334 = vsel %vm3622, %v4239, 0
        %v4337 = vsel %vm3622, %v4240, 0
        %v4340 = vsel %vm3880, %v4242, 0
        %4342 = vmatpush.msra.mxu0 0.0
        %4343 = vmatpush.msra.mxu0 0.0
        %4344 = vmatpush.msra.mxu0 0.0
        %4345 = vmatpush.msra.mxu0 0.0
        %4346 = vmatpush.msra.mxu0 0.0
        %4347 = vmatpush.msra.mxu0 0.0
        %4348 = vmatpush.msra.mxu0 0.0
        %4349 = vmatpush.msra.mxu0 0.0
        %4350 = vmatpush.msra.mxu0 0.0
        %4351 = vmatpush.msra.mxu0 0.0
        %4352 = vmatpush.msra.mxu0 0.0
        %4353 = vmatpush.msra.mxu0 0.0
        %4354 = vmatpush.msra.mxu0 0.0
        %4355 = vmatpush.msra.mxu0 0.0
        %4356 = vmatpush.msra.mxu0 0.0
        %4357 = vmatpush.msra.mxu0 %v4340
        %4358 = vmatmul.f32.gmra.mxu0 %v4244
        %v4359 = vpop.f32.mrf.mxu0
        %v4360 = vadd.f32 0.0, %v4359
        %4361 = vmatmul.f32.gmra.mxu0 %v4247
        %v4362 = vpop.f32.mrf.mxu0
        %v4363 = vadd.f32 0.0, %v4362
        %4364 = vmatmul.f32.gmra.mxu0 %v4250
        %v4365 = vpop.f32.mrf.mxu0
        %v4366 = vadd.f32 0.0, %v4365
        %4367 = vmatmul.f32.gmra.mxu0 %v4253
        %v4368 = vpop.f32.mrf.mxu0
        %v4369 = vadd.f32 0.0, %v4368
        %4370 = vmatmul.f32.gmra.mxu0 %v4256
        %v4371 = vpop.f32.mrf.mxu0
        %v4372 = vadd.f32 0.0, %v4371
        %4373 = vmatmul.f32.gmra.mxu0 %v4259
        %v4374 = vpop.f32.mrf.mxu0
        %v4375 = vadd.f32 0.0, %v4374
        %4376 = vmatmul.f32.gmra.mxu0 %v4262
        %v4377 = vpop.f32.mrf.mxu0
        %v4378 = vadd.f32 0.0, %v4377
        %4379 = vmatmul.f32.gmra.mxu0 %v4265
        %v4380 = vpop.f32.mrf.mxu0
        %v4381 = vadd.f32 0.0, %v4380
        %4382 = vmatmul.f32.gmra.mxu0 %v4268
        %v4383 = vpop.f32.mrf.mxu0
        %v4384 = vadd.f32 0.0, %v4383
        %4385 = vmatmul.f32.gmra.mxu0 %v4271
        %v4386 = vpop.f32.mrf.mxu0
        %v4387 = vadd.f32 0.0, %v4386
        %4388 = vmatmul.f32.gmra.mxu0 %v4274
        %v4389 = vpop.f32.mrf.mxu0
        %v4390 = vadd.f32 0.0, %v4389
        %4391 = vmatmul.f32.gmra.mxu0 %v4277
        %v4392 = vpop.f32.mrf.mxu0
        %v4393 = vadd.f32 0.0, %v4392
        %4394 = vmatmul.f32.gmra.mxu0 %v4280
        %v4395 = vpop.f32.mrf.mxu0
        %v4396 = vadd.f32 0.0, %v4395
        %4397 = vmatmul.f32.gmra.mxu0 %v4283
        %v4398 = vpop.f32.mrf.mxu0
        %v4399 = vadd.f32 0.0, %v4398
        %4400 = vmatmul.f32.gmra.mxu0 %v4286
        %v4401 = vpop.f32.mrf.mxu0
        %v4402 = vadd.f32 0.0, %v4401
        %4403 = vmatmul.f32.gmra.mxu0 %v4289
        %v4404 = vpop.f32.mrf.mxu0
        %v4405 = vadd.f32 0.0, %v4404
        %4406 = vmatmul.f32.gmra.mxu0 %v4292
        %v4407 = vpop.f32.mrf.mxu0
        %v4408 = vadd.f32 0.0, %v4407
        %4409 = vmatmul.f32.gmra.mxu0 %v4295
        %v4410 = vpop.f32.mrf.mxu0
        %v4411 = vadd.f32 0.0, %v4410
        %4412 = vmatmul.f32.gmra.mxu0 %v4298
        %v4413 = vpop.f32.mrf.mxu0
        %v4414 = vadd.f32 0.0, %v4413
        %4415 = vmatmul.f32.gmra.mxu0 %v4301
        %v4416 = vpop.f32.mrf.mxu0
        %v4417 = vadd.f32 0.0, %v4416
        %4418 = vmatmul.f32.gmra.mxu0 %v4304
        %v4419 = vpop.f32.mrf.mxu0
        %v4420 = vadd.f32 0.0, %v4419
        %4421 = vmatmul.f32.gmra.mxu0 %v4307
        %v4422 = vpop.f32.mrf.mxu0
        %v4423 = vadd.f32 0.0, %v4422
        %4424 = vmatmul.f32.gmra.mxu0 %v4310
        %v4425 = vpop.f32.mrf.mxu0
        %v4426 = vadd.f32 0.0, %v4425
        %4427 = vmatmul.f32.gmra.mxu0 %v4313
        %v4428 = vpop.f32.mrf.mxu0
        %v4429 = vadd.f32 0.0, %v4428
        %4430 = vmatmul.f32.gmra.mxu0 %v4316
        %v4431 = vpop.f32.mrf.mxu0
        %v4432 = vadd.f32 0.0, %v4431
        %4433 = vmatmul.f32.gmra.mxu0 %v4319
        %v4434 = vpop.f32.mrf.mxu0
        %v4435 = vadd.f32 0.0, %v4434
        %4436 = vmatmul.f32.gmra.mxu0 %v4322
        %v4437 = vpop.f32.mrf.mxu0
        %v4438 = vadd.f32 0.0, %v4437
        %4439 = vmatmul.f32.gmra.mxu0 %v4325
        %v4440 = vpop.f32.mrf.mxu0
        %v4441 = vadd.f32 0.0, %v4440
        %4442 = vmatmul.f32.gmra.mxu0 %v4328
        %v4443 = vpop.f32.mrf.mxu0
        %v4444 = vadd.f32 0.0, %v4443
        %4445 = vmatmul.f32.gmra.mxu0 %v4331
        %v4446 = vpop.f32.mrf.mxu0
        %v4447 = vadd.f32 0.0, %v4446
        %4448 = vmatmul.f32.gmra.mxu0 %v4334
        %v4449 = vpop.f32.mrf.mxu0
        %v4450 = vadd.f32 0.0, %v4449
        %4451 = vmatmul.f32.gmra.mxu0 %v4337
        %v4452 = vpop.f32.mrf.mxu0
        %v4453 = vadd.f32 0.0, %v4452
        %4454 = vdwg.mxu0
        %v4455 = vadd.f32 %v4114, %v4360
        %v4456 = vadd.f32 %v4117, %v4363
        %v4457 = vadd.f32 %v4120, %v4366
        %v4458 = vadd.f32 %v4123, %v4369
        %v4459 = vadd.f32 %v4126, %v4372
        %v4460 = vadd.f32 %v4129, %v4375
        %v4461 = vadd.f32 %v4132, %v4378
        %v4462 = vadd.f32 %v4135, %v4381
        %v4463 = vadd.f32 %v4138, %v4384
        %v4464 = vadd.f32 %v4141, %v4387
        %v4465 = vadd.f32 %v4144, %v4390
        %v4466 = vadd.f32 %v4147, %v4393
        %v4467 = vadd.f32 %v4150, %v4396
        %v4468 = vadd.f32 %v4153, %v4399
        %v4469 = vadd.f32 %v4156, %v4402
        %v4470 = vadd.f32 %v4159, %v4405
        %v4471 = vadd.f32 %v4162, %v4408
        %v4472 = vadd.f32 %v4165, %v4411
        %v4473 = vadd.f32 %v4168, %v4414
        %v4474 = vadd.f32 %v4171, %v4417
        %v4475 = vadd.f32 %v4174, %v4420
        %v4476 = vadd.f32 %v4177, %v4423
        %v4477 = vadd.f32 %v4180, %v4426
        %v4478 = vadd.f32 %v4183, %v4429
        %v4479 = vadd.f32 %v4186, %v4432
        %v4480 = vadd.f32 %v4189, %v4435
        %v4481 = vadd.f32 %v4192, %v4438
        %v4482 = vadd.f32 %v4195, %v4441
        %v4483 = vadd.f32 %v4198, %v4444
        %v4484 = vadd.f32 %v4201, %v4447
        %v4485 = vadd.f32 %v4204, %v4450
        %v4486 = vadd.f32 %v4207, %v4453
        %v4487 = vld [vmem:[#allocation3 + $0x3] sm:$0xff]
        %v4488 = vld [vmem:[#allocation3 + $0xb] sm:$0xff]
        %v4489 = vld [vmem:[#allocation3 + $0x1b] sm:$0xff]
        %v4490 = vld [vmem:[#allocation3 + $0x23] sm:$0xff]
        %v4491 = vld [vmem:[#allocation3 + $0x33] sm:$0xff]
        %v4492 = vld [vmem:[#allocation3 + $0x3b] sm:$0xff]
        %v4493 = vld [vmem:[#allocation3 + $0x4b] sm:$0xff]
        %v4494 = vld [vmem:[#allocation3 + $0x53] sm:$0xff]
        %v4495 = vld [vmem:[#allocation3 + $0x63] sm:$0xff]
        %v4496 = vld [vmem:[#allocation3 + $0x6b] sm:$0xff]
        %v4497 = vld [vmem:[#allocation3 + $0x7b] sm:$0xff]
        %v4498 = vld [vmem:[#allocation3 + $0x83] sm:$0xff]
        %v4499 = vld [vmem:[#allocation3 + $0x93] sm:$0xff]
        %v4500 = vld [vmem:[#allocation3 + $0x9b] sm:$0xff]
        %v4501 = vld [vmem:[#allocation3 + $0xab] sm:$0xff]
        %v4502 = vld [vmem:[#allocation3 + $0xb3] sm:$0xff]
        %v4503 = vld [vmem:[#allocation3 + $0xc3] sm:$0xff]
        %v4504 = vld [vmem:[#allocation3 + $0xcb] sm:$0xff]
        %v4505 = vld [vmem:[#allocation3 + $0xdb] sm:$0xff]
        %v4506 = vld [vmem:[#allocation3 + $0xe3] sm:$0xff]
        %v4507 = vld [vmem:[#allocation3 + $0xf3] sm:$0xff]
        %v4508 = vld [vmem:[#allocation3 + $0xfb] sm:$0xff]
        %v4509 = vld [vmem:[#allocation3 + $0x10b] sm:$0xff]
        %v4510 = vld [vmem:[#allocation3 + $0x113] sm:$0xff]
        %v4511 = vld [vmem:[#allocation3 + $0x123] sm:$0xff]
        %v4512 = vld [vmem:[#allocation3 + $0x12b] sm:$0xff]
        %v4513 = vld [vmem:[#allocation3 + $0x13b] sm:$0xff]
        %v4514 = vld [vmem:[#allocation3 + $0x143] sm:$0xff]
        %v4515 = vld [vmem:[#allocation3 + $0x153] sm:$0xff]
        %v4516 = vld [vmem:[#allocation3 + $0x15b] sm:$0xff]
        %v4517 = vld [vmem:[#allocation3 + $0x16b] sm:$0xff]
        %v4518 = vld [vmem:[#allocation3 + $0x173] sm:$0xff]
        %s4519 = scalar_lea.vmem %s9, 6
        %v4520 = vld [vmem:[%s4519] sm:$0x3]
        %v4522 = vsel %vm3622, %v4487, 0
        %v4525 = vsel %vm3622, %v4488, 0
        %v4528 = vsel %vm3622, %v4489, 0
        %v4531 = vsel %vm3622, %v4490, 0
        %v4534 = vsel %vm3622, %v4491, 0
        %v4537 = vsel %vm3622, %v4492, 0
        %v4540 = vsel %vm3622, %v4493, 0
        %v4543 = vsel %vm3622, %v4494, 0
        %v4546 = vsel %vm3622, %v4495, 0
        %v4549 = vsel %vm3622, %v4496, 0
        %v4552 = vsel %vm3622, %v4497, 0
        %v4555 = vsel %vm3622, %v4498, 0
        %v4558 = vsel %vm3622, %v4499, 0
        %v4561 = vsel %vm3622, %v4500, 0
        %v4564 = vsel %vm3622, %v4501, 0
        %v4567 = vsel %vm3622, %v4502, 0
        %v4570 = vsel %vm3622, %v4503, 0
        %v4573 = vsel %vm3622, %v4504, 0
        %v4576 = vsel %vm3622, %v4505, 0
        %v4579 = vsel %vm3622, %v4506, 0
        %v4582 = vsel %vm3622, %v4507, 0
        %v4585 = vsel %vm3622, %v4508, 0
        %v4588 = vsel %vm3622, %v4509, 0
        %v4591 = vsel %vm3622, %v4510, 0
        %v4594 = vsel %vm3622, %v4511, 0
        %v4597 = vsel %vm3622, %v4512, 0
        %v4600 = vsel %vm3622, %v4513, 0
        %v4603 = vsel %vm3622, %v4514, 0
        %v4606 = vsel %vm3622, %v4515, 0
        %v4609 = vsel %vm3622, %v4516, 0
        %v4612 = vsel %vm3622, %v4517, 0
        %v4615 = vsel %vm3622, %v4518, 0
        %v4618 = vsel %vm3880, %v4520, 0
        %4620 = vmatpush.msra.mxu0 0.0
        %4621 = vmatpush.msra.mxu0 0.0
        %4622 = vmatpush.msra.mxu0 0.0
        %4623 = vmatpush.msra.mxu0 0.0
        %4624 = vmatpush.msra.mxu0 0.0
        %4625 = vmatpush.msra.mxu0 0.0
        %4626 = vmatpush.msra.mxu0 0.0
        %4627 = vmatpush.msra.mxu0 0.0
        %4628 = vmatpush.msra.mxu0 0.0
        %4629 = vmatpush.msra.mxu0 0.0
        %4630 = vmatpush.msra.mxu0 0.0
        %4631 = vmatpush.msra.mxu0 0.0
        %4632 = vmatpush.msra.mxu0 0.0
        %4633 = vmatpush.msra.mxu0 0.0
        %4634 = vmatpush.msra.mxu0 0.0
        %4635 = vmatpush.msra.mxu0 %v4618
        %4636 = vmatmul.f32.gmra.mxu0 %v4522
        %v4637 = vpop.f32.mrf.mxu0
        %v4638 = vadd.f32 0.0, %v4637
        %4639 = vmatmul.f32.gmra.mxu0 %v4525
        %v4640 = vpop.f32.mrf.mxu0
        %v4641 = vadd.f32 0.0, %v4640
        %4642 = vmatmul.f32.gmra.mxu0 %v4528
        %v4643 = vpop.f32.mrf.mxu0
        %v4644 = vadd.f32 0.0, %v4643
        %4645 = vmatmul.f32.gmra.mxu0 %v4531
        %v4646 = vpop.f32.mrf.mxu0
        %v4647 = vadd.f32 0.0, %v4646
        %4648 = vmatmul.f32.gmra.mxu0 %v4534
        %v4649 = vpop.f32.mrf.mxu0
        %v4650 = vadd.f32 0.0, %v4649
        %4651 = vmatmul.f32.gmra.mxu0 %v4537
        %v4652 = vpop.f32.mrf.mxu0
        %v4653 = vadd.f32 0.0, %v4652
        %4654 = vmatmul.f32.gmra.mxu0 %v4540
        %v4655 = vpop.f32.mrf.mxu0
        %v4656 = vadd.f32 0.0, %v4655
        %4657 = vmatmul.f32.gmra.mxu0 %v4543
        %v4658 = vpop.f32.mrf.mxu0
        %v4659 = vadd.f32 0.0, %v4658
        %4660 = vmatmul.f32.gmra.mxu0 %v4546
        %v4661 = vpop.f32.mrf.mxu0
        %v4662 = vadd.f32 0.0, %v4661
        %4663 = vmatmul.f32.gmra.mxu0 %v4549
        %v4664 = vpop.f32.mrf.mxu0
        %v4665 = vadd.f32 0.0, %v4664
        %4666 = vmatmul.f32.gmra.mxu0 %v4552
        %v4667 = vpop.f32.mrf.mxu0
        %v4668 = vadd.f32 0.0, %v4667
        %4669 = vmatmul.f32.gmra.mxu0 %v4555
        %v4670 = vpop.f32.mrf.mxu0
        %v4671 = vadd.f32 0.0, %v4670
        %4672 = vmatmul.f32.gmra.mxu0 %v4558
        %v4673 = vpop.f32.mrf.mxu0
        %v4674 = vadd.f32 0.0, %v4673
        %4675 = vmatmul.f32.gmra.mxu0 %v4561
        %v4676 = vpop.f32.mrf.mxu0
        %v4677 = vadd.f32 0.0, %v4676
        %4678 = vmatmul.f32.gmra.mxu0 %v4564
        %v4679 = vpop.f32.mrf.mxu0
        %v4680 = vadd.f32 0.0, %v4679
        %4681 = vmatmul.f32.gmra.mxu0 %v4567
        %v4682 = vpop.f32.mrf.mxu0
        %v4683 = vadd.f32 0.0, %v4682
        %4684 = vmatmul.f32.gmra.mxu0 %v4570
        %v4685 = vpop.f32.mrf.mxu0
        %v4686 = vadd.f32 0.0, %v4685
        %4687 = vmatmul.f32.gmra.mxu0 %v4573
        %v4688 = vpop.f32.mrf.mxu0
        %v4689 = vadd.f32 0.0, %v4688
        %4690 = vmatmul.f32.gmra.mxu0 %v4576
        %v4691 = vpop.f32.mrf.mxu0
        %v4692 = vadd.f32 0.0, %v4691
        %4693 = vmatmul.f32.gmra.mxu0 %v4579
        %v4694 = vpop.f32.mrf.mxu0
        %v4695 = vadd.f32 0.0, %v4694
        %4696 = vmatmul.f32.gmra.mxu0 %v4582
        %v4697 = vpop.f32.mrf.mxu0
        %v4698 = vadd.f32 0.0, %v4697
        %4699 = vmatmul.f32.gmra.mxu0 %v4585
        %v4700 = vpop.f32.mrf.mxu0
        %v4701 = vadd.f32 0.0, %v4700
        %4702 = vmatmul.f32.gmra.mxu0 %v4588
        %v4703 = vpop.f32.mrf.mxu0
        %v4704 = vadd.f32 0.0, %v4703
        %4705 = vmatmul.f32.gmra.mxu0 %v4591
        %v4706 = vpop.f32.mrf.mxu0
        %v4707 = vadd.f32 0.0, %v4706
        %4708 = vmatmul.f32.gmra.mxu0 %v4594
        %v4709 = vpop.f32.mrf.mxu0
        %v4710 = vadd.f32 0.0, %v4709
        %4711 = vmatmul.f32.gmra.mxu0 %v4597
        %v4712 = vpop.f32.mrf.mxu0
        %v4713 = vadd.f32 0.0, %v4712
        %4714 = vmatmul.f32.gmra.mxu0 %v4600
        %v4715 = vpop.f32.mrf.mxu0
        %v4716 = vadd.f32 0.0, %v4715
        %4717 = vmatmul.f32.gmra.mxu0 %v4603
        %v4718 = vpop.f32.mrf.mxu0
        %v4719 = vadd.f32 0.0, %v4718
        %4720 = vmatmul.f32.gmra.mxu0 %v4606
        %v4721 = vpop.f32.mrf.mxu0
        %v4722 = vadd.f32 0.0, %v4721
        %4723 = vmatmul.f32.gmra.mxu0 %v4609
        %v4724 = vpop.f32.mrf.mxu0
        %v4725 = vadd.f32 0.0, %v4724
        %4726 = vmatmul.f32.gmra.mxu0 %v4612
        %v4727 = vpop.f32.mrf.mxu0
        %v4728 = vadd.f32 0.0, %v4727
        %4729 = vmatmul.f32.gmra.mxu0 %v4615
        %v4730 = vpop.f32.mrf.mxu0
        %v4731 = vadd.f32 0.0, %v4730
        %4732 = vdwg.mxu0
        %v4733 = vadd.f32 %v4455, %v4638
        %v4734 = vadd.f32 %v4456, %v4641
        %v4735 = vadd.f32 %v4457, %v4644
        %v4736 = vadd.f32 %v4458, %v4647
        %v4737 = vadd.f32 %v4459, %v4650
        %v4738 = vadd.f32 %v4460, %v4653
        %v4739 = vadd.f32 %v4461, %v4656
        %v4740 = vadd.f32 %v4462, %v4659
        %v4741 = vadd.f32 %v4463, %v4662
        %v4742 = vadd.f32 %v4464, %v4665
        %v4743 = vadd.f32 %v4465, %v4668
        %v4744 = vadd.f32 %v4466, %v4671
        %v4745 = vadd.f32 %v4467, %v4674
        %v4746 = vadd.f32 %v4468, %v4677
        %v4747 = vadd.f32 %v4469, %v4680
        %v4748 = vadd.f32 %v4470, %v4683
        %v4749 = vadd.f32 %v4471, %v4686
        %v4750 = vadd.f32 %v4472, %v4689
        %v4751 = vadd.f32 %v4473, %v4692
        %v4752 = vadd.f32 %v4474, %v4695
        %v4753 = vadd.f32 %v4475, %v4698
        %v4754 = vadd.f32 %v4476, %v4701
        %v4755 = vadd.f32 %v4477, %v4704
        %v4756 = vadd.f32 %v4478, %v4707
        %v4757 = vadd.f32 %v4479, %v4710
        %v4758 = vadd.f32 %v4480, %v4713
        %v4759 = vadd.f32 %v4481, %v4716
        %v4760 = vadd.f32 %v4482, %v4719
        %v4761 = vadd.f32 %v4483, %v4722
        %v4762 = vadd.f32 %v4484, %v4725
        %v4763 = vadd.f32 %v4485, %v4728
        %v4764 = vadd.f32 %v4486, %v4731
        %v4765 = vld [vmem:[#allocation3 + $0x4] sm:$0xff]
        %v4766 = vld [vmem:[#allocation3 + $0xc] sm:$0xff]
        %v4767 = vld [vmem:[#allocation3 + $0x1c] sm:$0xff]
        %v4768 = vld [vmem:[#allocation3 + $0x24] sm:$0xff]
        %v4769 = vld [vmem:[#allocation3 + $0x34] sm:$0xff]
        %v4770 = vld [vmem:[#allocation3 + $0x3c] sm:$0xff]
        %v4771 = vld [vmem:[#allocation3 + $0x4c] sm:$0xff]
        %v4772 = vld [vmem:[#allocation3 + $0x54] sm:$0xff]
        %v4773 = vld [vmem:[#allocation3 + $0x64] sm:$0xff]
        %v4774 = vld [vmem:[#allocation3 + $0x6c] sm:$0xff]
        %v4775 = vld [vmem:[#allocation3 + $0x7c] sm:$0xff]
        %v4776 = vld [vmem:[#allocation3 + $0x84] sm:$0xff]
        %v4777 = vld [vmem:[#allocation3 + $0x94] sm:$0xff]
        %v4778 = vld [vmem:[#allocation3 + $0x9c] sm:$0xff]
        %v4779 = vld [vmem:[#allocation3 + $0xac] sm:$0xff]
        %v4780 = vld [vmem:[#allocation3 + $0xb4] sm:$0xff]
        %v4781 = vld [vmem:[#allocation3 + $0xc4] sm:$0xff]
        %v4782 = vld [vmem:[#allocation3 + $0xcc] sm:$0xff]
        %v4783 = vld [vmem:[#allocation3 + $0xdc] sm:$0xff]
        %v4784 = vld [vmem:[#allocation3 + $0xe4] sm:$0xff]
        %v4785 = vld [vmem:[#allocation3 + $0xf4] sm:$0xff]
        %v4786 = vld [vmem:[#allocation3 + $0xfc] sm:$0xff]
        %v4787 = vld [vmem:[#allocation3 + $0x10c] sm:$0xff]
        %v4788 = vld [vmem:[#allocation3 + $0x114] sm:$0xff]
        %v4789 = vld [vmem:[#allocation3 + $0x124] sm:$0xff]
        %v4790 = vld [vmem:[#allocation3 + $0x12c] sm:$0xff]
        %v4791 = vld [vmem:[#allocation3 + $0x13c] sm:$0xff]
        %v4792 = vld [vmem:[#allocation3 + $0x144] sm:$0xff]
        %v4793 = vld [vmem:[#allocation3 + $0x154] sm:$0xff]
        %v4794 = vld [vmem:[#allocation3 + $0x15c] sm:$0xff]
        %v4795 = vld [vmem:[#allocation3 + $0x16c] sm:$0xff]
        %v4796 = vld [vmem:[#allocation3 + $0x174] sm:$0xff]
        %s4797 = scalar_lea.vmem %s9, 8
        %v4798 = vld [vmem:[%s4797] sm:$0x3]
        %v4800 = vsel %vm3622, %v4765, 0
        %v4803 = vsel %vm3622, %v4766, 0
        %v4806 = vsel %vm3622, %v4767, 0
        %v4809 = vsel %vm3622, %v4768, 0
        %v4812 = vsel %vm3622, %v4769, 0
        %v4815 = vsel %vm3622, %v4770, 0
        %v4818 = vsel %vm3622, %v4771, 0
        %v4821 = vsel %vm3622, %v4772, 0
        %v4824 = vsel %vm3622, %v4773, 0
        %v4827 = vsel %vm3622, %v4774, 0
        %v4830 = vsel %vm3622, %v4775, 0
        %v4833 = vsel %vm3622, %v4776, 0
        %v4836 = vsel %vm3622, %v4777, 0
        %v4839 = vsel %vm3622, %v4778, 0
        %v4842 = vsel %vm3622, %v4779, 0
        %v4845 = vsel %vm3622, %v4780, 0
        %v4848 = vsel %vm3622, %v4781, 0
        %v4851 = vsel %vm3622, %v4782, 0
        %v4854 = vsel %vm3622, %v4783, 0
        %v4857 = vsel %vm3622, %v4784, 0
        %v4860 = vsel %vm3622, %v4785, 0
        %v4863 = vsel %vm3622, %v4786, 0
        %v4866 = vsel %vm3622, %v4787, 0
        %v4869 = vsel %vm3622, %v4788, 0
        %v4872 = vsel %vm3622, %v4789, 0
        %v4875 = vsel %vm3622, %v4790, 0
        %v4878 = vsel %vm3622, %v4791, 0
        %v4881 = vsel %vm3622, %v4792, 0
        %v4884 = vsel %vm3622, %v4793, 0
        %v4887 = vsel %vm3622, %v4794, 0
        %v4890 = vsel %vm3622, %v4795, 0
        %v4893 = vsel %vm3622, %v4796, 0
        %v4896 = vsel %vm3880, %v4798, 0
        %4898 = vmatpush.msra.mxu0 0.0
        %4899 = vmatpush.msra.mxu0 0.0
        %4900 = vmatpush.msra.mxu0 0.0
        %4901 = vmatpush.msra.mxu0 0.0
        %4902 = vmatpush.msra.mxu0 0.0
        %4903 = vmatpush.msra.mxu0 0.0
        %4904 = vmatpush.msra.mxu0 0.0
        %4905 = vmatpush.msra.mxu0 0.0
        %4906 = vmatpush.msra.mxu0 0.0
        %4907 = vmatpush.msra.mxu0 0.0
        %4908 = vmatpush.msra.mxu0 0.0
        %4909 = vmatpush.msra.mxu0 0.0
        %4910 = vmatpush.msra.mxu0 0.0
        %4911 = vmatpush.msra.mxu0 0.0
        %4912 = vmatpush.msra.mxu0 0.0
        %4913 = vmatpush.msra.mxu0 %v4896
        %4914 = vmatmul.f32.gmra.mxu0 %v4800
        %v4915 = vpop.f32.mrf.mxu0
        %v4916 = vadd.f32 0.0, %v4915
        %4917 = vmatmul.f32.gmra.mxu0 %v4803
        %v4918 = vpop.f32.mrf.mxu0
        %v4919 = vadd.f32 0.0, %v4918
        %4920 = vmatmul.f32.gmra.mxu0 %v4806
        %v4921 = vpop.f32.mrf.mxu0
        %v4922 = vadd.f32 0.0, %v4921
        %4923 = vmatmul.f32.gmra.mxu0 %v4809
        %v4924 = vpop.f32.mrf.mxu0
        %v4925 = vadd.f32 0.0, %v4924
        %4926 = vmatmul.f32.gmra.mxu0 %v4812
        %v4927 = vpop.f32.mrf.mxu0
        %v4928 = vadd.f32 0.0, %v4927
        %4929 = vmatmul.f32.gmra.mxu0 %v4815
        %v4930 = vpop.f32.mrf.mxu0
        %v4931 = vadd.f32 0.0, %v4930
        %4932 = vmatmul.f32.gmra.mxu0 %v4818
        %v4933 = vpop.f32.mrf.mxu0
        %v4934 = vadd.f32 0.0, %v4933
        %4935 = vmatmul.f32.gmra.mxu0 %v4821
        %v4936 = vpop.f32.mrf.mxu0
        %v4937 = vadd.f32 0.0, %v4936
        %4938 = vmatmul.f32.gmra.mxu0 %v4824
        %v4939 = vpop.f32.mrf.mxu0
        %v4940 = vadd.f32 0.0, %v4939
        %4941 = vmatmul.f32.gmra.mxu0 %v4827
        %v4942 = vpop.f32.mrf.mxu0
        %v4943 = vadd.f32 0.0, %v4942
        %4944 = vmatmul.f32.gmra.mxu0 %v4830
        %v4945 = vpop.f32.mrf.mxu0
        %v4946 = vadd.f32 0.0, %v4945
        %4947 = vmatmul.f32.gmra.mxu0 %v4833
        %v4948 = vpop.f32.mrf.mxu0
        %v4949 = vadd.f32 0.0, %v4948
        %4950 = vmatmul.f32.gmra.mxu0 %v4836
        %v4951 = vpop.f32.mrf.mxu0
        %v4952 = vadd.f32 0.0, %v4951
        %4953 = vmatmul.f32.gmra.mxu0 %v4839
        %v4954 = vpop.f32.mrf.mxu0
        %v4955 = vadd.f32 0.0, %v4954
        %4956 = vmatmul.f32.gmra.mxu0 %v4842
        %v4957 = vpop.f32.mrf.mxu0
        %v4958 = vadd.f32 0.0, %v4957
        %4959 = vmatmul.f32.gmra.mxu0 %v4845
        %v4960 = vpop.f32.mrf.mxu0
        %v4961 = vadd.f32 0.0, %v4960
        %4962 = vmatmul.f32.gmra.mxu0 %v4848
        %v4963 = vpop.f32.mrf.mxu0
        %v4964 = vadd.f32 0.0, %v4963
        %4965 = vmatmul.f32.gmra.mxu0 %v4851
        %v4966 = vpop.f32.mrf.mxu0
        %v4967 = vadd.f32 0.0, %v4966
        %4968 = vmatmul.f32.gmra.mxu0 %v4854
        %v4969 = vpop.f32.mrf.mxu0
        %v4970 = vadd.f32 0.0, %v4969
        %4971 = vmatmul.f32.gmra.mxu0 %v4857
        %v4972 = vpop.f32.mrf.mxu0
        %v4973 = vadd.f32 0.0, %v4972
        %4974 = vmatmul.f32.gmra.mxu0 %v4860
        %v4975 = vpop.f32.mrf.mxu0
        %v4976 = vadd.f32 0.0, %v4975
        %4977 = vmatmul.f32.gmra.mxu0 %v4863
        %v4978 = vpop.f32.mrf.mxu0
        %v4979 = vadd.f32 0.0, %v4978
        %4980 = vmatmul.f32.gmra.mxu0 %v4866
        %v4981 = vpop.f32.mrf.mxu0
        %v4982 = vadd.f32 0.0, %v4981
        %4983 = vmatmul.f32.gmra.mxu0 %v4869
        %v4984 = vpop.f32.mrf.mxu0
        %v4985 = vadd.f32 0.0, %v4984
        %4986 = vmatmul.f32.gmra.mxu0 %v4872
        %v4987 = vpop.f32.mrf.mxu0
        %v4988 = vadd.f32 0.0, %v4987
        %4989 = vmatmul.f32.gmra.mxu0 %v4875
        %v4990 = vpop.f32.mrf.mxu0
        %v4991 = vadd.f32 0.0, %v4990
        %4992 = vmatmul.f32.gmra.mxu0 %v4878
        %v4993 = vpop.f32.mrf.mxu0
        %v4994 = vadd.f32 0.0, %v4993
        %4995 = vmatmul.f32.gmra.mxu0 %v4881
        %v4996 = vpop.f32.mrf.mxu0
        %v4997 = vadd.f32 0.0, %v4996
        %4998 = vmatmul.f32.gmra.mxu0 %v4884
        %v4999 = vpop.f32.mrf.mxu0
        %v5000 = vadd.f32 0.0, %v4999
        %5001 = vmatmul.f32.gmra.mxu0 %v4887
        %v5002 = vpop.f32.mrf.mxu0
        %v5003 = vadd.f32 0.0, %v5002
        %5004 = vmatmul.f32.gmra.mxu0 %v4890
        %v5005 = vpop.f32.mrf.mxu0
        %v5006 = vadd.f32 0.0, %v5005
        %5007 = vmatmul.f32.gmra.mxu0 %v4893
        %v5008 = vpop.f32.mrf.mxu0
        %v5009 = vadd.f32 0.0, %v5008
        %5010 = vdwg.mxu0
        %v5011 = vadd.f32 %v4733, %v4916
        %v5012 = vadd.f32 %v4734, %v4919
        %v5013 = vadd.f32 %v4735, %v4922
        %v5014 = vadd.f32 %v4736, %v4925
        %v5015 = vadd.f32 %v4737, %v4928
        %v5016 = vadd.f32 %v4738, %v4931
        %v5017 = vadd.f32 %v4739, %v4934
        %v5018 = vadd.f32 %v4740, %v4937
        %v5019 = vadd.f32 %v4741, %v4940
        %v5020 = vadd.f32 %v4742, %v4943
        %v5021 = vadd.f32 %v4743, %v4946
        %v5022 = vadd.f32 %v4744, %v4949
        %v5023 = vadd.f32 %v4745, %v4952
        %v5024 = vadd.f32 %v4746, %v4955
        %v5025 = vadd.f32 %v4747, %v4958
        %v5026 = vadd.f32 %v4748, %v4961
        %v5027 = vadd.f32 %v4749, %v4964
        %v5028 = vadd.f32 %v4750, %v4967
        %v5029 = vadd.f32 %v4751, %v4970
        %v5030 = vadd.f32 %v4752, %v4973
        %v5031 = vadd.f32 %v4753, %v4976
        %v5032 = vadd.f32 %v4754, %v4979
        %v5033 = vadd.f32 %v4755, %v4982
        %v5034 = vadd.f32 %v4756, %v4985
        %v5035 = vadd.f32 %v4757, %v4988
        %v5036 = vadd.f32 %v4758, %v4991
        %v5037 = vadd.f32 %v4759, %v4994
        %v5038 = vadd.f32 %v4760, %v4997
        %v5039 = vadd.f32 %v4761, %v5000
        %v5040 = vadd.f32 %v4762, %v5003
        %v5041 = vadd.f32 %v4763, %v5006
        %v5042 = vadd.f32 %v4764, %v5009
        %s5043 = scalar_lea.vmem [#allocation3], 24
        %v5044 = vld [vmem:[%s5043] sm:$0xff]
        %v5045 = vld [vmem:[%s5043 + $0x8] sm:$0xff]
        %v5046 = vld [vmem:[%s5043 + $0x18] sm:$0xff]
        %v5047 = vld [vmem:[%s5043 + $0x20] sm:$0xff]
        %v5048 = vld [vmem:[%s5043 + $0x30] sm:$0xff]
        %v5049 = vld [vmem:[%s5043 + $0x38] sm:$0xff]
        %v5050 = vld [vmem:[%s5043 + $0x48] sm:$0xff]
        %v5051 = vld [vmem:[%s5043 + $0x50] sm:$0xff]
        %v5052 = vld [vmem:[%s5043 + $0x60] sm:$0xff]
        %v5053 = vld [vmem:[%s5043 + $0x68] sm:$0xff]
        %v5054 = vld [vmem:[%s5043 + $0x78] sm:$0xff]
        %v5055 = vld [vmem:[%s5043 + $0x80] sm:$0xff]
        %v5056 = vld [vmem:[%s5043 + $0x90] sm:$0xff]
        %v5057 = vld [vmem:[%s5043 + $0x98] sm:$0xff]
        %v5058 = vld [vmem:[%s5043 + $0xa8] sm:$0xff]
        %v5059 = vld [vmem:[%s5043 + $0xb0] sm:$0xff]
        %v5060 = vld [vmem:[%s5043 + $0xc0] sm:$0xff]
        %v5061 = vld [vmem:[%s5043 + $0xc8] sm:$0xff]
        %v5062 = vld [vmem:[%s5043 + $0xd8] sm:$0xff]
        %v5063 = vld [vmem:[%s5043 + $0xe0] sm:$0xff]
        %v5064 = vld [vmem:[%s5043 + $0xf0] sm:$0xff]
        %v5065 = vld [vmem:[%s5043 + $0xf8] sm:$0xff]
        %v5066 = vld [vmem:[%s5043 + $0x108] sm:$0xff]
        %v5067 = vld [vmem:[%s5043 + $0x110] sm:$0xff]
        %v5068 = vld [vmem:[%s5043 + $0x120] sm:$0xff]
        %v5069 = vld [vmem:[%s5043 + $0x128] sm:$0xff]
        %v5070 = vld [vmem:[%s5043 + $0x138] sm:$0xff]
        %v5071 = vld [vmem:[%s5043 + $0x140] sm:$0xff]
        %v5072 = vld [vmem:[%s5043 + $0x150] sm:$0xff]
        %v5073 = vld [vmem:[%s5043 + $0x158] sm:$0xff]
        %v5074 = vld [vmem:[%s5043 + $0x168] sm:$0xff]
        %v5075 = vld [vmem:[%s5043 + $0x170] sm:$0xff]
        %s5076 = scalar_lea.vmem %s9, 10
        %v5077 = vld [vmem:[%s5076] sm:$0x3]
        %v5079 = vsel %vm3622, %v5044, 0
        %v5082 = vsel %vm3622, %v5045, 0
        %v5085 = vsel %vm3622, %v5046, 0
        %v5088 = vsel %vm3622, %v5047, 0
        %v5091 = vsel %vm3622, %v5048, 0
        %v5094 = vsel %vm3622, %v5049, 0
        %v5097 = vsel %vm3622, %v5050, 0
        %v5100 = vsel %vm3622, %v5051, 0
        %v5103 = vsel %vm3622, %v5052, 0
        %v5106 = vsel %vm3622, %v5053, 0
        %v5109 = vsel %vm3622, %v5054, 0
        %v5112 = vsel %vm3622, %v5055, 0
        %v5115 = vsel %vm3622, %v5056, 0
        %v5118 = vsel %vm3622, %v5057, 0
        %v5121 = vsel %vm3622, %v5058, 0
        %v5124 = vsel %vm3622, %v5059, 0
        %v5127 = vsel %vm3622, %v5060, 0
        %v5130 = vsel %vm3622, %v5061, 0
        %v5133 = vsel %vm3622, %v5062, 0
        %v5136 = vsel %vm3622, %v5063, 0
        %v5139 = vsel %vm3622, %v5064, 0
        %v5142 = vsel %vm3622, %v5065, 0
        %v5145 = vsel %vm3622, %v5066, 0
        %v5148 = vsel %vm3622, %v5067, 0
        %v5151 = vsel %vm3622, %v5068, 0
        %v5154 = vsel %vm3622, %v5069, 0
        %v5157 = vsel %vm3622, %v5070, 0
        %v5160 = vsel %vm3622, %v5071, 0
        %v5163 = vsel %vm3622, %v5072, 0
        %v5166 = vsel %vm3622, %v5073, 0
        %v5169 = vsel %vm3622, %v5074, 0
        %v5172 = vsel %vm3622, %v5075, 0
        %v5175 = vsel %vm3880, %v5077, 0
        %5177 = vmatpush.msra.mxu0 0.0
        %5178 = vmatpush.msra.mxu0 0.0
        %5179 = vmatpush.msra.mxu0 0.0
        %5180 = vmatpush.msra.mxu0 0.0
        %5181 = vmatpush.msra.mxu0 0.0
        %5182 = vmatpush.msra.mxu0 0.0
        %5183 = vmatpush.msra.mxu0 0.0
        %5184 = vmatpush.msra.mxu0 0.0
        %5185 = vmatpush.msra.mxu0 0.0
        %5186 = vmatpush.msra.mxu0 0.0
        %5187 = vmatpush.msra.mxu0 0.0
        %5188 = vmatpush.msra.mxu0 0.0
        %5189 = vmatpush.msra.mxu0 0.0
        %5190 = vmatpush.msra.mxu0 0.0
        %5191 = vmatpush.msra.mxu0 0.0
        %5192 = vmatpush.msra.mxu0 %v5175
        %5193 = vmatmul.f32.gmra.mxu0 %v5079
        %v5194 = vpop.f32.mrf.mxu0
        %v5195 = vadd.f32 0.0, %v5194
        %5196 = vmatmul.f32.gmra.mxu0 %v5082
        %v5197 = vpop.f32.mrf.mxu0
        %v5198 = vadd.f32 0.0, %v5197
        %5199 = vmatmul.f32.gmra.mxu0 %v5085
        %v5200 = vpop.f32.mrf.mxu0
        %v5201 = vadd.f32 0.0, %v5200
        %5202 = vmatmul.f32.gmra.mxu0 %v5088
        %v5203 = vpop.f32.mrf.mxu0
        %v5204 = vadd.f32 0.0, %v5203
        %5205 = vmatmul.f32.gmra.mxu0 %v5091
        %v5206 = vpop.f32.mrf.mxu0
        %v5207 = vadd.f32 0.0, %v5206
        %5208 = vmatmul.f32.gmra.mxu0 %v5094
        %v5209 = vpop.f32.mrf.mxu0
        %v5210 = vadd.f32 0.0, %v5209
        %5211 = vmatmul.f32.gmra.mxu0 %v5097
        %v5212 = vpop.f32.mrf.mxu0
        %v5213 = vadd.f32 0.0, %v5212
        %5214 = vmatmul.f32.gmra.mxu0 %v5100
        %v5215 = vpop.f32.mrf.mxu0
        %v5216 = vadd.f32 0.0, %v5215
        %5217 = vmatmul.f32.gmra.mxu0 %v5103
        %v5218 = vpop.f32.mrf.mxu0
        %v5219 = vadd.f32 0.0, %v5218
        %5220 = vmatmul.f32.gmra.mxu0 %v5106
        %v5221 = vpop.f32.mrf.mxu0
        %v5222 = vadd.f32 0.0, %v5221
        %5223 = vmatmul.f32.gmra.mxu0 %v5109
        %v5224 = vpop.f32.mrf.mxu0
        %v5225 = vadd.f32 0.0, %v5224
        %5226 = vmatmul.f32.gmra.mxu0 %v5112
        %v5227 = vpop.f32.mrf.mxu0
        %v5228 = vadd.f32 0.0, %v5227
        %5229 = vmatmul.f32.gmra.mxu0 %v5115
        %v5230 = vpop.f32.mrf.mxu0
        %v5231 = vadd.f32 0.0, %v5230
        %5232 = vmatmul.f32.gmra.mxu0 %v5118
        %v5233 = vpop.f32.mrf.mxu0
        %v5234 = vadd.f32 0.0, %v5233
        %5235 = vmatmul.f32.gmra.mxu0 %v5121
        %v5236 = vpop.f32.mrf.mxu0
        %v5237 = vadd.f32 0.0, %v5236
        %5238 = vmatmul.f32.gmra.mxu0 %v5124
        %v5239 = vpop.f32.mrf.mxu0
        %v5240 = vadd.f32 0.0, %v5239
        %5241 = vmatmul.f32.gmra.mxu0 %v5127
        %v5242 = vpop.f32.mrf.mxu0
        %v5243 = vadd.f32 0.0, %v5242
        %5244 = vmatmul.f32.gmra.mxu0 %v5130
        %v5245 = vpop.f32.mrf.mxu0
        %v5246 = vadd.f32 0.0, %v5245
        %5247 = vmatmul.f32.gmra.mxu0 %v5133
        %v5248 = vpop.f32.mrf.mxu0
        %v5249 = vadd.f32 0.0, %v5248
        %5250 = vmatmul.f32.gmra.mxu0 %v5136
        %v5251 = vpop.f32.mrf.mxu0
        %v5252 = vadd.f32 0.0, %v5251
        %5253 = vmatmul.f32.gmra.mxu0 %v5139
        %v5254 = vpop.f32.mrf.mxu0
        %v5255 = vadd.f32 0.0, %v5254
        %5256 = vmatmul.f32.gmra.mxu0 %v5142
        %v5257 = vpop.f32.mrf.mxu0
        %v5258 = vadd.f32 0.0, %v5257
        %5259 = vmatmul.f32.gmra.mxu0 %v5145
        %v5260 = vpop.f32.mrf.mxu0
        %v5261 = vadd.f32 0.0, %v5260
        %5262 = vmatmul.f32.gmra.mxu0 %v5148
        %v5263 = vpop.f32.mrf.mxu0
        %v5264 = vadd.f32 0.0, %v5263
        %5265 = vmatmul.f32.gmra.mxu0 %v5151
        %v5266 = vpop.f32.mrf.mxu0
        %v5267 = vadd.f32 0.0, %v5266
        %5268 = vmatmul.f32.gmra.mxu0 %v5154
        %v5269 = vpop.f32.mrf.mxu0
        %v5270 = vadd.f32 0.0, %v5269
        %5271 = vmatmul.f32.gmra.mxu0 %v5157
        %v5272 = vpop.f32.mrf.mxu0
        %v5273 = vadd.f32 0.0, %v5272
        %5274 = vmatmul.f32.gmra.mxu0 %v5160
        %v5275 = vpop.f32.mrf.mxu0
        %v5276 = vadd.f32 0.0, %v5275
        %5277 = vmatmul.f32.gmra.mxu0 %v5163
        %v5278 = vpop.f32.mrf.mxu0
        %v5279 = vadd.f32 0.0, %v5278
        %5280 = vmatmul.f32.gmra.mxu0 %v5166
        %v5281 = vpop.f32.mrf.mxu0
        %v5282 = vadd.f32 0.0, %v5281
        %5283 = vmatmul.f32.gmra.mxu0 %v5169
        %v5284 = vpop.f32.mrf.mxu0
        %v5285 = vadd.f32 0.0, %v5284
        %5286 = vmatmul.f32.gmra.mxu0 %v5172
        %v5287 = vpop.f32.mrf.mxu0
        %v5288 = vadd.f32 0.0, %v5287
        %5289 = vdwg.mxu0
        %v5290 = vadd.f32 %v5011, %v5195
        %v5291 = vadd.f32 %v5012, %v5198
        %v5292 = vadd.f32 %v5013, %v5201
        %v5293 = vadd.f32 %v5014, %v5204
        %v5294 = vadd.f32 %v5015, %v5207
        %v5295 = vadd.f32 %v5016, %v5210
        %v5296 = vadd.f32 %v5017, %v5213
        %v5297 = vadd.f32 %v5018, %v5216
        %v5298 = vadd.f32 %v5019, %v5219
        %v5299 = vadd.f32 %v5020, %v5222
        %v5300 = vadd.f32 %v5021, %v5225
        %v5301 = vadd.f32 %v5022, %v5228
        %v5302 = vadd.f32 %v5023, %v5231
        %v5303 = vadd.f32 %v5024, %v5234
        %v5304 = vadd.f32 %v5025, %v5237
        %v5305 = vadd.f32 %v5026, %v5240
        %v5306 = vadd.f32 %v5027, %v5243
        %v5307 = vadd.f32 %v5028, %v5246
        %v5308 = vadd.f32 %v5029, %v5249
        %v5309 = vadd.f32 %v5030, %v5252
        %v5310 = vadd.f32 %v5031, %v5255
        %v5311 = vadd.f32 %v5032, %v5258
        %v5312 = vadd.f32 %v5033, %v5261
        %v5313 = vadd.f32 %v5034, %v5264
        %v5314 = vadd.f32 %v5035, %v5267
        %v5315 = vadd.f32 %v5036, %v5270
        %v5316 = vadd.f32 %v5037, %v5273
        %v5317 = vadd.f32 %v5038, %v5276
        %v5318 = vadd.f32 %v5039, %v5279
        %v5319 = vadd.f32 %v5040, %v5282
        %v5320 = vadd.f32 %v5041, %v5285
        %v5321 = vadd.f32 %v5042, %v5288
        %v5322 = vld [vmem:[%s5043 + $0x1] sm:$0xff]
        %v5323 = vld [vmem:[%s5043 + $0x9] sm:$0xff]
        %v5324 = vld [vmem:[%s5043 + $0x19] sm:$0xff]
        %v5325 = vld [vmem:[%s5043 + $0x21] sm:$0xff]
        %v5326 = vld [vmem:[%s5043 + $0x31] sm:$0xff]
        %v5327 = vld [vmem:[%s5043 + $0x39] sm:$0xff]
        %v5328 = vld [vmem:[%s5043 + $0x49] sm:$0xff]
        %v5329 = vld [vmem:[%s5043 + $0x51] sm:$0xff]
        %v5330 = vld [vmem:[%s5043 + $0x61] sm:$0xff]
        %v5331 = vld [vmem:[%s5043 + $0x69] sm:$0xff]
        %v5332 = vld [vmem:[%s5043 + $0x79] sm:$0xff]
        %v5333 = vld [vmem:[%s5043 + $0x81] sm:$0xff]
        %v5334 = vld [vmem:[%s5043 + $0x91] sm:$0xff]
        %v5335 = vld [vmem:[%s5043 + $0x99] sm:$0xff]
        %v5336 = vld [vmem:[%s5043 + $0xa9] sm:$0xff]
        %v5337 = vld [vmem:[%s5043 + $0xb1] sm:$0xff]
        %v5338 = vld [vmem:[%s5043 + $0xc1] sm:$0xff]
        %v5339 = vld [vmem:[%s5043 + $0xc9] sm:$0xff]
        %v5340 = vld [vmem:[%s5043 + $0xd9] sm:$0xff]
        %v5341 = vld [vmem:[%s5043 + $0xe1] sm:$0xff]
        %v5342 = vld [vmem:[%s5043 + $0xf1] sm:$0xff]
        %v5343 = vld [vmem:[%s5043 + $0xf9] sm:$0xff]
        %v5344 = vld [vmem:[%s5043 + $0x109] sm:$0xff]
        %v5345 = vld [vmem:[%s5043 + $0x111] sm:$0xff]
        %v5346 = vld [vmem:[%s5043 + $0x121] sm:$0xff]
        %v5347 = vld [vmem:[%s5043 + $0x129] sm:$0xff]
        %v5348 = vld [vmem:[%s5043 + $0x139] sm:$0xff]
        %v5349 = vld [vmem:[%s5043 + $0x141] sm:$0xff]
        %v5350 = vld [vmem:[%s5043 + $0x151] sm:$0xff]
        %v5351 = vld [vmem:[%s5043 + $0x159] sm:$0xff]
        %v5352 = vld [vmem:[%s5043 + $0x169] sm:$0xff]
        %v5353 = vld [vmem:[%s5043 + $0x171] sm:$0xff]
        %s5354 = scalar_lea.vmem %s9, 12
        %v5355 = vld [vmem:[%s5354] sm:$0x3]
        %v5357 = vsel %vm3622, %v5322, 0
        %v5360 = vsel %vm3622, %v5323, 0
        %v5363 = vsel %vm3622, %v5324, 0
        %v5366 = vsel %vm3622, %v5325, 0
        %v5369 = vsel %vm3622, %v5326, 0
        %v5372 = vsel %vm3622, %v5327, 0
        %v5375 = vsel %vm3622, %v5328, 0
        %v5378 = vsel %vm3622, %v5329, 0
        %v5381 = vsel %vm3622, %v5330, 0
        %v5384 = vsel %vm3622, %v5331, 0
        %v5387 = vsel %vm3622, %v5332, 0
        %v5390 = vsel %vm3622, %v5333, 0
        %v5393 = vsel %vm3622, %v5334, 0
        %v5396 = vsel %vm3622, %v5335, 0
        %v5399 = vsel %vm3622, %v5336, 0
        %v5402 = vsel %vm3622, %v5337, 0
        %v5405 = vsel %vm3622, %v5338, 0
        %v5408 = vsel %vm3622, %v5339, 0
        %v5411 = vsel %vm3622, %v5340, 0
        %v5414 = vsel %vm3622, %v5341, 0
        %v5417 = vsel %vm3622, %v5342, 0
        %v5420 = vsel %vm3622, %v5343, 0
        %v5423 = vsel %vm3622, %v5344, 0
        %v5426 = vsel %vm3622, %v5345, 0
        %v5429 = vsel %vm3622, %v5346, 0
        %v5432 = vsel %vm3622, %v5347, 0
        %v5435 = vsel %vm3622, %v5348, 0
        %v5438 = vsel %vm3622, %v5349, 0
        %v5441 = vsel %vm3622, %v5350, 0
        %v5444 = vsel %vm3622, %v5351, 0
        %v5447 = vsel %vm3622, %v5352, 0
        %v5450 = vsel %vm3622, %v5353, 0
        %v5453 = vsel %vm3880, %v5355, 0
        %5455 = vmatpush.msra.mxu0 0.0
        %5456 = vmatpush.msra.mxu0 0.0
        %5457 = vmatpush.msra.mxu0 0.0
        %5458 = vmatpush.msra.mxu0 0.0
        %5459 = vmatpush.msra.mxu0 0.0
        %5460 = vmatpush.msra.mxu0 0.0
        %5461 = vmatpush.msra.mxu0 0.0
        %5462 = vmatpush.msra.mxu0 0.0
        %5463 = vmatpush.msra.mxu0 0.0
        %5464 = vmatpush.msra.mxu0 0.0
        %5465 = vmatpush.msra.mxu0 0.0
        %5466 = vmatpush.msra.mxu0 0.0
        %5467 = vmatpush.msra.mxu0 0.0
        %5468 = vmatpush.msra.mxu0 0.0
        %5469 = vmatpush.msra.mxu0 0.0
        %5470 = vmatpush.msra.mxu0 %v5453
        %5471 = vmatmul.f32.gmra.mxu0 %v5357
        %v5472 = vpop.f32.mrf.mxu0
        %v5473 = vadd.f32 0.0, %v5472
        %5474 = vmatmul.f32.gmra.mxu0 %v5360
        %v5475 = vpop.f32.mrf.mxu0
        %v5476 = vadd.f32 0.0, %v5475
        %5477 = vmatmul.f32.gmra.mxu0 %v5363
        %v5478 = vpop.f32.mrf.mxu0
        %v5479 = vadd.f32 0.0, %v5478
        %5480 = vmatmul.f32.gmra.mxu0 %v5366
        %v5481 = vpop.f32.mrf.mxu0
        %v5482 = vadd.f32 0.0, %v5481
        %5483 = vmatmul.f32.gmra.mxu0 %v5369
        %v5484 = vpop.f32.mrf.mxu0
        %v5485 = vadd.f32 0.0, %v5484
        %5486 = vmatmul.f32.gmra.mxu0 %v5372
        %v5487 = vpop.f32.mrf.mxu0
        %v5488 = vadd.f32 0.0, %v5487
        %5489 = vmatmul.f32.gmra.mxu0 %v5375
        %v5490 = vpop.f32.mrf.mxu0
        %v5491 = vadd.f32 0.0, %v5490
        %5492 = vmatmul.f32.gmra.mxu0 %v5378
        %v5493 = vpop.f32.mrf.mxu0
        %v5494 = vadd.f32 0.0, %v5493
        %5495 = vmatmul.f32.gmra.mxu0 %v5381
        %v5496 = vpop.f32.mrf.mxu0
        %v5497 = vadd.f32 0.0, %v5496
        %5498 = vmatmul.f32.gmra.mxu0 %v5384
        %v5499 = vpop.f32.mrf.mxu0
        %v5500 = vadd.f32 0.0, %v5499
        %5501 = vmatmul.f32.gmra.mxu0 %v5387
        %v5502 = vpop.f32.mrf.mxu0
        %v5503 = vadd.f32 0.0, %v5502
        %5504 = vmatmul.f32.gmra.mxu0 %v5390
        %v5505 = vpop.f32.mrf.mxu0
        %v5506 = vadd.f32 0.0, %v5505
        %5507 = vmatmul.f32.gmra.mxu0 %v5393
        %v5508 = vpop.f32.mrf.mxu0
        %v5509 = vadd.f32 0.0, %v5508
        %5510 = vmatmul.f32.gmra.mxu0 %v5396
        %v5511 = vpop.f32.mrf.mxu0
        %v5512 = vadd.f32 0.0, %v5511
        %5513 = vmatmul.f32.gmra.mxu0 %v5399
        %v5514 = vpop.f32.mrf.mxu0
        %v5515 = vadd.f32 0.0, %v5514
        %5516 = vmatmul.f32.gmra.mxu0 %v5402
        %v5517 = vpop.f32.mrf.mxu0
        %v5518 = vadd.f32 0.0, %v5517
        %5519 = vmatmul.f32.gmra.mxu0 %v5405
        %v5520 = vpop.f32.mrf.mxu0
        %v5521 = vadd.f32 0.0, %v5520
        %5522 = vmatmul.f32.gmra.mxu0 %v5408
        %v5523 = vpop.f32.mrf.mxu0
        %v5524 = vadd.f32 0.0, %v5523
        %5525 = vmatmul.f32.gmra.mxu0 %v5411
        %v5526 = vpop.f32.mrf.mxu0
        %v5527 = vadd.f32 0.0, %v5526
        %5528 = vmatmul.f32.gmra.mxu0 %v5414
        %v5529 = vpop.f32.mrf.mxu0
        %v5530 = vadd.f32 0.0, %v5529
        %5531 = vmatmul.f32.gmra.mxu0 %v5417
        %v5532 = vpop.f32.mrf.mxu0
        %v5533 = vadd.f32 0.0, %v5532
        %5534 = vmatmul.f32.gmra.mxu0 %v5420
        %v5535 = vpop.f32.mrf.mxu0
        %v5536 = vadd.f32 0.0, %v5535
        %5537 = vmatmul.f32.gmra.mxu0 %v5423
        %v5538 = vpop.f32.mrf.mxu0
        %v5539 = vadd.f32 0.0, %v5538
        %5540 = vmatmul.f32.gmra.mxu0 %v5426
        %v5541 = vpop.f32.mrf.mxu0
        %v5542 = vadd.f32 0.0, %v5541
        %5543 = vmatmul.f32.gmra.mxu0 %v5429
        %v5544 = vpop.f32.mrf.mxu0
        %v5545 = vadd.f32 0.0, %v5544
        %5546 = vmatmul.f32.gmra.mxu0 %v5432
        %v5547 = vpop.f32.mrf.mxu0
        %v5548 = vadd.f32 0.0, %v5547
        %5549 = vmatmul.f32.gmra.mxu0 %v5435
        %v5550 = vpop.f32.mrf.mxu0
        %v5551 = vadd.f32 0.0, %v5550
        %5552 = vmatmul.f32.gmra.mxu0 %v5438
        %v5553 = vpop.f32.mrf.mxu0
        %v5554 = vadd.f32 0.0, %v5553
        %5555 = vmatmul.f32.gmra.mxu0 %v5441
        %v5556 = vpop.f32.mrf.mxu0
        %v5557 = vadd.f32 0.0, %v5556
        %5558 = vmatmul.f32.gmra.mxu0 %v5444
        %v5559 = vpop.f32.mrf.mxu0
        %v5560 = vadd.f32 0.0, %v5559
        %5561 = vmatmul.f32.gmra.mxu0 %v5447
        %v5562 = vpop.f32.mrf.mxu0
        %v5563 = vadd.f32 0.0, %v5562
        %5564 = vmatmul.f32.gmra.mxu0 %v5450
        %v5565 = vpop.f32.mrf.mxu0
        %v5566 = vadd.f32 0.0, %v5565
        %5567 = vdwg.mxu0
        %v5568 = vadd.f32 %v5290, %v5473
        %v5569 = vadd.f32 %v5291, %v5476
        %v5570 = vadd.f32 %v5292, %v5479
        %v5571 = vadd.f32 %v5293, %v5482
        %v5572 = vadd.f32 %v5294, %v5485
        %v5573 = vadd.f32 %v5295, %v5488
        %v5574 = vadd.f32 %v5296, %v5491
        %v5575 = vadd.f32 %v5297, %v5494
        %v5576 = vadd.f32 %v5298, %v5497
        %v5577 = vadd.f32 %v5299, %v5500
        %v5578 = vadd.f32 %v5300, %v5503
        %v5579 = vadd.f32 %v5301, %v5506
        %v5580 = vadd.f32 %v5302, %v5509
        %v5581 = vadd.f32 %v5303, %v5512
        %v5582 = vadd.f32 %v5304, %v5515
        %v5583 = vadd.f32 %v5305, %v5518
        %v5584 = vadd.f32 %v5306, %v5521
        %v5585 = vadd.f32 %v5307, %v5524
        %v5586 = vadd.f32 %v5308, %v5527
        %v5587 = vadd.f32 %v5309, %v5530
        %v5588 = vadd.f32 %v5310, %v5533
        %v5589 = vadd.f32 %v5311, %v5536
        %v5590 = vadd.f32 %v5312, %v5539
        %v5591 = vadd.f32 %v5313, %v5542
        %v5592 = vadd.f32 %v5314, %v5545
        %v5593 = vadd.f32 %v5315, %v5548
        %v5594 = vadd.f32 %v5316, %v5551
        %v5595 = vadd.f32 %v5317, %v5554
        %v5596 = vadd.f32 %v5318, %v5557
        %v5597 = vadd.f32 %v5319, %v5560
        %v5598 = vadd.f32 %v5320, %v5563
        %v5599 = vadd.f32 %v5321, %v5566
        %v5600 = vld [vmem:[%s5043 + $0x2] sm:$0xff]
        %v5601 = vld [vmem:[%s5043 + $0xa] sm:$0xff]
        %v5602 = vld [vmem:[%s5043 + $0x1a] sm:$0xff]
        %v5603 = vld [vmem:[%s5043 + $0x22] sm:$0xff]
        %v5604 = vld [vmem:[%s5043 + $0x32] sm:$0xff]
        %v5605 = vld [vmem:[%s5043 + $0x3a] sm:$0xff]
        %v5606 = vld [vmem:[%s5043 + $0x4a] sm:$0xff]
        %v5607 = vld [vmem:[%s5043 + $0x52] sm:$0xff]
        %v5608 = vld [vmem:[%s5043 + $0x62] sm:$0xff]
        %v5609 = vld [vmem:[%s5043 + $0x6a] sm:$0xff]
        %v5610 = vld [vmem:[%s5043 + $0x7a] sm:$0xff]
        %v5611 = vld [vmem:[%s5043 + $0x82] sm:$0xff]
        %v5612 = vld [vmem:[%s5043 + $0x92] sm:$0xff]
        %v5613 = vld [vmem:[%s5043 + $0x9a] sm:$0xff]
        %v5614 = vld [vmem:[%s5043 + $0xaa] sm:$0xff]
        %v5615 = vld [vmem:[%s5043 + $0xb2] sm:$0xff]
        %v5616 = vld [vmem:[%s5043 + $0xc2] sm:$0xff]
        %v5617 = vld [vmem:[%s5043 + $0xca] sm:$0xff]
        %v5618 = vld [vmem:[%s5043 + $0xda] sm:$0xff]
        %v5619 = vld [vmem:[%s5043 + $0xe2] sm:$0xff]
        %v5620 = vld [vmem:[%s5043 + $0xf2] sm:$0xff]
        %v5621 = vld [vmem:[%s5043 + $0xfa] sm:$0xff]
        %v5622 = vld [vmem:[%s5043 + $0x10a] sm:$0xff]
        %v5623 = vld [vmem:[%s5043 + $0x112] sm:$0xff]
        %v5624 = vld [vmem:[%s5043 + $0x122] sm:$0xff]
        %v5625 = vld [vmem:[%s5043 + $0x12a] sm:$0xff]
        %v5626 = vld [vmem:[%s5043 + $0x13a] sm:$0xff]
        %v5627 = vld [vmem:[%s5043 + $0x142] sm:$0xff]
        %v5628 = vld [vmem:[%s5043 + $0x152] sm:$0xff]
        %v5629 = vld [vmem:[%s5043 + $0x15a] sm:$0xff]
        %v5630 = vld [vmem:[%s5043 + $0x16a] sm:$0xff]
        %v5631 = vld [vmem:[%s5043 + $0x172] sm:$0xff]
        %s5632 = scalar_lea.vmem %s9, 14
        %v5633 = vld [vmem:[%s5632] sm:$0x3]
        %v5635 = vsel %vm3622, %v5600, 0
        %v5638 = vsel %vm3622, %v5601, 0
        %v5641 = vsel %vm3622, %v5602, 0
        %v5644 = vsel %vm3622, %v5603, 0
        %v5647 = vsel %vm3622, %v5604, 0
        %v5650 = vsel %vm3622, %v5605, 0
        %v5653 = vsel %vm3622, %v5606, 0
        %v5656 = vsel %vm3622, %v5607, 0
        %v5659 = vsel %vm3622, %v5608, 0
        %v5662 = vsel %vm3622, %v5609, 0
        %v5665 = vsel %vm3622, %v5610, 0
        %v5668 = vsel %vm3622, %v5611, 0
        %v5671 = vsel %vm3622, %v5612, 0
        %v5674 = vsel %vm3622, %v5613, 0
        %v5677 = vsel %vm3622, %v5614, 0
        %v5680 = vsel %vm3622, %v5615, 0
        %v5683 = vsel %vm3622, %v5616, 0
        %v5686 = vsel %vm3622, %v5617, 0
        %v5689 = vsel %vm3622, %v5618, 0
        %v5692 = vsel %vm3622, %v5619, 0
        %v5695 = vsel %vm3622, %v5620, 0
        %v5698 = vsel %vm3622, %v5621, 0
        %v5701 = vsel %vm3622, %v5622, 0
        %v5704 = vsel %vm3622, %v5623, 0
        %v5707 = vsel %vm3622, %v5624, 0
        %v5710 = vsel %vm3622, %v5625, 0
        %v5713 = vsel %vm3622, %v5626, 0
        %v5716 = vsel %vm3622, %v5627, 0
        %v5719 = vsel %vm3622, %v5628, 0
        %v5722 = vsel %vm3622, %v5629, 0
        %v5725 = vsel %vm3622, %v5630, 0
        %v5728 = vsel %vm3622, %v5631, 0
        %v5731 = vsel %vm3880, %v5633, 0
        %5733 = vmatpush.msra.mxu0 0.0
        %5734 = vmatpush.msra.mxu0 0.0
        %5735 = vmatpush.msra.mxu0 0.0
        %5736 = vmatpush.msra.mxu0 0.0
        %5737 = vmatpush.msra.mxu0 0.0
        %5738 = vmatpush.msra.mxu0 0.0
        %5739 = vmatpush.msra.mxu0 0.0
        %5740 = vmatpush.msra.mxu0 0.0
        %5741 = vmatpush.msra.mxu0 0.0
        %5742 = vmatpush.msra.mxu0 0.0
        %5743 = vmatpush.msra.mxu0 0.0
        %5744 = vmatpush.msra.mxu0 0.0
        %5745 = vmatpush.msra.mxu0 0.0
        %5746 = vmatpush.msra.mxu0 0.0
        %5747 = vmatpush.msra.mxu0 0.0
        %5748 = vmatpush.msra.mxu0 %v5731
        %5749 = vmatmul.f32.gmra.mxu0 %v5635
        %v5750 = vpop.f32.mrf.mxu0
        %v5751 = vadd.f32 0.0, %v5750
        %5752 = vmatmul.f32.gmra.mxu0 %v5638
        %v5753 = vpop.f32.mrf.mxu0
        %v5754 = vadd.f32 0.0, %v5753
        %5755 = vmatmul.f32.gmra.mxu0 %v5641
        %v5756 = vpop.f32.mrf.mxu0
        %v5757 = vadd.f32 0.0, %v5756
        %5758 = vmatmul.f32.gmra.mxu0 %v5644
        %v5759 = vpop.f32.mrf.mxu0
        %v5760 = vadd.f32 0.0, %v5759
        %5761 = vmatmul.f32.gmra.mxu0 %v5647
        %v5762 = vpop.f32.mrf.mxu0
        %v5763 = vadd.f32 0.0, %v5762
        %5764 = vmatmul.f32.gmra.mxu0 %v5650
        %v5765 = vpop.f32.mrf.mxu0
        %v5766 = vadd.f32 0.0, %v5765
        %5767 = vmatmul.f32.gmra.mxu0 %v5653
        %v5768 = vpop.f32.mrf.mxu0
        %v5769 = vadd.f32 0.0, %v5768
        %5770 = vmatmul.f32.gmra.mxu0 %v5656
        %v5771 = vpop.f32.mrf.mxu0
        %v5772 = vadd.f32 0.0, %v5771
        %5773 = vmatmul.f32.gmra.mxu0 %v5659
        %v5774 = vpop.f32.mrf.mxu0
        %v5775 = vadd.f32 0.0, %v5774
        %5776 = vmatmul.f32.gmra.mxu0 %v5662
        %v5777 = vpop.f32.mrf.mxu0
        %v5778 = vadd.f32 0.0, %v5777
        %5779 = vmatmul.f32.gmra.mxu0 %v5665
        %v5780 = vpop.f32.mrf.mxu0
        %v5781 = vadd.f32 0.0, %v5780
        %5782 = vmatmul.f32.gmra.mxu0 %v5668
        %v5783 = vpop.f32.mrf.mxu0
        %v5784 = vadd.f32 0.0, %v5783
        %5785 = vmatmul.f32.gmra.mxu0 %v5671
        %v5786 = vpop.f32.mrf.mxu0
        %v5787 = vadd.f32 0.0, %v5786
        %5788 = vmatmul.f32.gmra.mxu0 %v5674
        %v5789 = vpop.f32.mrf.mxu0
        %v5790 = vadd.f32 0.0, %v5789
        %5791 = vmatmul.f32.gmra.mxu0 %v5677
        %v5792 = vpop.f32.mrf.mxu0
        %v5793 = vadd.f32 0.0, %v5792
        %5794 = vmatmul.f32.gmra.mxu0 %v5680
        %v5795 = vpop.f32.mrf.mxu0
        %v5796 = vadd.f32 0.0, %v5795
        %5797 = vmatmul.f32.gmra.mxu0 %v5683
        %v5798 = vpop.f32.mrf.mxu0
        %v5799 = vadd.f32 0.0, %v5798
        %5800 = vmatmul.f32.gmra.mxu0 %v5686
        %v5801 = vpop.f32.mrf.mxu0
        %v5802 = vadd.f32 0.0, %v5801
        %5803 = vmatmul.f32.gmra.mxu0 %v5689
        %v5804 = vpop.f32.mrf.mxu0
        %v5805 = vadd.f32 0.0, %v5804
        %5806 = vmatmul.f32.gmra.mxu0 %v5692
        %v5807 = vpop.f32.mrf.mxu0
        %v5808 = vadd.f32 0.0, %v5807
        %5809 = vmatmul.f32.gmra.mxu0 %v5695
        %v5810 = vpop.f32.mrf.mxu0
        %v5811 = vadd.f32 0.0, %v5810
        %5812 = vmatmul.f32.gmra.mxu0 %v5698
        %v5813 = vpop.f32.mrf.mxu0
        %v5814 = vadd.f32 0.0, %v5813
        %5815 = vmatmul.f32.gmra.mxu0 %v5701
        %v5816 = vpop.f32.mrf.mxu0
        %v5817 = vadd.f32 0.0, %v5816
        %5818 = vmatmul.f32.gmra.mxu0 %v5704
        %v5819 = vpop.f32.mrf.mxu0
        %v5820 = vadd.f32 0.0, %v5819
        %5821 = vmatmul.f32.gmra.mxu0 %v5707
        %v5822 = vpop.f32.mrf.mxu0
        %v5823 = vadd.f32 0.0, %v5822
        %5824 = vmatmul.f32.gmra.mxu0 %v5710
        %v5825 = vpop.f32.mrf.mxu0
        %v5826 = vadd.f32 0.0, %v5825
        %5827 = vmatmul.f32.gmra.mxu0 %v5713
        %v5828 = vpop.f32.mrf.mxu0
        %v5829 = vadd.f32 0.0, %v5828
        %5830 = vmatmul.f32.gmra.mxu0 %v5716
        %v5831 = vpop.f32.mrf.mxu0
        %v5832 = vadd.f32 0.0, %v5831
        %5833 = vmatmul.f32.gmra.mxu0 %v5719
        %v5834 = vpop.f32.mrf.mxu0
        %v5835 = vadd.f32 0.0, %v5834
        %5836 = vmatmul.f32.gmra.mxu0 %v5722
        %v5837 = vpop.f32.mrf.mxu0
        %v5838 = vadd.f32 0.0, %v5837
        %5839 = vmatmul.f32.gmra.mxu0 %v5725
        %v5840 = vpop.f32.mrf.mxu0
        %v5841 = vadd.f32 0.0, %v5840
        %5842 = vmatmul.f32.gmra.mxu0 %v5728
        %v5843 = vpop.f32.mrf.mxu0
        %v5844 = vadd.f32 0.0, %v5843
        %5845 = vdwg.mxu0
        %v5846 = vadd.f32 %v5568, %v5751
        %v5847 = vadd.f32 %v5569, %v5754
        %v5848 = vadd.f32 %v5570, %v5757
        %v5849 = vadd.f32 %v5571, %v5760
        %v5850 = vadd.f32 %v5572, %v5763
        %v5851 = vadd.f32 %v5573, %v5766
        %v5852 = vadd.f32 %v5574, %v5769
        %v5853 = vadd.f32 %v5575, %v5772
        %v5854 = vadd.f32 %v5576, %v5775
        %v5855 = vadd.f32 %v5577, %v5778
        %v5856 = vadd.f32 %v5578, %v5781
        %v5857 = vadd.f32 %v5579, %v5784
        %v5858 = vadd.f32 %v5580, %v5787
        %v5859 = vadd.f32 %v5581, %v5790
        %v5860 = vadd.f32 %v5582, %v5793
        %v5861 = vadd.f32 %v5583, %v5796
        %v5862 = vadd.f32 %v5584, %v5799
        %v5863 = vadd.f32 %v5585, %v5802
        %v5864 = vadd.f32 %v5586, %v5805
        %v5865 = vadd.f32 %v5587, %v5808
        %v5866 = vadd.f32 %v5588, %v5811
        %v5867 = vadd.f32 %v5589, %v5814
        %v5868 = vadd.f32 %v5590, %v5817
        %v5869 = vadd.f32 %v5591, %v5820
        %v5870 = vadd.f32 %v5592, %v5823
        %v5871 = vadd.f32 %v5593, %v5826
        %v5872 = vadd.f32 %v5594, %v5829
        %v5873 = vadd.f32 %v5595, %v5832
        %v5874 = vadd.f32 %v5596, %v5835
        %v5875 = vadd.f32 %v5597, %v5838
        %v5876 = vadd.f32 %v5598, %v5841
        %v5877 = vadd.f32 %v5599, %v5844
        %v5878 = vld [vmem:[%s5043 + $0x3] sm:$0xff]
        %v5879 = vld [vmem:[%s5043 + $0xb] sm:$0xff]
        %v5880 = vld [vmem:[%s5043 + $0x1b] sm:$0xff]
        %v5881 = vld [vmem:[%s5043 + $0x23] sm:$0xff]
        %v5882 = vld [vmem:[%s5043 + $0x33] sm:$0xff]
        %v5883 = vld [vmem:[%s5043 + $0x3b] sm:$0xff]
        %v5884 = vld [vmem:[%s5043 + $0x4b] sm:$0xff]
        %v5885 = vld [vmem:[%s5043 + $0x53] sm:$0xff]
        %v5886 = vld [vmem:[%s5043 + $0x63] sm:$0xff]
        %v5887 = vld [vmem:[%s5043 + $0x6b] sm:$0xff]
        %v5888 = vld [vmem:[%s5043 + $0x7b] sm:$0xff]
        %v5889 = vld [vmem:[%s5043 + $0x83] sm:$0xff]
        %v5890 = vld [vmem:[%s5043 + $0x93] sm:$0xff]
        %v5891 = vld [vmem:[%s5043 + $0x9b] sm:$0xff]
        %v5892 = vld [vmem:[%s5043 + $0xab] sm:$0xff]
        %v5893 = vld [vmem:[%s5043 + $0xb3] sm:$0xff]
        %v5894 = vld [vmem:[%s5043 + $0xc3] sm:$0xff]
        %v5895 = vld [vmem:[%s5043 + $0xcb] sm:$0xff]
        %v5896 = vld [vmem:[%s5043 + $0xdb] sm:$0xff]
        %v5897 = vld [vmem:[%s5043 + $0xe3] sm:$0xff]
        %v5898 = vld [vmem:[%s5043 + $0xf3] sm:$0xff]
        %v5899 = vld [vmem:[%s5043 + $0xfb] sm:$0xff]
        %v5900 = vld [vmem:[%s5043 + $0x10b] sm:$0xff]
        %v5901 = vld [vmem:[%s5043 + $0x113] sm:$0xff]
        %v5902 = vld [vmem:[%s5043 + $0x123] sm:$0xff]
        %v5903 = vld [vmem:[%s5043 + $0x12b] sm:$0xff]
        %v5904 = vld [vmem:[%s5043 + $0x13b] sm:$0xff]
        %v5905 = vld [vmem:[%s5043 + $0x143] sm:$0xff]
        %v5906 = vld [vmem:[%s5043 + $0x153] sm:$0xff]
        %v5907 = vld [vmem:[%s5043 + $0x15b] sm:$0xff]
        %v5908 = vld [vmem:[%s5043 + $0x16b] sm:$0xff]
        %v5909 = vld [vmem:[%s5043 + $0x173] sm:$0xff]
        %s5910 = scalar_lea.vmem %s9, 16
        %v5911 = vld [vmem:[%s5910] sm:$0x3]
        %v5913 = vsel %vm3622, %v5878, 0
        %v5916 = vsel %vm3622, %v5879, 0
        %v5919 = vsel %vm3622, %v5880, 0
        %v5922 = vsel %vm3622, %v5881, 0
        %v5925 = vsel %vm3622, %v5882, 0
        %v5928 = vsel %vm3622, %v5883, 0
        %v5931 = vsel %vm3622, %v5884, 0
        %v5934 = vsel %vm3622, %v5885, 0
        %v5937 = vsel %vm3622, %v5886, 0
        %v5940 = vsel %vm3622, %v5887, 0
        %v5943 = vsel %vm3622, %v5888, 0
        %v5946 = vsel %vm3622, %v5889, 0
        %v5949 = vsel %vm3622, %v5890, 0
        %v5952 = vsel %vm3622, %v5891, 0
        %v5955 = vsel %vm3622, %v5892, 0
        %v5958 = vsel %vm3622, %v5893, 0
        %v5961 = vsel %vm3622, %v5894, 0
        %v5964 = vsel %vm3622, %v5895, 0
        %v5967 = vsel %vm3622, %v5896, 0
        %v5970 = vsel %vm3622, %v5897, 0
        %v5973 = vsel %vm3622, %v5898, 0
        %v5976 = vsel %vm3622, %v5899, 0
        %v5979 = vsel %vm3622, %v5900, 0
        %v5982 = vsel %vm3622, %v5901, 0
        %v5985 = vsel %vm3622, %v5902, 0
        %v5988 = vsel %vm3622, %v5903, 0
        %v5991 = vsel %vm3622, %v5904, 0
        %v5994 = vsel %vm3622, %v5905, 0
        %v5997 = vsel %vm3622, %v5906, 0
        %v6000 = vsel %vm3622, %v5907, 0
        %v6003 = vsel %vm3622, %v5908, 0
        %v6006 = vsel %vm3622, %v5909, 0
        %v6009 = vsel %vm3880, %v5911, 0
        %6011 = vmatpush.msra.mxu0 0.0
        %6012 = vmatpush.msra.mxu0 0.0
        %6013 = vmatpush.msra.mxu0 0.0
        %6014 = vmatpush.msra.mxu0 0.0
        %6015 = vmatpush.msra.mxu0 0.0
        %6016 = vmatpush.msra.mxu0 0.0
        %6017 = vmatpush.msra.mxu0 0.0
        %6018 = vmatpush.msra.mxu0 0.0
        %6019 = vmatpush.msra.mxu0 0.0
        %6020 = vmatpush.msra.mxu0 0.0
        %6021 = vmatpush.msra.mxu0 0.0
        %6022 = vmatpush.msra.mxu0 0.0
        %6023 = vmatpush.msra.mxu0 0.0
        %6024 = vmatpush.msra.mxu0 0.0
        %6025 = vmatpush.msra.mxu0 0.0
        %6026 = vmatpush.msra.mxu0 %v6009
        %6027 = vmatmul.f32.gmra.mxu0 %v5913
        %v6028 = vpop.f32.mrf.mxu0
        %v6029 = vadd.f32 0.0, %v6028
        %6030 = vmatmul.f32.gmra.mxu0 %v5916
        %v6031 = vpop.f32.mrf.mxu0
        %v6032 = vadd.f32 0.0, %v6031
        %6033 = vmatmul.f32.gmra.mxu0 %v5919
        %v6034 = vpop.f32.mrf.mxu0
        %v6035 = vadd.f32 0.0, %v6034
        %6036 = vmatmul.f32.gmra.mxu0 %v5922
        %v6037 = vpop.f32.mrf.mxu0
        %v6038 = vadd.f32 0.0, %v6037
        %6039 = vmatmul.f32.gmra.mxu0 %v5925
        %v6040 = vpop.f32.mrf.mxu0
        %v6041 = vadd.f32 0.0, %v6040
        %6042 = vmatmul.f32.gmra.mxu0 %v5928
        %v6043 = vpop.f32.mrf.mxu0
        %v6044 = vadd.f32 0.0, %v6043
        %6045 = vmatmul.f32.gmra.mxu0 %v5931
        %v6046 = vpop.f32.mrf.mxu0
        %v6047 = vadd.f32 0.0, %v6046
        %6048 = vmatmul.f32.gmra.mxu0 %v5934
        %v6049 = vpop.f32.mrf.mxu0
        %v6050 = vadd.f32 0.0, %v6049
        %6051 = vmatmul.f32.gmra.mxu0 %v5937
        %v6052 = vpop.f32.mrf.mxu0
        %v6053 = vadd.f32 0.0, %v6052
        %6054 = vmatmul.f32.gmra.mxu0 %v5940
        %v6055 = vpop.f32.mrf.mxu0
        %v6056 = vadd.f32 0.0, %v6055
        %6057 = vmatmul.f32.gmra.mxu0 %v5943
        %v6058 = vpop.f32.mrf.mxu0
        %v6059 = vadd.f32 0.0, %v6058
        %6060 = vmatmul.f32.gmra.mxu0 %v5946
        %v6061 = vpop.f32.mrf.mxu0
        %v6062 = vadd.f32 0.0, %v6061
        %6063 = vmatmul.f32.gmra.mxu0 %v5949
        %v6064 = vpop.f32.mrf.mxu0
        %v6065 = vadd.f32 0.0, %v6064
        %6066 = vmatmul.f32.gmra.mxu0 %v5952
        %v6067 = vpop.f32.mrf.mxu0
        %v6068 = vadd.f32 0.0, %v6067
        %6069 = vmatmul.f32.gmra.mxu0 %v5955
        %v6070 = vpop.f32.mrf.mxu0
        %v6071 = vadd.f32 0.0, %v6070
        %6072 = vmatmul.f32.gmra.mxu0 %v5958
        %v6073 = vpop.f32.mrf.mxu0
        %v6074 = vadd.f32 0.0, %v6073
        %6075 = vmatmul.f32.gmra.mxu0 %v5961
        %v6076 = vpop.f32.mrf.mxu0
        %v6077 = vadd.f32 0.0, %v6076
        %6078 = vmatmul.f32.gmra.mxu0 %v5964
        %v6079 = vpop.f32.mrf.mxu0
        %v6080 = vadd.f32 0.0, %v6079
        %6081 = vmatmul.f32.gmra.mxu0 %v5967
        %v6082 = vpop.f32.mrf.mxu0
        %v6083 = vadd.f32 0.0, %v6082
        %6084 = vmatmul.f32.gmra.mxu0 %v5970
        %v6085 = vpop.f32.mrf.mxu0
        %v6086 = vadd.f32 0.0, %v6085
        %6087 = vmatmul.f32.gmra.mxu0 %v5973
        %v6088 = vpop.f32.mrf.mxu0
        %v6089 = vadd.f32 0.0, %v6088
        %6090 = vmatmul.f32.gmra.mxu0 %v5976
        %v6091 = vpop.f32.mrf.mxu0
        %v6092 = vadd.f32 0.0, %v6091
        %6093 = vmatmul.f32.gmra.mxu0 %v5979
        %v6094 = vpop.f32.mrf.mxu0
        %v6095 = vadd.f32 0.0, %v6094
        %6096 = vmatmul.f32.gmra.mxu0 %v5982
        %v6097 = vpop.f32.mrf.mxu0
        %v6098 = vadd.f32 0.0, %v6097
        %6099 = vmatmul.f32.gmra.mxu0 %v5985
        %v6100 = vpop.f32.mrf.mxu0
        %v6101 = vadd.f32 0.0, %v6100
        %6102 = vmatmul.f32.gmra.mxu0 %v5988
        %v6103 = vpop.f32.mrf.mxu0
        %v6104 = vadd.f32 0.0, %v6103
        %6105 = vmatmul.f32.gmra.mxu0 %v5991
        %v6106 = vpop.f32.mrf.mxu0
        %v6107 = vadd.f32 0.0, %v6106
        %6108 = vmatmul.f32.gmra.mxu0 %v5994
        %v6109 = vpop.f32.mrf.mxu0
        %v6110 = vadd.f32 0.0, %v6109
        %6111 = vmatmul.f32.gmra.mxu0 %v5997
        %v6112 = vpop.f32.mrf.mxu0
        %v6113 = vadd.f32 0.0, %v6112
        %6114 = vmatmul.f32.gmra.mxu0 %v6000
        %v6115 = vpop.f32.mrf.mxu0
        %v6116 = vadd.f32 0.0, %v6115
        %6117 = vmatmul.f32.gmra.mxu0 %v6003
        %v6118 = vpop.f32.mrf.mxu0
        %v6119 = vadd.f32 0.0, %v6118
        %6120 = vmatmul.f32.gmra.mxu0 %v6006
        %v6121 = vpop.f32.mrf.mxu0
        %v6122 = vadd.f32 0.0, %v6121
        %6123 = vdwg.mxu0
        %v6124 = vadd.f32 %v5846, %v6029
        %v6125 = vadd.f32 %v5847, %v6032
        %v6126 = vadd.f32 %v5848, %v6035
        %v6127 = vadd.f32 %v5849, %v6038
        %v6128 = vadd.f32 %v5850, %v6041
        %v6129 = vadd.f32 %v5851, %v6044
        %v6130 = vadd.f32 %v5852, %v6047
        %v6131 = vadd.f32 %v5853, %v6050
        %v6132 = vadd.f32 %v5854, %v6053
        %v6133 = vadd.f32 %v5855, %v6056
        %v6134 = vadd.f32 %v5856, %v6059
        %v6135 = vadd.f32 %v5857, %v6062
        %v6136 = vadd.f32 %v5858, %v6065
        %v6137 = vadd.f32 %v5859, %v6068
        %v6138 = vadd.f32 %v5860, %v6071
        %v6139 = vadd.f32 %v5861, %v6074
        %v6140 = vadd.f32 %v5862, %v6077
        %v6141 = vadd.f32 %v5863, %v6080
        %v6142 = vadd.f32 %v5864, %v6083
        %v6143 = vadd.f32 %v5865, %v6086
        %v6144 = vadd.f32 %v5866, %v6089
        %v6145 = vadd.f32 %v5867, %v6092
        %v6146 = vadd.f32 %v5868, %v6095
        %v6147 = vadd.f32 %v5869, %v6098
        %v6148 = vadd.f32 %v5870, %v6101
        %v6149 = vadd.f32 %v5871, %v6104
        %v6150 = vadd.f32 %v5872, %v6107
        %v6151 = vadd.f32 %v5873, %v6110
        %v6152 = vadd.f32 %v5874, %v6113
        %v6153 = vadd.f32 %v5875, %v6116
        %v6154 = vadd.f32 %v5876, %v6119
        %v6155 = vadd.f32 %v5877, %v6122
        %v6156 = vld [vmem:[%s5043 + $0x4] sm:$0xff]
        %v6157 = vld [vmem:[%s5043 + $0xc] sm:$0xff]
        %v6158 = vld [vmem:[%s5043 + $0x1c] sm:$0xff]
        %v6159 = vld [vmem:[%s5043 + $0x24] sm:$0xff]
        %v6160 = vld [vmem:[%s5043 + $0x34] sm:$0xff]
        %v6161 = vld [vmem:[%s5043 + $0x3c] sm:$0xff]
        %v6162 = vld [vmem:[%s5043 + $0x4c] sm:$0xff]
        %v6163 = vld [vmem:[%s5043 + $0x54] sm:$0xff]
        %v6164 = vld [vmem:[%s5043 + $0x64] sm:$0xff]
        %v6165 = vld [vmem:[%s5043 + $0x6c] sm:$0xff]
        %v6166 = vld [vmem:[%s5043 + $0x7c] sm:$0xff]
        %v6167 = vld [vmem:[%s5043 + $0x84] sm:$0xff]
        %v6168 = vld [vmem:[%s5043 + $0x94] sm:$0xff]
        %v6169 = vld [vmem:[%s5043 + $0x9c] sm:$0xff]
        %v6170 = vld [vmem:[%s5043 + $0xac] sm:$0xff]
        %v6171 = vld [vmem:[%s5043 + $0xb4] sm:$0xff]
        %v6172 = vld [vmem:[%s5043 + $0xc4] sm:$0xff]
        %v6173 = vld [vmem:[%s5043 + $0xcc] sm:$0xff]
        %v6174 = vld [vmem:[%s5043 + $0xdc] sm:$0xff]
        %v6175 = vld [vmem:[%s5043 + $0xe4] sm:$0xff]
        %v6176 = vld [vmem:[%s5043 + $0xf4] sm:$0xff]
        %v6177 = vld [vmem:[%s5043 + $0xfc] sm:$0xff]
        %v6178 = vld [vmem:[%s5043 + $0x10c] sm:$0xff]
        %v6179 = vld [vmem:[%s5043 + $0x114] sm:$0xff]
        %v6180 = vld [vmem:[%s5043 + $0x124] sm:$0xff]
        %v6181 = vld [vmem:[%s5043 + $0x12c] sm:$0xff]
        %v6182 = vld [vmem:[%s5043 + $0x13c] sm:$0xff]
        %v6183 = vld [vmem:[%s5043 + $0x144] sm:$0xff]
        %v6184 = vld [vmem:[%s5043 + $0x154] sm:$0xff]
        %v6185 = vld [vmem:[%s5043 + $0x15c] sm:$0xff]
        %v6186 = vld [vmem:[%s5043 + $0x16c] sm:$0xff]
        %v6187 = vld [vmem:[%s5043 + $0x174] sm:$0xff]
        %s6188 = scalar_lea.vmem %s9, 18
        %v6189 = vld [vmem:[%s6188] sm:$0x3]
        %v6191 = vsel %vm3622, %v6156, 0
        %v6194 = vsel %vm3622, %v6157, 0
        %v6197 = vsel %vm3622, %v6158, 0
        %v6200 = vsel %vm3622, %v6159, 0
        %v6203 = vsel %vm3622, %v6160, 0
        %v6206 = vsel %vm3622, %v6161, 0
        %v6209 = vsel %vm3622, %v6162, 0
        %v6212 = vsel %vm3622, %v6163, 0
        %v6215 = vsel %vm3622, %v6164, 0
        %v6218 = vsel %vm3622, %v6165, 0
        %v6221 = vsel %vm3622, %v6166, 0
        %v6224 = vsel %vm3622, %v6167, 0
        %v6227 = vsel %vm3622, %v6168, 0
        %v6230 = vsel %vm3622, %v6169, 0
        %v6233 = vsel %vm3622, %v6170, 0
        %v6236 = vsel %vm3622, %v6171, 0
        %v6239 = vsel %vm3622, %v6172, 0
        %v6242 = vsel %vm3622, %v6173, 0
        %v6245 = vsel %vm3622, %v6174, 0
        %v6248 = vsel %vm3622, %v6175, 0
        %v6251 = vsel %vm3622, %v6176, 0
        %v6254 = vsel %vm3622, %v6177, 0
        %v6257 = vsel %vm3622, %v6178, 0
        %v6260 = vsel %vm3622, %v6179, 0
        %v6263 = vsel %vm3622, %v6180, 0
        %v6266 = vsel %vm3622, %v6181, 0
        %v6269 = vsel %vm3622, %v6182, 0
        %v6272 = vsel %vm3622, %v6183, 0
        %v6275 = vsel %vm3622, %v6184, 0
        %v6278 = vsel %vm3622, %v6185, 0
        %v6281 = vsel %vm3622, %v6186, 0
        %v6284 = vsel %vm3622, %v6187, 0
        %v6287 = vsel %vm3880, %v6189, 0
        %6289 = vmatpush.msra.mxu0 0.0
        %6290 = vmatpush.msra.mxu0 0.0
        %6291 = vmatpush.msra.mxu0 0.0
        %6292 = vmatpush.msra.mxu0 0.0
        %6293 = vmatpush.msra.mxu0 0.0
        %6294 = vmatpush.msra.mxu0 0.0
        %6295 = vmatpush.msra.mxu0 0.0
        %6296 = vmatpush.msra.mxu0 0.0
        %6297 = vmatpush.msra.mxu0 0.0
        %6298 = vmatpush.msra.mxu0 0.0
        %6299 = vmatpush.msra.mxu0 0.0
        %6300 = vmatpush.msra.mxu0 0.0
        %6301 = vmatpush.msra.mxu0 0.0
        %6302 = vmatpush.msra.mxu0 0.0
        %6303 = vmatpush.msra.mxu0 0.0
        %6304 = vmatpush.msra.mxu0 %v6287
        %6305 = vmatmul.f32.gmra.mxu0 %v6191
        %v6306 = vpop.f32.mrf.mxu0
        %v6307 = vadd.f32 0.0, %v6306
        %6308 = vmatmul.f32.gmra.mxu0 %v6194
        %v6309 = vpop.f32.mrf.mxu0
        %v6310 = vadd.f32 0.0, %v6309
        %6311 = vmatmul.f32.gmra.mxu0 %v6197
        %v6312 = vpop.f32.mrf.mxu0
        %v6313 = vadd.f32 0.0, %v6312
        %6314 = vmatmul.f32.gmra.mxu0 %v6200
        %v6315 = vpop.f32.mrf.mxu0
        %v6316 = vadd.f32 0.0, %v6315
        %6317 = vmatmul.f32.gmra.mxu0 %v6203
        %v6318 = vpop.f32.mrf.mxu0
        %v6319 = vadd.f32 0.0, %v6318
        %6320 = vmatmul.f32.gmra.mxu0 %v6206
        %v6321 = vpop.f32.mrf.mxu0
        %v6322 = vadd.f32 0.0, %v6321
        %6323 = vmatmul.f32.gmra.mxu0 %v6209
        %v6324 = vpop.f32.mrf.mxu0
        %v6325 = vadd.f32 0.0, %v6324
        %6326 = vmatmul.f32.gmra.mxu0 %v6212
        %v6327 = vpop.f32.mrf.mxu0
        %v6328 = vadd.f32 0.0, %v6327
        %6329 = vmatmul.f32.gmra.mxu0 %v6215
        %v6330 = vpop.f32.mrf.mxu0
        %v6331 = vadd.f32 0.0, %v6330
        %6332 = vmatmul.f32.gmra.mxu0 %v6218
        %v6333 = vpop.f32.mrf.mxu0
        %v6334 = vadd.f32 0.0, %v6333
        %6335 = vmatmul.f32.gmra.mxu0 %v6221
        %v6336 = vpop.f32.mrf.mxu0
        %v6337 = vadd.f32 0.0, %v6336
        %6338 = vmatmul.f32.gmra.mxu0 %v6224
        %v6339 = vpop.f32.mrf.mxu0
        %v6340 = vadd.f32 0.0, %v6339
        %6341 = vmatmul.f32.gmra.mxu0 %v6227
        %v6342 = vpop.f32.mrf.mxu0
        %v6343 = vadd.f32 0.0, %v6342
        %6344 = vmatmul.f32.gmra.mxu0 %v6230
        %v6345 = vpop.f32.mrf.mxu0
        %v6346 = vadd.f32 0.0, %v6345
        %6347 = vmatmul.f32.gmra.mxu0 %v6233
        %v6348 = vpop.f32.mrf.mxu0
        %v6349 = vadd.f32 0.0, %v6348
        %6350 = vmatmul.f32.gmra.mxu0 %v6236
        %v6351 = vpop.f32.mrf.mxu0
        %v6352 = vadd.f32 0.0, %v6351
        %6353 = vmatmul.f32.gmra.mxu0 %v6239
        %v6354 = vpop.f32.mrf.mxu0
        %v6355 = vadd.f32 0.0, %v6354
        %6356 = vmatmul.f32.gmra.mxu0 %v6242
        %v6357 = vpop.f32.mrf.mxu0
        %v6358 = vadd.f32 0.0, %v6357
        %6359 = vmatmul.f32.gmra.mxu0 %v6245
        %v6360 = vpop.f32.mrf.mxu0
        %v6361 = vadd.f32 0.0, %v6360
        %6362 = vmatmul.f32.gmra.mxu0 %v6248
        %v6363 = vpop.f32.mrf.mxu0
        %v6364 = vadd.f32 0.0, %v6363
        %6365 = vmatmul.f32.gmra.mxu0 %v6251
        %v6366 = vpop.f32.mrf.mxu0
        %v6367 = vadd.f32 0.0, %v6366
        %6368 = vmatmul.f32.gmra.mxu0 %v6254
        %v6369 = vpop.f32.mrf.mxu0
        %v6370 = vadd.f32 0.0, %v6369
        %6371 = vmatmul.f32.gmra.mxu0 %v6257
        %v6372 = vpop.f32.mrf.mxu0
        %v6373 = vadd.f32 0.0, %v6372
        %6374 = vmatmul.f32.gmra.mxu0 %v6260
        %v6375 = vpop.f32.mrf.mxu0
        %v6376 = vadd.f32 0.0, %v6375
        %6377 = vmatmul.f32.gmra.mxu0 %v6263
        %v6378 = vpop.f32.mrf.mxu0
        %v6379 = vadd.f32 0.0, %v6378
        %6380 = vmatmul.f32.gmra.mxu0 %v6266
        %v6381 = vpop.f32.mrf.mxu0
        %v6382 = vadd.f32 0.0, %v6381
        %6383 = vmatmul.f32.gmra.mxu0 %v6269
        %v6384 = vpop.f32.mrf.mxu0
        %v6385 = vadd.f32 0.0, %v6384
        %6386 = vmatmul.f32.gmra.mxu0 %v6272
        %v6387 = vpop.f32.mrf.mxu0
        %v6388 = vadd.f32 0.0, %v6387
        %6389 = vmatmul.f32.gmra.mxu0 %v6275
        %v6390 = vpop.f32.mrf.mxu0
        %v6391 = vadd.f32 0.0, %v6390
        %6392 = vmatmul.f32.gmra.mxu0 %v6278
        %v6393 = vpop.f32.mrf.mxu0
        %v6394 = vadd.f32 0.0, %v6393
        %6395 = vmatmul.f32.gmra.mxu0 %v6281
        %v6396 = vpop.f32.mrf.mxu0
        %v6397 = vadd.f32 0.0, %v6396
        %6398 = vmatmul.f32.gmra.mxu0 %v6284
        %v6399 = vpop.f32.mrf.mxu0
        %v6400 = vadd.f32 0.0, %v6399
        %6401 = vdwg.mxu0
        %v6402 = vadd.f32 %v6124, %v6307
        %v6403 = vadd.f32 %v6125, %v6310
        %v6404 = vadd.f32 %v6126, %v6313
        %v6405 = vadd.f32 %v6127, %v6316
        %v6406 = vadd.f32 %v6128, %v6319
        %v6407 = vadd.f32 %v6129, %v6322
        %v6408 = vadd.f32 %v6130, %v6325
        %v6409 = vadd.f32 %v6131, %v6328
        %v6410 = vadd.f32 %v6132, %v6331
        %v6411 = vadd.f32 %v6133, %v6334
        %v6412 = vadd.f32 %v6134, %v6337
        %v6413 = vadd.f32 %v6135, %v6340
        %v6414 = vadd.f32 %v6136, %v6343
        %v6415 = vadd.f32 %v6137, %v6346
        %v6416 = vadd.f32 %v6138, %v6349
        %v6417 = vadd.f32 %v6139, %v6352
        %v6418 = vadd.f32 %v6140, %v6355
        %v6419 = vadd.f32 %v6141, %v6358
        %v6420 = vadd.f32 %v6142, %v6361
        %v6421 = vadd.f32 %v6143, %v6364
        %v6422 = vadd.f32 %v6144, %v6367
        %v6423 = vadd.f32 %v6145, %v6370
        %v6424 = vadd.f32 %v6146, %v6373
        %v6425 = vadd.f32 %v6147, %v6376
        %v6426 = vadd.f32 %v6148, %v6379
        %v6427 = vadd.f32 %v6149, %v6382
        %v6428 = vadd.f32 %v6150, %v6385
        %v6429 = vadd.f32 %v6151, %v6388
        %v6430 = vadd.f32 %v6152, %v6391
        %v6431 = vadd.f32 %v6153, %v6394
        %v6432 = vadd.f32 %v6154, %v6397
        %v6433 = vadd.f32 %v6155, %v6400
        %v6434 = vld [vmem:[%s3684] sm:$0xff]
        %v6435 = vld [vmem:[%s3684 + $0x8] sm:$0xff]
        %v6436 = vld [vmem:[%s3684 + $0x18] sm:$0xff]
        %v6437 = vld [vmem:[%s3684 + $0x20] sm:$0xff]
        %v6438 = vld [vmem:[%s3684 + $0x30] sm:$0xff]
        %v6439 = vld [vmem:[%s3684 + $0x38] sm:$0xff]
        %v6440 = vld [vmem:[%s3684 + $0x48] sm:$0xff]
        %v6441 = vld [vmem:[%s3684 + $0x50] sm:$0xff]
        %v6442 = vld [vmem:[%s3684 + $0x60] sm:$0xff]
        %v6443 = vld [vmem:[%s3684 + $0x68] sm:$0xff]
        %v6444 = vld [vmem:[%s3684 + $0x78] sm:$0xff]
        %v6445 = vld [vmem:[%s3684 + $0x80] sm:$0xff]
        %v6446 = vld [vmem:[%s3684 + $0x90] sm:$0xff]
        %v6447 = vld [vmem:[%s3684 + $0x98] sm:$0xff]
        %v6448 = vld [vmem:[%s3684 + $0xa8] sm:$0xff]
        %v6449 = vld [vmem:[%s3684 + $0xb0] sm:$0xff]
        %v6450 = vld [vmem:[%s3684 + $0xc0] sm:$0xff]
        %v6451 = vld [vmem:[%s3684 + $0xc8] sm:$0xff]
        %v6452 = vld [vmem:[%s3684 + $0xd8] sm:$0xff]
        %v6453 = vld [vmem:[%s3684 + $0xe0] sm:$0xff]
        %v6454 = vld [vmem:[%s3684 + $0xf0] sm:$0xff]
        %v6455 = vld [vmem:[%s3684 + $0xf8] sm:$0xff]
        %v6456 = vld [vmem:[%s3684 + $0x108] sm:$0xff]
        %v6457 = vld [vmem:[%s3684 + $0x110] sm:$0xff]
        %v6458 = vld [vmem:[%s3684 + $0x120] sm:$0xff]
        %v6459 = vld [vmem:[%s3684 + $0x128] sm:$0xff]
        %v6460 = vld [vmem:[%s3684 + $0x138] sm:$0xff]
        %v6461 = vld [vmem:[%s3684 + $0x140] sm:$0xff]
        %v6462 = vld [vmem:[%s3684 + $0x150] sm:$0xff]
        %v6463 = vld [vmem:[%s3684 + $0x158] sm:$0xff]
        %v6464 = vld [vmem:[%s3684 + $0x168] sm:$0xff]
        %v6465 = vld [vmem:[%s3684 + $0x170] sm:$0xff]
        %s6466 = scalar_lea.vmem %s9, 20
        %v6467 = vld [vmem:[%s6466] sm:$0x3]
        %v6469 = vsel %vm3622, %v6434, 0
        %v6472 = vsel %vm3622, %v6435, 0
        %v6475 = vsel %vm3622, %v6436, 0
        %v6478 = vsel %vm3622, %v6437, 0
        %v6481 = vsel %vm3622, %v6438, 0
        %v6484 = vsel %vm3622, %v6439, 0
        %v6487 = vsel %vm3622, %v6440, 0
        %v6490 = vsel %vm3622, %v6441, 0
        %v6493 = vsel %vm3622, %v6442, 0
        %v6496 = vsel %vm3622, %v6443, 0
        %v6499 = vsel %vm3622, %v6444, 0
        %v6502 = vsel %vm3622, %v6445, 0
        %v6505 = vsel %vm3622, %v6446, 0
        %v6508 = vsel %vm3622, %v6447, 0
        %v6511 = vsel %vm3622, %v6448, 0
        %v6514 = vsel %vm3622, %v6449, 0
        %v6517 = vsel %vm3622, %v6450, 0
        %v6520 = vsel %vm3622, %v6451, 0
        %v6523 = vsel %vm3622, %v6452, 0
        %v6526 = vsel %vm3622, %v6453, 0
        %v6529 = vsel %vm3622, %v6454, 0
        %v6532 = vsel %vm3622, %v6455, 0
        %v6535 = vsel %vm3622, %v6456, 0
        %v6538 = vsel %vm3622, %v6457, 0
        %v6541 = vsel %vm3622, %v6458, 0
        %v6544 = vsel %vm3622, %v6459, 0
        %v6547 = vsel %vm3622, %v6460, 0
        %v6550 = vsel %vm3622, %v6461, 0
        %v6553 = vsel %vm3622, %v6462, 0
        %v6556 = vsel %vm3622, %v6463, 0
        %v6559 = vsel %vm3622, %v6464, 0
        %v6562 = vsel %vm3622, %v6465, 0
        %v6565 = vsel %vm3880, %v6467, 0
        %6567 = vmatpush.msra.mxu0 0.0
        %6568 = vmatpush.msra.mxu0 0.0
        %6569 = vmatpush.msra.mxu0 0.0
        %6570 = vmatpush.msra.mxu0 0.0
        %6571 = vmatpush.msra.mxu0 0.0
        %6572 = vmatpush.msra.mxu0 0.0
        %6573 = vmatpush.msra.mxu0 0.0
        %6574 = vmatpush.msra.mxu0 0.0
        %6575 = vmatpush.msra.mxu0 0.0
        %6576 = vmatpush.msra.mxu0 0.0
        %6577 = vmatpush.msra.mxu0 0.0
        %6578 = vmatpush.msra.mxu0 0.0
        %6579 = vmatpush.msra.mxu0 0.0
        %6580 = vmatpush.msra.mxu0 0.0
        %6581 = vmatpush.msra.mxu0 0.0
        %6582 = vmatpush.msra.mxu0 %v6565
        %6583 = vmatmul.f32.gmra.mxu0 %v6469
        %v6584 = vpop.f32.mrf.mxu0
        %v6585 = vadd.f32 0.0, %v6584
        %6586 = vmatmul.f32.gmra.mxu0 %v6472
        %v6587 = vpop.f32.mrf.mxu0
        %v6588 = vadd.f32 0.0, %v6587
        %6589 = vmatmul.f32.gmra.mxu0 %v6475
        %v6590 = vpop.f32.mrf.mxu0
        %v6591 = vadd.f32 0.0, %v6590
        %6592 = vmatmul.f32.gmra.mxu0 %v6478
        %v6593 = vpop.f32.mrf.mxu0
        %v6594 = vadd.f32 0.0, %v6593
        %6595 = vmatmul.f32.gmra.mxu0 %v6481
        %v6596 = vpop.f32.mrf.mxu0
        %v6597 = vadd.f32 0.0, %v6596
        %6598 = vmatmul.f32.gmra.mxu0 %v6484
        %v6599 = vpop.f32.mrf.mxu0
        %v6600 = vadd.f32 0.0, %v6599
        %6601 = vmatmul.f32.gmra.mxu0 %v6487
        %v6602 = vpop.f32.mrf.mxu0
        %v6603 = vadd.f32 0.0, %v6602
        %6604 = vmatmul.f32.gmra.mxu0 %v6490
        %v6605 = vpop.f32.mrf.mxu0
        %v6606 = vadd.f32 0.0, %v6605
        %6607 = vmatmul.f32.gmra.mxu0 %v6493
        %v6608 = vpop.f32.mrf.mxu0
        %v6609 = vadd.f32 0.0, %v6608
        %6610 = vmatmul.f32.gmra.mxu0 %v6496
        %v6611 = vpop.f32.mrf.mxu0
        %v6612 = vadd.f32 0.0, %v6611
        %6613 = vmatmul.f32.gmra.mxu0 %v6499
        %v6614 = vpop.f32.mrf.mxu0
        %v6615 = vadd.f32 0.0, %v6614
        %6616 = vmatmul.f32.gmra.mxu0 %v6502
        %v6617 = vpop.f32.mrf.mxu0
        %v6618 = vadd.f32 0.0, %v6617
        %6619 = vmatmul.f32.gmra.mxu0 %v6505
        %v6620 = vpop.f32.mrf.mxu0
        %v6621 = vadd.f32 0.0, %v6620
        %6622 = vmatmul.f32.gmra.mxu0 %v6508
        %v6623 = vpop.f32.mrf.mxu0
        %v6624 = vadd.f32 0.0, %v6623
        %6625 = vmatmul.f32.gmra.mxu0 %v6511
        %v6626 = vpop.f32.mrf.mxu0
        %v6627 = vadd.f32 0.0, %v6626
        %6628 = vmatmul.f32.gmra.mxu0 %v6514
        %v6629 = vpop.f32.mrf.mxu0
        %v6630 = vadd.f32 0.0, %v6629
        %6631 = vmatmul.f32.gmra.mxu0 %v6517
        %v6632 = vpop.f32.mrf.mxu0
        %v6633 = vadd.f32 0.0, %v6632
        %6634 = vmatmul.f32.gmra.mxu0 %v6520
        %v6635 = vpop.f32.mrf.mxu0
        %v6636 = vadd.f32 0.0, %v6635
        %6637 = vmatmul.f32.gmra.mxu0 %v6523
        %v6638 = vpop.f32.mrf.mxu0
        %v6639 = vadd.f32 0.0, %v6638
        %6640 = vmatmul.f32.gmra.mxu0 %v6526
        %v6641 = vpop.f32.mrf.mxu0
        %v6642 = vadd.f32 0.0, %v6641
        %6643 = vmatmul.f32.gmra.mxu0 %v6529
        %v6644 = vpop.f32.mrf.mxu0
        %v6645 = vadd.f32 0.0, %v6644
        %6646 = vmatmul.f32.gmra.mxu0 %v6532
        %v6647 = vpop.f32.mrf.mxu0
        %v6648 = vadd.f32 0.0, %v6647
        %6649 = vmatmul.f32.gmra.mxu0 %v6535
        %v6650 = vpop.f32.mrf.mxu0
        %v6651 = vadd.f32 0.0, %v6650
        %6652 = vmatmul.f32.gmra.mxu0 %v6538
        %v6653 = vpop.f32.mrf.mxu0
        %v6654 = vadd.f32 0.0, %v6653
        %6655 = vmatmul.f32.gmra.mxu0 %v6541
        %v6656 = vpop.f32.mrf.mxu0
        %v6657 = vadd.f32 0.0, %v6656
        %6658 = vmatmul.f32.gmra.mxu0 %v6544
        %v6659 = vpop.f32.mrf.mxu0
        %v6660 = vadd.f32 0.0, %v6659
        %6661 = vmatmul.f32.gmra.mxu0 %v6547
        %v6662 = vpop.f32.mrf.mxu0
        %v6663 = vadd.f32 0.0, %v6662
        %6664 = vmatmul.f32.gmra.mxu0 %v6550
        %v6665 = vpop.f32.mrf.mxu0
        %v6666 = vadd.f32 0.0, %v6665
        %6667 = vmatmul.f32.gmra.mxu0 %v6553
        %v6668 = vpop.f32.mrf.mxu0
        %v6669 = vadd.f32 0.0, %v6668
        %6670 = vmatmul.f32.gmra.mxu0 %v6556
        %v6671 = vpop.f32.mrf.mxu0
        %v6672 = vadd.f32 0.0, %v6671
        %6673 = vmatmul.f32.gmra.mxu0 %v6559
        %v6674 = vpop.f32.mrf.mxu0
        %v6675 = vadd.f32 0.0, %v6674
        %6676 = vmatmul.f32.gmra.mxu0 %v6562
        %v6677 = vpop.f32.mrf.mxu0
        %v6678 = vadd.f32 0.0, %v6677
        %6679 = vdwg.mxu0
        %v6680 = vadd.f32 %v6402, %v6585
        %v6681 = vadd.f32 %v6403, %v6588
        %v6682 = vadd.f32 %v6404, %v6591
        %v6683 = vadd.f32 %v6405, %v6594
        %v6684 = vadd.f32 %v6406, %v6597
        %v6685 = vadd.f32 %v6407, %v6600
        %v6686 = vadd.f32 %v6408, %v6603
        %v6687 = vadd.f32 %v6409, %v6606
        %v6688 = vadd.f32 %v6410, %v6609
        %v6689 = vadd.f32 %v6411, %v6612
        %v6690 = vadd.f32 %v6412, %v6615
        %v6691 = vadd.f32 %v6413, %v6618
        %v6692 = vadd.f32 %v6414, %v6621
        %v6693 = vadd.f32 %v6415, %v6624
        %v6694 = vadd.f32 %v6416, %v6627
        %v6695 = vadd.f32 %v6417, %v6630
        %v6696 = vadd.f32 %v6418, %v6633
        %v6697 = vadd.f32 %v6419, %v6636
        %v6698 = vadd.f32 %v6420, %v6639
        %v6699 = vadd.f32 %v6421, %v6642
        %v6700 = vadd.f32 %v6422, %v6645
        %v6701 = vadd.f32 %v6423, %v6648
        %v6702 = vadd.f32 %v6424, %v6651
        %v6703 = vadd.f32 %v6425, %v6654
        %v6704 = vadd.f32 %v6426, %v6657
        %v6705 = vadd.f32 %v6427, %v6660
        %v6706 = vadd.f32 %v6428, %v6663
        %v6707 = vadd.f32 %v6429, %v6666
        %v6708 = vadd.f32 %v6430, %v6669
        %v6709 = vadd.f32 %v6431, %v6672
        %v6710 = vadd.f32 %v6432, %v6675
        %v6711 = vadd.f32 %v6433, %v6678
        %v6712 = vld [vmem:[%s3684 + $0x1] sm:$0xff]
        %v6713 = vld [vmem:[%s3684 + $0x9] sm:$0xff]
        %v6714 = vld [vmem:[%s3684 + $0x19] sm:$0xff]
        %v6715 = vld [vmem:[%s3684 + $0x21] sm:$0xff]
        %v6716 = vld [vmem:[%s3684 + $0x31] sm:$0xff]
        %v6717 = vld [vmem:[%s3684 + $0x39] sm:$0xff]
        %v6718 = vld [vmem:[%s3684 + $0x49] sm:$0xff]
        %v6719 = vld [vmem:[%s3684 + $0x51] sm:$0xff]
        %v6720 = vld [vmem:[%s3684 + $0x61] sm:$0xff]
        %v6721 = vld [vmem:[%s3684 + $0x69] sm:$0xff]
        %v6722 = vld [vmem:[%s3684 + $0x79] sm:$0xff]
        %v6723 = vld [vmem:[%s3684 + $0x81] sm:$0xff]
        %v6724 = vld [vmem:[%s3684 + $0x91] sm:$0xff]
        %v6725 = vld [vmem:[%s3684 + $0x99] sm:$0xff]
        %v6726 = vld [vmem:[%s3684 + $0xa9] sm:$0xff]
        %v6727 = vld [vmem:[%s3684 + $0xb1] sm:$0xff]
        %v6728 = vld [vmem:[%s3684 + $0xc1] sm:$0xff]
        %v6729 = vld [vmem:[%s3684 + $0xc9] sm:$0xff]
        %v6730 = vld [vmem:[%s3684 + $0xd9] sm:$0xff]
        %v6731 = vld [vmem:[%s3684 + $0xe1] sm:$0xff]
        %v6732 = vld [vmem:[%s3684 + $0xf1] sm:$0xff]
        %v6733 = vld [vmem:[%s3684 + $0xf9] sm:$0xff]
        %v6734 = vld [vmem:[%s3684 + $0x109] sm:$0xff]
        %v6735 = vld [vmem:[%s3684 + $0x111] sm:$0xff]
        %v6736 = vld [vmem:[%s3684 + $0x121] sm:$0xff]
        %v6737 = vld [vmem:[%s3684 + $0x129] sm:$0xff]
        %v6738 = vld [vmem:[%s3684 + $0x139] sm:$0xff]
        %v6739 = vld [vmem:[%s3684 + $0x141] sm:$0xff]
        %v6740 = vld [vmem:[%s3684 + $0x151] sm:$0xff]
        %v6741 = vld [vmem:[%s3684 + $0x159] sm:$0xff]
        %v6742 = vld [vmem:[%s3684 + $0x169] sm:$0xff]
        %v6743 = vld [vmem:[%s3684 + $0x171] sm:$0xff]
        %s6744 = scalar_lea.vmem %s9, 22
        %v6745 = vld [vmem:[%s6744] sm:$0x3]
        %v6747 = vsel %vm3622, %v6712, 0
        %v6750 = vsel %vm3622, %v6713, 0
        %v6753 = vsel %vm3622, %v6714, 0
        %v6756 = vsel %vm3622, %v6715, 0
        %v6759 = vsel %vm3622, %v6716, 0
        %v6762 = vsel %vm3622, %v6717, 0
        %v6765 = vsel %vm3622, %v6718, 0
        %v6768 = vsel %vm3622, %v6719, 0
        %v6771 = vsel %vm3622, %v6720, 0
        %v6774 = vsel %vm3622, %v6721, 0
        %v6777 = vsel %vm3622, %v6722, 0
        %v6780 = vsel %vm3622, %v6723, 0
        %v6783 = vsel %vm3622, %v6724, 0
        %v6786 = vsel %vm3622, %v6725, 0
        %v6789 = vsel %vm3622, %v6726, 0
        %v6792 = vsel %vm3622, %v6727, 0
        %v6795 = vsel %vm3622, %v6728, 0
        %v6798 = vsel %vm3622, %v6729, 0
        %v6801 = vsel %vm3622, %v6730, 0
        %v6804 = vsel %vm3622, %v6731, 0
        %v6807 = vsel %vm3622, %v6732, 0
        %v6810 = vsel %vm3622, %v6733, 0
        %v6813 = vsel %vm3622, %v6734, 0
        %v6816 = vsel %vm3622, %v6735, 0
        %v6819 = vsel %vm3622, %v6736, 0
        %v6822 = vsel %vm3622, %v6737, 0
        %v6825 = vsel %vm3622, %v6738, 0
        %v6828 = vsel %vm3622, %v6739, 0
        %v6831 = vsel %vm3622, %v6740, 0
        %v6834 = vsel %vm3622, %v6741, 0
        %v6837 = vsel %vm3622, %v6742, 0
        %v6840 = vsel %vm3622, %v6743, 0
        %v6843 = vsel %vm3880, %v6745, 0
        %6845 = vmatpush.msra.mxu0 0.0
        %6846 = vmatpush.msra.mxu0 0.0
        %6847 = vmatpush.msra.mxu0 0.0
        %6848 = vmatpush.msra.mxu0 0.0
        %6849 = vmatpush.msra.mxu0 0.0
        %6850 = vmatpush.msra.mxu0 0.0
        %6851 = vmatpush.msra.mxu0 0.0
        %6852 = vmatpush.msra.mxu0 0.0
        %6853 = vmatpush.msra.mxu0 0.0
        %6854 = vmatpush.msra.mxu0 0.0
        %6855 = vmatpush.msra.mxu0 0.0
        %6856 = vmatpush.msra.mxu0 0.0
        %6857 = vmatpush.msra.mxu0 0.0
        %6858 = vmatpush.msra.mxu0 0.0
        %6859 = vmatpush.msra.mxu0 0.0
        %6860 = vmatpush.msra.mxu0 %v6843
        %6861 = vmatmul.f32.gmra.mxu0 %v6747
        %v6862 = vpop.f32.mrf.mxu0
        %v6863 = vadd.f32 0.0, %v6862
        %6864 = vmatmul.f32.gmra.mxu0 %v6750
        %v6865 = vpop.f32.mrf.mxu0
        %v6866 = vadd.f32 0.0, %v6865
        %6867 = vmatmul.f32.gmra.mxu0 %v6753
        %v6868 = vpop.f32.mrf.mxu0
        %v6869 = vadd.f32 0.0, %v6868
        %6870 = vmatmul.f32.gmra.mxu0 %v6756
        %v6871 = vpop.f32.mrf.mxu0
        %v6872 = vadd.f32 0.0, %v6871
        %6873 = vmatmul.f32.gmra.mxu0 %v6759
        %v6874 = vpop.f32.mrf.mxu0
        %v6875 = vadd.f32 0.0, %v6874
        %6876 = vmatmul.f32.gmra.mxu0 %v6762
        %v6877 = vpop.f32.mrf.mxu0
        %v6878 = vadd.f32 0.0, %v6877
        %6879 = vmatmul.f32.gmra.mxu0 %v6765
        %v6880 = vpop.f32.mrf.mxu0
        %v6881 = vadd.f32 0.0, %v6880
        %6882 = vmatmul.f32.gmra.mxu0 %v6768
        %v6883 = vpop.f32.mrf.mxu0
        %v6884 = vadd.f32 0.0, %v6883
        %6885 = vmatmul.f32.gmra.mxu0 %v6771
        %v6886 = vpop.f32.mrf.mxu0
        %v6887 = vadd.f32 0.0, %v6886
        %6888 = vmatmul.f32.gmra.mxu0 %v6774
        %v6889 = vpop.f32.mrf.mxu0
        %v6890 = vadd.f32 0.0, %v6889
        %6891 = vmatmul.f32.gmra.mxu0 %v6777
        %v6892 = vpop.f32.mrf.mxu0
        %v6893 = vadd.f32 0.0, %v6892
        %6894 = vmatmul.f32.gmra.mxu0 %v6780
        %v6895 = vpop.f32.mrf.mxu0
        %v6896 = vadd.f32 0.0, %v6895
        %6897 = vmatmul.f32.gmra.mxu0 %v6783
        %v6898 = vpop.f32.mrf.mxu0
        %v6899 = vadd.f32 0.0, %v6898
        %6900 = vmatmul.f32.gmra.mxu0 %v6786
        %v6901 = vpop.f32.mrf.mxu0
        %v6902 = vadd.f32 0.0, %v6901
        %6903 = vmatmul.f32.gmra.mxu0 %v6789
        %v6904 = vpop.f32.mrf.mxu0
        %v6905 = vadd.f32 0.0, %v6904
        %6906 = vmatmul.f32.gmra.mxu0 %v6792
        %v6907 = vpop.f32.mrf.mxu0
        %v6908 = vadd.f32 0.0, %v6907
        %6909 = vmatmul.f32.gmra.mxu0 %v6795
        %v6910 = vpop.f32.mrf.mxu0
        %v6911 = vadd.f32 0.0, %v6910
        %6912 = vmatmul.f32.gmra.mxu0 %v6798
        %v6913 = vpop.f32.mrf.mxu0
        %v6914 = vadd.f32 0.0, %v6913
        %6915 = vmatmul.f32.gmra.mxu0 %v6801
        %v6916 = vpop.f32.mrf.mxu0
        %v6917 = vadd.f32 0.0, %v6916
        %6918 = vmatmul.f32.gmra.mxu0 %v6804
        %v6919 = vpop.f32.mrf.mxu0
        %v6920 = vadd.f32 0.0, %v6919
        %6921 = vmatmul.f32.gmra.mxu0 %v6807
        %v6922 = vpop.f32.mrf.mxu0
        %v6923 = vadd.f32 0.0, %v6922
        %6924 = vmatmul.f32.gmra.mxu0 %v6810
        %v6925 = vpop.f32.mrf.mxu0
        %v6926 = vadd.f32 0.0, %v6925
        %6927 = vmatmul.f32.gmra.mxu0 %v6813
        %v6928 = vpop.f32.mrf.mxu0
        %v6929 = vadd.f32 0.0, %v6928
        %6930 = vmatmul.f32.gmra.mxu0 %v6816
        %v6931 = vpop.f32.mrf.mxu0
        %v6932 = vadd.f32 0.0, %v6931
        %6933 = vmatmul.f32.gmra.mxu0 %v6819
        %v6934 = vpop.f32.mrf.mxu0
        %v6935 = vadd.f32 0.0, %v6934
        %6936 = vmatmul.f32.gmra.mxu0 %v6822
        %v6937 = vpop.f32.mrf.mxu0
        %v6938 = vadd.f32 0.0, %v6937
        %6939 = vmatmul.f32.gmra.mxu0 %v6825
        %v6940 = vpop.f32.mrf.mxu0
        %v6941 = vadd.f32 0.0, %v6940
        %6942 = vmatmul.f32.gmra.mxu0 %v6828
        %v6943 = vpop.f32.mrf.mxu0
        %v6944 = vadd.f32 0.0, %v6943
        %6945 = vmatmul.f32.gmra.mxu0 %v6831
        %v6946 = vpop.f32.mrf.mxu0
        %v6947 = vadd.f32 0.0, %v6946
        %6948 = vmatmul.f32.gmra.mxu0 %v6834
        %v6949 = vpop.f32.mrf.mxu0
        %v6950 = vadd.f32 0.0, %v6949
        %6951 = vmatmul.f32.gmra.mxu0 %v6837
        %v6952 = vpop.f32.mrf.mxu0
        %v6953 = vadd.f32 0.0, %v6952
        %6954 = vmatmul.f32.gmra.mxu0 %v6840
        %v6955 = vpop.f32.mrf.mxu0
        %v6956 = vadd.f32 0.0, %v6955
        %6957 = vdwg.mxu0
        %v6958 = vadd.f32 %v6680, %v6863
        %v6959 = vadd.f32 %v6681, %v6866
        %v6960 = vadd.f32 %v6682, %v6869
        %v6961 = vadd.f32 %v6683, %v6872
        %v6962 = vadd.f32 %v6684, %v6875
        %v6963 = vadd.f32 %v6685, %v6878
        %v6964 = vadd.f32 %v6686, %v6881
        %v6965 = vadd.f32 %v6687, %v6884
        %v6966 = vadd.f32 %v6688, %v6887
        %v6967 = vadd.f32 %v6689, %v6890
        %v6968 = vadd.f32 %v6690, %v6893
        %v6969 = vadd.f32 %v6691, %v6896
        %v6970 = vadd.f32 %v6692, %v6899
        %v6971 = vadd.f32 %v6693, %v6902
        %v6972 = vadd.f32 %v6694, %v6905
        %v6973 = vadd.f32 %v6695, %v6908
        %v6974 = vadd.f32 %v6696, %v6911
        %v6975 = vadd.f32 %v6697, %v6914
        %v6976 = vadd.f32 %v6698, %v6917
        %v6977 = vadd.f32 %v6699, %v6920
        %v6978 = vadd.f32 %v6700, %v6923
        %v6979 = vadd.f32 %v6701, %v6926
        %v6980 = vadd.f32 %v6702, %v6929
        %v6981 = vadd.f32 %v6703, %v6932
        %v6982 = vadd.f32 %v6704, %v6935
        %v6983 = vadd.f32 %v6705, %v6938
        %v6984 = vadd.f32 %v6706, %v6941
        %v6985 = vadd.f32 %v6707, %v6944
        %v6986 = vadd.f32 %v6708, %v6947
        %v6987 = vadd.f32 %v6709, %v6950
        %v6988 = vadd.f32 %v6710, %v6953
        %v6989 = vadd.f32 %v6711, %v6956
        %v6990 = vld [vmem:[%s3684 + $0x2] sm:$0xff]
        %v6991 = vld [vmem:[%s3684 + $0xa] sm:$0xff]
        %v6992 = vld [vmem:[%s3684 + $0x1a] sm:$0xff]
        %v6993 = vld [vmem:[%s3684 + $0x22] sm:$0xff]
        %v6994 = vld [vmem:[%s3684 + $0x32] sm:$0xff]
        %v6995 = vld [vmem:[%s3684 + $0x3a] sm:$0xff]
        %v6996 = vld [vmem:[%s3684 + $0x4a] sm:$0xff]
        %v6997 = vld [vmem:[%s3684 + $0x52] sm:$0xff]
        %v6998 = vld [vmem:[%s3684 + $0x62] sm:$0xff]
        %v6999 = vld [vmem:[%s3684 + $0x6a] sm:$0xff]
        %v7000 = vld [vmem:[%s3684 + $0x7a] sm:$0xff]
        %v7001 = vld [vmem:[%s3684 + $0x82] sm:$0xff]
        %v7002 = vld [vmem:[%s3684 + $0x92] sm:$0xff]
        %v7003 = vld [vmem:[%s3684 + $0x9a] sm:$0xff]
        %v7004 = vld [vmem:[%s3684 + $0xaa] sm:$0xff]
        %v7005 = vld [vmem:[%s3684 + $0xb2] sm:$0xff]
        %v7006 = vld [vmem:[%s3684 + $0xc2] sm:$0xff]
        %v7007 = vld [vmem:[%s3684 + $0xca] sm:$0xff]
        %v7008 = vld [vmem:[%s3684 + $0xda] sm:$0xff]
        %v7009 = vld [vmem:[%s3684 + $0xe2] sm:$0xff]
        %v7010 = vld [vmem:[%s3684 + $0xf2] sm:$0xff]
        %v7011 = vld [vmem:[%s3684 + $0xfa] sm:$0xff]
        %v7012 = vld [vmem:[%s3684 + $0x10a] sm:$0xff]
        %v7013 = vld [vmem:[%s3684 + $0x112] sm:$0xff]
        %v7014 = vld [vmem:[%s3684 + $0x122] sm:$0xff]
        %v7015 = vld [vmem:[%s3684 + $0x12a] sm:$0xff]
        %v7016 = vld [vmem:[%s3684 + $0x13a] sm:$0xff]
        %v7017 = vld [vmem:[%s3684 + $0x142] sm:$0xff]
        %v7018 = vld [vmem:[%s3684 + $0x152] sm:$0xff]
        %v7019 = vld [vmem:[%s3684 + $0x15a] sm:$0xff]
        %v7020 = vld [vmem:[%s3684 + $0x16a] sm:$0xff]
        %v7021 = vld [vmem:[%s3684 + $0x172] sm:$0xff]
        %s7022 = scalar_lea.vmem %s9, 24
        %v7023 = vld [vmem:[%s7022] sm:$0x3]
        %v7025 = vsel %vm3622, %v6990, 0
        %v7028 = vsel %vm3622, %v6991, 0
        %v7031 = vsel %vm3622, %v6992, 0
        %v7034 = vsel %vm3622, %v6993, 0
        %v7037 = vsel %vm3622, %v6994, 0
        %v7040 = vsel %vm3622, %v6995, 0
        %v7043 = vsel %vm3622, %v6996, 0
        %v7046 = vsel %vm3622, %v6997, 0
        %v7049 = vsel %vm3622, %v6998, 0
        %v7052 = vsel %vm3622, %v6999, 0
        %v7055 = vsel %vm3622, %v7000, 0
        %v7058 = vsel %vm3622, %v7001, 0
        %v7061 = vsel %vm3622, %v7002, 0
        %v7064 = vsel %vm3622, %v7003, 0
        %v7067 = vsel %vm3622, %v7004, 0
        %v7070 = vsel %vm3622, %v7005, 0
        %v7073 = vsel %vm3622, %v7006, 0
        %v7076 = vsel %vm3622, %v7007, 0
        %v7079 = vsel %vm3622, %v7008, 0
        %v7082 = vsel %vm3622, %v7009, 0
        %v7085 = vsel %vm3622, %v7010, 0
        %v7088 = vsel %vm3622, %v7011, 0
        %v7091 = vsel %vm3622, %v7012, 0
        %v7094 = vsel %vm3622, %v7013, 0
        %v7097 = vsel %vm3622, %v7014, 0
        %v7100 = vsel %vm3622, %v7015, 0
        %v7103 = vsel %vm3622, %v7016, 0
        %v7106 = vsel %vm3622, %v7017, 0
        %v7109 = vsel %vm3622, %v7018, 0
        %v7112 = vsel %vm3622, %v7019, 0
        %v7115 = vsel %vm3622, %v7020, 0
        %v7118 = vsel %vm3622, %v7021, 0
        %v7121 = vsel %vm3880, %v7023, 0
        %7123 = vmatpush.msra.mxu0 0.0
        %7124 = vmatpush.msra.mxu0 0.0
        %7125 = vmatpush.msra.mxu0 0.0
        %7126 = vmatpush.msra.mxu0 0.0
        %7127 = vmatpush.msra.mxu0 0.0
        %7128 = vmatpush.msra.mxu0 0.0
        %7129 = vmatpush.msra.mxu0 0.0
        %7130 = vmatpush.msra.mxu0 0.0
        %7131 = vmatpush.msra.mxu0 0.0
        %7132 = vmatpush.msra.mxu0 0.0
        %7133 = vmatpush.msra.mxu0 0.0
        %7134 = vmatpush.msra.mxu0 0.0
        %7135 = vmatpush.msra.mxu0 0.0
        %7136 = vmatpush.msra.mxu0 0.0
        %7137 = vmatpush.msra.mxu0 0.0
        %7138 = vmatpush.msra.mxu0 %v7121
        %7139 = vmatmul.f32.gmra.mxu0 %v7025
        %v7140 = vpop.f32.mrf.mxu0
        %v7141 = vadd.f32 0.0, %v7140
        %7142 = vmatmul.f32.gmra.mxu0 %v7028
        %v7143 = vpop.f32.mrf.mxu0
        %v7144 = vadd.f32 0.0, %v7143
        %7145 = vmatmul.f32.gmra.mxu0 %v7031
        %v7146 = vpop.f32.mrf.mxu0
        %v7147 = vadd.f32 0.0, %v7146
        %7148 = vmatmul.f32.gmra.mxu0 %v7034
        %v7149 = vpop.f32.mrf.mxu0
        %v7150 = vadd.f32 0.0, %v7149
        %7151 = vmatmul.f32.gmra.mxu0 %v7037
        %v7152 = vpop.f32.mrf.mxu0
        %v7153 = vadd.f32 0.0, %v7152
        %7154 = vmatmul.f32.gmra.mxu0 %v7040
        %v7155 = vpop.f32.mrf.mxu0
        %v7156 = vadd.f32 0.0, %v7155
        %7157 = vmatmul.f32.gmra.mxu0 %v7043
        %v7158 = vpop.f32.mrf.mxu0
        %v7159 = vadd.f32 0.0, %v7158
        %7160 = vmatmul.f32.gmra.mxu0 %v7046
        %v7161 = vpop.f32.mrf.mxu0
        %v7162 = vadd.f32 0.0, %v7161
        %7163 = vmatmul.f32.gmra.mxu0 %v7049
        %v7164 = vpop.f32.mrf.mxu0
        %v7165 = vadd.f32 0.0, %v7164
        %7166 = vmatmul.f32.gmra.mxu0 %v7052
        %v7167 = vpop.f32.mrf.mxu0
        %v7168 = vadd.f32 0.0, %v7167
        %7169 = vmatmul.f32.gmra.mxu0 %v7055
        %v7170 = vpop.f32.mrf.mxu0
        %v7171 = vadd.f32 0.0, %v7170
        %7172 = vmatmul.f32.gmra.mxu0 %v7058
        %v7173 = vpop.f32.mrf.mxu0
        %v7174 = vadd.f32 0.0, %v7173
        %7175 = vmatmul.f32.gmra.mxu0 %v7061
        %v7176 = vpop.f32.mrf.mxu0
        %v7177 = vadd.f32 0.0, %v7176
        %7178 = vmatmul.f32.gmra.mxu0 %v7064
        %v7179 = vpop.f32.mrf.mxu0
        %v7180 = vadd.f32 0.0, %v7179
        %7181 = vmatmul.f32.gmra.mxu0 %v7067
        %v7182 = vpop.f32.mrf.mxu0
        %v7183 = vadd.f32 0.0, %v7182
        %7184 = vmatmul.f32.gmra.mxu0 %v7070
        %v7185 = vpop.f32.mrf.mxu0
        %v7186 = vadd.f32 0.0, %v7185
        %7187 = vmatmul.f32.gmra.mxu0 %v7073
        %v7188 = vpop.f32.mrf.mxu0
        %v7189 = vadd.f32 0.0, %v7188
        %7190 = vmatmul.f32.gmra.mxu0 %v7076
        %v7191 = vpop.f32.mrf.mxu0
        %v7192 = vadd.f32 0.0, %v7191
        %7193 = vmatmul.f32.gmra.mxu0 %v7079
        %v7194 = vpop.f32.mrf.mxu0
        %v7195 = vadd.f32 0.0, %v7194
        %7196 = vmatmul.f32.gmra.mxu0 %v7082
        %v7197 = vpop.f32.mrf.mxu0
        %v7198 = vadd.f32 0.0, %v7197
        %7199 = vmatmul.f32.gmra.mxu0 %v7085
        %v7200 = vpop.f32.mrf.mxu0
        %v7201 = vadd.f32 0.0, %v7200
        %7202 = vmatmul.f32.gmra.mxu0 %v7088
        %v7203 = vpop.f32.mrf.mxu0
        %v7204 = vadd.f32 0.0, %v7203
        %7205 = vmatmul.f32.gmra.mxu0 %v7091
        %v7206 = vpop.f32.mrf.mxu0
        %v7207 = vadd.f32 0.0, %v7206
        %7208 = vmatmul.f32.gmra.mxu0 %v7094
        %v7209 = vpop.f32.mrf.mxu0
        %v7210 = vadd.f32 0.0, %v7209
        %7211 = vmatmul.f32.gmra.mxu0 %v7097
        %v7212 = vpop.f32.mrf.mxu0
        %v7213 = vadd.f32 0.0, %v7212
        %7214 = vmatmul.f32.gmra.mxu0 %v7100
        %v7215 = vpop.f32.mrf.mxu0
        %v7216 = vadd.f32 0.0, %v7215
        %7217 = vmatmul.f32.gmra.mxu0 %v7103
        %v7218 = vpop.f32.mrf.mxu0
        %v7219 = vadd.f32 0.0, %v7218
        %7220 = vmatmul.f32.gmra.mxu0 %v7106
        %v7221 = vpop.f32.mrf.mxu0
        %v7222 = vadd.f32 0.0, %v7221
        %7223 = vmatmul.f32.gmra.mxu0 %v7109
        %v7224 = vpop.f32.mrf.mxu0
        %v7225 = vadd.f32 0.0, %v7224
        %7226 = vmatmul.f32.gmra.mxu0 %v7112
        %v7227 = vpop.f32.mrf.mxu0
        %v7228 = vadd.f32 0.0, %v7227
        %7229 = vmatmul.f32.gmra.mxu0 %v7115
        %v7230 = vpop.f32.mrf.mxu0
        %v7231 = vadd.f32 0.0, %v7230
        %7232 = vmatmul.f32.gmra.mxu0 %v7118
        %v7233 = vpop.f32.mrf.mxu0
        %v7234 = vadd.f32 0.0, %v7233
        %7235 = vdwg.mxu0
        %v7236 = vadd.f32 %v6958, %v7141
        %v7237 = vadd.f32 %v6959, %v7144
        %v7238 = vadd.f32 %v6960, %v7147
        %v7239 = vadd.f32 %v6961, %v7150
        %v7240 = vadd.f32 %v6962, %v7153
        %v7241 = vadd.f32 %v6963, %v7156
        %v7242 = vadd.f32 %v6964, %v7159
        %v7243 = vadd.f32 %v6965, %v7162
        %v7244 = vadd.f32 %v6966, %v7165
        %v7245 = vadd.f32 %v6967, %v7168
        %v7246 = vadd.f32 %v6968, %v7171
        %v7247 = vadd.f32 %v6969, %v7174
        %v7248 = vadd.f32 %v6970, %v7177
        %v7249 = vadd.f32 %v6971, %v7180
        %v7250 = vadd.f32 %v6972, %v7183
        %v7251 = vadd.f32 %v6973, %v7186
        %v7252 = vadd.f32 %v6974, %v7189
        %v7253 = vadd.f32 %v6975, %v7192
        %v7254 = vadd.f32 %v6976, %v7195
        %v7255 = vadd.f32 %v6977, %v7198
        %v7256 = vadd.f32 %v6978, %v7201
        %v7257 = vadd.f32 %v6979, %v7204
        %v7258 = vadd.f32 %v6980, %v7207
        %v7259 = vadd.f32 %v6981, %v7210
        %v7260 = vadd.f32 %v6982, %v7213
        %v7261 = vadd.f32 %v6983, %v7216
        %v7262 = vadd.f32 %v6984, %v7219
        %v7263 = vadd.f32 %v6985, %v7222
        %v7264 = vadd.f32 %v6986, %v7225
        %v7265 = vadd.f32 %v6987, %v7228
        %v7266 = vadd.f32 %v6988, %v7231
        %v7267 = vadd.f32 %v6989, %v7234
        %v7268 = vld [vmem:[%s3684 + $0x3] sm:$0xff]
        %v7269 = vld [vmem:[%s3684 + $0xb] sm:$0xff]
        %v7270 = vld [vmem:[%s3684 + $0x1b] sm:$0xff]
        %v7271 = vld [vmem:[%s3684 + $0x23] sm:$0xff]
        %v7272 = vld [vmem:[%s3684 + $0x33] sm:$0xff]
        %v7273 = vld [vmem:[%s3684 + $0x3b] sm:$0xff]
        %v7274 = vld [vmem:[%s3684 + $0x4b] sm:$0xff]
        %v7275 = vld [vmem:[%s3684 + $0x53] sm:$0xff]
        %v7276 = vld [vmem:[%s3684 + $0x63] sm:$0xff]
        %v7277 = vld [vmem:[%s3684 + $0x6b] sm:$0xff]
        %v7278 = vld [vmem:[%s3684 + $0x7b] sm:$0xff]
        %v7279 = vld [vmem:[%s3684 + $0x83] sm:$0xff]
        %v7280 = vld [vmem:[%s3684 + $0x93] sm:$0xff]
        %v7281 = vld [vmem:[%s3684 + $0x9b] sm:$0xff]
        %v7282 = vld [vmem:[%s3684 + $0xab] sm:$0xff]
        %v7283 = vld [vmem:[%s3684 + $0xb3] sm:$0xff]
        %v7284 = vld [vmem:[%s3684 + $0xc3] sm:$0xff]
        %v7285 = vld [vmem:[%s3684 + $0xcb] sm:$0xff]
        %v7286 = vld [vmem:[%s3684 + $0xdb] sm:$0xff]
        %v7287 = vld [vmem:[%s3684 + $0xe3] sm:$0xff]
        %v7288 = vld [vmem:[%s3684 + $0xf3] sm:$0xff]
        %v7289 = vld [vmem:[%s3684 + $0xfb] sm:$0xff]
        %v7290 = vld [vmem:[%s3684 + $0x10b] sm:$0xff]
        %v7291 = vld [vmem:[%s3684 + $0x113] sm:$0xff]
        %v7292 = vld [vmem:[%s3684 + $0x123] sm:$0xff]
        %v7293 = vld [vmem:[%s3684 + $0x12b] sm:$0xff]
        %v7294 = vld [vmem:[%s3684 + $0x13b] sm:$0xff]
        %v7295 = vld [vmem:[%s3684 + $0x143] sm:$0xff]
        %v7296 = vld [vmem:[%s3684 + $0x153] sm:$0xff]
        %v7297 = vld [vmem:[%s3684 + $0x15b] sm:$0xff]
        %v7298 = vld [vmem:[%s3684 + $0x16b] sm:$0xff]
        %v7299 = vld [vmem:[%s3684 + $0x173] sm:$0xff]
        %s7300 = scalar_lea.vmem %s9, 26
        %v7301 = vld [vmem:[%s7300] sm:$0x3]
        %v7303 = vsel %vm3622, %v7268, 0
        %v7306 = vsel %vm3622, %v7269, 0
        %v7309 = vsel %vm3622, %v7270, 0
        %v7312 = vsel %vm3622, %v7271, 0
        %v7315 = vsel %vm3622, %v7272, 0
        %v7318 = vsel %vm3622, %v7273, 0
        %v7321 = vsel %vm3622, %v7274, 0
        %v7324 = vsel %vm3622, %v7275, 0
        %v7327 = vsel %vm3622, %v7276, 0
        %v7330 = vsel %vm3622, %v7277, 0
        %v7333 = vsel %vm3622, %v7278, 0
        %v7336 = vsel %vm3622, %v7279, 0
        %v7339 = vsel %vm3622, %v7280, 0
        %v7342 = vsel %vm3622, %v7281, 0
        %v7345 = vsel %vm3622, %v7282, 0
        %v7348 = vsel %vm3622, %v7283, 0
        %v7351 = vsel %vm3622, %v7284, 0
        %v7354 = vsel %vm3622, %v7285, 0
        %v7357 = vsel %vm3622, %v7286, 0
        %v7360 = vsel %vm3622, %v7287, 0
        %v7363 = vsel %vm3622, %v7288, 0
        %v7366 = vsel %vm3622, %v7289, 0
        %v7369 = vsel %vm3622, %v7290, 0
        %v7372 = vsel %vm3622, %v7291, 0
        %v7375 = vsel %vm3622, %v7292, 0
        %v7378 = vsel %vm3622, %v7293, 0
        %v7381 = vsel %vm3622, %v7294, 0
        %v7384 = vsel %vm3622, %v7295, 0
        %v7387 = vsel %vm3622, %v7296, 0
        %v7390 = vsel %vm3622, %v7297, 0
        %v7393 = vsel %vm3622, %v7298, 0
        %v7396 = vsel %vm3622, %v7299, 0
        %v7399 = vsel %vm3880, %v7301, 0
        %7401 = vmatpush.msra.mxu0 0.0
        %7402 = vmatpush.msra.mxu0 0.0
        %7403 = vmatpush.msra.mxu0 0.0
        %7404 = vmatpush.msra.mxu0 0.0
        %7405 = vmatpush.msra.mxu0 0.0
        %7406 = vmatpush.msra.mxu0 0.0
        %7407 = vmatpush.msra.mxu0 0.0
        %7408 = vmatpush.msra.mxu0 0.0
        %7409 = vmatpush.msra.mxu0 0.0
        %7410 = vmatpush.msra.mxu0 0.0
        %7411 = vmatpush.msra.mxu0 0.0
        %7412 = vmatpush.msra.mxu0 0.0
        %7413 = vmatpush.msra.mxu0 0.0
        %7414 = vmatpush.msra.mxu0 0.0
        %7415 = vmatpush.msra.mxu0 0.0
        %7416 = vmatpush.msra.mxu0 %v7399
        %7417 = vmatmul.f32.gmra.mxu0 %v7303
        %v7418 = vpop.f32.mrf.mxu0
        %v7419 = vadd.f32 0.0, %v7418
        %7420 = vmatmul.f32.gmra.mxu0 %v7306
        %v7421 = vpop.f32.mrf.mxu0
        %v7422 = vadd.f32 0.0, %v7421
        %7423 = vmatmul.f32.gmra.mxu0 %v7309
        %v7424 = vpop.f32.mrf.mxu0
        %v7425 = vadd.f32 0.0, %v7424
        %7426 = vmatmul.f32.gmra.mxu0 %v7312
        %v7427 = vpop.f32.mrf.mxu0
        %v7428 = vadd.f32 0.0, %v7427
        %7429 = vmatmul.f32.gmra.mxu0 %v7315
        %v7430 = vpop.f32.mrf.mxu0
        %v7431 = vadd.f32 0.0, %v7430
        %7432 = vmatmul.f32.gmra.mxu0 %v7318
        %v7433 = vpop.f32.mrf.mxu0
        %v7434 = vadd.f32 0.0, %v7433
        %7435 = vmatmul.f32.gmra.mxu0 %v7321
        %v7436 = vpop.f32.mrf.mxu0
        %v7437 = vadd.f32 0.0, %v7436
        %7438 = vmatmul.f32.gmra.mxu0 %v7324
        %v7439 = vpop.f32.mrf.mxu0
        %v7440 = vadd.f32 0.0, %v7439
        %7441 = vmatmul.f32.gmra.mxu0 %v7327
        %v7442 = vpop.f32.mrf.mxu0
        %v7443 = vadd.f32 0.0, %v7442
        %7444 = vmatmul.f32.gmra.mxu0 %v7330
        %v7445 = vpop.f32.mrf.mxu0
        %v7446 = vadd.f32 0.0, %v7445
        %7447 = vmatmul.f32.gmra.mxu0 %v7333
        %v7448 = vpop.f32.mrf.mxu0
        %v7449 = vadd.f32 0.0, %v7448
        %7450 = vmatmul.f32.gmra.mxu0 %v7336
        %v7451 = vpop.f32.mrf.mxu0
        %v7452 = vadd.f32 0.0, %v7451
        %7453 = vmatmul.f32.gmra.mxu0 %v7339
        %v7454 = vpop.f32.mrf.mxu0
        %v7455 = vadd.f32 0.0, %v7454
        %7456 = vmatmul.f32.gmra.mxu0 %v7342
        %v7457 = vpop.f32.mrf.mxu0
        %v7458 = vadd.f32 0.0, %v7457
        %7459 = vmatmul.f32.gmra.mxu0 %v7345
        %v7460 = vpop.f32.mrf.mxu0
        %v7461 = vadd.f32 0.0, %v7460
        %7462 = vmatmul.f32.gmra.mxu0 %v7348
        %v7463 = vpop.f32.mrf.mxu0
        %v7464 = vadd.f32 0.0, %v7463
        %7465 = vmatmul.f32.gmra.mxu0 %v7351
        %v7466 = vpop.f32.mrf.mxu0
        %v7467 = vadd.f32 0.0, %v7466
        %7468 = vmatmul.f32.gmra.mxu0 %v7354
        %v7469 = vpop.f32.mrf.mxu0
        %v7470 = vadd.f32 0.0, %v7469
        %7471 = vmatmul.f32.gmra.mxu0 %v7357
        %v7472 = vpop.f32.mrf.mxu0
        %v7473 = vadd.f32 0.0, %v7472
        %7474 = vmatmul.f32.gmra.mxu0 %v7360
        %v7475 = vpop.f32.mrf.mxu0
        %v7476 = vadd.f32 0.0, %v7475
        %7477 = vmatmul.f32.gmra.mxu0 %v7363
        %v7478 = vpop.f32.mrf.mxu0
        %v7479 = vadd.f32 0.0, %v7478
        %7480 = vmatmul.f32.gmra.mxu0 %v7366
        %v7481 = vpop.f32.mrf.mxu0
        %v7482 = vadd.f32 0.0, %v7481
        %7483 = vmatmul.f32.gmra.mxu0 %v7369
        %v7484 = vpop.f32.mrf.mxu0
        %v7485 = vadd.f32 0.0, %v7484
        %7486 = vmatmul.f32.gmra.mxu0 %v7372
        %v7487 = vpop.f32.mrf.mxu0
        %v7488 = vadd.f32 0.0, %v7487
        %7489 = vmatmul.f32.gmra.mxu0 %v7375
        %v7490 = vpop.f32.mrf.mxu0
        %v7491 = vadd.f32 0.0, %v7490
        %7492 = vmatmul.f32.gmra.mxu0 %v7378
        %v7493 = vpop.f32.mrf.mxu0
        %v7494 = vadd.f32 0.0, %v7493
        %7495 = vmatmul.f32.gmra.mxu0 %v7381
        %v7496 = vpop.f32.mrf.mxu0
        %v7497 = vadd.f32 0.0, %v7496
        %7498 = vmatmul.f32.gmra.mxu0 %v7384
        %v7499 = vpop.f32.mrf.mxu0
        %v7500 = vadd.f32 0.0, %v7499
        %7501 = vmatmul.f32.gmra.mxu0 %v7387
        %v7502 = vpop.f32.mrf.mxu0
        %v7503 = vadd.f32 0.0, %v7502
        %7504 = vmatmul.f32.gmra.mxu0 %v7390
        %v7505 = vpop.f32.mrf.mxu0
        %v7506 = vadd.f32 0.0, %v7505
        %7507 = vmatmul.f32.gmra.mxu0 %v7393
        %v7508 = vpop.f32.mrf.mxu0
        %v7509 = vadd.f32 0.0, %v7508
        %7510 = vmatmul.f32.gmra.mxu0 %v7396
        %v7511 = vpop.f32.mrf.mxu0
        %v7512 = vadd.f32 0.0, %v7511
        %7513 = vdwg.mxu0
        %v7514 = vadd.f32 %v7236, %v7419
        %v7515 = vadd.f32 %v7237, %v7422
        %v7516 = vadd.f32 %v7238, %v7425
        %v7517 = vadd.f32 %v7239, %v7428
        %v7518 = vadd.f32 %v7240, %v7431
        %v7519 = vadd.f32 %v7241, %v7434
        %v7520 = vadd.f32 %v7242, %v7437
        %v7521 = vadd.f32 %v7243, %v7440
        %v7522 = vadd.f32 %v7244, %v7443
        %v7523 = vadd.f32 %v7245, %v7446
        %v7524 = vadd.f32 %v7246, %v7449
        %v7525 = vadd.f32 %v7247, %v7452
        %v7526 = vadd.f32 %v7248, %v7455
        %v7527 = vadd.f32 %v7249, %v7458
        %v7528 = vadd.f32 %v7250, %v7461
        %v7529 = vadd.f32 %v7251, %v7464
        %v7530 = vadd.f32 %v7252, %v7467
        %v7531 = vadd.f32 %v7253, %v7470
        %v7532 = vadd.f32 %v7254, %v7473
        %v7533 = vadd.f32 %v7255, %v7476
        %v7534 = vadd.f32 %v7256, %v7479
        %v7535 = vadd.f32 %v7257, %v7482
        %v7536 = vadd.f32 %v7258, %v7485
        %v7537 = vadd.f32 %v7259, %v7488
        %v7538 = vadd.f32 %v7260, %v7491
        %v7539 = vadd.f32 %v7261, %v7494
        %v7540 = vadd.f32 %v7262, %v7497
        %v7541 = vadd.f32 %v7263, %v7500
        %v7542 = vadd.f32 %v7264, %v7503
        %v7543 = vadd.f32 %v7265, %v7506
        %v7544 = vadd.f32 %v7266, %v7509
        %v7545 = vadd.f32 %v7267, %v7512
        %v7546 = vld [vmem:[%s3684 + $0x4] sm:$0xff]
        %v7547 = vld [vmem:[%s3684 + $0xc] sm:$0xff]
        %v7548 = vld [vmem:[%s3684 + $0x1c] sm:$0xff]
        %v7549 = vld [vmem:[%s3684 + $0x24] sm:$0xff]
        %v7550 = vld [vmem:[%s3684 + $0x34] sm:$0xff]
        %v7551 = vld [vmem:[%s3684 + $0x3c] sm:$0xff]
        %v7552 = vld [vmem:[%s3684 + $0x4c] sm:$0xff]
        %v7553 = vld [vmem:[%s3684 + $0x54] sm:$0xff]
        %v7554 = vld [vmem:[%s3684 + $0x64] sm:$0xff]
        %v7555 = vld [vmem:[%s3684 + $0x6c] sm:$0xff]
        %v7556 = vld [vmem:[%s3684 + $0x7c] sm:$0xff]
        %v7557 = vld [vmem:[%s3684 + $0x84] sm:$0xff]
        %v7558 = vld [vmem:[%s3684 + $0x94] sm:$0xff]
        %v7559 = vld [vmem:[%s3684 + $0x9c] sm:$0xff]
        %v7560 = vld [vmem:[%s3684 + $0xac] sm:$0xff]
        %v7561 = vld [vmem:[%s3684 + $0xb4] sm:$0xff]
        %v7562 = vld [vmem:[%s3684 + $0xc4] sm:$0xff]
        %v7563 = vld [vmem:[%s3684 + $0xcc] sm:$0xff]
        %v7564 = vld [vmem:[%s3684 + $0xdc] sm:$0xff]
        %v7565 = vld [vmem:[%s3684 + $0xe4] sm:$0xff]
        %v7566 = vld [vmem:[%s3684 + $0xf4] sm:$0xff]
        %v7567 = vld [vmem:[%s3684 + $0xfc] sm:$0xff]
        %v7568 = vld [vmem:[%s3684 + $0x10c] sm:$0xff]
        %v7569 = vld [vmem:[%s3684 + $0x114] sm:$0xff]
        %v7570 = vld [vmem:[%s3684 + $0x124] sm:$0xff]
        %v7571 = vld [vmem:[%s3684 + $0x12c] sm:$0xff]
        %v7572 = vld [vmem:[%s3684 + $0x13c] sm:$0xff]
        %v7573 = vld [vmem:[%s3684 + $0x144] sm:$0xff]
        %v7574 = vld [vmem:[%s3684 + $0x154] sm:$0xff]
        %v7575 = vld [vmem:[%s3684 + $0x15c] sm:$0xff]
        %v7576 = vld [vmem:[%s3684 + $0x16c] sm:$0xff]
        %v7577 = vld [vmem:[%s3684 + $0x174] sm:$0xff]
        %s7578 = scalar_lea.vmem %s9, 28
        %v7579 = vld [vmem:[%s7578] sm:$0x3]
        %v7581 = vsel %vm3622, %v7546, 0
        %v7584 = vsel %vm3622, %v7547, 0
        %v7587 = vsel %vm3622, %v7548, 0
        %v7590 = vsel %vm3622, %v7549, 0
        %v7593 = vsel %vm3622, %v7550, 0
        %v7596 = vsel %vm3622, %v7551, 0
        %v7599 = vsel %vm3622, %v7552, 0
        %v7602 = vsel %vm3622, %v7553, 0
        %v7605 = vsel %vm3622, %v7554, 0
        %v7608 = vsel %vm3622, %v7555, 0
        %v7611 = vsel %vm3622, %v7556, 0
        %v7614 = vsel %vm3622, %v7557, 0
        %v7617 = vsel %vm3622, %v7558, 0
        %v7620 = vsel %vm3622, %v7559, 0
        %v7623 = vsel %vm3622, %v7560, 0
        %v7626 = vsel %vm3622, %v7561, 0
        %v7629 = vsel %vm3622, %v7562, 0
        %v7632 = vsel %vm3622, %v7563, 0
        %v7635 = vsel %vm3622, %v7564, 0
        %v7638 = vsel %vm3622, %v7565, 0
        %v7641 = vsel %vm3622, %v7566, 0
        %v7644 = vsel %vm3622, %v7567, 0
        %v7647 = vsel %vm3622, %v7568, 0
        %v7650 = vsel %vm3622, %v7569, 0
        %v7653 = vsel %vm3622, %v7570, 0
        %v7656 = vsel %vm3622, %v7571, 0
        %v7659 = vsel %vm3622, %v7572, 0
        %v7662 = vsel %vm3622, %v7573, 0
        %v7665 = vsel %vm3622, %v7574, 0
        %v7668 = vsel %vm3622, %v7575, 0
        %v7671 = vsel %vm3622, %v7576, 0
        %v7674 = vsel %vm3622, %v7577, 0
        %v7677 = vsel %vm3880, %v7579, 0
        %7679 = vmatpush.msra.mxu0 0.0
        %7680 = vmatpush.msra.mxu0 0.0
        %7681 = vmatpush.msra.mxu0 0.0
        %7682 = vmatpush.msra.mxu0 0.0
        %7683 = vmatpush.msra.mxu0 0.0
        %7684 = vmatpush.msra.mxu0 0.0
        %7685 = vmatpush.msra.mxu0 0.0
        %7686 = vmatpush.msra.mxu0 0.0
        %7687 = vmatpush.msra.mxu0 0.0
        %7688 = vmatpush.msra.mxu0 0.0
        %7689 = vmatpush.msra.mxu0 0.0
        %7690 = vmatpush.msra.mxu0 0.0
        %7691 = vmatpush.msra.mxu0 0.0
        %7692 = vmatpush.msra.mxu0 0.0
        %7693 = vmatpush.msra.mxu0 0.0
        %7694 = vmatpush.msra.mxu0 %v7677
        %7695 = vmatmul.f32.gmra.mxu0 %v7581
        %v7696 = vpop.f32.mrf.mxu0
        %v7697 = vadd.f32 0.0, %v7696
        %7698 = vmatmul.f32.gmra.mxu0 %v7584
        %v7699 = vpop.f32.mrf.mxu0
        %v7700 = vadd.f32 0.0, %v7699
        %7701 = vmatmul.f32.gmra.mxu0 %v7587
        %v7702 = vpop.f32.mrf.mxu0
        %v7703 = vadd.f32 0.0, %v7702
        %7704 = vmatmul.f32.gmra.mxu0 %v7590
        %v7705 = vpop.f32.mrf.mxu0
        %v7706 = vadd.f32 0.0, %v7705
        %7707 = vmatmul.f32.gmra.mxu0 %v7593
        %v7708 = vpop.f32.mrf.mxu0
        %v7709 = vadd.f32 0.0, %v7708
        %7710 = vmatmul.f32.gmra.mxu0 %v7596
        %v7711 = vpop.f32.mrf.mxu0
        %v7712 = vadd.f32 0.0, %v7711
        %7713 = vmatmul.f32.gmra.mxu0 %v7599
        %v7714 = vpop.f32.mrf.mxu0
        %v7715 = vadd.f32 0.0, %v7714
        %7716 = vmatmul.f32.gmra.mxu0 %v7602
        %v7717 = vpop.f32.mrf.mxu0
        %v7718 = vadd.f32 0.0, %v7717
        %7719 = vmatmul.f32.gmra.mxu0 %v7605
        %v7720 = vpop.f32.mrf.mxu0
        %v7721 = vadd.f32 0.0, %v7720
        %7722 = vmatmul.f32.gmra.mxu0 %v7608
        %v7723 = vpop.f32.mrf.mxu0
        %v7724 = vadd.f32 0.0, %v7723
        %7725 = vmatmul.f32.gmra.mxu0 %v7611
        %v7726 = vpop.f32.mrf.mxu0
        %v7727 = vadd.f32 0.0, %v7726
        %7728 = vmatmul.f32.gmra.mxu0 %v7614
        %v7729 = vpop.f32.mrf.mxu0
        %v7730 = vadd.f32 0.0, %v7729
        %7731 = vmatmul.f32.gmra.mxu0 %v7617
        %v7732 = vpop.f32.mrf.mxu0
        %v7733 = vadd.f32 0.0, %v7732
        %7734 = vmatmul.f32.gmra.mxu0 %v7620
        %v7735 = vpop.f32.mrf.mxu0
        %v7736 = vadd.f32 0.0, %v7735
        %7737 = vmatmul.f32.gmra.mxu0 %v7623
        %v7738 = vpop.f32.mrf.mxu0
        %v7739 = vadd.f32 0.0, %v7738
        %7740 = vmatmul.f32.gmra.mxu0 %v7626
        %v7741 = vpop.f32.mrf.mxu0
        %v7742 = vadd.f32 0.0, %v7741
        %7743 = vmatmul.f32.gmra.mxu0 %v7629
        %v7744 = vpop.f32.mrf.mxu0
        %v7745 = vadd.f32 0.0, %v7744
        %7746 = vmatmul.f32.gmra.mxu0 %v7632
        %v7747 = vpop.f32.mrf.mxu0
        %v7748 = vadd.f32 0.0, %v7747
        %7749 = vmatmul.f32.gmra.mxu0 %v7635
        %v7750 = vpop.f32.mrf.mxu0
        %v7751 = vadd.f32 0.0, %v7750
        %7752 = vmatmul.f32.gmra.mxu0 %v7638
        %v7753 = vpop.f32.mrf.mxu0
        %v7754 = vadd.f32 0.0, %v7753
        %7755 = vmatmul.f32.gmra.mxu0 %v7641
        %v7756 = vpop.f32.mrf.mxu0
        %v7757 = vadd.f32 0.0, %v7756
        %7758 = vmatmul.f32.gmra.mxu0 %v7644
        %v7759 = vpop.f32.mrf.mxu0
        %v7760 = vadd.f32 0.0, %v7759
        %7761 = vmatmul.f32.gmra.mxu0 %v7647
        %v7762 = vpop.f32.mrf.mxu0
        %v7763 = vadd.f32 0.0, %v7762
        %7764 = vmatmul.f32.gmra.mxu0 %v7650
        %v7765 = vpop.f32.mrf.mxu0
        %v7766 = vadd.f32 0.0, %v7765
        %7767 = vmatmul.f32.gmra.mxu0 %v7653
        %v7768 = vpop.f32.mrf.mxu0
        %v7769 = vadd.f32 0.0, %v7768
        %7770 = vmatmul.f32.gmra.mxu0 %v7656
        %v7771 = vpop.f32.mrf.mxu0
        %v7772 = vadd.f32 0.0, %v7771
        %7773 = vmatmul.f32.gmra.mxu0 %v7659
        %v7774 = vpop.f32.mrf.mxu0
        %v7775 = vadd.f32 0.0, %v7774
        %7776 = vmatmul.f32.gmra.mxu0 %v7662
        %v7777 = vpop.f32.mrf.mxu0
        %v7778 = vadd.f32 0.0, %v7777
        %7779 = vmatmul.f32.gmra.mxu0 %v7665
        %v7780 = vpop.f32.mrf.mxu0
        %v7781 = vadd.f32 0.0, %v7780
        %7782 = vmatmul.f32.gmra.mxu0 %v7668
        %v7783 = vpop.f32.mrf.mxu0
        %v7784 = vadd.f32 0.0, %v7783
        %7785 = vmatmul.f32.gmra.mxu0 %v7671
        %v7786 = vpop.f32.mrf.mxu0
        %v7787 = vadd.f32 0.0, %v7786
        %7788 = vmatmul.f32.gmra.mxu0 %v7674
        %v7789 = vpop.f32.mrf.mxu0
        %v7790 = vadd.f32 0.0, %v7789
        %7791 = vdwg.mxu0
        %v7792 = vadd.f32 %v7514, %v7697
        %v7793 = vadd.f32 %v7515, %v7700
        %v7794 = vadd.f32 %v7516, %v7703
        %v7795 = vadd.f32 %v7517, %v7706
        %v7796 = vadd.f32 %v7518, %v7709
        %v7797 = vadd.f32 %v7519, %v7712
        %v7798 = vadd.f32 %v7520, %v7715
        %v7799 = vadd.f32 %v7521, %v7718
        %v7800 = vadd.f32 %v7522, %v7721
        %v7801 = vadd.f32 %v7523, %v7724
        %v7802 = vadd.f32 %v7524, %v7727
        %v7803 = vadd.f32 %v7525, %v7730
        %v7804 = vadd.f32 %v7526, %v7733
        %v7805 = vadd.f32 %v7527, %v7736
        %v7806 = vadd.f32 %v7528, %v7739
        %v7807 = vadd.f32 %v7529, %v7742
        %v7808 = vadd.f32 %v7530, %v7745
        %v7809 = vadd.f32 %v7531, %v7748
        %v7810 = vadd.f32 %v7532, %v7751
        %v7811 = vadd.f32 %v7533, %v7754
        %v7812 = vadd.f32 %v7534, %v7757
        %v7813 = vadd.f32 %v7535, %v7760
        %v7814 = vadd.f32 %v7536, %v7763
        %v7815 = vadd.f32 %v7537, %v7766
        %v7816 = vadd.f32 %v7538, %v7769
        %v7817 = vadd.f32 %v7539, %v7772
        %v7818 = vadd.f32 %v7540, %v7775
        %v7819 = vadd.f32 %v7541, %v7778
        %v7820 = vadd.f32 %v7542, %v7781
        %v7821 = vadd.f32 %v7543, %v7784
        %v7822 = vadd.f32 %v7544, %v7787
        %v7823 = vadd.f32 %v7545, %v7790
        %s7824 = scalar_lea.vmem [#allocation3], 72
        %v7825 = vld [vmem:[%s7824] sm:$0xff]
        %v7826 = vld [vmem:[%s7824 + $0x8] sm:$0xff]
        %v7827 = vld [vmem:[%s7824 + $0x18] sm:$0xff]
        %v7828 = vld [vmem:[%s7824 + $0x20] sm:$0xff]
        %v7829 = vld [vmem:[%s7824 + $0x30] sm:$0xff]
        %v7830 = vld [vmem:[%s7824 + $0x38] sm:$0xff]
        %v7831 = vld [vmem:[%s7824 + $0x48] sm:$0xff]
        %v7832 = vld [vmem:[%s7824 + $0x50] sm:$0xff]
        %v7833 = vld [vmem:[%s7824 + $0x60] sm:$0xff]
        %v7834 = vld [vmem:[%s7824 + $0x68] sm:$0xff]
        %v7835 = vld [vmem:[%s7824 + $0x78] sm:$0xff]
        %v7836 = vld [vmem:[%s7824 + $0x80] sm:$0xff]
        %v7837 = vld [vmem:[%s7824 + $0x90] sm:$0xff]
        %v7838 = vld [vmem:[%s7824 + $0x98] sm:$0xff]
        %v7839 = vld [vmem:[%s7824 + $0xa8] sm:$0xff]
        %v7840 = vld [vmem:[%s7824 + $0xb0] sm:$0xff]
        %v7841 = vld [vmem:[%s7824 + $0xc0] sm:$0xff]
        %v7842 = vld [vmem:[%s7824 + $0xc8] sm:$0xff]
        %v7843 = vld [vmem:[%s7824 + $0xd8] sm:$0xff]
        %v7844 = vld [vmem:[%s7824 + $0xe0] sm:$0xff]
        %v7845 = vld [vmem:[%s7824 + $0xf0] sm:$0xff]
        %v7846 = vld [vmem:[%s7824 + $0xf8] sm:$0xff]
        %v7847 = vld [vmem:[%s7824 + $0x108] sm:$0xff]
        %v7848 = vld [vmem:[%s7824 + $0x110] sm:$0xff]
        %v7849 = vld [vmem:[%s7824 + $0x120] sm:$0xff]
        %v7850 = vld [vmem:[%s7824 + $0x128] sm:$0xff]
        %v7851 = vld [vmem:[%s7824 + $0x138] sm:$0xff]
        %v7852 = vld [vmem:[%s7824 + $0x140] sm:$0xff]
        %v7853 = vld [vmem:[%s7824 + $0x150] sm:$0xff]
        %v7854 = vld [vmem:[%s7824 + $0x158] sm:$0xff]
        %v7855 = vld [vmem:[%s7824 + $0x168] sm:$0xff]
        %v7856 = vld [vmem:[%s7824 + $0x170] sm:$0xff]
        %s7857 = scalar_lea.vmem %s9, 30
        %v7858 = vld [vmem:[%s7857] sm:$0x3]
        %v7860 = vsel %vm3622, %v7825, 0
        %v7863 = vsel %vm3622, %v7826, 0
        %v7866 = vsel %vm3622, %v7827, 0
        %v7869 = vsel %vm3622, %v7828, 0
        %v7872 = vsel %vm3622, %v7829, 0
        %v7875 = vsel %vm3622, %v7830, 0
        %v7878 = vsel %vm3622, %v7831, 0
        %v7881 = vsel %vm3622, %v7832, 0
        %v7884 = vsel %vm3622, %v7833, 0
        %v7887 = vsel %vm3622, %v7834, 0
        %v7890 = vsel %vm3622, %v7835, 0
        %v7893 = vsel %vm3622, %v7836, 0
        %v7896 = vsel %vm3622, %v7837, 0
        %v7899 = vsel %vm3622, %v7838, 0
        %v7902 = vsel %vm3622, %v7839, 0
        %v7905 = vsel %vm3622, %v7840, 0
        %v7908 = vsel %vm3622, %v7841, 0
        %v7911 = vsel %vm3622, %v7842, 0
        %v7914 = vsel %vm3622, %v7843, 0
        %v7917 = vsel %vm3622, %v7844, 0
        %v7920 = vsel %vm3622, %v7845, 0
        %v7923 = vsel %vm3622, %v7846, 0
        %v7926 = vsel %vm3622, %v7847, 0
        %v7929 = vsel %vm3622, %v7848, 0
        %v7932 = vsel %vm3622, %v7849, 0
        %v7935 = vsel %vm3622, %v7850, 0
        %v7938 = vsel %vm3622, %v7851, 0
        %v7941 = vsel %vm3622, %v7852, 0
        %v7944 = vsel %vm3622, %v7853, 0
        %v7947 = vsel %vm3622, %v7854, 0
        %v7950 = vsel %vm3622, %v7855, 0
        %v7953 = vsel %vm3622, %v7856, 0
        %v7956 = vsel %vm3880, %v7858, 0
        %7958 = vmatpush.msra.mxu0 0.0
        %7959 = vmatpush.msra.mxu0 0.0
        %7960 = vmatpush.msra.mxu0 0.0
        %7961 = vmatpush.msra.mxu0 0.0
        %7962 = vmatpush.msra.mxu0 0.0
        %7963 = vmatpush.msra.mxu0 0.0
        %7964 = vmatpush.msra.mxu0 0.0
        %7965 = vmatpush.msra.mxu0 0.0
        %7966 = vmatpush.msra.mxu0 0.0
        %7967 = vmatpush.msra.mxu0 0.0
        %7968 = vmatpush.msra.mxu0 0.0
        %7969 = vmatpush.msra.mxu0 0.0
        %7970 = vmatpush.msra.mxu0 0.0
        %7971 = vmatpush.msra.mxu0 0.0
        %7972 = vmatpush.msra.mxu0 0.0
        %7973 = vmatpush.msra.mxu0 %v7956
        %7974 = vmatmul.f32.gmra.mxu0 %v7860
        %v7975 = vpop.f32.mrf.mxu0
        %v7976 = vadd.f32 0.0, %v7975
        %7977 = vmatmul.f32.gmra.mxu0 %v7863
        %v7978 = vpop.f32.mrf.mxu0
        %v7979 = vadd.f32 0.0, %v7978
        %7980 = vmatmul.f32.gmra.mxu0 %v7866
        %v7981 = vpop.f32.mrf.mxu0
        %v7982 = vadd.f32 0.0, %v7981
        %7983 = vmatmul.f32.gmra.mxu0 %v7869
        %v7984 = vpop.f32.mrf.mxu0
        %v7985 = vadd.f32 0.0, %v7984
        %7986 = vmatmul.f32.gmra.mxu0 %v7872
        %v7987 = vpop.f32.mrf.mxu0
        %v7988 = vadd.f32 0.0, %v7987
        %7989 = vmatmul.f32.gmra.mxu0 %v7875
        %v7990 = vpop.f32.mrf.mxu0
        %v7991 = vadd.f32 0.0, %v7990
        %7992 = vmatmul.f32.gmra.mxu0 %v7878
        %v7993 = vpop.f32.mrf.mxu0
        %v7994 = vadd.f32 0.0, %v7993
        %7995 = vmatmul.f32.gmra.mxu0 %v7881
        %v7996 = vpop.f32.mrf.mxu0
        %v7997 = vadd.f32 0.0, %v7996
        %7998 = vmatmul.f32.gmra.mxu0 %v7884
        %v7999 = vpop.f32.mrf.mxu0
        %v8000 = vadd.f32 0.0, %v7999
        %8001 = vmatmul.f32.gmra.mxu0 %v7887
        %v8002 = vpop.f32.mrf.mxu0
        %v8003 = vadd.f32 0.0, %v8002
        %8004 = vmatmul.f32.gmra.mxu0 %v7890
        %v8005 = vpop.f32.mrf.mxu0
        %v8006 = vadd.f32 0.0, %v8005
        %8007 = vmatmul.f32.gmra.mxu0 %v7893
        %v8008 = vpop.f32.mrf.mxu0
        %v8009 = vadd.f32 0.0, %v8008
        %8010 = vmatmul.f32.gmra.mxu0 %v7896
        %v8011 = vpop.f32.mrf.mxu0
        %v8012 = vadd.f32 0.0, %v8011
        %8013 = vmatmul.f32.gmra.mxu0 %v7899
        %v8014 = vpop.f32.mrf.mxu0
        %v8015 = vadd.f32 0.0, %v8014
        %8016 = vmatmul.f32.gmra.mxu0 %v7902
        %v8017 = vpop.f32.mrf.mxu0
        %v8018 = vadd.f32 0.0, %v8017
        %8019 = vmatmul.f32.gmra.mxu0 %v7905
        %v8020 = vpop.f32.mrf.mxu0
        %v8021 = vadd.f32 0.0, %v8020
        %8022 = vmatmul.f32.gmra.mxu0 %v7908
        %v8023 = vpop.f32.mrf.mxu0
        %v8024 = vadd.f32 0.0, %v8023
        %8025 = vmatmul.f32.gmra.mxu0 %v7911
        %v8026 = vpop.f32.mrf.mxu0
        %v8027 = vadd.f32 0.0, %v8026
        %8028 = vmatmul.f32.gmra.mxu0 %v7914
        %v8029 = vpop.f32.mrf.mxu0
        %v8030 = vadd.f32 0.0, %v8029
        %8031 = vmatmul.f32.gmra.mxu0 %v7917
        %v8032 = vpop.f32.mrf.mxu0
        %v8033 = vadd.f32 0.0, %v8032
        %8034 = vmatmul.f32.gmra.mxu0 %v7920
        %v8035 = vpop.f32.mrf.mxu0
        %v8036 = vadd.f32 0.0, %v8035
        %8037 = vmatmul.f32.gmra.mxu0 %v7923
        %v8038 = vpop.f32.mrf.mxu0
        %v8039 = vadd.f32 0.0, %v8038
        %8040 = vmatmul.f32.gmra.mxu0 %v7926
        %v8041 = vpop.f32.mrf.mxu0
        %v8042 = vadd.f32 0.0, %v8041
        %8043 = vmatmul.f32.gmra.mxu0 %v7929
        %v8044 = vpop.f32.mrf.mxu0
        %v8045 = vadd.f32 0.0, %v8044
        %8046 = vmatmul.f32.gmra.mxu0 %v7932
        %v8047 = vpop.f32.mrf.mxu0
        %v8048 = vadd.f32 0.0, %v8047
        %8049 = vmatmul.f32.gmra.mxu0 %v7935
        %v8050 = vpop.f32.mrf.mxu0
        %v8051 = vadd.f32 0.0, %v8050
        %8052 = vmatmul.f32.gmra.mxu0 %v7938
        %v8053 = vpop.f32.mrf.mxu0
        %v8054 = vadd.f32 0.0, %v8053
        %8055 = vmatmul.f32.gmra.mxu0 %v7941
        %v8056 = vpop.f32.mrf.mxu0
        %v8057 = vadd.f32 0.0, %v8056
        %8058 = vmatmul.f32.gmra.mxu0 %v7944
        %v8059 = vpop.f32.mrf.mxu0
        %v8060 = vadd.f32 0.0, %v8059
        %8061 = vmatmul.f32.gmra.mxu0 %v7947
        %v8062 = vpop.f32.mrf.mxu0
        %v8063 = vadd.f32 0.0, %v8062
        %8064 = vmatmul.f32.gmra.mxu0 %v7950
        %v8065 = vpop.f32.mrf.mxu0
        %v8066 = vadd.f32 0.0, %v8065
        %8067 = vmatmul.f32.gmra.mxu0 %v7953
        %v8068 = vpop.f32.mrf.mxu0
        %v8069 = vadd.f32 0.0, %v8068
        %8070 = vdwg.mxu0
        %v8071 = vadd.f32 %v7792, %v7976
        %v8072 = vadd.f32 %v7793, %v7979
        %v8073 = vadd.f32 %v7794, %v7982
        %v8074 = vadd.f32 %v7795, %v7985
        %v8075 = vadd.f32 %v7796, %v7988
        %v8076 = vadd.f32 %v7797, %v7991
        %v8077 = vadd.f32 %v7798, %v7994
        %v8078 = vadd.f32 %v7799, %v7997
        %v8079 = vadd.f32 %v7800, %v8000
        %v8080 = vadd.f32 %v7801, %v8003
        %v8081 = vadd.f32 %v7802, %v8006
        %v8082 = vadd.f32 %v7803, %v8009
        %v8083 = vadd.f32 %v7804, %v8012
        %v8084 = vadd.f32 %v7805, %v8015
        %v8085 = vadd.f32 %v7806, %v8018
        %v8086 = vadd.f32 %v7807, %v8021
        %v8087 = vadd.f32 %v7808, %v8024
        %v8088 = vadd.f32 %v7809, %v8027
        %v8089 = vadd.f32 %v7810, %v8030
        %v8090 = vadd.f32 %v7811, %v8033
        %v8091 = vadd.f32 %v7812, %v8036
        %v8092 = vadd.f32 %v7813, %v8039
        %v8093 = vadd.f32 %v7814, %v8042
        %v8094 = vadd.f32 %v7815, %v8045
        %v8095 = vadd.f32 %v7816, %v8048
        %v8096 = vadd.f32 %v7817, %v8051
        %v8097 = vadd.f32 %v7818, %v8054
        %v8098 = vadd.f32 %v7819, %v8057
        %v8099 = vadd.f32 %v7820, %v8060
        %v8100 = vadd.f32 %v7821, %v8063
        %v8101 = vadd.f32 %v7822, %v8066
        %v8102 = vadd.f32 %v7823, %v8069
        %v8103 = vld [vmem:[%s7824 + $0x1] sm:$0xff]
        %v8104 = vld [vmem:[%s7824 + $0x9] sm:$0xff]
        %v8105 = vld [vmem:[%s7824 + $0x19] sm:$0xff]
        %v8106 = vld [vmem:[%s7824 + $0x21] sm:$0xff]
        %v8107 = vld [vmem:[%s7824 + $0x31] sm:$0xff]
        %v8108 = vld [vmem:[%s7824 + $0x39] sm:$0xff]
        %v8109 = vld [vmem:[%s7824 + $0x49] sm:$0xff]
        %v8110 = vld [vmem:[%s7824 + $0x51] sm:$0xff]
        %v8111 = vld [vmem:[%s7824 + $0x61] sm:$0xff]
        %v8112 = vld [vmem:[%s7824 + $0x69] sm:$0xff]
        %v8113 = vld [vmem:[%s7824 + $0x79] sm:$0xff]
        %v8114 = vld [vmem:[%s7824 + $0x81] sm:$0xff]
        %v8115 = vld [vmem:[%s7824 + $0x91] sm:$0xff]
        %v8116 = vld [vmem:[%s7824 + $0x99] sm:$0xff]
        %v8117 = vld [vmem:[%s7824 + $0xa9] sm:$0xff]
        %v8118 = vld [vmem:[%s7824 + $0xb1] sm:$0xff]
        %v8119 = vld [vmem:[%s7824 + $0xc1] sm:$0xff]
        %v8120 = vld [vmem:[%s7824 + $0xc9] sm:$0xff]
        %v8121 = vld [vmem:[%s7824 + $0xd9] sm:$0xff]
        %v8122 = vld [vmem:[%s7824 + $0xe1] sm:$0xff]
        %v8123 = vld [vmem:[%s7824 + $0xf1] sm:$0xff]
        %v8124 = vld [vmem:[%s7824 + $0xf9] sm:$0xff]
        %v8125 = vld [vmem:[%s7824 + $0x109] sm:$0xff]
        %v8126 = vld [vmem:[%s7824 + $0x111] sm:$0xff]
        %v8127 = vld [vmem:[%s7824 + $0x121] sm:$0xff]
        %v8128 = vld [vmem:[%s7824 + $0x129] sm:$0xff]
        %v8129 = vld [vmem:[%s7824 + $0x139] sm:$0xff]
        %v8130 = vld [vmem:[%s7824 + $0x141] sm:$0xff]
        %v8131 = vld [vmem:[%s7824 + $0x151] sm:$0xff]
        %v8132 = vld [vmem:[%s7824 + $0x159] sm:$0xff]
        %v8133 = vld [vmem:[%s7824 + $0x169] sm:$0xff]
        %v8134 = vld [vmem:[%s7824 + $0x171] sm:$0xff]
        %s8135 = scalar_lea.vmem %s9, 32
        %v8136 = vld [vmem:[%s8135] sm:$0x3]
        %v8138 = vsel %vm3622, %v8103, 0
        %v8141 = vsel %vm3622, %v8104, 0
        %v8144 = vsel %vm3622, %v8105, 0
        %v8147 = vsel %vm3622, %v8106, 0
        %v8150 = vsel %vm3622, %v8107, 0
        %v8153 = vsel %vm3622, %v8108, 0
        %v8156 = vsel %vm3622, %v8109, 0
        %v8159 = vsel %vm3622, %v8110, 0
        %v8162 = vsel %vm3622, %v8111, 0
        %v8165 = vsel %vm3622, %v8112, 0
        %v8168 = vsel %vm3622, %v8113, 0
        %v8171 = vsel %vm3622, %v8114, 0
        %v8174 = vsel %vm3622, %v8115, 0
        %v8177 = vsel %vm3622, %v8116, 0
        %v8180 = vsel %vm3622, %v8117, 0
        %v8183 = vsel %vm3622, %v8118, 0
        %v8186 = vsel %vm3622, %v8119, 0
        %v8189 = vsel %vm3622, %v8120, 0
        %v8192 = vsel %vm3622, %v8121, 0
        %v8195 = vsel %vm3622, %v8122, 0
        %v8198 = vsel %vm3622, %v8123, 0
        %v8201 = vsel %vm3622, %v8124, 0
        %v8204 = vsel %vm3622, %v8125, 0
        %v8207 = vsel %vm3622, %v8126, 0
        %v8210 = vsel %vm3622, %v8127, 0
        %v8213 = vsel %vm3622, %v8128, 0
        %v8216 = vsel %vm3622, %v8129, 0
        %v8219 = vsel %vm3622, %v8130, 0
        %v8222 = vsel %vm3622, %v8131, 0
        %v8225 = vsel %vm3622, %v8132, 0
        %v8228 = vsel %vm3622, %v8133, 0
        %v8231 = vsel %vm3622, %v8134, 0
        %v8234 = vsel %vm3880, %v8136, 0
        %8236 = vmatpush.msra.mxu0 0.0
        %8237 = vmatpush.msra.mxu0 0.0
        %8238 = vmatpush.msra.mxu0 0.0
        %8239 = vmatpush.msra.mxu0 0.0
        %8240 = vmatpush.msra.mxu0 0.0
        %8241 = vmatpush.msra.mxu0 0.0
        %8242 = vmatpush.msra.mxu0 0.0
        %8243 = vmatpush.msra.mxu0 0.0
        %8244 = vmatpush.msra.mxu0 0.0
        %8245 = vmatpush.msra.mxu0 0.0
        %8246 = vmatpush.msra.mxu0 0.0
        %8247 = vmatpush.msra.mxu0 0.0
        %8248 = vmatpush.msra.mxu0 0.0
        %8249 = vmatpush.msra.mxu0 0.0
        %8250 = vmatpush.msra.mxu0 0.0
        %8251 = vmatpush.msra.mxu0 %v8234
        %8252 = vmatmul.f32.gmra.mxu0 %v8138
        %v8253 = vpop.f32.mrf.mxu0
        %v8254 = vadd.f32 0.0, %v8253
        %8255 = vmatmul.f32.gmra.mxu0 %v8141
        %v8256 = vpop.f32.mrf.mxu0
        %v8257 = vadd.f32 0.0, %v8256
        %8258 = vmatmul.f32.gmra.mxu0 %v8144
        %v8259 = vpop.f32.mrf.mxu0
        %v8260 = vadd.f32 0.0, %v8259
        %8261 = vmatmul.f32.gmra.mxu0 %v8147
        %v8262 = vpop.f32.mrf.mxu0
        %v8263 = vadd.f32 0.0, %v8262
        %8264 = vmatmul.f32.gmra.mxu0 %v8150
        %v8265 = vpop.f32.mrf.mxu0
        %v8266 = vadd.f32 0.0, %v8265
        %8267 = vmatmul.f32.gmra.mxu0 %v8153
        %v8268 = vpop.f32.mrf.mxu0
        %v8269 = vadd.f32 0.0, %v8268
        %8270 = vmatmul.f32.gmra.mxu0 %v8156
        %v8271 = vpop.f32.mrf.mxu0
        %v8272 = vadd.f32 0.0, %v8271
        %8273 = vmatmul.f32.gmra.mxu0 %v8159
        %v8274 = vpop.f32.mrf.mxu0
        %v8275 = vadd.f32 0.0, %v8274
        %8276 = vmatmul.f32.gmra.mxu0 %v8162
        %v8277 = vpop.f32.mrf.mxu0
        %v8278 = vadd.f32 0.0, %v8277
        %8279 = vmatmul.f32.gmra.mxu0 %v8165
        %v8280 = vpop.f32.mrf.mxu0
        %v8281 = vadd.f32 0.0, %v8280
        %8282 = vmatmul.f32.gmra.mxu0 %v8168
        %v8283 = vpop.f32.mrf.mxu0
        %v8284 = vadd.f32 0.0, %v8283
        %8285 = vmatmul.f32.gmra.mxu0 %v8171
        %v8286 = vpop.f32.mrf.mxu0
        %v8287 = vadd.f32 0.0, %v8286
        %8288 = vmatmul.f32.gmra.mxu0 %v8174
        %v8289 = vpop.f32.mrf.mxu0
        %v8290 = vadd.f32 0.0, %v8289
        %8291 = vmatmul.f32.gmra.mxu0 %v8177
        %v8292 = vpop.f32.mrf.mxu0
        %v8293 = vadd.f32 0.0, %v8292
        %8294 = vmatmul.f32.gmra.mxu0 %v8180
        %v8295 = vpop.f32.mrf.mxu0
        %v8296 = vadd.f32 0.0, %v8295
        %8297 = vmatmul.f32.gmra.mxu0 %v8183
        %v8298 = vpop.f32.mrf.mxu0
        %v8299 = vadd.f32 0.0, %v8298
        %8300 = vmatmul.f32.gmra.mxu0 %v8186
        %v8301 = vpop.f32.mrf.mxu0
        %v8302 = vadd.f32 0.0, %v8301
        %8303 = vmatmul.f32.gmra.mxu0 %v8189
        %v8304 = vpop.f32.mrf.mxu0
        %v8305 = vadd.f32 0.0, %v8304
        %8306 = vmatmul.f32.gmra.mxu0 %v8192
        %v8307 = vpop.f32.mrf.mxu0
        %v8308 = vadd.f32 0.0, %v8307
        %8309 = vmatmul.f32.gmra.mxu0 %v8195
        %v8310 = vpop.f32.mrf.mxu0
        %v8311 = vadd.f32 0.0, %v8310
        %8312 = vmatmul.f32.gmra.mxu0 %v8198
        %v8313 = vpop.f32.mrf.mxu0
        %v8314 = vadd.f32 0.0, %v8313
        %8315 = vmatmul.f32.gmra.mxu0 %v8201
        %v8316 = vpop.f32.mrf.mxu0
        %v8317 = vadd.f32 0.0, %v8316
        %8318 = vmatmul.f32.gmra.mxu0 %v8204
        %v8319 = vpop.f32.mrf.mxu0
        %v8320 = vadd.f32 0.0, %v8319
        %8321 = vmatmul.f32.gmra.mxu0 %v8207
        %v8322 = vpop.f32.mrf.mxu0
        %v8323 = vadd.f32 0.0, %v8322
        %8324 = vmatmul.f32.gmra.mxu0 %v8210
        %v8325 = vpop.f32.mrf.mxu0
        %v8326 = vadd.f32 0.0, %v8325
        %8327 = vmatmul.f32.gmra.mxu0 %v8213
        %v8328 = vpop.f32.mrf.mxu0
        %v8329 = vadd.f32 0.0, %v8328
        %8330 = vmatmul.f32.gmra.mxu0 %v8216
        %v8331 = vpop.f32.mrf.mxu0
        %v8332 = vadd.f32 0.0, %v8331
        %8333 = vmatmul.f32.gmra.mxu0 %v8219
        %v8334 = vpop.f32.mrf.mxu0
        %v8335 = vadd.f32 0.0, %v8334
        %8336 = vmatmul.f32.gmra.mxu0 %v8222
        %v8337 = vpop.f32.mrf.mxu0
        %v8338 = vadd.f32 0.0, %v8337
        %8339 = vmatmul.f32.gmra.mxu0 %v8225
        %v8340 = vpop.f32.mrf.mxu0
        %v8341 = vadd.f32 0.0, %v8340
        %8342 = vmatmul.f32.gmra.mxu0 %v8228
        %v8343 = vpop.f32.mrf.mxu0
        %v8344 = vadd.f32 0.0, %v8343
        %8345 = vmatmul.f32.gmra.mxu0 %v8231
        %v8346 = vpop.f32.mrf.mxu0
        %v8347 = vadd.f32 0.0, %v8346
        %8348 = vdwg.mxu0
        %v8349 = vadd.f32 %v8071, %v8254
        %v8350 = vadd.f32 %v8072, %v8257
        %v8351 = vadd.f32 %v8073, %v8260
        %v8352 = vadd.f32 %v8074, %v8263
        %v8353 = vadd.f32 %v8075, %v8266
        %v8354 = vadd.f32 %v8076, %v8269
        %v8355 = vadd.f32 %v8077, %v8272
        %v8356 = vadd.f32 %v8078, %v8275
        %v8357 = vadd.f32 %v8079, %v8278
        %v8358 = vadd.f32 %v8080, %v8281
        %v8359 = vadd.f32 %v8081, %v8284
        %v8360 = vadd.f32 %v8082, %v8287
        %v8361 = vadd.f32 %v8083, %v8290
        %v8362 = vadd.f32 %v8084, %v8293
        %v8363 = vadd.f32 %v8085, %v8296
        %v8364 = vadd.f32 %v8086, %v8299
        %v8365 = vadd.f32 %v8087, %v8302
        %v8366 = vadd.f32 %v8088, %v8305
        %v8367 = vadd.f32 %v8089, %v8308
        %v8368 = vadd.f32 %v8090, %v8311
        %v8369 = vadd.f32 %v8091, %v8314
        %v8370 = vadd.f32 %v8092, %v8317
        %v8371 = vadd.f32 %v8093, %v8320
        %v8372 = vadd.f32 %v8094, %v8323
        %v8373 = vadd.f32 %v8095, %v8326
        %v8374 = vadd.f32 %v8096, %v8329
        %v8375 = vadd.f32 %v8097, %v8332
        %v8376 = vadd.f32 %v8098, %v8335
        %v8377 = vadd.f32 %v8099, %v8338
        %v8378 = vadd.f32 %v8100, %v8341
        %v8379 = vadd.f32 %v8101, %v8344
        %v8380 = vadd.f32 %v8102, %v8347
        %v8381 = vld [vmem:[%s7824 + $0x2] sm:$0xff]
        %v8382 = vld [vmem:[%s7824 + $0xa] sm:$0xff]
        %v8383 = vld [vmem:[%s7824 + $0x1a] sm:$0xff]
        %v8384 = vld [vmem:[%s7824 + $0x22] sm:$0xff]
        %v8385 = vld [vmem:[%s7824 + $0x32] sm:$0xff]
        %v8386 = vld [vmem:[%s7824 + $0x3a] sm:$0xff]
        %v8387 = vld [vmem:[%s7824 + $0x4a] sm:$0xff]
        %v8388 = vld [vmem:[%s7824 + $0x52] sm:$0xff]
        %v8389 = vld [vmem:[%s7824 + $0x62] sm:$0xff]
        %v8390 = vld [vmem:[%s7824 + $0x6a] sm:$0xff]
        %v8391 = vld [vmem:[%s7824 + $0x7a] sm:$0xff]
        %v8392 = vld [vmem:[%s7824 + $0x82] sm:$0xff]
        %v8393 = vld [vmem:[%s7824 + $0x92] sm:$0xff]
        %v8394 = vld [vmem:[%s7824 + $0x9a] sm:$0xff]
        %v8395 = vld [vmem:[%s7824 + $0xaa] sm:$0xff]
        %v8396 = vld [vmem:[%s7824 + $0xb2] sm:$0xff]
        %v8397 = vld [vmem:[%s7824 + $0xc2] sm:$0xff]
        %v8398 = vld [vmem:[%s7824 + $0xca] sm:$0xff]
        %v8399 = vld [vmem:[%s7824 + $0xda] sm:$0xff]
        %v8400 = vld [vmem:[%s7824 + $0xe2] sm:$0xff]
        %v8401 = vld [vmem:[%s7824 + $0xf2] sm:$0xff]
        %v8402 = vld [vmem:[%s7824 + $0xfa] sm:$0xff]
        %v8403 = vld [vmem:[%s7824 + $0x10a] sm:$0xff]
        %v8404 = vld [vmem:[%s7824 + $0x112] sm:$0xff]
        %v8405 = vld [vmem:[%s7824 + $0x122] sm:$0xff]
        %v8406 = vld [vmem:[%s7824 + $0x12a] sm:$0xff]
        %v8407 = vld [vmem:[%s7824 + $0x13a] sm:$0xff]
        %v8408 = vld [vmem:[%s7824 + $0x142] sm:$0xff]
        %v8409 = vld [vmem:[%s7824 + $0x152] sm:$0xff]
        %v8410 = vld [vmem:[%s7824 + $0x15a] sm:$0xff]
        %v8411 = vld [vmem:[%s7824 + $0x16a] sm:$0xff]
        %v8412 = vld [vmem:[%s7824 + $0x172] sm:$0xff]
        %s8413 = scalar_lea.vmem %s9, 34
        %v8414 = vld [vmem:[%s8413] sm:$0x3]
        %v8416 = vsel %vm3622, %v8381, 0
        %v8419 = vsel %vm3622, %v8382, 0
        %v8422 = vsel %vm3622, %v8383, 0
        %v8425 = vsel %vm3622, %v8384, 0
        %v8428 = vsel %vm3622, %v8385, 0
        %v8431 = vsel %vm3622, %v8386, 0
        %v8434 = vsel %vm3622, %v8387, 0
        %v8437 = vsel %vm3622, %v8388, 0
        %v8440 = vsel %vm3622, %v8389, 0
        %v8443 = vsel %vm3622, %v8390, 0
        %v8446 = vsel %vm3622, %v8391, 0
        %v8449 = vsel %vm3622, %v8392, 0
        %v8452 = vsel %vm3622, %v8393, 0
        %v8455 = vsel %vm3622, %v8394, 0
        %v8458 = vsel %vm3622, %v8395, 0
        %v8461 = vsel %vm3622, %v8396, 0
        %v8464 = vsel %vm3622, %v8397, 0
        %v8467 = vsel %vm3622, %v8398, 0
        %v8470 = vsel %vm3622, %v8399, 0
        %v8473 = vsel %vm3622, %v8400, 0
        %v8476 = vsel %vm3622, %v8401, 0
        %v8479 = vsel %vm3622, %v8402, 0
        %v8482 = vsel %vm3622, %v8403, 0
        %v8485 = vsel %vm3622, %v8404, 0
        %v8488 = vsel %vm3622, %v8405, 0
        %v8491 = vsel %vm3622, %v8406, 0
        %v8494 = vsel %vm3622, %v8407, 0
        %v8497 = vsel %vm3622, %v8408, 0
        %v8500 = vsel %vm3622, %v8409, 0
        %v8503 = vsel %vm3622, %v8410, 0
        %v8506 = vsel %vm3622, %v8411, 0
        %v8509 = vsel %vm3622, %v8412, 0
        %v8512 = vsel %vm3880, %v8414, 0
        %8514 = vmatpush.msra.mxu0 0.0
        %8515 = vmatpush.msra.mxu0 0.0
        %8516 = vmatpush.msra.mxu0 0.0
        %8517 = vmatpush.msra.mxu0 0.0
        %8518 = vmatpush.msra.mxu0 0.0
        %8519 = vmatpush.msra.mxu0 0.0
        %8520 = vmatpush.msra.mxu0 0.0
        %8521 = vmatpush.msra.mxu0 0.0
        %8522 = vmatpush.msra.mxu0 0.0
        %8523 = vmatpush.msra.mxu0 0.0
        %8524 = vmatpush.msra.mxu0 0.0
        %8525 = vmatpush.msra.mxu0 0.0
        %8526 = vmatpush.msra.mxu0 0.0
        %8527 = vmatpush.msra.mxu0 0.0
        %8528 = vmatpush.msra.mxu0 0.0
        %8529 = vmatpush.msra.mxu0 %v8512
        %8530 = vmatmul.f32.gmra.mxu0 %v8416
        %v8531 = vpop.f32.mrf.mxu0
        %v8532 = vadd.f32 0.0, %v8531
        %8533 = vmatmul.f32.gmra.mxu0 %v8419
        %v8534 = vpop.f32.mrf.mxu0
        %v8535 = vadd.f32 0.0, %v8534
        %8536 = vmatmul.f32.gmra.mxu0 %v8422
        %v8537 = vpop.f32.mrf.mxu0
        %v8538 = vadd.f32 0.0, %v8537
        %8539 = vmatmul.f32.gmra.mxu0 %v8425
        %v8540 = vpop.f32.mrf.mxu0
        %v8541 = vadd.f32 0.0, %v8540
        %8542 = vmatmul.f32.gmra.mxu0 %v8428
        %v8543 = vpop.f32.mrf.mxu0
        %v8544 = vadd.f32 0.0, %v8543
        %8545 = vmatmul.f32.gmra.mxu0 %v8431
        %v8546 = vpop.f32.mrf.mxu0
        %v8547 = vadd.f32 0.0, %v8546
        %8548 = vmatmul.f32.gmra.mxu0 %v8434
        %v8549 = vpop.f32.mrf.mxu0
        %v8550 = vadd.f32 0.0, %v8549
        %8551 = vmatmul.f32.gmra.mxu0 %v8437
        %v8552 = vpop.f32.mrf.mxu0
        %v8553 = vadd.f32 0.0, %v8552
        %8554 = vmatmul.f32.gmra.mxu0 %v8440
        %v8555 = vpop.f32.mrf.mxu0
        %v8556 = vadd.f32 0.0, %v8555
        %8557 = vmatmul.f32.gmra.mxu0 %v8443
        %v8558 = vpop.f32.mrf.mxu0
        %v8559 = vadd.f32 0.0, %v8558
        %8560 = vmatmul.f32.gmra.mxu0 %v8446
        %v8561 = vpop.f32.mrf.mxu0
        %v8562 = vadd.f32 0.0, %v8561
        %8563 = vmatmul.f32.gmra.mxu0 %v8449
        %v8564 = vpop.f32.mrf.mxu0
        %v8565 = vadd.f32 0.0, %v8564
        %8566 = vmatmul.f32.gmra.mxu0 %v8452
        %v8567 = vpop.f32.mrf.mxu0
        %v8568 = vadd.f32 0.0, %v8567
        %8569 = vmatmul.f32.gmra.mxu0 %v8455
        %v8570 = vpop.f32.mrf.mxu0
        %v8571 = vadd.f32 0.0, %v8570
        %8572 = vmatmul.f32.gmra.mxu0 %v8458
        %v8573 = vpop.f32.mrf.mxu0
        %v8574 = vadd.f32 0.0, %v8573
        %8575 = vmatmul.f32.gmra.mxu0 %v8461
        %v8576 = vpop.f32.mrf.mxu0
        %v8577 = vadd.f32 0.0, %v8576
        %8578 = vmatmul.f32.gmra.mxu0 %v8464
        %v8579 = vpop.f32.mrf.mxu0
        %v8580 = vadd.f32 0.0, %v8579
        %8581 = vmatmul.f32.gmra.mxu0 %v8467
        %v8582 = vpop.f32.mrf.mxu0
        %v8583 = vadd.f32 0.0, %v8582
        %8584 = vmatmul.f32.gmra.mxu0 %v8470
        %v8585 = vpop.f32.mrf.mxu0
        %v8586 = vadd.f32 0.0, %v8585
        %8587 = vmatmul.f32.gmra.mxu0 %v8473
        %v8588 = vpop.f32.mrf.mxu0
        %v8589 = vadd.f32 0.0, %v8588
        %8590 = vmatmul.f32.gmra.mxu0 %v8476
        %v8591 = vpop.f32.mrf.mxu0
        %v8592 = vadd.f32 0.0, %v8591
        %8593 = vmatmul.f32.gmra.mxu0 %v8479
        %v8594 = vpop.f32.mrf.mxu0
        %v8595 = vadd.f32 0.0, %v8594
        %8596 = vmatmul.f32.gmra.mxu0 %v8482
        %v8597 = vpop.f32.mrf.mxu0
        %v8598 = vadd.f32 0.0, %v8597
        %8599 = vmatmul.f32.gmra.mxu0 %v8485
        %v8600 = vpop.f32.mrf.mxu0
        %v8601 = vadd.f32 0.0, %v8600
        %8602 = vmatmul.f32.gmra.mxu0 %v8488
        %v8603 = vpop.f32.mrf.mxu0
        %v8604 = vadd.f32 0.0, %v8603
        %8605 = vmatmul.f32.gmra.mxu0 %v8491
        %v8606 = vpop.f32.mrf.mxu0
        %v8607 = vadd.f32 0.0, %v8606
        %8608 = vmatmul.f32.gmra.mxu0 %v8494
        %v8609 = vpop.f32.mrf.mxu0
        %v8610 = vadd.f32 0.0, %v8609
        %8611 = vmatmul.f32.gmra.mxu0 %v8497
        %v8612 = vpop.f32.mrf.mxu0
        %v8613 = vadd.f32 0.0, %v8612
        %8614 = vmatmul.f32.gmra.mxu0 %v8500
        %v8615 = vpop.f32.mrf.mxu0
        %v8616 = vadd.f32 0.0, %v8615
        %8617 = vmatmul.f32.gmra.mxu0 %v8503
        %v8618 = vpop.f32.mrf.mxu0
        %v8619 = vadd.f32 0.0, %v8618
        %8620 = vmatmul.f32.gmra.mxu0 %v8506
        %v8621 = vpop.f32.mrf.mxu0
        %v8622 = vadd.f32 0.0, %v8621
        %8623 = vmatmul.f32.gmra.mxu0 %v8509
        %v8624 = vpop.f32.mrf.mxu0
        %v8625 = vadd.f32 0.0, %v8624
        %8626 = vdwg.mxu0
        %v8627 = vadd.f32 %v8349, %v8532
        %v8628 = vadd.f32 %v8350, %v8535
        %v8629 = vadd.f32 %v8351, %v8538
        %v8630 = vadd.f32 %v8352, %v8541
        %v8631 = vadd.f32 %v8353, %v8544
        %v8632 = vadd.f32 %v8354, %v8547
        %v8633 = vadd.f32 %v8355, %v8550
        %v8634 = vadd.f32 %v8356, %v8553
        %v8635 = vadd.f32 %v8357, %v8556
        %v8636 = vadd.f32 %v8358, %v8559
        %v8637 = vadd.f32 %v8359, %v8562
        %v8638 = vadd.f32 %v8360, %v8565
        %v8639 = vadd.f32 %v8361, %v8568
        %v8640 = vadd.f32 %v8362, %v8571
        %v8641 = vadd.f32 %v8363, %v8574
        %v8642 = vadd.f32 %v8364, %v8577
        %v8643 = vadd.f32 %v8365, %v8580
        %v8644 = vadd.f32 %v8366, %v8583
        %v8645 = vadd.f32 %v8367, %v8586
        %v8646 = vadd.f32 %v8368, %v8589
        %v8647 = vadd.f32 %v8369, %v8592
        %v8648 = vadd.f32 %v8370, %v8595
        %v8649 = vadd.f32 %v8371, %v8598
        %v8650 = vadd.f32 %v8372, %v8601
        %v8651 = vadd.f32 %v8373, %v8604
        %v8652 = vadd.f32 %v8374, %v8607
        %v8653 = vadd.f32 %v8375, %v8610
        %v8654 = vadd.f32 %v8376, %v8613
        %v8655 = vadd.f32 %v8377, %v8616
        %v8656 = vadd.f32 %v8378, %v8619
        %v8657 = vadd.f32 %v8379, %v8622
        %v8658 = vadd.f32 %v8380, %v8625
        %v8659 = vld [vmem:[%s7824 + $0x3] sm:$0xff]
        %v8660 = vld [vmem:[%s7824 + $0xb] sm:$0xff]
        %v8661 = vld [vmem:[%s7824 + $0x1b] sm:$0xff]
        %v8662 = vld [vmem:[%s7824 + $0x23] sm:$0xff]
        %v8663 = vld [vmem:[%s7824 + $0x33] sm:$0xff]
        %v8664 = vld [vmem:[%s7824 + $0x3b] sm:$0xff]
        %v8665 = vld [vmem:[%s7824 + $0x4b] sm:$0xff]
        %v8666 = vld [vmem:[%s7824 + $0x53] sm:$0xff]
        %v8667 = vld [vmem:[%s7824 + $0x63] sm:$0xff]
        %v8668 = vld [vmem:[%s7824 + $0x6b] sm:$0xff]
        %v8669 = vld [vmem:[%s7824 + $0x7b] sm:$0xff]
        %v8670 = vld [vmem:[%s7824 + $0x83] sm:$0xff]
        %v8671 = vld [vmem:[%s7824 + $0x93] sm:$0xff]
        %v8672 = vld [vmem:[%s7824 + $0x9b] sm:$0xff]
        %v8673 = vld [vmem:[%s7824 + $0xab] sm:$0xff]
        %v8674 = vld [vmem:[%s7824 + $0xb3] sm:$0xff]
        %v8675 = vld [vmem:[%s7824 + $0xc3] sm:$0xff]
        %v8676 = vld [vmem:[%s7824 + $0xcb] sm:$0xff]
        %v8677 = vld [vmem:[%s7824 + $0xdb] sm:$0xff]
        %v8678 = vld [vmem:[%s7824 + $0xe3] sm:$0xff]
        %v8679 = vld [vmem:[%s7824 + $0xf3] sm:$0xff]
        %v8680 = vld [vmem:[%s7824 + $0xfb] sm:$0xff]
        %v8681 = vld [vmem:[%s7824 + $0x10b] sm:$0xff]
        %v8682 = vld [vmem:[%s7824 + $0x113] sm:$0xff]
        %v8683 = vld [vmem:[%s7824 + $0x123] sm:$0xff]
        %v8684 = vld [vmem:[%s7824 + $0x12b] sm:$0xff]
        %v8685 = vld [vmem:[%s7824 + $0x13b] sm:$0xff]
        %v8686 = vld [vmem:[%s7824 + $0x143] sm:$0xff]
        %v8687 = vld [vmem:[%s7824 + $0x153] sm:$0xff]
        %v8688 = vld [vmem:[%s7824 + $0x15b] sm:$0xff]
        %v8689 = vld [vmem:[%s7824 + $0x16b] sm:$0xff]
        %v8690 = vld [vmem:[%s7824 + $0x173] sm:$0xff]
        %s8691 = scalar_lea.vmem %s9, 36
        %v8692 = vld [vmem:[%s8691] sm:$0x3]
        %v8694 = vsel %vm3622, %v8659, 0
        %v8697 = vsel %vm3622, %v8660, 0
        %v8700 = vsel %vm3622, %v8661, 0
        %v8703 = vsel %vm3622, %v8662, 0
        %v8706 = vsel %vm3622, %v8663, 0
        %v8709 = vsel %vm3622, %v8664, 0
        %v8712 = vsel %vm3622, %v8665, 0
        %v8715 = vsel %vm3622, %v8666, 0
        %v8718 = vsel %vm3622, %v8667, 0
        %v8721 = vsel %vm3622, %v8668, 0
        %v8724 = vsel %vm3622, %v8669, 0
        %v8727 = vsel %vm3622, %v8670, 0
        %v8730 = vsel %vm3622, %v8671, 0
        %v8733 = vsel %vm3622, %v8672, 0
        %v8736 = vsel %vm3622, %v8673, 0
        %v8739 = vsel %vm3622, %v8674, 0
        %v8742 = vsel %vm3622, %v8675, 0
        %v8745 = vsel %vm3622, %v8676, 0
        %v8748 = vsel %vm3622, %v8677, 0
        %v8751 = vsel %vm3622, %v8678, 0
        %v8754 = vsel %vm3622, %v8679, 0
        %v8757 = vsel %vm3622, %v8680, 0
        %v8760 = vsel %vm3622, %v8681, 0
        %v8763 = vsel %vm3622, %v8682, 0
        %v8766 = vsel %vm3622, %v8683, 0
        %v8769 = vsel %vm3622, %v8684, 0
        %v8772 = vsel %vm3622, %v8685, 0
        %v8775 = vsel %vm3622, %v8686, 0
        %v8778 = vsel %vm3622, %v8687, 0
        %v8781 = vsel %vm3622, %v8688, 0
        %v8784 = vsel %vm3622, %v8689, 0
        %v8787 = vsel %vm3622, %v8690, 0
        %v8790 = vsel %vm3880, %v8692, 0
        %8792 = vmatpush.msra.mxu0 0.0
        %8793 = vmatpush.msra.mxu0 0.0
        %8794 = vmatpush.msra.mxu0 0.0
        %8795 = vmatpush.msra.mxu0 0.0
        %8796 = vmatpush.msra.mxu0 0.0
        %8797 = vmatpush.msra.mxu0 0.0
        %8798 = vmatpush.msra.mxu0 0.0
        %8799 = vmatpush.msra.mxu0 0.0
        %8800 = vmatpush.msra.mxu0 0.0
        %8801 = vmatpush.msra.mxu0 0.0
        %8802 = vmatpush.msra.mxu0 0.0
        %8803 = vmatpush.msra.mxu0 0.0
        %8804 = vmatpush.msra.mxu0 0.0
        %8805 = vmatpush.msra.mxu0 0.0
        %8806 = vmatpush.msra.mxu0 0.0
        %8807 = vmatpush.msra.mxu0 %v8790
        %8808 = vmatmul.f32.gmra.mxu0 %v8694
        %v8809 = vpop.f32.mrf.mxu0
        %v8810 = vadd.f32 0.0, %v8809
        %8811 = vmatmul.f32.gmra.mxu0 %v8697
        %v8812 = vpop.f32.mrf.mxu0
        %v8813 = vadd.f32 0.0, %v8812
        %8814 = vmatmul.f32.gmra.mxu0 %v8700
        %v8815 = vpop.f32.mrf.mxu0
        %v8816 = vadd.f32 0.0, %v8815
        %8817 = vmatmul.f32.gmra.mxu0 %v8703
        %v8818 = vpop.f32.mrf.mxu0
        %v8819 = vadd.f32 0.0, %v8818
        %8820 = vmatmul.f32.gmra.mxu0 %v8706
        %v8821 = vpop.f32.mrf.mxu0
        %v8822 = vadd.f32 0.0, %v8821
        %8823 = vmatmul.f32.gmra.mxu0 %v8709
        %v8824 = vpop.f32.mrf.mxu0
        %v8825 = vadd.f32 0.0, %v8824
        %8826 = vmatmul.f32.gmra.mxu0 %v8712
        %v8827 = vpop.f32.mrf.mxu0
        %v8828 = vadd.f32 0.0, %v8827
        %8829 = vmatmul.f32.gmra.mxu0 %v8715
        %v8830 = vpop.f32.mrf.mxu0
        %v8831 = vadd.f32 0.0, %v8830
        %8832 = vmatmul.f32.gmra.mxu0 %v8718
        %v8833 = vpop.f32.mrf.mxu0
        %v8834 = vadd.f32 0.0, %v8833
        %8835 = vmatmul.f32.gmra.mxu0 %v8721
        %v8836 = vpop.f32.mrf.mxu0
        %v8837 = vadd.f32 0.0, %v8836
        %8838 = vmatmul.f32.gmra.mxu0 %v8724
        %v8839 = vpop.f32.mrf.mxu0
        %v8840 = vadd.f32 0.0, %v8839
        %8841 = vmatmul.f32.gmra.mxu0 %v8727
        %v8842 = vpop.f32.mrf.mxu0
        %v8843 = vadd.f32 0.0, %v8842
        %8844 = vmatmul.f32.gmra.mxu0 %v8730
        %v8845 = vpop.f32.mrf.mxu0
        %v8846 = vadd.f32 0.0, %v8845
        %8847 = vmatmul.f32.gmra.mxu0 %v8733
        %v8848 = vpop.f32.mrf.mxu0
        %v8849 = vadd.f32 0.0, %v8848
        %8850 = vmatmul.f32.gmra.mxu0 %v8736
        %v8851 = vpop.f32.mrf.mxu0
        %v8852 = vadd.f32 0.0, %v8851
        %8853 = vmatmul.f32.gmra.mxu0 %v8739
        %v8854 = vpop.f32.mrf.mxu0
        %v8855 = vadd.f32 0.0, %v8854
        %8856 = vmatmul.f32.gmra.mxu0 %v8742
        %v8857 = vpop.f32.mrf.mxu0
        %v8858 = vadd.f32 0.0, %v8857
        %8859 = vmatmul.f32.gmra.mxu0 %v8745
        %v8860 = vpop.f32.mrf.mxu0
        %v8861 = vadd.f32 0.0, %v8860
        %8862 = vmatmul.f32.gmra.mxu0 %v8748
        %v8863 = vpop.f32.mrf.mxu0
        %v8864 = vadd.f32 0.0, %v8863
        %8865 = vmatmul.f32.gmra.mxu0 %v8751
        %v8866 = vpop.f32.mrf.mxu0
        %v8867 = vadd.f32 0.0, %v8866
        %8868 = vmatmul.f32.gmra.mxu0 %v8754
        %v8869 = vpop.f32.mrf.mxu0
        %v8870 = vadd.f32 0.0, %v8869
        %8871 = vmatmul.f32.gmra.mxu0 %v8757
        %v8872 = vpop.f32.mrf.mxu0
        %v8873 = vadd.f32 0.0, %v8872
        %8874 = vmatmul.f32.gmra.mxu0 %v8760
        %v8875 = vpop.f32.mrf.mxu0
        %v8876 = vadd.f32 0.0, %v8875
        %8877 = vmatmul.f32.gmra.mxu0 %v8763
        %v8878 = vpop.f32.mrf.mxu0
        %v8879 = vadd.f32 0.0, %v8878
        %8880 = vmatmul.f32.gmra.mxu0 %v8766
        %v8881 = vpop.f32.mrf.mxu0
        %v8882 = vadd.f32 0.0, %v8881
        %8883 = vmatmul.f32.gmra.mxu0 %v8769
        %v8884 = vpop.f32.mrf.mxu0
        %v8885 = vadd.f32 0.0, %v8884
        %8886 = vmatmul.f32.gmra.mxu0 %v8772
        %v8887 = vpop.f32.mrf.mxu0
        %v8888 = vadd.f32 0.0, %v8887
        %8889 = vmatmul.f32.gmra.mxu0 %v8775
        %v8890 = vpop.f32.mrf.mxu0
        %v8891 = vadd.f32 0.0, %v8890
        %8892 = vmatmul.f32.gmra.mxu0 %v8778
        %v8893 = vpop.f32.mrf.mxu0
        %v8894 = vadd.f32 0.0, %v8893
        %8895 = vmatmul.f32.gmra.mxu0 %v8781
        %v8896 = vpop.f32.mrf.mxu0
        %v8897 = vadd.f32 0.0, %v8896
        %8898 = vmatmul.f32.gmra.mxu0 %v8784
        %v8899 = vpop.f32.mrf.mxu0
        %v8900 = vadd.f32 0.0, %v8899
        %8901 = vmatmul.f32.gmra.mxu0 %v8787
        %v8902 = vpop.f32.mrf.mxu0
        %v8903 = vadd.f32 0.0, %v8902
        %8904 = vdwg.mxu0
        %v8905 = vadd.f32 %v8627, %v8810
        %v8906 = vadd.f32 %v8628, %v8813
        %v8907 = vadd.f32 %v8629, %v8816
        %v8908 = vadd.f32 %v8630, %v8819
        %v8909 = vadd.f32 %v8631, %v8822
        %v8910 = vadd.f32 %v8632, %v8825
        %v8911 = vadd.f32 %v8633, %v8828
        %v8912 = vadd.f32 %v8634, %v8831
        %v8913 = vadd.f32 %v8635, %v8834
        %v8914 = vadd.f32 %v8636, %v8837
        %v8915 = vadd.f32 %v8637, %v8840
        %v8916 = vadd.f32 %v8638, %v8843
        %v8917 = vadd.f32 %v8639, %v8846
        %v8918 = vadd.f32 %v8640, %v8849
        %v8919 = vadd.f32 %v8641, %v8852
        %v8920 = vadd.f32 %v8642, %v8855
        %v8921 = vadd.f32 %v8643, %v8858
        %v8922 = vadd.f32 %v8644, %v8861
        %v8923 = vadd.f32 %v8645, %v8864
        %v8924 = vadd.f32 %v8646, %v8867
        %v8925 = vadd.f32 %v8647, %v8870
        %v8926 = vadd.f32 %v8648, %v8873
        %v8927 = vadd.f32 %v8649, %v8876
        %v8928 = vadd.f32 %v8650, %v8879
        %v8929 = vadd.f32 %v8651, %v8882
        %v8930 = vadd.f32 %v8652, %v8885
        %v8931 = vadd.f32 %v8653, %v8888
        %v8932 = vadd.f32 %v8654, %v8891
        %v8933 = vadd.f32 %v8655, %v8894
        %v8934 = vadd.f32 %v8656, %v8897
        %v8935 = vadd.f32 %v8657, %v8900
        %v8936 = vadd.f32 %v8658, %v8903
        %v8937 = vld [vmem:[%s7824 + $0x4] sm:$0xff]
        %v8938 = vld [vmem:[%s7824 + $0xc] sm:$0xff]
        %v8939 = vld [vmem:[%s7824 + $0x1c] sm:$0xff]
        %v8940 = vld [vmem:[%s7824 + $0x24] sm:$0xff]
        %v8941 = vld [vmem:[%s7824 + $0x34] sm:$0xff]
        %v8942 = vld [vmem:[%s7824 + $0x3c] sm:$0xff]
        %v8943 = vld [vmem:[%s7824 + $0x4c] sm:$0xff]
        %v8944 = vld [vmem:[%s7824 + $0x54] sm:$0xff]
        %v8945 = vld [vmem:[%s7824 + $0x64] sm:$0xff]
        %v8946 = vld [vmem:[%s7824 + $0x6c] sm:$0xff]
        %v8947 = vld [vmem:[%s7824 + $0x7c] sm:$0xff]
        %v8948 = vld [vmem:[%s7824 + $0x84] sm:$0xff]
        %v8949 = vld [vmem:[%s7824 + $0x94] sm:$0xff]
        %v8950 = vld [vmem:[%s7824 + $0x9c] sm:$0xff]
        %v8951 = vld [vmem:[%s7824 + $0xac] sm:$0xff]
        %v8952 = vld [vmem:[%s7824 + $0xb4] sm:$0xff]
        %v8953 = vld [vmem:[%s7824 + $0xc4] sm:$0xff]
        %v8954 = vld [vmem:[%s7824 + $0xcc] sm:$0xff]
        %v8955 = vld [vmem:[%s7824 + $0xdc] sm:$0xff]
        %v8956 = vld [vmem:[%s7824 + $0xe4] sm:$0xff]
        %v8957 = vld [vmem:[%s7824 + $0xf4] sm:$0xff]
        %v8958 = vld [vmem:[%s7824 + $0xfc] sm:$0xff]
        %v8959 = vld [vmem:[%s7824 + $0x10c] sm:$0xff]
        %v8960 = vld [vmem:[%s7824 + $0x114] sm:$0xff]
        %v8961 = vld [vmem:[%s7824 + $0x124] sm:$0xff]
        %v8962 = vld [vmem:[%s7824 + $0x12c] sm:$0xff]
        %v8963 = vld [vmem:[%s7824 + $0x13c] sm:$0xff]
        %v8964 = vld [vmem:[%s7824 + $0x144] sm:$0xff]
        %v8965 = vld [vmem:[%s7824 + $0x154] sm:$0xff]
        %v8966 = vld [vmem:[%s7824 + $0x15c] sm:$0xff]
        %v8967 = vld [vmem:[%s7824 + $0x16c] sm:$0xff]
        %v8968 = vld [vmem:[%s7824 + $0x174] sm:$0xff]
        %s8969 = scalar_lea.vmem %s9, 38
        %v8970 = vld [vmem:[%s8969] sm:$0x3]
        %v8972 = vsel %vm3622, %v8937, 0
        %v8975 = vsel %vm3622, %v8938, 0
        %v8978 = vsel %vm3622, %v8939, 0
        %v8981 = vsel %vm3622, %v8940, 0
        %v8984 = vsel %vm3622, %v8941, 0
        %v8987 = vsel %vm3622, %v8942, 0
        %v8990 = vsel %vm3622, %v8943, 0
        %v8993 = vsel %vm3622, %v8944, 0
        %v8996 = vsel %vm3622, %v8945, 0
        %v8999 = vsel %vm3622, %v8946, 0
        %v9002 = vsel %vm3622, %v8947, 0
        %v9005 = vsel %vm3622, %v8948, 0
        %v9008 = vsel %vm3622, %v8949, 0
        %v9011 = vsel %vm3622, %v8950, 0
        %v9014 = vsel %vm3622, %v8951, 0
        %v9017 = vsel %vm3622, %v8952, 0
        %v9020 = vsel %vm3622, %v8953, 0
        %v9023 = vsel %vm3622, %v8954, 0
        %v9026 = vsel %vm3622, %v8955, 0
        %v9029 = vsel %vm3622, %v8956, 0
        %v9032 = vsel %vm3622, %v8957, 0
        %v9035 = vsel %vm3622, %v8958, 0
        %v9038 = vsel %vm3622, %v8959, 0
        %v9041 = vsel %vm3622, %v8960, 0
        %v9044 = vsel %vm3622, %v8961, 0
        %v9047 = vsel %vm3622, %v8962, 0
        %v9050 = vsel %vm3622, %v8963, 0
        %v9053 = vsel %vm3622, %v8964, 0
        %v9056 = vsel %vm3622, %v8965, 0
        %v9059 = vsel %vm3622, %v8966, 0
        %v9062 = vsel %vm3622, %v8967, 0
        %v9065 = vsel %vm3622, %v8968, 0
        %v9068 = vsel %vm3880, %v8970, 0
        %9070 = vmatpush.msra.mxu0 0.0
        %9071 = vmatpush.msra.mxu0 0.0
        %9072 = vmatpush.msra.mxu0 0.0
        %9073 = vmatpush.msra.mxu0 0.0
        %9074 = vmatpush.msra.mxu0 0.0
        %9075 = vmatpush.msra.mxu0 0.0
        %9076 = vmatpush.msra.mxu0 0.0
        %9077 = vmatpush.msra.mxu0 0.0
        %9078 = vmatpush.msra.mxu0 0.0
        %9079 = vmatpush.msra.mxu0 0.0
        %9080 = vmatpush.msra.mxu0 0.0
        %9081 = vmatpush.msra.mxu0 0.0
        %9082 = vmatpush.msra.mxu0 0.0
        %9083 = vmatpush.msra.mxu0 0.0
        %9084 = vmatpush.msra.mxu0 0.0
        %9085 = vmatpush.msra.mxu0 %v9068
        %9086 = vmatmul.f32.gmra.mxu0 %v8972
        %v9087 = vpop.f32.mrf.mxu0
        %v9088 = vadd.f32 0.0, %v9087
        %9089 = vmatmul.f32.gmra.mxu0 %v8975
        %v9090 = vpop.f32.mrf.mxu0
        %v9091 = vadd.f32 0.0, %v9090
        %9092 = vmatmul.f32.gmra.mxu0 %v8978
        %v9093 = vpop.f32.mrf.mxu0
        %v9094 = vadd.f32 0.0, %v9093
        %9095 = vmatmul.f32.gmra.mxu0 %v8981
        %v9096 = vpop.f32.mrf.mxu0
        %v9097 = vadd.f32 0.0, %v9096
        %9098 = vmatmul.f32.gmra.mxu0 %v8984
        %v9099 = vpop.f32.mrf.mxu0
        %v9100 = vadd.f32 0.0, %v9099
        %9101 = vmatmul.f32.gmra.mxu0 %v8987
        %v9102 = vpop.f32.mrf.mxu0
        %v9103 = vadd.f32 0.0, %v9102
        %9104 = vmatmul.f32.gmra.mxu0 %v8990
        %v9105 = vpop.f32.mrf.mxu0
        %v9106 = vadd.f32 0.0, %v9105
        %9107 = vmatmul.f32.gmra.mxu0 %v8993
        %v9108 = vpop.f32.mrf.mxu0
        %v9109 = vadd.f32 0.0, %v9108
        %9110 = vmatmul.f32.gmra.mxu0 %v8996
        %v9111 = vpop.f32.mrf.mxu0
        %v9112 = vadd.f32 0.0, %v9111
        %9113 = vmatmul.f32.gmra.mxu0 %v8999
        %v9114 = vpop.f32.mrf.mxu0
        %v9115 = vadd.f32 0.0, %v9114
        %9116 = vmatmul.f32.gmra.mxu0 %v9002
        %v9117 = vpop.f32.mrf.mxu0
        %v9118 = vadd.f32 0.0, %v9117
        %9119 = vmatmul.f32.gmra.mxu0 %v9005
        %v9120 = vpop.f32.mrf.mxu0
        %v9121 = vadd.f32 0.0, %v9120
        %9122 = vmatmul.f32.gmra.mxu0 %v9008
        %v9123 = vpop.f32.mrf.mxu0
        %v9124 = vadd.f32 0.0, %v9123
        %9125 = vmatmul.f32.gmra.mxu0 %v9011
        %v9126 = vpop.f32.mrf.mxu0
        %v9127 = vadd.f32 0.0, %v9126
        %9128 = vmatmul.f32.gmra.mxu0 %v9014
        %v9129 = vpop.f32.mrf.mxu0
        %v9130 = vadd.f32 0.0, %v9129
        %9131 = vmatmul.f32.gmra.mxu0 %v9017
        %v9132 = vpop.f32.mrf.mxu0
        %v9133 = vadd.f32 0.0, %v9132
        %9134 = vmatmul.f32.gmra.mxu0 %v9020
        %v9135 = vpop.f32.mrf.mxu0
        %v9136 = vadd.f32 0.0, %v9135
        %9137 = vmatmul.f32.gmra.mxu0 %v9023
        %v9138 = vpop.f32.mrf.mxu0
        %v9139 = vadd.f32 0.0, %v9138
        %9140 = vmatmul.f32.gmra.mxu0 %v9026
        %v9141 = vpop.f32.mrf.mxu0
        %v9142 = vadd.f32 0.0, %v9141
        %9143 = vmatmul.f32.gmra.mxu0 %v9029
        %v9144 = vpop.f32.mrf.mxu0
        %v9145 = vadd.f32 0.0, %v9144
        %9146 = vmatmul.f32.gmra.mxu0 %v9032
        %v9147 = vpop.f32.mrf.mxu0
        %v9148 = vadd.f32 0.0, %v9147
        %9149 = vmatmul.f32.gmra.mxu0 %v9035
        %v9150 = vpop.f32.mrf.mxu0
        %v9151 = vadd.f32 0.0, %v9150
        %9152 = vmatmul.f32.gmra.mxu0 %v9038
        %v9153 = vpop.f32.mrf.mxu0
        %v9154 = vadd.f32 0.0, %v9153
        %9155 = vmatmul.f32.gmra.mxu0 %v9041
        %v9156 = vpop.f32.mrf.mxu0
        %v9157 = vadd.f32 0.0, %v9156
        %9158 = vmatmul.f32.gmra.mxu0 %v9044
        %v9159 = vpop.f32.mrf.mxu0
        %v9160 = vadd.f32 0.0, %v9159
        %9161 = vmatmul.f32.gmra.mxu0 %v9047
        %v9162 = vpop.f32.mrf.mxu0
        %v9163 = vadd.f32 0.0, %v9162
        %9164 = vmatmul.f32.gmra.mxu0 %v9050
        %v9165 = vpop.f32.mrf.mxu0
        %v9166 = vadd.f32 0.0, %v9165
        %9167 = vmatmul.f32.gmra.mxu0 %v9053
        %v9168 = vpop.f32.mrf.mxu0
        %v9169 = vadd.f32 0.0, %v9168
        %9170 = vmatmul.f32.gmra.mxu0 %v9056
        %v9171 = vpop.f32.mrf.mxu0
        %v9172 = vadd.f32 0.0, %v9171
        %9173 = vmatmul.f32.gmra.mxu0 %v9059
        %v9174 = vpop.f32.mrf.mxu0
        %v9175 = vadd.f32 0.0, %v9174
        %9176 = vmatmul.f32.gmra.mxu0 %v9062
        %v9177 = vpop.f32.mrf.mxu0
        %v9178 = vadd.f32 0.0, %v9177
        %9179 = vmatmul.f32.gmra.mxu0 %v9065
        %v9180 = vpop.f32.mrf.mxu0
        %v9181 = vadd.f32 0.0, %v9180
        %9182 = vdwg.mxu0
        %v9183 = vadd.f32 %v8905, %v9088
        %v9184 = vadd.f32 %v8906, %v9091
        %v9185 = vadd.f32 %v8907, %v9094
        %v9186 = vadd.f32 %v8908, %v9097
        %v9187 = vadd.f32 %v8909, %v9100
        %v9188 = vadd.f32 %v8910, %v9103
        %v9189 = vadd.f32 %v8911, %v9106
        %v9190 = vadd.f32 %v8912, %v9109
        %v9191 = vadd.f32 %v8913, %v9112
        %v9192 = vadd.f32 %v8914, %v9115
        %v9193 = vadd.f32 %v8915, %v9118
        %v9194 = vadd.f32 %v8916, %v9121
        %v9195 = vadd.f32 %v8917, %v9124
        %v9196 = vadd.f32 %v8918, %v9127
        %v9197 = vadd.f32 %v8919, %v9130
        %v9198 = vadd.f32 %v8920, %v9133
        %v9199 = vadd.f32 %v8921, %v9136
        %v9200 = vadd.f32 %v8922, %v9139
        %v9201 = vadd.f32 %v8923, %v9142
        %v9202 = vadd.f32 %v8924, %v9145
        %v9203 = vadd.f32 %v8925, %v9148
        %v9204 = vadd.f32 %v8926, %v9151
        %v9205 = vadd.f32 %v8927, %v9154
        %v9206 = vadd.f32 %v8928, %v9157
        %v9207 = vadd.f32 %v8929, %v9160
        %v9208 = vadd.f32 %v8930, %v9163
        %v9209 = vadd.f32 %v8931, %v9166
        %v9210 = vadd.f32 %v8932, %v9169
        %v9211 = vadd.f32 %v8933, %v9172
        %v9212 = vadd.f32 %v8934, %v9175
        %v9213 = vadd.f32 %v8935, %v9178
        %v9214 = vadd.f32 %v8936, %v9181
        %s9215 = scalar_lea.vmem [#allocation3], 96
        %v9216 = vld [vmem:[%s9215] sm:$0xff]
        %v9217 = vld [vmem:[%s9215 + $0x8] sm:$0xff]
        %v9218 = vld [vmem:[%s9215 + $0x18] sm:$0xff]
        %v9219 = vld [vmem:[%s9215 + $0x20] sm:$0xff]
        %v9220 = vld [vmem:[%s9215 + $0x30] sm:$0xff]
        %v9221 = vld [vmem:[%s9215 + $0x38] sm:$0xff]
        %v9222 = vld [vmem:[%s9215 + $0x48] sm:$0xff]
        %v9223 = vld [vmem:[%s9215 + $0x50] sm:$0xff]
        %v9224 = vld [vmem:[%s9215 + $0x60] sm:$0xff]
        %v9225 = vld [vmem:[%s9215 + $0x68] sm:$0xff]
        %v9226 = vld [vmem:[%s9215 + $0x78] sm:$0xff]
        %v9227 = vld [vmem:[%s9215 + $0x80] sm:$0xff]
        %v9228 = vld [vmem:[%s9215 + $0x90] sm:$0xff]
        %v9229 = vld [vmem:[%s9215 + $0x98] sm:$0xff]
        %v9230 = vld [vmem:[%s9215 + $0xa8] sm:$0xff]
        %v9231 = vld [vmem:[%s9215 + $0xb0] sm:$0xff]
        %v9232 = vld [vmem:[%s9215 + $0xc0] sm:$0xff]
        %v9233 = vld [vmem:[%s9215 + $0xc8] sm:$0xff]
        %v9234 = vld [vmem:[%s9215 + $0xd8] sm:$0xff]
        %v9235 = vld [vmem:[%s9215 + $0xe0] sm:$0xff]
        %v9236 = vld [vmem:[%s9215 + $0xf0] sm:$0xff]
        %v9237 = vld [vmem:[%s9215 + $0xf8] sm:$0xff]
        %v9238 = vld [vmem:[%s9215 + $0x108] sm:$0xff]
        %v9239 = vld [vmem:[%s9215 + $0x110] sm:$0xff]
        %v9240 = vld [vmem:[%s9215 + $0x120] sm:$0xff]
        %v9241 = vld [vmem:[%s9215 + $0x128] sm:$0xff]
        %v9242 = vld [vmem:[%s9215 + $0x138] sm:$0xff]
        %v9243 = vld [vmem:[%s9215 + $0x140] sm:$0xff]
        %v9244 = vld [vmem:[%s9215 + $0x150] sm:$0xff]
        %v9245 = vld [vmem:[%s9215 + $0x158] sm:$0xff]
        %v9246 = vld [vmem:[%s9215 + $0x168] sm:$0xff]
        %v9247 = vld [vmem:[%s9215 + $0x170] sm:$0xff]
        %s9248 = scalar_lea.vmem %s9, 40
        %v9249 = vld [vmem:[%s9248] sm:$0x3]
        %v9251 = vsel %vm3622, %v9216, 0
        %v9254 = vsel %vm3622, %v9217, 0
        %v9257 = vsel %vm3622, %v9218, 0
        %v9260 = vsel %vm3622, %v9219, 0
        %v9263 = vsel %vm3622, %v9220, 0
        %v9266 = vsel %vm3622, %v9221, 0
        %v9269 = vsel %vm3622, %v9222, 0
        %v9272 = vsel %vm3622, %v9223, 0
        %v9275 = vsel %vm3622, %v9224, 0
        %v9278 = vsel %vm3622, %v9225, 0
        %v9281 = vsel %vm3622, %v9226, 0
        %v9284 = vsel %vm3622, %v9227, 0
        %v9287 = vsel %vm3622, %v9228, 0
        %v9290 = vsel %vm3622, %v9229, 0
        %v9293 = vsel %vm3622, %v9230, 0
        %v9296 = vsel %vm3622, %v9231, 0
        %v9299 = vsel %vm3622, %v9232, 0
        %v9302 = vsel %vm3622, %v9233, 0
        %v9305 = vsel %vm3622, %v9234, 0
        %v9308 = vsel %vm3622, %v9235, 0
        %v9311 = vsel %vm3622, %v9236, 0
        %v9314 = vsel %vm3622, %v9237, 0
        %v9317 = vsel %vm3622, %v9238, 0
        %v9320 = vsel %vm3622, %v9239, 0
        %v9323 = vsel %vm3622, %v9240, 0
        %v9326 = vsel %vm3622, %v9241, 0
        %v9329 = vsel %vm3622, %v9242, 0
        %v9332 = vsel %vm3622, %v9243, 0
        %v9335 = vsel %vm3622, %v9244, 0
        %v9338 = vsel %vm3622, %v9245, 0
        %v9341 = vsel %vm3622, %v9246, 0
        %v9344 = vsel %vm3622, %v9247, 0
        %v9347 = vsel %vm3880, %v9249, 0
        %9349 = vmatpush.msra.mxu0 0.0
        %9350 = vmatpush.msra.mxu0 0.0
        %9351 = vmatpush.msra.mxu0 0.0
        %9352 = vmatpush.msra.mxu0 0.0
        %9353 = vmatpush.msra.mxu0 0.0
        %9354 = vmatpush.msra.mxu0 0.0
        %9355 = vmatpush.msra.mxu0 0.0
        %9356 = vmatpush.msra.mxu0 0.0
        %9357 = vmatpush.msra.mxu0 0.0
        %9358 = vmatpush.msra.mxu0 0.0
        %9359 = vmatpush.msra.mxu0 0.0
        %9360 = vmatpush.msra.mxu0 0.0
        %9361 = vmatpush.msra.mxu0 0.0
        %9362 = vmatpush.msra.mxu0 0.0
        %9363 = vmatpush.msra.mxu0 0.0
        %9364 = vmatpush.msra.mxu0 %v9347
        %9365 = vmatmul.f32.gmra.mxu0 %v9251
        %v9366 = vpop.f32.mrf.mxu0
        %v9367 = vadd.f32 0.0, %v9366
        %9368 = vmatmul.f32.gmra.mxu0 %v9254
        %v9369 = vpop.f32.mrf.mxu0
        %v9370 = vadd.f32 0.0, %v9369
        %9371 = vmatmul.f32.gmra.mxu0 %v9257
        %v9372 = vpop.f32.mrf.mxu0
        %v9373 = vadd.f32 0.0, %v9372
        %9374 = vmatmul.f32.gmra.mxu0 %v9260
        %v9375 = vpop.f32.mrf.mxu0
        %v9376 = vadd.f32 0.0, %v9375
        %9377 = vmatmul.f32.gmra.mxu0 %v9263
        %v9378 = vpop.f32.mrf.mxu0
        %v9379 = vadd.f32 0.0, %v9378
        %9380 = vmatmul.f32.gmra.mxu0 %v9266
        %v9381 = vpop.f32.mrf.mxu0
        %v9382 = vadd.f32 0.0, %v9381
        %9383 = vmatmul.f32.gmra.mxu0 %v9269
        %v9384 = vpop.f32.mrf.mxu0
        %v9385 = vadd.f32 0.0, %v9384
        %9386 = vmatmul.f32.gmra.mxu0 %v9272
        %v9387 = vpop.f32.mrf.mxu0
        %v9388 = vadd.f32 0.0, %v9387
        %9389 = vmatmul.f32.gmra.mxu0 %v9275
        %v9390 = vpop.f32.mrf.mxu0
        %v9391 = vadd.f32 0.0, %v9390
        %9392 = vmatmul.f32.gmra.mxu0 %v9278
        %v9393 = vpop.f32.mrf.mxu0
        %v9394 = vadd.f32 0.0, %v9393
        %9395 = vmatmul.f32.gmra.mxu0 %v9281
        %v9396 = vpop.f32.mrf.mxu0
        %v9397 = vadd.f32 0.0, %v9396
        %9398 = vmatmul.f32.gmra.mxu0 %v9284
        %v9399 = vpop.f32.mrf.mxu0
        %v9400 = vadd.f32 0.0, %v9399
        %9401 = vmatmul.f32.gmra.mxu0 %v9287
        %v9402 = vpop.f32.mrf.mxu0
        %v9403 = vadd.f32 0.0, %v9402
        %9404 = vmatmul.f32.gmra.mxu0 %v9290
        %v9405 = vpop.f32.mrf.mxu0
        %v9406 = vadd.f32 0.0, %v9405
        %9407 = vmatmul.f32.gmra.mxu0 %v9293
        %v9408 = vpop.f32.mrf.mxu0
        %v9409 = vadd.f32 0.0, %v9408
        %9410 = vmatmul.f32.gmra.mxu0 %v9296
        %v9411 = vpop.f32.mrf.mxu0
        %v9412 = vadd.f32 0.0, %v9411
        %9413 = vmatmul.f32.gmra.mxu0 %v9299
        %v9414 = vpop.f32.mrf.mxu0
        %v9415 = vadd.f32 0.0, %v9414
        %9416 = vmatmul.f32.gmra.mxu0 %v9302
        %v9417 = vpop.f32.mrf.mxu0
        %v9418 = vadd.f32 0.0, %v9417
        %9419 = vmatmul.f32.gmra.mxu0 %v9305
        %v9420 = vpop.f32.mrf.mxu0
        %v9421 = vadd.f32 0.0, %v9420
        %9422 = vmatmul.f32.gmra.mxu0 %v9308
        %v9423 = vpop.f32.mrf.mxu0
        %v9424 = vadd.f32 0.0, %v9423
        %9425 = vmatmul.f32.gmra.mxu0 %v9311
        %v9426 = vpop.f32.mrf.mxu0
        %v9427 = vadd.f32 0.0, %v9426
        %9428 = vmatmul.f32.gmra.mxu0 %v9314
        %v9429 = vpop.f32.mrf.mxu0
        %v9430 = vadd.f32 0.0, %v9429
        %9431 = vmatmul.f32.gmra.mxu0 %v9317
        %v9432 = vpop.f32.mrf.mxu0
        %v9433 = vadd.f32 0.0, %v9432
        %9434 = vmatmul.f32.gmra.mxu0 %v9320
        %v9435 = vpop.f32.mrf.mxu0
        %v9436 = vadd.f32 0.0, %v9435
        %9437 = vmatmul.f32.gmra.mxu0 %v9323
        %v9438 = vpop.f32.mrf.mxu0
        %v9439 = vadd.f32 0.0, %v9438
        %9440 = vmatmul.f32.gmra.mxu0 %v9326
        %v9441 = vpop.f32.mrf.mxu0
        %v9442 = vadd.f32 0.0, %v9441
        %9443 = vmatmul.f32.gmra.mxu0 %v9329
        %v9444 = vpop.f32.mrf.mxu0
        %v9445 = vadd.f32 0.0, %v9444
        %9446 = vmatmul.f32.gmra.mxu0 %v9332
        %v9447 = vpop.f32.mrf.mxu0
        %v9448 = vadd.f32 0.0, %v9447
        %9449 = vmatmul.f32.gmra.mxu0 %v9335
        %v9450 = vpop.f32.mrf.mxu0
        %v9451 = vadd.f32 0.0, %v9450
        %9452 = vmatmul.f32.gmra.mxu0 %v9338
        %v9453 = vpop.f32.mrf.mxu0
        %v9454 = vadd.f32 0.0, %v9453
        %9455 = vmatmul.f32.gmra.mxu0 %v9341
        %v9456 = vpop.f32.mrf.mxu0
        %v9457 = vadd.f32 0.0, %v9456
        %9458 = vmatmul.f32.gmra.mxu0 %v9344
        %v9459 = vpop.f32.mrf.mxu0
        %v9460 = vadd.f32 0.0, %v9459
        %9461 = vdwg.mxu0
        %v9462 = vadd.f32 %v9183, %v9367
        %v9463 = vadd.f32 %v9184, %v9370
        %v9464 = vadd.f32 %v9185, %v9373
        %v9465 = vadd.f32 %v9186, %v9376
        %v9466 = vadd.f32 %v9187, %v9379
        %v9467 = vadd.f32 %v9188, %v9382
        %v9468 = vadd.f32 %v9189, %v9385
        %v9469 = vadd.f32 %v9190, %v9388
        %v9470 = vadd.f32 %v9191, %v9391
        %v9471 = vadd.f32 %v9192, %v9394
        %v9472 = vadd.f32 %v9193, %v9397
        %v9473 = vadd.f32 %v9194, %v9400
        %v9474 = vadd.f32 %v9195, %v9403
        %v9475 = vadd.f32 %v9196, %v9406
        %v9476 = vadd.f32 %v9197, %v9409
        %v9477 = vadd.f32 %v9198, %v9412
        %v9478 = vadd.f32 %v9199, %v9415
        %v9479 = vadd.f32 %v9200, %v9418
        %v9480 = vadd.f32 %v9201, %v9421
        %v9481 = vadd.f32 %v9202, %v9424
        %v9482 = vadd.f32 %v9203, %v9427
        %v9483 = vadd.f32 %v9204, %v9430
        %v9484 = vadd.f32 %v9205, %v9433
        %v9485 = vadd.f32 %v9206, %v9436
        %v9486 = vadd.f32 %v9207, %v9439
        %v9487 = vadd.f32 %v9208, %v9442
        %v9488 = vadd.f32 %v9209, %v9445
        %v9489 = vadd.f32 %v9210, %v9448
        %v9490 = vadd.f32 %v9211, %v9451
        %v9491 = vadd.f32 %v9212, %v9454
        %v9492 = vadd.f32 %v9213, %v9457
        %v9493 = vadd.f32 %v9214, %v9460
        %v9494 = vld [vmem:[%s9215 + $0x1] sm:$0xff]
        %v9495 = vld [vmem:[%s9215 + $0x9] sm:$0xff]
        %v9496 = vld [vmem:[%s9215 + $0x19] sm:$0xff]
        %v9497 = vld [vmem:[%s9215 + $0x21] sm:$0xff]
        %v9498 = vld [vmem:[%s9215 + $0x31] sm:$0xff]
        %v9499 = vld [vmem:[%s9215 + $0x39] sm:$0xff]
        %v9500 = vld [vmem:[%s9215 + $0x49] sm:$0xff]
        %v9501 = vld [vmem:[%s9215 + $0x51] sm:$0xff]
        %v9502 = vld [vmem:[%s9215 + $0x61] sm:$0xff]
        %v9503 = vld [vmem:[%s9215 + $0x69] sm:$0xff]
        %v9504 = vld [vmem:[%s9215 + $0x79] sm:$0xff]
        %v9505 = vld [vmem:[%s9215 + $0x81] sm:$0xff]
        %v9506 = vld [vmem:[%s9215 + $0x91] sm:$0xff]
        %v9507 = vld [vmem:[%s9215 + $0x99] sm:$0xff]
        %v9508 = vld [vmem:[%s9215 + $0xa9] sm:$0xff]
        %v9509 = vld [vmem:[%s9215 + $0xb1] sm:$0xff]
        %v9510 = vld [vmem:[%s9215 + $0xc1] sm:$0xff]
        %v9511 = vld [vmem:[%s9215 + $0xc9] sm:$0xff]
        %v9512 = vld [vmem:[%s9215 + $0xd9] sm:$0xff]
        %v9513 = vld [vmem:[%s9215 + $0xe1] sm:$0xff]
        %v9514 = vld [vmem:[%s9215 + $0xf1] sm:$0xff]
        %v9515 = vld [vmem:[%s9215 + $0xf9] sm:$0xff]
        %v9516 = vld [vmem:[%s9215 + $0x109] sm:$0xff]
        %v9517 = vld [vmem:[%s9215 + $0x111] sm:$0xff]
        %v9518 = vld [vmem:[%s9215 + $0x121] sm:$0xff]
        %v9519 = vld [vmem:[%s9215 + $0x129] sm:$0xff]
        %v9520 = vld [vmem:[%s9215 + $0x139] sm:$0xff]
        %v9521 = vld [vmem:[%s9215 + $0x141] sm:$0xff]
        %v9522 = vld [vmem:[%s9215 + $0x151] sm:$0xff]
        %v9523 = vld [vmem:[%s9215 + $0x159] sm:$0xff]
        %v9524 = vld [vmem:[%s9215 + $0x169] sm:$0xff]
        %v9525 = vld [vmem:[%s9215 + $0x171] sm:$0xff]
        %s9526 = scalar_lea.vmem %s9, 42
        %v9527 = vld [vmem:[%s9526] sm:$0x3]
        %v9529 = vsel %vm3622, %v9494, 0
        %v9532 = vsel %vm3622, %v9495, 0
        %v9535 = vsel %vm3622, %v9496, 0
        %v9538 = vsel %vm3622, %v9497, 0
        %v9541 = vsel %vm3622, %v9498, 0
        %v9544 = vsel %vm3622, %v9499, 0
        %v9547 = vsel %vm3622, %v9500, 0
        %v9550 = vsel %vm3622, %v9501, 0
        %v9553 = vsel %vm3622, %v9502, 0
        %v9556 = vsel %vm3622, %v9503, 0
        %v9559 = vsel %vm3622, %v9504, 0
        %v9562 = vsel %vm3622, %v9505, 0
        %v9565 = vsel %vm3622, %v9506, 0
        %v9568 = vsel %vm3622, %v9507, 0
        %v9571 = vsel %vm3622, %v9508, 0
        %v9574 = vsel %vm3622, %v9509, 0
        %v9577 = vsel %vm3622, %v9510, 0
        %v9580 = vsel %vm3622, %v9511, 0
        %v9583 = vsel %vm3622, %v9512, 0
        %v9586 = vsel %vm3622, %v9513, 0
        %v9589 = vsel %vm3622, %v9514, 0
        %v9592 = vsel %vm3622, %v9515, 0
        %v9595 = vsel %vm3622, %v9516, 0
        %v9598 = vsel %vm3622, %v9517, 0
        %v9601 = vsel %vm3622, %v9518, 0
        %v9604 = vsel %vm3622, %v9519, 0
        %v9607 = vsel %vm3622, %v9520, 0
        %v9610 = vsel %vm3622, %v9521, 0
        %v9613 = vsel %vm3622, %v9522, 0
        %v9616 = vsel %vm3622, %v9523, 0
        %v9619 = vsel %vm3622, %v9524, 0
        %v9622 = vsel %vm3622, %v9525, 0
        %v9625 = vsel %vm3880, %v9527, 0
        %9627 = vmatpush.msra.mxu0 0.0
        %9628 = vmatpush.msra.mxu0 0.0
        %9629 = vmatpush.msra.mxu0 0.0
        %9630 = vmatpush.msra.mxu0 0.0
        %9631 = vmatpush.msra.mxu0 0.0
        %9632 = vmatpush.msra.mxu0 0.0
        %9633 = vmatpush.msra.mxu0 0.0
        %9634 = vmatpush.msra.mxu0 0.0
        %9635 = vmatpush.msra.mxu0 0.0
        %9636 = vmatpush.msra.mxu0 0.0
        %9637 = vmatpush.msra.mxu0 0.0
        %9638 = vmatpush.msra.mxu0 0.0
        %9639 = vmatpush.msra.mxu0 0.0
        %9640 = vmatpush.msra.mxu0 0.0
        %9641 = vmatpush.msra.mxu0 0.0
        %9642 = vmatpush.msra.mxu0 %v9625
        %9643 = vmatmul.f32.gmra.mxu0 %v9529
        %v9644 = vpop.f32.mrf.mxu0
        %v9645 = vadd.f32 0.0, %v9644
        %9646 = vmatmul.f32.gmra.mxu0 %v9532
        %v9647 = vpop.f32.mrf.mxu0
        %v9648 = vadd.f32 0.0, %v9647
        %9649 = vmatmul.f32.gmra.mxu0 %v9535
        %v9650 = vpop.f32.mrf.mxu0
        %v9651 = vadd.f32 0.0, %v9650
        %9652 = vmatmul.f32.gmra.mxu0 %v9538
        %v9653 = vpop.f32.mrf.mxu0
        %v9654 = vadd.f32 0.0, %v9653
        %9655 = vmatmul.f32.gmra.mxu0 %v9541
        %v9656 = vpop.f32.mrf.mxu0
        %v9657 = vadd.f32 0.0, %v9656
        %9658 = vmatmul.f32.gmra.mxu0 %v9544
        %v9659 = vpop.f32.mrf.mxu0
        %v9660 = vadd.f32 0.0, %v9659
        %9661 = vmatmul.f32.gmra.mxu0 %v9547
        %v9662 = vpop.f32.mrf.mxu0
        %v9663 = vadd.f32 0.0, %v9662
        %9664 = vmatmul.f32.gmra.mxu0 %v9550
        %v9665 = vpop.f32.mrf.mxu0
        %v9666 = vadd.f32 0.0, %v9665
        %9667 = vmatmul.f32.gmra.mxu0 %v9553
        %v9668 = vpop.f32.mrf.mxu0
        %v9669 = vadd.f32 0.0, %v9668
        %9670 = vmatmul.f32.gmra.mxu0 %v9556
        %v9671 = vpop.f32.mrf.mxu0
        %v9672 = vadd.f32 0.0, %v9671
        %9673 = vmatmul.f32.gmra.mxu0 %v9559
        %v9674 = vpop.f32.mrf.mxu0
        %v9675 = vadd.f32 0.0, %v9674
        %9676 = vmatmul.f32.gmra.mxu0 %v9562
        %v9677 = vpop.f32.mrf.mxu0
        %v9678 = vadd.f32 0.0, %v9677
        %9679 = vmatmul.f32.gmra.mxu0 %v9565
        %v9680 = vpop.f32.mrf.mxu0
        %v9681 = vadd.f32 0.0, %v9680
        %9682 = vmatmul.f32.gmra.mxu0 %v9568
        %v9683 = vpop.f32.mrf.mxu0
        %v9684 = vadd.f32 0.0, %v9683
        %9685 = vmatmul.f32.gmra.mxu0 %v9571
        %v9686 = vpop.f32.mrf.mxu0
        %v9687 = vadd.f32 0.0, %v9686
        %9688 = vmatmul.f32.gmra.mxu0 %v9574
        %v9689 = vpop.f32.mrf.mxu0
        %v9690 = vadd.f32 0.0, %v9689
        %9691 = vmatmul.f32.gmra.mxu0 %v9577
        %v9692 = vpop.f32.mrf.mxu0
        %v9693 = vadd.f32 0.0, %v9692
        %9694 = vmatmul.f32.gmra.mxu0 %v9580
        %v9695 = vpop.f32.mrf.mxu0
        %v9696 = vadd.f32 0.0, %v9695
        %9697 = vmatmul.f32.gmra.mxu0 %v9583
        %v9698 = vpop.f32.mrf.mxu0
        %v9699 = vadd.f32 0.0, %v9698
        %9700 = vmatmul.f32.gmra.mxu0 %v9586
        %v9701 = vpop.f32.mrf.mxu0
        %v9702 = vadd.f32 0.0, %v9701
        %9703 = vmatmul.f32.gmra.mxu0 %v9589
        %v9704 = vpop.f32.mrf.mxu0
        %v9705 = vadd.f32 0.0, %v9704
        %9706 = vmatmul.f32.gmra.mxu0 %v9592
        %v9707 = vpop.f32.mrf.mxu0
        %v9708 = vadd.f32 0.0, %v9707
        %9709 = vmatmul.f32.gmra.mxu0 %v9595
        %v9710 = vpop.f32.mrf.mxu0
        %v9711 = vadd.f32 0.0, %v9710
        %9712 = vmatmul.f32.gmra.mxu0 %v9598
        %v9713 = vpop.f32.mrf.mxu0
        %v9714 = vadd.f32 0.0, %v9713
        %9715 = vmatmul.f32.gmra.mxu0 %v9601
        %v9716 = vpop.f32.mrf.mxu0
        %v9717 = vadd.f32 0.0, %v9716
        %9718 = vmatmul.f32.gmra.mxu0 %v9604
        %v9719 = vpop.f32.mrf.mxu0
        %v9720 = vadd.f32 0.0, %v9719
        %9721 = vmatmul.f32.gmra.mxu0 %v9607
        %v9722 = vpop.f32.mrf.mxu0
        %v9723 = vadd.f32 0.0, %v9722
        %9724 = vmatmul.f32.gmra.mxu0 %v9610
        %v9725 = vpop.f32.mrf.mxu0
        %v9726 = vadd.f32 0.0, %v9725
        %9727 = vmatmul.f32.gmra.mxu0 %v9613
        %v9728 = vpop.f32.mrf.mxu0
        %v9729 = vadd.f32 0.0, %v9728
        %9730 = vmatmul.f32.gmra.mxu0 %v9616
        %v9731 = vpop.f32.mrf.mxu0
        %v9732 = vadd.f32 0.0, %v9731
        %9733 = vmatmul.f32.gmra.mxu0 %v9619
        %v9734 = vpop.f32.mrf.mxu0
        %v9735 = vadd.f32 0.0, %v9734
        %9736 = vmatmul.f32.gmra.mxu0 %v9622
        %v9737 = vpop.f32.mrf.mxu0
        %v9738 = vadd.f32 0.0, %v9737
        %9739 = vdwg.mxu0
        %v9740 = vadd.f32 %v9462, %v9645
        %v9741 = vadd.f32 %v9463, %v9648
        %v9742 = vadd.f32 %v9464, %v9651
        %v9743 = vadd.f32 %v9465, %v9654
        %v9744 = vadd.f32 %v9466, %v9657
        %v9745 = vadd.f32 %v9467, %v9660
        %v9746 = vadd.f32 %v9468, %v9663
        %v9747 = vadd.f32 %v9469, %v9666
        %v9748 = vadd.f32 %v9470, %v9669
        %v9749 = vadd.f32 %v9471, %v9672
        %v9750 = vadd.f32 %v9472, %v9675
        %v9751 = vadd.f32 %v9473, %v9678
        %v9752 = vadd.f32 %v9474, %v9681
        %v9753 = vadd.f32 %v9475, %v9684
        %v9754 = vadd.f32 %v9476, %v9687
        %v9755 = vadd.f32 %v9477, %v9690
        %v9756 = vadd.f32 %v9478, %v9693
        %v9757 = vadd.f32 %v9479, %v9696
        %v9758 = vadd.f32 %v9480, %v9699
        %v9759 = vadd.f32 %v9481, %v9702
        %v9760 = vadd.f32 %v9482, %v9705
        %v9761 = vadd.f32 %v9483, %v9708
        %v9762 = vadd.f32 %v9484, %v9711
        %v9763 = vadd.f32 %v9485, %v9714
        %v9764 = vadd.f32 %v9486, %v9717
        %v9765 = vadd.f32 %v9487, %v9720
        %v9766 = vadd.f32 %v9488, %v9723
        %v9767 = vadd.f32 %v9489, %v9726
        %v9768 = vadd.f32 %v9490, %v9729
        %v9769 = vadd.f32 %v9491, %v9732
        %v9770 = vadd.f32 %v9492, %v9735
        %v9771 = vadd.f32 %v9493, %v9738
        %v9772 = vld [vmem:[%s9215 + $0x2] sm:$0xff]
        %v9773 = vld [vmem:[%s9215 + $0xa] sm:$0xff]
        %v9774 = vld [vmem:[%s9215 + $0x1a] sm:$0xff]
        %v9775 = vld [vmem:[%s9215 + $0x22] sm:$0xff]
        %v9776 = vld [vmem:[%s9215 + $0x32] sm:$0xff]
        %v9777 = vld [vmem:[%s9215 + $0x3a] sm:$0xff]
        %v9778 = vld [vmem:[%s9215 + $0x4a] sm:$0xff]
        %v9779 = vld [vmem:[%s9215 + $0x52] sm:$0xff]
        %v9780 = vld [vmem:[%s9215 + $0x62] sm:$0xff]
        %v9781 = vld [vmem:[%s9215 + $0x6a] sm:$0xff]
        %v9782 = vld [vmem:[%s9215 + $0x7a] sm:$0xff]
        %v9783 = vld [vmem:[%s9215 + $0x82] sm:$0xff]
        %v9784 = vld [vmem:[%s9215 + $0x92] sm:$0xff]
        %v9785 = vld [vmem:[%s9215 + $0x9a] sm:$0xff]
        %v9786 = vld [vmem:[%s9215 + $0xaa] sm:$0xff]
        %v9787 = vld [vmem:[%s9215 + $0xb2] sm:$0xff]
        %v9788 = vld [vmem:[%s9215 + $0xc2] sm:$0xff]
        %v9789 = vld [vmem:[%s9215 + $0xca] sm:$0xff]
        %v9790 = vld [vmem:[%s9215 + $0xda] sm:$0xff]
        %v9791 = vld [vmem:[%s9215 + $0xe2] sm:$0xff]
        %v9792 = vld [vmem:[%s9215 + $0xf2] sm:$0xff]
        %v9793 = vld [vmem:[%s9215 + $0xfa] sm:$0xff]
        %v9794 = vld [vmem:[%s9215 + $0x10a] sm:$0xff]
        %v9795 = vld [vmem:[%s9215 + $0x112] sm:$0xff]
        %v9796 = vld [vmem:[%s9215 + $0x122] sm:$0xff]
        %v9797 = vld [vmem:[%s9215 + $0x12a] sm:$0xff]
        %v9798 = vld [vmem:[%s9215 + $0x13a] sm:$0xff]
        %v9799 = vld [vmem:[%s9215 + $0x142] sm:$0xff]
        %v9800 = vld [vmem:[%s9215 + $0x152] sm:$0xff]
        %v9801 = vld [vmem:[%s9215 + $0x15a] sm:$0xff]
        %v9802 = vld [vmem:[%s9215 + $0x16a] sm:$0xff]
        %v9803 = vld [vmem:[%s9215 + $0x172] sm:$0xff]
        %s9804 = scalar_lea.vmem %s9, 44
        %v9805 = vld [vmem:[%s9804] sm:$0x3]
        %v9807 = vsel %vm3622, %v9772, 0
        %v9810 = vsel %vm3622, %v9773, 0
        %v9813 = vsel %vm3622, %v9774, 0
        %v9816 = vsel %vm3622, %v9775, 0
        %v9819 = vsel %vm3622, %v9776, 0
        %v9822 = vsel %vm3622, %v9777, 0
        %v9825 = vsel %vm3622, %v9778, 0
        %v9828 = vsel %vm3622, %v9779, 0
        %v9831 = vsel %vm3622, %v9780, 0
        %v9834 = vsel %vm3622, %v9781, 0
        %v9837 = vsel %vm3622, %v9782, 0
        %v9840 = vsel %vm3622, %v9783, 0
        %v9843 = vsel %vm3622, %v9784, 0
        %v9846 = vsel %vm3622, %v9785, 0
        %v9849 = vsel %vm3622, %v9786, 0
        %v9852 = vsel %vm3622, %v9787, 0
        %v9855 = vsel %vm3622, %v9788, 0
        %v9858 = vsel %vm3622, %v9789, 0
        %v9861 = vsel %vm3622, %v9790, 0
        %v9864 = vsel %vm3622, %v9791, 0
        %v9867 = vsel %vm3622, %v9792, 0
        %v9870 = vsel %vm3622, %v9793, 0
        %v9873 = vsel %vm3622, %v9794, 0
        %v9876 = vsel %vm3622, %v9795, 0
        %v9879 = vsel %vm3622, %v9796, 0
        %v9882 = vsel %vm3622, %v9797, 0
        %v9885 = vsel %vm3622, %v9798, 0
        %v9888 = vsel %vm3622, %v9799, 0
        %v9891 = vsel %vm3622, %v9800, 0
        %v9894 = vsel %vm3622, %v9801, 0
        %v9897 = vsel %vm3622, %v9802, 0
        %v9900 = vsel %vm3622, %v9803, 0
        %v9903 = vsel %vm3880, %v9805, 0
        %9905 = vmatpush.msra.mxu0 0.0
        %9906 = vmatpush.msra.mxu0 0.0
        %9907 = vmatpush.msra.mxu0 0.0
        %9908 = vmatpush.msra.mxu0 0.0
        %9909 = vmatpush.msra.mxu0 0.0
        %9910 = vmatpush.msra.mxu0 0.0
        %9911 = vmatpush.msra.mxu0 0.0
        %9912 = vmatpush.msra.mxu0 0.0
        %9913 = vmatpush.msra.mxu0 0.0
        %9914 = vmatpush.msra.mxu0 0.0
        %9915 = vmatpush.msra.mxu0 0.0
        %9916 = vmatpush.msra.mxu0 0.0
        %9917 = vmatpush.msra.mxu0 0.0
        %9918 = vmatpush.msra.mxu0 0.0
        %9919 = vmatpush.msra.mxu0 0.0
        %9920 = vmatpush.msra.mxu0 %v9903
        %9921 = vmatmul.f32.gmra.mxu0 %v9807
        %v9922 = vpop.f32.mrf.mxu0
        %v9923 = vadd.f32 0.0, %v9922
        %9924 = vmatmul.f32.gmra.mxu0 %v9810
        %v9925 = vpop.f32.mrf.mxu0
        %v9926 = vadd.f32 0.0, %v9925
        %9927 = vmatmul.f32.gmra.mxu0 %v9813
        %v9928 = vpop.f32.mrf.mxu0
        %v9929 = vadd.f32 0.0, %v9928
        %9930 = vmatmul.f32.gmra.mxu0 %v9816
        %v9931 = vpop.f32.mrf.mxu0
        %v9932 = vadd.f32 0.0, %v9931
        %9933 = vmatmul.f32.gmra.mxu0 %v9819
        %v9934 = vpop.f32.mrf.mxu0
        %v9935 = vadd.f32 0.0, %v9934
        %9936 = vmatmul.f32.gmra.mxu0 %v9822
        %v9937 = vpop.f32.mrf.mxu0
        %v9938 = vadd.f32 0.0, %v9937
        %9939 = vmatmul.f32.gmra.mxu0 %v9825
        %v9940 = vpop.f32.mrf.mxu0
        %v9941 = vadd.f32 0.0, %v9940
        %9942 = vmatmul.f32.gmra.mxu0 %v9828
        %v9943 = vpop.f32.mrf.mxu0
        %v9944 = vadd.f32 0.0, %v9943
        %9945 = vmatmul.f32.gmra.mxu0 %v9831
        %v9946 = vpop.f32.mrf.mxu0
        %v9947 = vadd.f32 0.0, %v9946
        %9948 = vmatmul.f32.gmra.mxu0 %v9834
        %v9949 = vpop.f32.mrf.mxu0
        %v9950 = vadd.f32 0.0, %v9949
        %9951 = vmatmul.f32.gmra.mxu0 %v9837
        %v9952 = vpop.f32.mrf.mxu0
        %v9953 = vadd.f32 0.0, %v9952
        %9954 = vmatmul.f32.gmra.mxu0 %v9840
        %v9955 = vpop.f32.mrf.mxu0
        %v9956 = vadd.f32 0.0, %v9955
        %9957 = vmatmul.f32.gmra.mxu0 %v9843
        %v9958 = vpop.f32.mrf.mxu0
        %v9959 = vadd.f32 0.0, %v9958
        %9960 = vmatmul.f32.gmra.mxu0 %v9846
        %v9961 = vpop.f32.mrf.mxu0
        %v9962 = vadd.f32 0.0, %v9961
        %9963 = vmatmul.f32.gmra.mxu0 %v9849
        %v9964 = vpop.f32.mrf.mxu0
        %v9965 = vadd.f32 0.0, %v9964
        %9966 = vmatmul.f32.gmra.mxu0 %v9852
        %v9967 = vpop.f32.mrf.mxu0
        %v9968 = vadd.f32 0.0, %v9967
        %9969 = vmatmul.f32.gmra.mxu0 %v9855
        %v9970 = vpop.f32.mrf.mxu0
        %v9971 = vadd.f32 0.0, %v9970
        %9972 = vmatmul.f32.gmra.mxu0 %v9858
        %v9973 = vpop.f32.mrf.mxu0
        %v9974 = vadd.f32 0.0, %v9973
        %9975 = vmatmul.f32.gmra.mxu0 %v9861
        %v9976 = vpop.f32.mrf.mxu0
        %v9977 = vadd.f32 0.0, %v9976
        %9978 = vmatmul.f32.gmra.mxu0 %v9864
        %v9979 = vpop.f32.mrf.mxu0
        %v9980 = vadd.f32 0.0, %v9979
        %9981 = vmatmul.f32.gmra.mxu0 %v9867
        %v9982 = vpop.f32.mrf.mxu0
        %v9983 = vadd.f32 0.0, %v9982
        %9984 = vmatmul.f32.gmra.mxu0 %v9870
        %v9985 = vpop.f32.mrf.mxu0
        %v9986 = vadd.f32 0.0, %v9985
        %9987 = vmatmul.f32.gmra.mxu0 %v9873
        %v9988 = vpop.f32.mrf.mxu0
        %v9989 = vadd.f32 0.0, %v9988
        %9990 = vmatmul.f32.gmra.mxu0 %v9876
        %v9991 = vpop.f32.mrf.mxu0
        %v9992 = vadd.f32 0.0, %v9991
        %9993 = vmatmul.f32.gmra.mxu0 %v9879
        %v9994 = vpop.f32.mrf.mxu0
        %v9995 = vadd.f32 0.0, %v9994
        %9996 = vmatmul.f32.gmra.mxu0 %v9882
        %v9997 = vpop.f32.mrf.mxu0
        %v9998 = vadd.f32 0.0, %v9997
        %9999 = vmatmul.f32.gmra.mxu0 %v9885
        %v10000 = vpop.f32.mrf.mxu0
        %v10001 = vadd.f32 0.0, %v10000
        %10002 = vmatmul.f32.gmra.mxu0 %v9888
        %v10003 = vpop.f32.mrf.mxu0
        %v10004 = vadd.f32 0.0, %v10003
        %10005 = vmatmul.f32.gmra.mxu0 %v9891
        %v10006 = vpop.f32.mrf.mxu0
        %v10007 = vadd.f32 0.0, %v10006
        %10008 = vmatmul.f32.gmra.mxu0 %v9894
        %v10009 = vpop.f32.mrf.mxu0
        %v10010 = vadd.f32 0.0, %v10009
        %10011 = vmatmul.f32.gmra.mxu0 %v9897
        %v10012 = vpop.f32.mrf.mxu0
        %v10013 = vadd.f32 0.0, %v10012
        %10014 = vmatmul.f32.gmra.mxu0 %v9900
        %v10015 = vpop.f32.mrf.mxu0
        %v10016 = vadd.f32 0.0, %v10015
        %10017 = vdwg.mxu0
        %v10018 = vadd.f32 %v9740, %v9923
        %v10019 = vadd.f32 %v9741, %v9926
        %v10020 = vadd.f32 %v9742, %v9929
        %v10021 = vadd.f32 %v9743, %v9932
        %v10022 = vadd.f32 %v9744, %v9935
        %v10023 = vadd.f32 %v9745, %v9938
        %v10024 = vadd.f32 %v9746, %v9941
        %v10025 = vadd.f32 %v9747, %v9944
        %v10026 = vadd.f32 %v9748, %v9947
        %v10027 = vadd.f32 %v9749, %v9950
        %v10028 = vadd.f32 %v9750, %v9953
        %v10029 = vadd.f32 %v9751, %v9956
        %v10030 = vadd.f32 %v9752, %v9959
        %v10031 = vadd.f32 %v9753, %v9962
        %v10032 = vadd.f32 %v9754, %v9965
        %v10033 = vadd.f32 %v9755, %v9968
        %v10034 = vadd.f32 %v9756, %v9971
        %v10035 = vadd.f32 %v9757, %v9974
        %v10036 = vadd.f32 %v9758, %v9977
        %v10037 = vadd.f32 %v9759, %v9980
        %v10038 = vadd.f32 %v9760, %v9983
        %v10039 = vadd.f32 %v9761, %v9986
        %v10040 = vadd.f32 %v9762, %v9989
        %v10041 = vadd.f32 %v9763, %v9992
        %v10042 = vadd.f32 %v9764, %v9995
        %v10043 = vadd.f32 %v9765, %v9998
        %v10044 = vadd.f32 %v9766, %v10001
        %v10045 = vadd.f32 %v9767, %v10004
        %v10046 = vadd.f32 %v9768, %v10007
        %v10047 = vadd.f32 %v9769, %v10010
        %v10048 = vadd.f32 %v9770, %v10013
        %v10049 = vadd.f32 %v9771, %v10016
        %v10050 = vld [vmem:[%s9215 + $0x3] sm:$0xff]
        %v10051 = vld [vmem:[%s9215 + $0xb] sm:$0xff]
        %v10052 = vld [vmem:[%s9215 + $0x1b] sm:$0xff]
        %v10053 = vld [vmem:[%s9215 + $0x23] sm:$0xff]
        %v10054 = vld [vmem:[%s9215 + $0x33] sm:$0xff]
        %v10055 = vld [vmem:[%s9215 + $0x3b] sm:$0xff]
        %v10056 = vld [vmem:[%s9215 + $0x4b] sm:$0xff]
        %v10057 = vld [vmem:[%s9215 + $0x53] sm:$0xff]
        %v10058 = vld [vmem:[%s9215 + $0x63] sm:$0xff]
        %v10059 = vld [vmem:[%s9215 + $0x6b] sm:$0xff]
        %v10060 = vld [vmem:[%s9215 + $0x7b] sm:$0xff]
        %v10061 = vld [vmem:[%s9215 + $0x83] sm:$0xff]
        %v10062 = vld [vmem:[%s9215 + $0x93] sm:$0xff]
        %v10063 = vld [vmem:[%s9215 + $0x9b] sm:$0xff]
        %v10064 = vld [vmem:[%s9215 + $0xab] sm:$0xff]
        %v10065 = vld [vmem:[%s9215 + $0xb3] sm:$0xff]
        %v10066 = vld [vmem:[%s9215 + $0xc3] sm:$0xff]
        %v10067 = vld [vmem:[%s9215 + $0xcb] sm:$0xff]
        %v10068 = vld [vmem:[%s9215 + $0xdb] sm:$0xff]
        %v10069 = vld [vmem:[%s9215 + $0xe3] sm:$0xff]
        %v10070 = vld [vmem:[%s9215 + $0xf3] sm:$0xff]
        %v10071 = vld [vmem:[%s9215 + $0xfb] sm:$0xff]
        %v10072 = vld [vmem:[%s9215 + $0x10b] sm:$0xff]
        %v10073 = vld [vmem:[%s9215 + $0x113] sm:$0xff]
        %v10074 = vld [vmem:[%s9215 + $0x123] sm:$0xff]
        %v10075 = vld [vmem:[%s9215 + $0x12b] sm:$0xff]
        %v10076 = vld [vmem:[%s9215 + $0x13b] sm:$0xff]
        %v10077 = vld [vmem:[%s9215 + $0x143] sm:$0xff]
        %v10078 = vld [vmem:[%s9215 + $0x153] sm:$0xff]
        %v10079 = vld [vmem:[%s9215 + $0x15b] sm:$0xff]
        %v10080 = vld [vmem:[%s9215 + $0x16b] sm:$0xff]
        %v10081 = vld [vmem:[%s9215 + $0x173] sm:$0xff]
        %s10082 = scalar_lea.vmem %s9, 46
        %v10083 = vld [vmem:[%s10082] sm:$0x3]
        %v10085 = vsel %vm3622, %v10050, 0
        %v10088 = vsel %vm3622, %v10051, 0
        %v10091 = vsel %vm3622, %v10052, 0
        %v10094 = vsel %vm3622, %v10053, 0
        %v10097 = vsel %vm3622, %v10054, 0
        %v10100 = vsel %vm3622, %v10055, 0
        %v10103 = vsel %vm3622, %v10056, 0
        %v10106 = vsel %vm3622, %v10057, 0
        %v10109 = vsel %vm3622, %v10058, 0
        %v10112 = vsel %vm3622, %v10059, 0
        %v10115 = vsel %vm3622, %v10060, 0
        %v10118 = vsel %vm3622, %v10061, 0
        %v10121 = vsel %vm3622, %v10062, 0
        %v10124 = vsel %vm3622, %v10063, 0
        %v10127 = vsel %vm3622, %v10064, 0
        %v10130 = vsel %vm3622, %v10065, 0
        %v10133 = vsel %vm3622, %v10066, 0
        %v10136 = vsel %vm3622, %v10067, 0
        %v10139 = vsel %vm3622, %v10068, 0
        %v10142 = vsel %vm3622, %v10069, 0
        %v10145 = vsel %vm3622, %v10070, 0
        %v10148 = vsel %vm3622, %v10071, 0
        %v10151 = vsel %vm3622, %v10072, 0
        %v10154 = vsel %vm3622, %v10073, 0
        %v10157 = vsel %vm3622, %v10074, 0
        %v10160 = vsel %vm3622, %v10075, 0
        %v10163 = vsel %vm3622, %v10076, 0
        %v10166 = vsel %vm3622, %v10077, 0
        %v10169 = vsel %vm3622, %v10078, 0
        %v10172 = vsel %vm3622, %v10079, 0
        %v10175 = vsel %vm3622, %v10080, 0
        %v10178 = vsel %vm3622, %v10081, 0
        %v10181 = vsel %vm3880, %v10083, 0
        %10183 = vmatpush.msra.mxu0 0.0
        %10184 = vmatpush.msra.mxu0 0.0
        %10185 = vmatpush.msra.mxu0 0.0
        %10186 = vmatpush.msra.mxu0 0.0
        %10187 = vmatpush.msra.mxu0 0.0
        %10188 = vmatpush.msra.mxu0 0.0
        %10189 = vmatpush.msra.mxu0 0.0
        %10190 = vmatpush.msra.mxu0 0.0
        %10191 = vmatpush.msra.mxu0 0.0
        %10192 = vmatpush.msra.mxu0 0.0
        %10193 = vmatpush.msra.mxu0 0.0
        %10194 = vmatpush.msra.mxu0 0.0
        %10195 = vmatpush.msra.mxu0 0.0
        %10196 = vmatpush.msra.mxu0 0.0
        %10197 = vmatpush.msra.mxu0 0.0
        %10198 = vmatpush.msra.mxu0 %v10181
        %10199 = vmatmul.f32.gmra.mxu0 %v10085
        %v10200 = vpop.f32.mrf.mxu0
        %v10201 = vadd.f32 0.0, %v10200
        %10202 = vmatmul.f32.gmra.mxu0 %v10088
        %v10203 = vpop.f32.mrf.mxu0
        %v10204 = vadd.f32 0.0, %v10203
        %10205 = vmatmul.f32.gmra.mxu0 %v10091
        %v10206 = vpop.f32.mrf.mxu0
        %v10207 = vadd.f32 0.0, %v10206
        %10208 = vmatmul.f32.gmra.mxu0 %v10094
        %v10209 = vpop.f32.mrf.mxu0
        %v10210 = vadd.f32 0.0, %v10209
        %10211 = vmatmul.f32.gmra.mxu0 %v10097
        %v10212 = vpop.f32.mrf.mxu0
        %v10213 = vadd.f32 0.0, %v10212
        %10214 = vmatmul.f32.gmra.mxu0 %v10100
        %v10215 = vpop.f32.mrf.mxu0
        %v10216 = vadd.f32 0.0, %v10215
        %10217 = vmatmul.f32.gmra.mxu0 %v10103
        %v10218 = vpop.f32.mrf.mxu0
        %v10219 = vadd.f32 0.0, %v10218
        %10220 = vmatmul.f32.gmra.mxu0 %v10106
        %v10221 = vpop.f32.mrf.mxu0
        %v10222 = vadd.f32 0.0, %v10221
        %10223 = vmatmul.f32.gmra.mxu0 %v10109
        %v10224 = vpop.f32.mrf.mxu0
        %v10225 = vadd.f32 0.0, %v10224
        %10226 = vmatmul.f32.gmra.mxu0 %v10112
        %v10227 = vpop.f32.mrf.mxu0
        %v10228 = vadd.f32 0.0, %v10227
        %10229 = vmatmul.f32.gmra.mxu0 %v10115
        %v10230 = vpop.f32.mrf.mxu0
        %v10231 = vadd.f32 0.0, %v10230
        %10232 = vmatmul.f32.gmra.mxu0 %v10118
        %v10233 = vpop.f32.mrf.mxu0
        %v10234 = vadd.f32 0.0, %v10233
        %10235 = vmatmul.f32.gmra.mxu0 %v10121
        %v10236 = vpop.f32.mrf.mxu0
        %v10237 = vadd.f32 0.0, %v10236
        %10238 = vmatmul.f32.gmra.mxu0 %v10124
        %v10239 = vpop.f32.mrf.mxu0
        %v10240 = vadd.f32 0.0, %v10239
        %10241 = vmatmul.f32.gmra.mxu0 %v10127
        %v10242 = vpop.f32.mrf.mxu0
        %v10243 = vadd.f32 0.0, %v10242
        %10244 = vmatmul.f32.gmra.mxu0 %v10130
        %v10245 = vpop.f32.mrf.mxu0
        %v10246 = vadd.f32 0.0, %v10245
        %10247 = vmatmul.f32.gmra.mxu0 %v10133
        %v10248 = vpop.f32.mrf.mxu0
        %v10249 = vadd.f32 0.0, %v10248
        %10250 = vmatmul.f32.gmra.mxu0 %v10136
        %v10251 = vpop.f32.mrf.mxu0
        %v10252 = vadd.f32 0.0, %v10251
        %10253 = vmatmul.f32.gmra.mxu0 %v10139
        %v10254 = vpop.f32.mrf.mxu0
        %v10255 = vadd.f32 0.0, %v10254
        %10256 = vmatmul.f32.gmra.mxu0 %v10142
        %v10257 = vpop.f32.mrf.mxu0
        %v10258 = vadd.f32 0.0, %v10257
        %10259 = vmatmul.f32.gmra.mxu0 %v10145
        %v10260 = vpop.f32.mrf.mxu0
        %v10261 = vadd.f32 0.0, %v10260
        %10262 = vmatmul.f32.gmra.mxu0 %v10148
        %v10263 = vpop.f32.mrf.mxu0
        %v10264 = vadd.f32 0.0, %v10263
        %10265 = vmatmul.f32.gmra.mxu0 %v10151
        %v10266 = vpop.f32.mrf.mxu0
        %v10267 = vadd.f32 0.0, %v10266
        %10268 = vmatmul.f32.gmra.mxu0 %v10154
        %v10269 = vpop.f32.mrf.mxu0
        %v10270 = vadd.f32 0.0, %v10269
        %10271 = vmatmul.f32.gmra.mxu0 %v10157
        %v10272 = vpop.f32.mrf.mxu0
        %v10273 = vadd.f32 0.0, %v10272
        %10274 = vmatmul.f32.gmra.mxu0 %v10160
        %v10275 = vpop.f32.mrf.mxu0
        %v10276 = vadd.f32 0.0, %v10275
        %10277 = vmatmul.f32.gmra.mxu0 %v10163
        %v10278 = vpop.f32.mrf.mxu0
        %v10279 = vadd.f32 0.0, %v10278
        %10280 = vmatmul.f32.gmra.mxu0 %v10166
        %v10281 = vpop.f32.mrf.mxu0
        %v10282 = vadd.f32 0.0, %v10281
        %10283 = vmatmul.f32.gmra.mxu0 %v10169
        %v10284 = vpop.f32.mrf.mxu0
        %v10285 = vadd.f32 0.0, %v10284
        %10286 = vmatmul.f32.gmra.mxu0 %v10172
        %v10287 = vpop.f32.mrf.mxu0
        %v10288 = vadd.f32 0.0, %v10287
        %10289 = vmatmul.f32.gmra.mxu0 %v10175
        %v10290 = vpop.f32.mrf.mxu0
        %v10291 = vadd.f32 0.0, %v10290
        %10292 = vmatmul.f32.gmra.mxu0 %v10178
        %v10293 = vpop.f32.mrf.mxu0
        %v10294 = vadd.f32 0.0, %v10293
        %10295 = vdwg.mxu0
        %v10296 = vadd.f32 %v10018, %v10201
        %v10297 = vadd.f32 %v10019, %v10204
        %v10298 = vadd.f32 %v10020, %v10207
        %v10299 = vadd.f32 %v10021, %v10210
        %v10300 = vadd.f32 %v10022, %v10213
        %v10301 = vadd.f32 %v10023, %v10216
        %v10302 = vadd.f32 %v10024, %v10219
        %v10303 = vadd.f32 %v10025, %v10222
        %v10304 = vadd.f32 %v10026, %v10225
        %v10305 = vadd.f32 %v10027, %v10228
        %v10306 = vadd.f32 %v10028, %v10231
        %v10307 = vadd.f32 %v10029, %v10234
        %v10308 = vadd.f32 %v10030, %v10237
        %v10309 = vadd.f32 %v10031, %v10240
        %v10310 = vadd.f32 %v10032, %v10243
        %v10311 = vadd.f32 %v10033, %v10246
        %v10312 = vadd.f32 %v10034, %v10249
        %v10313 = vadd.f32 %v10035, %v10252
        %v10314 = vadd.f32 %v10036, %v10255
        %v10315 = vadd.f32 %v10037, %v10258
        %v10316 = vadd.f32 %v10038, %v10261
        %v10317 = vadd.f32 %v10039, %v10264
        %v10318 = vadd.f32 %v10040, %v10267
        %v10319 = vadd.f32 %v10041, %v10270
        %v10320 = vadd.f32 %v10042, %v10273
        %v10321 = vadd.f32 %v10043, %v10276
        %v10322 = vadd.f32 %v10044, %v10279
        %v10323 = vadd.f32 %v10045, %v10282
        %v10324 = vadd.f32 %v10046, %v10285
        %v10325 = vadd.f32 %v10047, %v10288
        %v10326 = vadd.f32 %v10048, %v10291
        %v10327 = vadd.f32 %v10049, %v10294
        %v10328 = vld [vmem:[%s9215 + $0x4] sm:$0xff]
        %v10329 = vld [vmem:[%s9215 + $0xc] sm:$0xff]
        %v10330 = vld [vmem:[%s9215 + $0x1c] sm:$0xff]
        %v10331 = vld [vmem:[%s9215 + $0x24] sm:$0xff]
        %v10332 = vld [vmem:[%s9215 + $0x34] sm:$0xff]
        %v10333 = vld [vmem:[%s9215 + $0x3c] sm:$0xff]
        %v10334 = vld [vmem:[%s9215 + $0x4c] sm:$0xff]
        %v10335 = vld [vmem:[%s9215 + $0x54] sm:$0xff]
        %v10336 = vld [vmem:[%s9215 + $0x64] sm:$0xff]
        %v10337 = vld [vmem:[%s9215 + $0x6c] sm:$0xff]
        %v10338 = vld [vmem:[%s9215 + $0x7c] sm:$0xff]
        %v10339 = vld [vmem:[%s9215 + $0x84] sm:$0xff]
        %v10340 = vld [vmem:[%s9215 + $0x94] sm:$0xff]
        %v10341 = vld [vmem:[%s9215 + $0x9c] sm:$0xff]
        %v10342 = vld [vmem:[%s9215 + $0xac] sm:$0xff]
        %v10343 = vld [vmem:[%s9215 + $0xb4] sm:$0xff]
        %v10344 = vld [vmem:[%s9215 + $0xc4] sm:$0xff]
        %v10345 = vld [vmem:[%s9215 + $0xcc] sm:$0xff]
        %v10346 = vld [vmem:[%s9215 + $0xdc] sm:$0xff]
        %v10347 = vld [vmem:[%s9215 + $0xe4] sm:$0xff]
        %v10348 = vld [vmem:[%s9215 + $0xf4] sm:$0xff]
        %v10349 = vld [vmem:[%s9215 + $0xfc] sm:$0xff]
        %v10350 = vld [vmem:[%s9215 + $0x10c] sm:$0xff]
        %v10351 = vld [vmem:[%s9215 + $0x114] sm:$0xff]
        %v10352 = vld [vmem:[%s9215 + $0x124] sm:$0xff]
        %v10353 = vld [vmem:[%s9215 + $0x12c] sm:$0xff]
        %v10354 = vld [vmem:[%s9215 + $0x13c] sm:$0xff]
        %v10355 = vld [vmem:[%s9215 + $0x144] sm:$0xff]
        %v10356 = vld [vmem:[%s9215 + $0x154] sm:$0xff]
        %v10357 = vld [vmem:[%s9215 + $0x15c] sm:$0xff]
        %v10358 = vld [vmem:[%s9215 + $0x16c] sm:$0xff]
        %v10359 = vld [vmem:[%s9215 + $0x174] sm:$0xff]
        %s10360 = scalar_lea.vmem %s9, 48
        %v10361 = vld [vmem:[%s10360] sm:$0x3]
        %v10363 = vsel %vm3622, %v10328, 0
        %v10366 = vsel %vm3622, %v10329, 0
        %v10369 = vsel %vm3622, %v10330, 0
        %v10372 = vsel %vm3622, %v10331, 0
        %v10375 = vsel %vm3622, %v10332, 0
        %v10378 = vsel %vm3622, %v10333, 0
        %v10381 = vsel %vm3622, %v10334, 0
        %v10384 = vsel %vm3622, %v10335, 0
        %v10387 = vsel %vm3622, %v10336, 0
        %v10390 = vsel %vm3622, %v10337, 0
        %v10393 = vsel %vm3622, %v10338, 0
        %v10396 = vsel %vm3622, %v10339, 0
        %v10399 = vsel %vm3622, %v10340, 0
        %v10402 = vsel %vm3622, %v10341, 0
        %v10405 = vsel %vm3622, %v10342, 0
        %v10408 = vsel %vm3622, %v10343, 0
        %v10411 = vsel %vm3622, %v10344, 0
        %v10414 = vsel %vm3622, %v10345, 0
        %v10417 = vsel %vm3622, %v10346, 0
        %v10420 = vsel %vm3622, %v10347, 0
        %v10423 = vsel %vm3622, %v10348, 0
        %v10426 = vsel %vm3622, %v10349, 0
        %v10429 = vsel %vm3622, %v10350, 0
        %v10432 = vsel %vm3622, %v10351, 0
        %v10435 = vsel %vm3622, %v10352, 0
        %v10438 = vsel %vm3622, %v10353, 0
        %v10441 = vsel %vm3622, %v10354, 0
        %v10444 = vsel %vm3622, %v10355, 0
        %v10447 = vsel %vm3622, %v10356, 0
        %v10450 = vsel %vm3622, %v10357, 0
        %v10453 = vsel %vm3622, %v10358, 0
        %v10456 = vsel %vm3622, %v10359, 0
        %v10459 = vsel %vm3880, %v10361, 0
        %10461 = vmatpush.msra.mxu0 0.0
        %10462 = vmatpush.msra.mxu0 0.0
        %10463 = vmatpush.msra.mxu0 0.0
        %10464 = vmatpush.msra.mxu0 0.0
        %10465 = vmatpush.msra.mxu0 0.0
        %10466 = vmatpush.msra.mxu0 0.0
        %10467 = vmatpush.msra.mxu0 0.0
        %10468 = vmatpush.msra.mxu0 0.0
        %10469 = vmatpush.msra.mxu0 0.0
        %10470 = vmatpush.msra.mxu0 0.0
        %10471 = vmatpush.msra.mxu0 0.0
        %10472 = vmatpush.msra.mxu0 0.0
        %10473 = vmatpush.msra.mxu0 0.0
        %10474 = vmatpush.msra.mxu0 0.0
        %10475 = vmatpush.msra.mxu0 0.0
        %10476 = vmatpush.msra.mxu0 %v10459
        %10477 = vmatmul.f32.gmra.mxu0 %v10363
        %v10478 = vpop.f32.mrf.mxu0
        %v10479 = vadd.f32 0.0, %v10478
        %10480 = vmatmul.f32.gmra.mxu0 %v10366
        %v10481 = vpop.f32.mrf.mxu0
        %v10482 = vadd.f32 0.0, %v10481
        %10483 = vmatmul.f32.gmra.mxu0 %v10369
        %v10484 = vpop.f32.mrf.mxu0
        %v10485 = vadd.f32 0.0, %v10484
        %10486 = vmatmul.f32.gmra.mxu0 %v10372
        %v10487 = vpop.f32.mrf.mxu0
        %v10488 = vadd.f32 0.0, %v10487
        %10489 = vmatmul.f32.gmra.mxu0 %v10375
        %v10490 = vpop.f32.mrf.mxu0
        %v10491 = vadd.f32 0.0, %v10490
        %10492 = vmatmul.f32.gmra.mxu0 %v10378
        %v10493 = vpop.f32.mrf.mxu0
        %v10494 = vadd.f32 0.0, %v10493
        %10495 = vmatmul.f32.gmra.mxu0 %v10381
        %v10496 = vpop.f32.mrf.mxu0
        %v10497 = vadd.f32 0.0, %v10496
        %10498 = vmatmul.f32.gmra.mxu0 %v10384
        %v10499 = vpop.f32.mrf.mxu0
        %v10500 = vadd.f32 0.0, %v10499
        %10501 = vmatmul.f32.gmra.mxu0 %v10387
        %v10502 = vpop.f32.mrf.mxu0
        %v10503 = vadd.f32 0.0, %v10502
        %10504 = vmatmul.f32.gmra.mxu0 %v10390
        %v10505 = vpop.f32.mrf.mxu0
        %v10506 = vadd.f32 0.0, %v10505
        %10507 = vmatmul.f32.gmra.mxu0 %v10393
        %v10508 = vpop.f32.mrf.mxu0
        %v10509 = vadd.f32 0.0, %v10508
        %10510 = vmatmul.f32.gmra.mxu0 %v10396
        %v10511 = vpop.f32.mrf.mxu0
        %v10512 = vadd.f32 0.0, %v10511
        %10513 = vmatmul.f32.gmra.mxu0 %v10399
        %v10514 = vpop.f32.mrf.mxu0
        %v10515 = vadd.f32 0.0, %v10514
        %10516 = vmatmul.f32.gmra.mxu0 %v10402
        %v10517 = vpop.f32.mrf.mxu0
        %v10518 = vadd.f32 0.0, %v10517
        %10519 = vmatmul.f32.gmra.mxu0 %v10405
        %v10520 = vpop.f32.mrf.mxu0
        %v10521 = vadd.f32 0.0, %v10520
        %10522 = vmatmul.f32.gmra.mxu0 %v10408
        %v10523 = vpop.f32.mrf.mxu0
        %v10524 = vadd.f32 0.0, %v10523
        %10525 = vmatmul.f32.gmra.mxu0 %v10411
        %v10526 = vpop.f32.mrf.mxu0
        %v10527 = vadd.f32 0.0, %v10526
        %10528 = vmatmul.f32.gmra.mxu0 %v10414
        %v10529 = vpop.f32.mrf.mxu0
        %v10530 = vadd.f32 0.0, %v10529
        %10531 = vmatmul.f32.gmra.mxu0 %v10417
        %v10532 = vpop.f32.mrf.mxu0
        %v10533 = vadd.f32 0.0, %v10532
        %10534 = vmatmul.f32.gmra.mxu0 %v10420
        %v10535 = vpop.f32.mrf.mxu0
        %v10536 = vadd.f32 0.0, %v10535
        %10537 = vmatmul.f32.gmra.mxu0 %v10423
        %v10538 = vpop.f32.mrf.mxu0
        %v10539 = vadd.f32 0.0, %v10538
        %10540 = vmatmul.f32.gmra.mxu0 %v10426
        %v10541 = vpop.f32.mrf.mxu0
        %v10542 = vadd.f32 0.0, %v10541
        %10543 = vmatmul.f32.gmra.mxu0 %v10429
        %v10544 = vpop.f32.mrf.mxu0
        %v10545 = vadd.f32 0.0, %v10544
        %10546 = vmatmul.f32.gmra.mxu0 %v10432
        %v10547 = vpop.f32.mrf.mxu0
        %v10548 = vadd.f32 0.0, %v10547
        %10549 = vmatmul.f32.gmra.mxu0 %v10435
        %v10550 = vpop.f32.mrf.mxu0
        %v10551 = vadd.f32 0.0, %v10550
        %10552 = vmatmul.f32.gmra.mxu0 %v10438
        %v10553 = vpop.f32.mrf.mxu0
        %v10554 = vadd.f32 0.0, %v10553
        %10555 = vmatmul.f32.gmra.mxu0 %v10441
        %v10556 = vpop.f32.mrf.mxu0
        %v10557 = vadd.f32 0.0, %v10556
        %10558 = vmatmul.f32.gmra.mxu0 %v10444
        %v10559 = vpop.f32.mrf.mxu0
        %v10560 = vadd.f32 0.0, %v10559
        %10561 = vmatmul.f32.gmra.mxu0 %v10447
        %v10562 = vpop.f32.mrf.mxu0
        %v10563 = vadd.f32 0.0, %v10562
        %10564 = vmatmul.f32.gmra.mxu0 %v10450
        %v10565 = vpop.f32.mrf.mxu0
        %v10566 = vadd.f32 0.0, %v10565
        %10567 = vmatmul.f32.gmra.mxu0 %v10453
        %v10568 = vpop.f32.mrf.mxu0
        %v10569 = vadd.f32 0.0, %v10568
        %10570 = vmatmul.f32.gmra.mxu0 %v10456
        %v10571 = vpop.f32.mrf.mxu0
        %v10572 = vadd.f32 0.0, %v10571
        %10573 = vdwg.mxu0
        %v10574 = vadd.f32 %v10296, %v10479
        %v10575 = vadd.f32 %v10297, %v10482
        %v10576 = vadd.f32 %v10298, %v10485
        %v10577 = vadd.f32 %v10299, %v10488
        %v10578 = vadd.f32 %v10300, %v10491
        %v10579 = vadd.f32 %v10301, %v10494
        %v10580 = vadd.f32 %v10302, %v10497
        %v10581 = vadd.f32 %v10303, %v10500
        %v10582 = vadd.f32 %v10304, %v10503
        %v10583 = vadd.f32 %v10305, %v10506
        %v10584 = vadd.f32 %v10306, %v10509
        %v10585 = vadd.f32 %v10307, %v10512
        %v10586 = vadd.f32 %v10308, %v10515
        %v10587 = vadd.f32 %v10309, %v10518
        %v10588 = vadd.f32 %v10310, %v10521
        %v10589 = vadd.f32 %v10311, %v10524
        %v10590 = vadd.f32 %v10312, %v10527
        %v10591 = vadd.f32 %v10313, %v10530
        %v10592 = vadd.f32 %v10314, %v10533
        %v10593 = vadd.f32 %v10315, %v10536
        %v10594 = vadd.f32 %v10316, %v10539
        %v10595 = vadd.f32 %v10317, %v10542
        %v10596 = vadd.f32 %v10318, %v10545
        %v10597 = vadd.f32 %v10319, %v10548
        %v10598 = vadd.f32 %v10320, %v10551
        %v10599 = vadd.f32 %v10321, %v10554
        %v10600 = vadd.f32 %v10322, %v10557
        %v10601 = vadd.f32 %v10323, %v10560
        %v10602 = vadd.f32 %v10324, %v10563
        %v10603 = vadd.f32 %v10325, %v10566
        %v10604 = vadd.f32 %v10326, %v10569
        %v10605 = vadd.f32 %v10327, %v10572
        %v10606 = vld [vmem:[%s10] sm:$0x1]
        %v10608 = vperm.slane %v10606, 0
        %v10610 = vadd.f32 %v10574, %v10608
        %v10611 = vadd.f32 %v10575, %v10608
        %v10612 = vadd.f32 %v10576, %v10608
        %v10613 = vadd.f32 %v10577, %v10608
        %v10614 = vadd.f32 %v10578, %v10608
        %v10615 = vadd.f32 %v10579, %v10608
        %v10616 = vadd.f32 %v10580, %v10608
        %v10617 = vadd.f32 %v10581, %v10608
        %v10618 = vadd.f32 %v10582, %v10608
        %v10619 = vadd.f32 %v10583, %v10608
        %v10620 = vadd.f32 %v10584, %v10608
        %v10621 = vadd.f32 %v10585, %v10608
        %v10622 = vadd.f32 %v10586, %v10608
        %v10623 = vadd.f32 %v10587, %v10608
        %v10624 = vadd.f32 %v10588, %v10608
        %v10625 = vadd.f32 %v10589, %v10608
        %v10626 = vadd.f32 %v10590, %v10608
        %v10627 = vadd.f32 %v10591, %v10608
        %v10628 = vadd.f32 %v10592, %v10608
        %v10629 = vadd.f32 %v10593, %v10608
        %v10630 = vadd.f32 %v10594, %v10608
        %v10631 = vadd.f32 %v10595, %v10608
        %v10632 = vadd.f32 %v10596, %v10608
        %v10633 = vadd.f32 %v10597, %v10608
        %v10634 = vadd.f32 %v10598, %v10608
        %v10635 = vadd.f32 %v10599, %v10608
        %v10636 = vadd.f32 %v10600, %v10608
        %v10637 = vadd.f32 %v10601, %v10608
        %v10638 = vadd.f32 %v10602, %v10608
        %v10639 = vadd.f32 %v10603, %v10608
        %v10640 = vadd.f32 %v10604, %v10608
        %v10641 = vadd.f32 %v10605, %v10608
        %v10642 = vmax.f32 %v10610, 0.0
        %v10643 = vmax.f32 %v10611, 0.0
        %v10644 = vmax.f32 %v10612, 0.0
        %v10645 = vmax.f32 %v10613, 0.0
        %v10646 = vmax.f32 %v10614, 0.0
        %v10647 = vmax.f32 %v10615, 0.0
        %v10648 = vmax.f32 %v10616, 0.0
        %v10649 = vmax.f32 %v10617, 0.0
        %v10650 = vmax.f32 %v10618, 0.0
        %v10651 = vmax.f32 %v10619, 0.0
        %v10652 = vmax.f32 %v10620, 0.0
        %v10653 = vmax.f32 %v10621, 0.0
        %v10654 = vmax.f32 %v10622, 0.0
        %v10655 = vmax.f32 %v10623, 0.0
        %v10656 = vmax.f32 %v10624, 0.0
        %v10657 = vmax.f32 %v10625, 0.0
        %v10658 = vmax.f32 %v10626, 0.0
        %v10659 = vmax.f32 %v10627, 0.0
        %v10660 = vmax.f32 %v10628, 0.0
        %v10661 = vmax.f32 %v10629, 0.0
        %v10662 = vmax.f32 %v10630, 0.0
        %v10663 = vmax.f32 %v10631, 0.0
        %v10664 = vmax.f32 %v10632, 0.0
        %v10665 = vmax.f32 %v10633, 0.0
        %v10666 = vmax.f32 %v10634, 0.0
        %v10667 = vmax.f32 %v10635, 0.0
        %v10668 = vmax.f32 %v10636, 0.0
        %v10669 = vmax.f32 %v10637, 0.0
        %v10670 = vmax.f32 %v10638, 0.0
        %v10671 = vmax.f32 %v10639, 0.0
        %v10672 = vmax.f32 %v10640, 0.0
        %v10673 = vmax.f32 %v10641, 0.0
        %10674 = vst.msk [vmem:[#allocation4] sm:$0xff] %vm476, -inf
        %10675 = vst.msk [vmem:[#allocation4 + $0x8] sm:$0xff] %vm476, -inf
        %10676 = vst.msk [vmem:[#allocation4 + $0x10] sm:$0x3] %vm877, -inf
        %10677 = vst.msk [vmem:[#allocation4 + $0x18] sm:$0xff] %vm476, -inf
        %10678 = vst.msk [vmem:[#allocation4 + $0x20] sm:$0xff] %vm476, -inf
        %10679 = vst.msk [vmem:[#allocation4 + $0x28] sm:$0x3] %vm877, -inf
        %10680 = vst.msk [vmem:[#allocation4 + $0x30] sm:$0xff] %vm476, -inf
        %10681 = vst.msk [vmem:[#allocation4 + $0x38] sm:$0xff] %vm476, -inf
        %10682 = vst.msk [vmem:[#allocation4 + $0x40] sm:$0x3] %vm877, -inf
        %10683 = vst.msk [vmem:[#allocation4 + $0x48] sm:$0xff] %vm476, -inf
        %10684 = vst.msk [vmem:[#allocation4 + $0x50] sm:$0xff] %vm476, -inf
        %10685 = vst.msk [vmem:[#allocation4 + $0x58] sm:$0x3] %vm877, -inf
        %10686 = vst.msk [vmem:[#allocation4 + $0x60] sm:$0xff] %vm476, -inf
        %10687 = vst.msk [vmem:[#allocation4 + $0x68] sm:$0xff] %vm476, -inf
        %10688 = vst.msk [vmem:[#allocation4 + $0x70] sm:$0x3] %vm877, -inf
        %10689 = vst.msk [vmem:[#allocation4 + $0x78] sm:$0xff] %vm476, -inf
        %10690 = vst.msk [vmem:[#allocation4 + $0x80] sm:$0xff] %vm476, -inf
        %10691 = vst.msk [vmem:[#allocation4 + $0x88] sm:$0x3] %vm877, -inf
        %10692 = vst.msk [vmem:[#allocation4 + $0x90] sm:$0xff] %vm476, -inf
        %10693 = vst.msk [vmem:[#allocation4 + $0x98] sm:$0xff] %vm476, -inf
        %10694 = vst.msk [vmem:[#allocation4 + $0xa0] sm:$0x3] %vm877, -inf
        %10695 = vst.msk [vmem:[#allocation4 + $0xa8] sm:$0xff] %vm476, -inf
        %10696 = vst.msk [vmem:[#allocation4 + $0xb0] sm:$0xff] %vm476, -inf
        %10697 = vst.msk [vmem:[#allocation4 + $0xb8] sm:$0x3] %vm877, -inf
        %10698 = vst.msk [vmem:[#allocation4 + $0xc0] sm:$0xff] %vm476, -inf
        %10699 = vst.msk [vmem:[#allocation4 + $0xc8] sm:$0xff] %vm476, -inf
        %10700 = vst.msk [vmem:[#allocation4 + $0xd0] sm:$0x3] %vm877, -inf
        %10701 = vst.msk [vmem:[#allocation4 + $0xd8] sm:$0xff] %vm476, -inf
        %10702 = vst.msk [vmem:[#allocation4 + $0xe0] sm:$0xff] %vm476, -inf
        %10703 = vst.msk [vmem:[#allocation4 + $0xe8] sm:$0x3] %vm877, -inf
        %10704 = vst.msk [vmem:[#allocation4 + $0xf0] sm:$0xff] %vm476, -inf
        %10705 = vst.msk [vmem:[#allocation4 + $0xf8] sm:$0xff] %vm476, -inf
        %10706 = vst.msk [vmem:[#allocation4 + $0x100] sm:$0x3] %vm877, -inf
        %10707 = vst.msk [vmem:[#allocation4 + $0x108] sm:$0xff] %vm476, -inf
        %10708 = vst.msk [vmem:[#allocation4 + $0x110] sm:$0xff] %vm476, -inf
        %10709 = vst.msk [vmem:[#allocation4 + $0x118] sm:$0x3] %vm877, -inf
        %10710 = vst.msk [vmem:[#allocation4 + $0x120] sm:$0xff] %vm476, -inf
        %10711 = vst.msk [vmem:[#allocation4 + $0x128] sm:$0xff] %vm476, -inf
        %10712 = vst.msk [vmem:[#allocation4 + $0x130] sm:$0x3] %vm877, -inf
        %10713 = vst.msk [vmem:[#allocation4 + $0x138] sm:$0xff] %vm476, -inf
        %10714 = vst.msk [vmem:[#allocation4 + $0x140] sm:$0xff] %vm476, -inf
        %10715 = vst.msk [vmem:[#allocation4 + $0x148] sm:$0x3] %vm877, -inf
        %10716 = vst.msk [vmem:[#allocation4 + $0x150] sm:$0xff] %vm476, -inf
        %10717 = vst.msk [vmem:[#allocation4 + $0x158] sm:$0xff] %vm476, -inf
        %10718 = vst.msk [vmem:[#allocation4 + $0x160] sm:$0x3] %vm877, -inf
        %10719 = vst.msk [vmem:[#allocation4 + $0x168] sm:$0xff] %vm476, -inf
        %10720 = vst.msk [vmem:[#allocation4 + $0x170] sm:$0xff] %vm476, -inf
        %10721 = vst.msk [vmem:[#allocation4 + $0x178] sm:$0x3] %vm877, -inf
        %10722 = vst.msk [vmem:[#allocation4 + $0x180] sm:$0xff] %vm476, -inf
        %10723 = vst.msk [vmem:[#allocation4 + $0x188] sm:$0xff] %vm476, -inf
        %10724 = vst.msk [vmem:[#allocation4 + $0x190] sm:$0x3] %vm877, -inf
        %10725 = vst.msk [vmem:[#allocation4 + $0x198] sm:$0xff] %vm476, -inf
        %10726 = vst.msk [vmem:[#allocation4 + $0x1a0] sm:$0xff] %vm476, -inf
        %10727 = vst.msk [vmem:[#allocation4 + $0x1a8] sm:$0x3] %vm877, -inf
        %s10728 = scalar_lea.vmem [#allocation4], 24
        %10729 = vst.msk [vmem:[%s10728 + $0x1] sm:$0xff] %vm476, %v439
        %10730 = vst.msk [vmem:[%s10728 + $0x9] sm:$0xff] %vm476, %v440
        %10731 = vst.msk [vmem:[%s10728 + $0x19] sm:$0xff] %vm476, %v441
        %10732 = vst.msk [vmem:[%s10728 + $0x21] sm:$0xff] %vm476, %v442
        %10733 = vst.msk [vmem:[%s10728 + $0x31] sm:$0xff] %vm476, %v443
        %10734 = vst.msk [vmem:[%s10728 + $0x39] sm:$0xff] %vm476, %v444
        %10735 = vst.msk [vmem:[%s10728 + $0x49] sm:$0xff] %vm476, %v445
        %10736 = vst.msk [vmem:[%s10728 + $0x51] sm:$0xff] %vm476, %v446
        %10737 = vst.msk [vmem:[%s10728 + $0x61] sm:$0xff] %vm476, %v447
        %10738 = vst.msk [vmem:[%s10728 + $0x69] sm:$0xff] %vm476, %v448
        %10739 = vst.msk [vmem:[%s10728 + $0x79] sm:$0xff] %vm476, %v449
        %10740 = vst.msk [vmem:[%s10728 + $0x81] sm:$0xff] %vm476, %v450
        %10741 = vst.msk [vmem:[%s10728 + $0x91] sm:$0xff] %vm476, %v451
        %10742 = vst.msk [vmem:[%s10728 + $0x99] sm:$0xff] %vm476, %v452
        %10743 = vst.msk [vmem:[%s10728 + $0xa9] sm:$0xff] %vm476, %v453
        %10744 = vst.msk [vmem:[%s10728 + $0xb1] sm:$0xff] %vm476, %v454
        %10745 = vst.msk [vmem:[%s10728 + $0xc1] sm:$0xff] %vm476, %v455
        %10746 = vst.msk [vmem:[%s10728 + $0xc9] sm:$0xff] %vm476, %v456
        %10747 = vst.msk [vmem:[%s10728 + $0xd9] sm:$0xff] %vm476, %v457
        %10748 = vst.msk [vmem:[%s10728 + $0xe1] sm:$0xff] %vm476, %v458
        %10749 = vst.msk [vmem:[%s10728 + $0xf1] sm:$0xff] %vm476, %v459
        %10750 = vst.msk [vmem:[%s10728 + $0xf9] sm:$0xff] %vm476, %v460
        %10751 = vst.msk [vmem:[%s10728 + $0x109] sm:$0xff] %vm476, %v461
        %10752 = vst.msk [vmem:[%s10728 + $0x111] sm:$0xff] %vm476, %v462
        %10753 = vst.msk [vmem:[%s10728 + $0x121] sm:$0xff] %vm476, %v463
        %10754 = vst.msk [vmem:[%s10728 + $0x129] sm:$0xff] %vm476, %v464
        %10755 = vst.msk [vmem:[%s10728 + $0x139] sm:$0xff] %vm476, %v465
        %10756 = vst.msk [vmem:[%s10728 + $0x141] sm:$0xff] %vm476, %v466
        %10757 = vst.msk [vmem:[%s10728 + $0x151] sm:$0xff] %vm476, %v467
        %10758 = vst.msk [vmem:[%s10728 + $0x159] sm:$0xff] %vm476, %v468
        %10759 = vst.msk [vmem:[%s10728 + $0x169] sm:$0xff] %vm476, %v469
        %10760 = vst.msk [vmem:[%s10728 + $0x171] sm:$0xff] %vm476, %v470
        %v10761 = vld [vmem:[#allocation4] sm:$0xff]
        %v10762 = vld [vmem:[#allocation4 + $0x8] sm:$0xff]
        %v10763 = vld [vmem:[#allocation4 + $0x18] sm:$0xff]
        %v10764 = vld [vmem:[#allocation4 + $0x20] sm:$0xff]
        %v10765 = vld [vmem:[#allocation4 + $0x30] sm:$0xff]
        %v10766 = vld [vmem:[#allocation4 + $0x38] sm:$0xff]
        %v10767 = vld [vmem:[#allocation4 + $0x48] sm:$0xff]
        %v10768 = vld [vmem:[#allocation4 + $0x50] sm:$0xff]
        %v10769 = vld [vmem:[#allocation4 + $0x60] sm:$0xff]
        %v10770 = vld [vmem:[#allocation4 + $0x68] sm:$0xff]
        %v10771 = vld [vmem:[#allocation4 + $0x78] sm:$0xff]
        %v10772 = vld [vmem:[#allocation4 + $0x80] sm:$0xff]
        %v10773 = vld [vmem:[#allocation4 + $0x90] sm:$0xff]
        %v10774 = vld [vmem:[#allocation4 + $0x98] sm:$0xff]
        %v10775 = vld [vmem:[#allocation4 + $0xa8] sm:$0xff]
        %v10776 = vld [vmem:[#allocation4 + $0xb0] sm:$0xff]
        %v10777 = vld [vmem:[#allocation4 + $0xc0] sm:$0xff]
        %v10778 = vld [vmem:[#allocation4 + $0xc8] sm:$0xff]
        %v10779 = vld [vmem:[#allocation4 + $0xd8] sm:$0xff]
        %v10780 = vld [vmem:[#allocation4 + $0xe0] sm:$0xff]
        %v10781 = vld [vmem:[#allocation4 + $0xf0] sm:$0xff]
        %v10782 = vld [vmem:[#allocation4 + $0xf8] sm:$0xff]
        %v10783 = vld [vmem:[#allocation4 + $0x108] sm:$0xff]
        %v10784 = vld [vmem:[#allocation4 + $0x110] sm:$0xff]
        %v10785 = vld [vmem:[#allocation4 + $0x120] sm:$0xff]
        %v10786 = vld [vmem:[#allocation4 + $0x128] sm:$0xff]
        %v10787 = vld [vmem:[#allocation4 + $0x138] sm:$0xff]
        %v10788 = vld [vmem:[#allocation4 + $0x140] sm:$0xff]
        %v10789 = vld [vmem:[#allocation4 + $0x150] sm:$0xff]
        %v10790 = vld [vmem:[#allocation4 + $0x158] sm:$0xff]
        %v10791 = vld [vmem:[#allocation4 + $0x168] sm:$0xff]
        %v10792 = vld [vmem:[#allocation4 + $0x170] sm:$0xff]
        %v10793 = vld [vmem:[#allocation4 + $0x1] sm:$0xff]
        %v10794 = vld [vmem:[#allocation4 + $0x9] sm:$0xff]
        %v10795 = vld [vmem:[#allocation4 + $0x19] sm:$0xff]
        %v10796 = vld [vmem:[#allocation4 + $0x21] sm:$0xff]
        %v10797 = vld [vmem:[#allocation4 + $0x31] sm:$0xff]
        %v10798 = vld [vmem:[#allocation4 + $0x39] sm:$0xff]
        %v10799 = vld [vmem:[#allocation4 + $0x49] sm:$0xff]
        %v10800 = vld [vmem:[#allocation4 + $0x51] sm:$0xff]
        %v10801 = vld [vmem:[#allocation4 + $0x61] sm:$0xff]
        %v10802 = vld [vmem:[#allocation4 + $0x69] sm:$0xff]
        %v10803 = vld [vmem:[#allocation4 + $0x79] sm:$0xff]
        %v10804 = vld [vmem:[#allocation4 + $0x81] sm:$0xff]
        %v10805 = vld [vmem:[#allocation4 + $0x91] sm:$0xff]
        %v10806 = vld [vmem:[#allocation4 + $0x99] sm:$0xff]
        %v10807 = vld [vmem:[#allocation4 + $0xa9] sm:$0xff]
        %v10808 = vld [vmem:[#allocation4 + $0xb1] sm:$0xff]
        %v10809 = vld [vmem:[#allocation4 + $0xc1] sm:$0xff]
        %v10810 = vld [vmem:[#allocation4 + $0xc9] sm:$0xff]
        %v10811 = vld [vmem:[#allocation4 + $0xd9] sm:$0xff]
        %v10812 = vld [vmem:[#allocation4 + $0xe1] sm:$0xff]
        %v10813 = vld [vmem:[#allocation4 + $0xf1] sm:$0xff]
        %v10814 = vld [vmem:[#allocation4 + $0xf9] sm:$0xff]
        %v10815 = vld [vmem:[#allocation4 + $0x109] sm:$0xff]
        %v10816 = vld [vmem:[#allocation4 + $0x111] sm:$0xff]
        %v10817 = vld [vmem:[#allocation4 + $0x121] sm:$0xff]
        %v10818 = vld [vmem:[#allocation4 + $0x129] sm:$0xff]
        %v10819 = vld [vmem:[#allocation4 + $0x139] sm:$0xff]
        %v10820 = vld [vmem:[#allocation4 + $0x141] sm:$0xff]
        %v10821 = vld [vmem:[#allocation4 + $0x151] sm:$0xff]
        %v10822 = vld [vmem:[#allocation4 + $0x159] sm:$0xff]
        %v10823 = vld [vmem:[#allocation4 + $0x169] sm:$0xff]
        %v10824 = vld [vmem:[#allocation4 + $0x171] sm:$0xff]
        %v10825 = vmax.f32 %v10761, %v10793
        %v10826 = vmax.f32 %v10762, %v10794
        %v10827 = vmax.f32 %v10763, %v10795
        %v10828 = vmax.f32 %v10764, %v10796
        %v10829 = vmax.f32 %v10765, %v10797
        %v10830 = vmax.f32 %v10766, %v10798
        %v10831 = vmax.f32 %v10767, %v10799
        %v10832 = vmax.f32 %v10768, %v10800
        %v10833 = vmax.f32 %v10769, %v10801
        %v10834 = vmax.f32 %v10770, %v10802
        %v10835 = vmax.f32 %v10771, %v10803
        %v10836 = vmax.f32 %v10772, %v10804
        %v10837 = vmax.f32 %v10773, %v10805
        %v10838 = vmax.f32 %v10774, %v10806
        %v10839 = vmax.f32 %v10775, %v10807
        %v10840 = vmax.f32 %v10776, %v10808
        %v10841 = vmax.f32 %v10777, %v10809
        %v10842 = vmax.f32 %v10778, %v10810
        %v10843 = vmax.f32 %v10779, %v10811
        %v10844 = vmax.f32 %v10780, %v10812
        %v10845 = vmax.f32 %v10781, %v10813
        %v10846 = vmax.f32 %v10782, %v10814
        %v10847 = vmax.f32 %v10783, %v10815
        %v10848 = vmax.f32 %v10784, %v10816
        %v10849 = vmax.f32 %v10785, %v10817
        %v10850 = vmax.f32 %v10786, %v10818
        %v10851 = vmax.f32 %v10787, %v10819
        %v10852 = vmax.f32 %v10788, %v10820
        %v10853 = vmax.f32 %v10789, %v10821
        %v10854 = vmax.f32 %v10790, %v10822
        %v10855 = vmax.f32 %v10791, %v10823
        %v10856 = vmax.f32 %v10792, %v10824
        %v10857 = vld [vmem:[#allocation4 + $0x2] sm:$0xff]
        %v10858 = vld [vmem:[#allocation4 + $0xa] sm:$0xff]
        %v10859 = vld [vmem:[#allocation4 + $0x1a] sm:$0xff]
        %v10860 = vld [vmem:[#allocation4 + $0x22] sm:$0xff]
        %v10861 = vld [vmem:[#allocation4 + $0x32] sm:$0xff]
        %v10862 = vld [vmem:[#allocation4 + $0x3a] sm:$0xff]
        %v10863 = vld [vmem:[#allocation4 + $0x4a] sm:$0xff]
        %v10864 = vld [vmem:[#allocation4 + $0x52] sm:$0xff]
        %v10865 = vld [vmem:[#allocation4 + $0x62] sm:$0xff]
        %v10866 = vld [vmem:[#allocation4 + $0x6a] sm:$0xff]
        %v10867 = vld [vmem:[#allocation4 + $0x7a] sm:$0xff]
        %v10868 = vld [vmem:[#allocation4 + $0x82] sm:$0xff]
        %v10869 = vld [vmem:[#allocation4 + $0x92] sm:$0xff]
        %v10870 = vld [vmem:[#allocation4 + $0x9a] sm:$0xff]
        %v10871 = vld [vmem:[#allocation4 + $0xaa] sm:$0xff]
        %v10872 = vld [vmem:[#allocation4 + $0xb2] sm:$0xff]
        %v10873 = vld [vmem:[#allocation4 + $0xc2] sm:$0xff]
        %v10874 = vld [vmem:[#allocation4 + $0xca] sm:$0xff]
        %v10875 = vld [vmem:[#allocation4 + $0xda] sm:$0xff]
        %v10876 = vld [vmem:[#allocation4 + $0xe2] sm:$0xff]
        %v10877 = vld [vmem:[#allocation4 + $0xf2] sm:$0xff]
        %v10878 = vld [vmem:[#allocation4 + $0xfa] sm:$0xff]
        %v10879 = vld [vmem:[#allocation4 + $0x10a] sm:$0xff]
        %v10880 = vld [vmem:[#allocation4 + $0x112] sm:$0xff]
        %v10881 = vld [vmem:[#allocation4 + $0x122] sm:$0xff]
        %v10882 = vld [vmem:[#allocation4 + $0x12a] sm:$0xff]
        %v10883 = vld [vmem:[#allocation4 + $0x13a] sm:$0xff]
        %v10884 = vld [vmem:[#allocation4 + $0x142] sm:$0xff]
        %v10885 = vld [vmem:[#allocation4 + $0x152] sm:$0xff]
        %v10886 = vld [vmem:[#allocation4 + $0x15a] sm:$0xff]
        %v10887 = vld [vmem:[#allocation4 + $0x16a] sm:$0xff]
        %v10888 = vld [vmem:[#allocation4 + $0x172] sm:$0xff]
        %v10889 = vmax.f32 %v10825, %v10857
        %v10890 = vmax.f32 %v10826, %v10858
        %v10891 = vmax.f32 %v10827, %v10859
        %v10892 = vmax.f32 %v10828, %v10860
        %v10893 = vmax.f32 %v10829, %v10861
        %v10894 = vmax.f32 %v10830, %v10862
        %v10895 = vmax.f32 %v10831, %v10863
        %v10896 = vmax.f32 %v10832, %v10864
        %v10897 = vmax.f32 %v10833, %v10865
        %v10898 = vmax.f32 %v10834, %v10866
        %v10899 = vmax.f32 %v10835, %v10867
        %v10900 = vmax.f32 %v10836, %v10868
        %v10901 = vmax.f32 %v10837, %v10869
        %v10902 = vmax.f32 %v10838, %v10870
        %v10903 = vmax.f32 %v10839, %v10871
        %v10904 = vmax.f32 %v10840, %v10872
        %v10905 = vmax.f32 %v10841, %v10873
        %v10906 = vmax.f32 %v10842, %v10874
        %v10907 = vmax.f32 %v10843, %v10875
        %v10908 = vmax.f32 %v10844, %v10876
        %v10909 = vmax.f32 %v10845, %v10877
        %v10910 = vmax.f32 %v10846, %v10878
        %v10911 = vmax.f32 %v10847, %v10879
        %v10912 = vmax.f32 %v10848, %v10880
        %v10913 = vmax.f32 %v10849, %v10881
        %v10914 = vmax.f32 %v10850, %v10882
        %v10915 = vmax.f32 %v10851, %v10883
        %v10916 = vmax.f32 %v10852, %v10884
        %v10917 = vmax.f32 %v10853, %v10885
        %v10918 = vmax.f32 %v10854, %v10886
        %v10919 = vmax.f32 %v10855, %v10887
        %v10920 = vmax.f32 %v10856, %v10888
        %v10921 = vld [vmem:[%s10728] sm:$0xff]
        %v10922 = vld [vmem:[%s10728 + $0x8] sm:$0xff]
        %v10923 = vld [vmem:[%s10728 + $0x18] sm:$0xff]
        %v10924 = vld [vmem:[%s10728 + $0x20] sm:$0xff]
        %v10925 = vld [vmem:[%s10728 + $0x30] sm:$0xff]
        %v10926 = vld [vmem:[%s10728 + $0x38] sm:$0xff]
        %v10927 = vld [vmem:[%s10728 + $0x48] sm:$0xff]
        %v10928 = vld [vmem:[%s10728 + $0x50] sm:$0xff]
        %v10929 = vld [vmem:[%s10728 + $0x60] sm:$0xff]
        %v10930 = vld [vmem:[%s10728 + $0x68] sm:$0xff]
        %v10931 = vld [vmem:[%s10728 + $0x78] sm:$0xff]
        %v10932 = vld [vmem:[%s10728 + $0x80] sm:$0xff]
        %v10933 = vld [vmem:[%s10728 + $0x90] sm:$0xff]
        %v10934 = vld [vmem:[%s10728 + $0x98] sm:$0xff]
        %v10935 = vld [vmem:[%s10728 + $0xa8] sm:$0xff]
        %v10936 = vld [vmem:[%s10728 + $0xb0] sm:$0xff]
        %v10937 = vld [vmem:[%s10728 + $0xc0] sm:$0xff]
        %v10938 = vld [vmem:[%s10728 + $0xc8] sm:$0xff]
        %v10939 = vld [vmem:[%s10728 + $0xd8] sm:$0xff]
        %v10940 = vld [vmem:[%s10728 + $0xe0] sm:$0xff]
        %v10941 = vld [vmem:[%s10728 + $0xf0] sm:$0xff]
        %v10942 = vld [vmem:[%s10728 + $0xf8] sm:$0xff]
        %v10943 = vld [vmem:[%s10728 + $0x108] sm:$0xff]
        %v10944 = vld [vmem:[%s10728 + $0x110] sm:$0xff]
        %v10945 = vld [vmem:[%s10728 + $0x120] sm:$0xff]
        %v10946 = vld [vmem:[%s10728 + $0x128] sm:$0xff]
        %v10947 = vld [vmem:[%s10728 + $0x138] sm:$0xff]
        %v10948 = vld [vmem:[%s10728 + $0x140] sm:$0xff]
        %v10949 = vld [vmem:[%s10728 + $0x150] sm:$0xff]
        %v10950 = vld [vmem:[%s10728 + $0x158] sm:$0xff]
        %v10951 = vld [vmem:[%s10728 + $0x168] sm:$0xff]
        %v10952 = vld [vmem:[%s10728 + $0x170] sm:$0xff]
        %v10953 = vmax.f32 %v10889, %v10921
        %v10954 = vmax.f32 %v10890, %v10922
        %v10955 = vmax.f32 %v10891, %v10923
        %v10956 = vmax.f32 %v10892, %v10924
        %v10957 = vmax.f32 %v10893, %v10925
        %v10958 = vmax.f32 %v10894, %v10926
        %v10959 = vmax.f32 %v10895, %v10927
        %v10960 = vmax.f32 %v10896, %v10928
        %v10961 = vmax.f32 %v10897, %v10929
        %v10962 = vmax.f32 %v10898, %v10930
        %v10963 = vmax.f32 %v10899, %v10931
        %v10964 = vmax.f32 %v10900, %v10932
        %v10965 = vmax.f32 %v10901, %v10933
        %v10966 = vmax.f32 %v10902, %v10934
        %v10967 = vmax.f32 %v10903, %v10935
        %v10968 = vmax.f32 %v10904, %v10936
        %v10969 = vmax.f32 %v10905, %v10937
        %v10970 = vmax.f32 %v10906, %v10938
        %v10971 = vmax.f32 %v10907, %v10939
        %v10972 = vmax.f32 %v10908, %v10940
        %v10973 = vmax.f32 %v10909, %v10941
        %v10974 = vmax.f32 %v10910, %v10942
        %v10975 = vmax.f32 %v10911, %v10943
        %v10976 = vmax.f32 %v10912, %v10944
        %v10977 = vmax.f32 %v10913, %v10945
        %v10978 = vmax.f32 %v10914, %v10946
        %v10979 = vmax.f32 %v10915, %v10947
        %v10980 = vmax.f32 %v10916, %v10948
        %v10981 = vmax.f32 %v10917, %v10949
        %v10982 = vmax.f32 %v10918, %v10950
        %v10983 = vmax.f32 %v10919, %v10951
        %v10984 = vmax.f32 %v10920, %v10952
        %v10985 = vld [vmem:[%s10728 + $0x1] sm:$0xff]
        %v10986 = vld [vmem:[%s10728 + $0x9] sm:$0xff]
        %v10987 = vld [vmem:[%s10728 + $0x19] sm:$0xff]
        %v10988 = vld [vmem:[%s10728 + $0x21] sm:$0xff]
        %v10989 = vld [vmem:[%s10728 + $0x31] sm:$0xff]
        %v10990 = vld [vmem:[%s10728 + $0x39] sm:$0xff]
        %v10991 = vld [vmem:[%s10728 + $0x49] sm:$0xff]
        %v10992 = vld [vmem:[%s10728 + $0x51] sm:$0xff]
        %v10993 = vld [vmem:[%s10728 + $0x61] sm:$0xff]
        %v10994 = vld [vmem:[%s10728 + $0x69] sm:$0xff]
        %v10995 = vld [vmem:[%s10728 + $0x79] sm:$0xff]
        %v10996 = vld [vmem:[%s10728 + $0x81] sm:$0xff]
        %v10997 = vld [vmem:[%s10728 + $0x91] sm:$0xff]
        %v10998 = vld [vmem:[%s10728 + $0x99] sm:$0xff]
        %v10999 = vld [vmem:[%s10728 + $0xa9] sm:$0xff]
        %v11000 = vld [vmem:[%s10728 + $0xb1] sm:$0xff]
        %v11001 = vld [vmem:[%s10728 + $0xc1] sm:$0xff]
        %v11002 = vld [vmem:[%s10728 + $0xc9] sm:$0xff]
        %v11003 = vld [vmem:[%s10728 + $0xd9] sm:$0xff]
        %v11004 = vld [vmem:[%s10728 + $0xe1] sm:$0xff]
        %v11005 = vld [vmem:[%s10728 + $0xf1] sm:$0xff]
        %v11006 = vld [vmem:[%s10728 + $0xf9] sm:$0xff]
        %v11007 = vld [vmem:[%s10728 + $0x109] sm:$0xff]
        %v11008 = vld [vmem:[%s10728 + $0x111] sm:$0xff]
        %v11009 = vld [vmem:[%s10728 + $0x121] sm:$0xff]
        %v11010 = vld [vmem:[%s10728 + $0x129] sm:$0xff]
        %v11011 = vld [vmem:[%s10728 + $0x139] sm:$0xff]
        %v11012 = vld [vmem:[%s10728 + $0x141] sm:$0xff]
        %v11013 = vld [vmem:[%s10728 + $0x151] sm:$0xff]
        %v11014 = vld [vmem:[%s10728 + $0x159] sm:$0xff]
        %v11015 = vld [vmem:[%s10728 + $0x169] sm:$0xff]
        %v11016 = vld [vmem:[%s10728 + $0x171] sm:$0xff]
        %v11017 = vmax.f32 %v10953, %v10985
        %v11018 = vmax.f32 %v10954, %v10986
        %v11019 = vmax.f32 %v10955, %v10987
        %v11020 = vmax.f32 %v10956, %v10988
        %v11021 = vmax.f32 %v10957, %v10989
        %v11022 = vmax.f32 %v10958, %v10990
        %v11023 = vmax.f32 %v10959, %v10991
        %v11024 = vmax.f32 %v10960, %v10992
        %v11025 = vmax.f32 %v10961, %v10993
        %v11026 = vmax.f32 %v10962, %v10994
        %v11027 = vmax.f32 %v10963, %v10995
        %v11028 = vmax.f32 %v10964, %v10996
        %v11029 = vmax.f32 %v10965, %v10997
        %v11030 = vmax.f32 %v10966, %v10998
        %v11031 = vmax.f32 %v10967, %v10999
        %v11032 = vmax.f32 %v10968, %v11000
        %v11033 = vmax.f32 %v10969, %v11001
        %v11034 = vmax.f32 %v10970, %v11002
        %v11035 = vmax.f32 %v10971, %v11003
        %v11036 = vmax.f32 %v10972, %v11004
        %v11037 = vmax.f32 %v10973, %v11005
        %v11038 = vmax.f32 %v10974, %v11006
        %v11039 = vmax.f32 %v10975, %v11007
        %v11040 = vmax.f32 %v10976, %v11008
        %v11041 = vmax.f32 %v10977, %v11009
        %v11042 = vmax.f32 %v10978, %v11010
        %v11043 = vmax.f32 %v10979, %v11011
        %v11044 = vmax.f32 %v10980, %v11012
        %v11045 = vmax.f32 %v10981, %v11013
        %v11046 = vmax.f32 %v10982, %v11014
        %v11047 = vmax.f32 %v10983, %v11015
        %v11048 = vmax.f32 %v10984, %v11016
        %v11049 = vld [vmem:[%s10728 + $0x2] sm:$0xff]
        %v11050 = vld [vmem:[%s10728 + $0xa] sm:$0xff]
        %v11051 = vld [vmem:[%s10728 + $0x1a] sm:$0xff]
        %v11052 = vld [vmem:[%s10728 + $0x22] sm:$0xff]
        %v11053 = vld [vmem:[%s10728 + $0x32] sm:$0xff]
        %v11054 = vld [vmem:[%s10728 + $0x3a] sm:$0xff]
        %v11055 = vld [vmem:[%s10728 + $0x4a] sm:$0xff]
        %v11056 = vld [vmem:[%s10728 + $0x52] sm:$0xff]
        %v11057 = vld [vmem:[%s10728 + $0x62] sm:$0xff]
        %v11058 = vld [vmem:[%s10728 + $0x6a] sm:$0xff]
        %v11059 = vld [vmem:[%s10728 + $0x7a] sm:$0xff]
        %v11060 = vld [vmem:[%s10728 + $0x82] sm:$0xff]
        %v11061 = vld [vmem:[%s10728 + $0x92] sm:$0xff]
        %v11062 = vld [vmem:[%s10728 + $0x9a] sm:$0xff]
        %v11063 = vld [vmem:[%s10728 + $0xaa] sm:$0xff]
        %v11064 = vld [vmem:[%s10728 + $0xb2] sm:$0xff]
        %v11065 = vld [vmem:[%s10728 + $0xc2] sm:$0xff]
        %v11066 = vld [vmem:[%s10728 + $0xca] sm:$0xff]
        %v11067 = vld [vmem:[%s10728 + $0xda] sm:$0xff]
        %v11068 = vld [vmem:[%s10728 + $0xe2] sm:$0xff]
        %v11069 = vld [vmem:[%s10728 + $0xf2] sm:$0xff]
        %v11070 = vld [vmem:[%s10728 + $0xfa] sm:$0xff]
        %v11071 = vld [vmem:[%s10728 + $0x10a] sm:$0xff]
        %v11072 = vld [vmem:[%s10728 + $0x112] sm:$0xff]
        %v11073 = vld [vmem:[%s10728 + $0x122] sm:$0xff]
        %v11074 = vld [vmem:[%s10728 + $0x12a] sm:$0xff]
        %v11075 = vld [vmem:[%s10728 + $0x13a] sm:$0xff]
        %v11076 = vld [vmem:[%s10728 + $0x142] sm:$0xff]
        %v11077 = vld [vmem:[%s10728 + $0x152] sm:$0xff]
        %v11078 = vld [vmem:[%s10728 + $0x15a] sm:$0xff]
        %v11079 = vld [vmem:[%s10728 + $0x16a] sm:$0xff]
        %v11080 = vld [vmem:[%s10728 + $0x172] sm:$0xff]
        %v11081 = vmax.f32 %v11017, %v11049
        %v11082 = vmax.f32 %v11018, %v11050
        %v11083 = vmax.f32 %v11019, %v11051
        %v11084 = vmax.f32 %v11020, %v11052
        %v11085 = vmax.f32 %v11021, %v11053
        %v11086 = vmax.f32 %v11022, %v11054
        %v11087 = vmax.f32 %v11023, %v11055
        %v11088 = vmax.f32 %v11024, %v11056
        %v11089 = vmax.f32 %v11025, %v11057
        %v11090 = vmax.f32 %v11026, %v11058
        %v11091 = vmax.f32 %v11027, %v11059
        %v11092 = vmax.f32 %v11028, %v11060
        %v11093 = vmax.f32 %v11029, %v11061
        %v11094 = vmax.f32 %v11030, %v11062
        %v11095 = vmax.f32 %v11031, %v11063
        %v11096 = vmax.f32 %v11032, %v11064
        %v11097 = vmax.f32 %v11033, %v11065
        %v11098 = vmax.f32 %v11034, %v11066
        %v11099 = vmax.f32 %v11035, %v11067
        %v11100 = vmax.f32 %v11036, %v11068
        %v11101 = vmax.f32 %v11037, %v11069
        %v11102 = vmax.f32 %v11038, %v11070
        %v11103 = vmax.f32 %v11039, %v11071
        %v11104 = vmax.f32 %v11040, %v11072
        %v11105 = vmax.f32 %v11041, %v11073
        %v11106 = vmax.f32 %v11042, %v11074
        %v11107 = vmax.f32 %v11043, %v11075
        %v11108 = vmax.f32 %v11044, %v11076
        %v11109 = vmax.f32 %v11045, %v11077
        %v11110 = vmax.f32 %v11046, %v11078
        %v11111 = vmax.f32 %v11047, %v11079
        %v11112 = vmax.f32 %v11048, %v11080
        %s11113 = scalar_lea.vmem [#allocation4], 48
        %v11114 = vld [vmem:[%s11113] sm:$0xff]
        %v11115 = vld [vmem:[%s11113 + $0x8] sm:$0xff]
        %v11116 = vld [vmem:[%s11113 + $0x18] sm:$0xff]
        %v11117 = vld [vmem:[%s11113 + $0x20] sm:$0xff]
        %v11118 = vld [vmem:[%s11113 + $0x30] sm:$0xff]
        %v11119 = vld [vmem:[%s11113 + $0x38] sm:$0xff]
        %v11120 = vld [vmem:[%s11113 + $0x48] sm:$0xff]
        %v11121 = vld [vmem:[%s11113 + $0x50] sm:$0xff]
        %v11122 = vld [vmem:[%s11113 + $0x60] sm:$0xff]
        %v11123 = vld [vmem:[%s11113 + $0x68] sm:$0xff]
        %v11124 = vld [vmem:[%s11113 + $0x78] sm:$0xff]
        %v11125 = vld [vmem:[%s11113 + $0x80] sm:$0xff]
        %v11126 = vld [vmem:[%s11113 + $0x90] sm:$0xff]
        %v11127 = vld [vmem:[%s11113 + $0x98] sm:$0xff]
        %v11128 = vld [vmem:[%s11113 + $0xa8] sm:$0xff]
        %v11129 = vld [vmem:[%s11113 + $0xb0] sm:$0xff]
        %v11130 = vld [vmem:[%s11113 + $0xc0] sm:$0xff]
        %v11131 = vld [vmem:[%s11113 + $0xc8] sm:$0xff]
        %v11132 = vld [vmem:[%s11113 + $0xd8] sm:$0xff]
        %v11133 = vld [vmem:[%s11113 + $0xe0] sm:$0xff]
        %v11134 = vld [vmem:[%s11113 + $0xf0] sm:$0xff]
        %v11135 = vld [vmem:[%s11113 + $0xf8] sm:$0xff]
        %v11136 = vld [vmem:[%s11113 + $0x108] sm:$0xff]
        %v11137 = vld [vmem:[%s11113 + $0x110] sm:$0xff]
        %v11138 = vld [vmem:[%s11113 + $0x120] sm:$0xff]
        %v11139 = vld [vmem:[%s11113 + $0x128] sm:$0xff]
        %v11140 = vld [vmem:[%s11113 + $0x138] sm:$0xff]
        %v11141 = vld [vmem:[%s11113 + $0x140] sm:$0xff]
        %v11142 = vld [vmem:[%s11113 + $0x150] sm:$0xff]
        %v11143 = vld [vmem:[%s11113 + $0x158] sm:$0xff]
        %v11144 = vld [vmem:[%s11113 + $0x168] sm:$0xff]
        %v11145 = vld [vmem:[%s11113 + $0x170] sm:$0xff]
        %v11146 = vmax.f32 %v11081, %v11114
        %v11147 = vmax.f32 %v11082, %v11115
        %v11148 = vmax.f32 %v11083, %v11116
        %v11149 = vmax.f32 %v11084, %v11117
        %v11150 = vmax.f32 %v11085, %v11118
        %v11151 = vmax.f32 %v11086, %v11119
        %v11152 = vmax.f32 %v11087, %v11120
        %v11153 = vmax.f32 %v11088, %v11121
        %v11154 = vmax.f32 %v11089, %v11122
        %v11155 = vmax.f32 %v11090, %v11123
        %v11156 = vmax.f32 %v11091, %v11124
        %v11157 = vmax.f32 %v11092, %v11125
        %v11158 = vmax.f32 %v11093, %v11126
        %v11159 = vmax.f32 %v11094, %v11127
        %v11160 = vmax.f32 %v11095, %v11128
        %v11161 = vmax.f32 %v11096, %v11129
        %v11162 = vmax.f32 %v11097, %v11130
        %v11163 = vmax.f32 %v11098, %v11131
        %v11164 = vmax.f32 %v11099, %v11132
        %v11165 = vmax.f32 %v11100, %v11133
        %v11166 = vmax.f32 %v11101, %v11134
        %v11167 = vmax.f32 %v11102, %v11135
        %v11168 = vmax.f32 %v11103, %v11136
        %v11169 = vmax.f32 %v11104, %v11137
        %v11170 = vmax.f32 %v11105, %v11138
        %v11171 = vmax.f32 %v11106, %v11139
        %v11172 = vmax.f32 %v11107, %v11140
        %v11173 = vmax.f32 %v11108, %v11141
        %v11174 = vmax.f32 %v11109, %v11142
        %v11175 = vmax.f32 %v11110, %v11143
        %v11176 = vmax.f32 %v11111, %v11144
        %v11177 = vmax.f32 %v11112, %v11145
        %v11178 = vld [vmem:[%s11113 + $0x1] sm:$0xff]
        %v11179 = vld [vmem:[%s11113 + $0x9] sm:$0xff]
        %v11180 = vld [vmem:[%s11113 + $0x19] sm:$0xff]
        %v11181 = vld [vmem:[%s11113 + $0x21] sm:$0xff]
        %v11182 = vld [vmem:[%s11113 + $0x31] sm:$0xff]
        %v11183 = vld [vmem:[%s11113 + $0x39] sm:$0xff]
        %v11184 = vld [vmem:[%s11113 + $0x49] sm:$0xff]
        %v11185 = vld [vmem:[%s11113 + $0x51] sm:$0xff]
        %v11186 = vld [vmem:[%s11113 + $0x61] sm:$0xff]
        %v11187 = vld [vmem:[%s11113 + $0x69] sm:$0xff]
        %v11188 = vld [vmem:[%s11113 + $0x79] sm:$0xff]
        %v11189 = vld [vmem:[%s11113 + $0x81] sm:$0xff]
        %v11190 = vld [vmem:[%s11113 + $0x91] sm:$0xff]
        %v11191 = vld [vmem:[%s11113 + $0x99] sm:$0xff]
        %v11192 = vld [vmem:[%s11113 + $0xa9] sm:$0xff]
        %v11193 = vld [vmem:[%s11113 + $0xb1] sm:$0xff]
        %v11194 = vld [vmem:[%s11113 + $0xc1] sm:$0xff]
        %v11195 = vld [vmem:[%s11113 + $0xc9] sm:$0xff]
        %v11196 = vld [vmem:[%s11113 + $0xd9] sm:$0xff]
        %v11197 = vld [vmem:[%s11113 + $0xe1] sm:$0xff]
        %v11198 = vld [vmem:[%s11113 + $0xf1] sm:$0xff]
        %v11199 = vld [vmem:[%s11113 + $0xf9] sm:$0xff]
        %v11200 = vld [vmem:[%s11113 + $0x109] sm:$0xff]
        %v11201 = vld [vmem:[%s11113 + $0x111] sm:$0xff]
        %v11202 = vld [vmem:[%s11113 + $0x121] sm:$0xff]
        %v11203 = vld [vmem:[%s11113 + $0x129] sm:$0xff]
        %v11204 = vld [vmem:[%s11113 + $0x139] sm:$0xff]
        %v11205 = vld [vmem:[%s11113 + $0x141] sm:$0xff]
        %v11206 = vld [vmem:[%s11113 + $0x151] sm:$0xff]
        %v11207 = vld [vmem:[%s11113 + $0x159] sm:$0xff]
        %v11208 = vld [vmem:[%s11113 + $0x169] sm:$0xff]
        %v11209 = vld [vmem:[%s11113 + $0x171] sm:$0xff]
        %v11210 = vmax.f32 %v11146, %v11178
        %v11211 = vmax.f32 %v11147, %v11179
        %v11212 = vmax.f32 %v11148, %v11180
        %v11213 = vmax.f32 %v11149, %v11181
        %v11214 = vmax.f32 %v11150, %v11182
        %v11215 = vmax.f32 %v11151, %v11183
        %v11216 = vmax.f32 %v11152, %v11184
        %v11217 = vmax.f32 %v11153, %v11185
        %v11218 = vmax.f32 %v11154, %v11186
        %v11219 = vmax.f32 %v11155, %v11187
        %v11220 = vmax.f32 %v11156, %v11188
        %v11221 = vmax.f32 %v11157, %v11189
        %v11222 = vmax.f32 %v11158, %v11190
        %v11223 = vmax.f32 %v11159, %v11191
        %v11224 = vmax.f32 %v11160, %v11192
        %v11225 = vmax.f32 %v11161, %v11193
        %v11226 = vmax.f32 %v11162, %v11194
        %v11227 = vmax.f32 %v11163, %v11195
        %v11228 = vmax.f32 %v11164, %v11196
        %v11229 = vmax.f32 %v11165, %v11197
        %v11230 = vmax.f32 %v11166, %v11198
        %v11231 = vmax.f32 %v11167, %v11199
        %v11232 = vmax.f32 %v11168, %v11200
        %v11233 = vmax.f32 %v11169, %v11201
        %v11234 = vmax.f32 %v11170, %v11202
        %v11235 = vmax.f32 %v11171, %v11203
        %v11236 = vmax.f32 %v11172, %v11204
        %v11237 = vmax.f32 %v11173, %v11205
        %v11238 = vmax.f32 %v11174, %v11206
        %v11239 = vmax.f32 %v11175, %v11207
        %v11240 = vmax.f32 %v11176, %v11208
        %v11241 = vmax.f32 %v11177, %v11209
        %v11242 = vld [vmem:[%s11113 + $0x2] sm:$0xff]
        %v11243 = vld [vmem:[%s11113 + $0xa] sm:$0xff]
        %v11244 = vld [vmem:[%s11113 + $0x1a] sm:$0xff]
        %v11245 = vld [vmem:[%s11113 + $0x22] sm:$0xff]
        %v11246 = vld [vmem:[%s11113 + $0x32] sm:$0xff]
        %v11247 = vld [vmem:[%s11113 + $0x3a] sm:$0xff]
        %v11248 = vld [vmem:[%s11113 + $0x4a] sm:$0xff]
        %v11249 = vld [vmem:[%s11113 + $0x52] sm:$0xff]
        %v11250 = vld [vmem:[%s11113 + $0x62] sm:$0xff]
        %v11251 = vld [vmem:[%s11113 + $0x6a] sm:$0xff]
        %v11252 = vld [vmem:[%s11113 + $0x7a] sm:$0xff]
        %v11253 = vld [vmem:[%s11113 + $0x82] sm:$0xff]
        %v11254 = vld [vmem:[%s11113 + $0x92] sm:$0xff]
        %v11255 = vld [vmem:[%s11113 + $0x9a] sm:$0xff]
        %v11256 = vld [vmem:[%s11113 + $0xaa] sm:$0xff]
        %v11257 = vld [vmem:[%s11113 + $0xb2] sm:$0xff]
        %v11258 = vld [vmem:[%s11113 + $0xc2] sm:$0xff]
        %v11259 = vld [vmem:[%s11113 + $0xca] sm:$0xff]
        %v11260 = vld [vmem:[%s11113 + $0xda] sm:$0xff]
        %v11261 = vld [vmem:[%s11113 + $0xe2] sm:$0xff]
        %v11262 = vld [vmem:[%s11113 + $0xf2] sm:$0xff]
        %v11263 = vld [vmem:[%s11113 + $0xfa] sm:$0xff]
        %v11264 = vld [vmem:[%s11113 + $0x10a] sm:$0xff]
        %v11265 = vld [vmem:[%s11113 + $0x112] sm:$0xff]
        %v11266 = vld [vmem:[%s11113 + $0x122] sm:$0xff]
        %v11267 = vld [vmem:[%s11113 + $0x12a] sm:$0xff]
        %v11268 = vld [vmem:[%s11113 + $0x13a] sm:$0xff]
        %v11269 = vld [vmem:[%s11113 + $0x142] sm:$0xff]
        %v11270 = vld [vmem:[%s11113 + $0x152] sm:$0xff]
        %v11271 = vld [vmem:[%s11113 + $0x15a] sm:$0xff]
        %v11272 = vld [vmem:[%s11113 + $0x16a] sm:$0xff]
        %v11273 = vld [vmem:[%s11113 + $0x172] sm:$0xff]
        %v11274 = vmax.f32 %v11210, %v11242
        %v11275 = vmax.f32 %v11211, %v11243
        %v11276 = vmax.f32 %v11212, %v11244
        %v11277 = vmax.f32 %v11213, %v11245
        %v11278 = vmax.f32 %v11214, %v11246
        %v11279 = vmax.f32 %v11215, %v11247
        %v11280 = vmax.f32 %v11216, %v11248
        %v11281 = vmax.f32 %v11217, %v11249
        %v11282 = vmax.f32 %v11218, %v11250
        %v11283 = vmax.f32 %v11219, %v11251
        %v11284 = vmax.f32 %v11220, %v11252
        %v11285 = vmax.f32 %v11221, %v11253
        %v11286 = vmax.f32 %v11222, %v11254
        %v11287 = vmax.f32 %v11223, %v11255
        %v11288 = vmax.f32 %v11224, %v11256
        %v11289 = vmax.f32 %v11225, %v11257
        %v11290 = vmax.f32 %v11226, %v11258
        %v11291 = vmax.f32 %v11227, %v11259
        %v11292 = vmax.f32 %v11228, %v11260
        %v11293 = vmax.f32 %v11229, %v11261
        %v11294 = vmax.f32 %v11230, %v11262
        %v11295 = vmax.f32 %v11231, %v11263
        %v11296 = vmax.f32 %v11232, %v11264
        %v11297 = vmax.f32 %v11233, %v11265
        %v11298 = vmax.f32 %v11234, %v11266
        %v11299 = vmax.f32 %v11235, %v11267
        %v11300 = vmax.f32 %v11236, %v11268
        %v11301 = vmax.f32 %v11237, %v11269
        %v11302 = vmax.f32 %v11238, %v11270
        %v11303 = vmax.f32 %v11239, %v11271
        %v11304 = vmax.f32 %v11240, %v11272
        %v11305 = vmax.f32 %v11241, %v11273
        %v11306 = vld [vmem:[%s11] sm:$0xf]
        %v11307 = vld [vmem:[%s12] sm:$0x1]
        %v11309 = vperm.slane %v11307, 0
        %v11312 = vsel %vm476, %v11274, 0
        %v11315 = vsel %vm476, %v11275, 0
        %v11318 = vsel %vm476, %v11276, 0
        %v11321 = vsel %vm476, %v11277, 0
        %v11324 = vsel %vm476, %v11278, 0
        %v11327 = vsel %vm476, %v11279, 0
        %v11330 = vsel %vm476, %v11280, 0
        %v11333 = vsel %vm476, %v11281, 0
        %v11336 = vsel %vm476, %v11282, 0
        %v11339 = vsel %vm476, %v11283, 0
        %v11342 = vsel %vm476, %v11284, 0
        %v11345 = vsel %vm476, %v11285, 0
        %v11348 = vsel %vm476, %v11286, 0
        %v11351 = vsel %vm476, %v11287, 0
        %v11354 = vsel %vm476, %v11288, 0
        %v11357 = vsel %vm476, %v11289, 0
        %v11360 = vsel %vm476, %v11290, 0
        %v11363 = vsel %vm476, %v11291, 0
        %v11366 = vsel %vm476, %v11292, 0
        %v11369 = vsel %vm476, %v11293, 0
        %v11372 = vsel %vm476, %v11294, 0
        %v11375 = vsel %vm476, %v11295, 0
        %v11378 = vsel %vm476, %v11296, 0
        %v11381 = vsel %vm476, %v11297, 0
        %v11384 = vsel %vm476, %v11298, 0
        %v11387 = vsel %vm476, %v11299, 0
        %v11390 = vsel %vm476, %v11300, 0
        %v11393 = vsel %vm476, %v11301, 0
        %v11396 = vsel %vm476, %v11302, 0
        %v11399 = vsel %vm476, %v11303, 0
        %v11402 = vsel %vm476, %v11304, 0
        %v11405 = vsel %vm476, %v11305, 0
        %v11408 = vsel %vm573, %v11306, 0
        %11410 = vmatpush.msra.mxu0 0.0
        %11411 = vmatpush.msra.mxu0 0.0
        %11412 = vmatpush.msra.mxu0 0.0
        %11413 = vmatpush.msra.mxu0 0.0
        %11414 = vmatpush.msra.mxu0 0.0
        %11415 = vmatpush.msra.mxu0 0.0
        %11416 = vmatpush.msra.mxu0 0.0
        %11417 = vmatpush.msra.mxu0 0.0
        %11418 = vmatpush.msra.mxu0 0.0
        %11419 = vmatpush.msra.mxu0 0.0
        %11420 = vmatpush.msra.mxu0 0.0
        %11421 = vmatpush.msra.mxu0 0.0
        %11422 = vmatpush.msra.mxu0 0.0
        %11423 = vmatpush.msra.mxu0 0.0
        %11424 = vmatpush.msra.mxu0 0.0
        %11425 = vmatpush.msra.mxu0 %v11408
        %11426 = vmatmul.f32.gmra.mxu0 %v11312
        %v11427 = vpop.f32.mrf.mxu0
        %v11428 = vadd.f32 %v11309, %v11427
        %11429 = vmatmul.f32.gmra.mxu0 %v11315
        %v11430 = vpop.f32.mrf.mxu0
        %v11431 = vadd.f32 %v11309, %v11430
        %11432 = vmatmul.f32.gmra.mxu0 %v11318
        %v11433 = vpop.f32.mrf.mxu0
        %v11434 = vadd.f32 %v11309, %v11433
        %11435 = vmatmul.f32.gmra.mxu0 %v11321
        %v11436 = vpop.f32.mrf.mxu0
        %v11437 = vadd.f32 %v11309, %v11436
        %11438 = vmatmul.f32.gmra.mxu0 %v11324
        %v11439 = vpop.f32.mrf.mxu0
        %v11440 = vadd.f32 %v11309, %v11439
        %11441 = vmatmul.f32.gmra.mxu0 %v11327
        %v11442 = vpop.f32.mrf.mxu0
        %v11443 = vadd.f32 %v11309, %v11442
        %11444 = vmatmul.f32.gmra.mxu0 %v11330
        %v11445 = vpop.f32.mrf.mxu0
        %v11446 = vadd.f32 %v11309, %v11445
        %11447 = vmatmul.f32.gmra.mxu0 %v11333
        %v11448 = vpop.f32.mrf.mxu0
        %v11449 = vadd.f32 %v11309, %v11448
        %11450 = vmatmul.f32.gmra.mxu0 %v11336
        %v11451 = vpop.f32.mrf.mxu0
        %v11452 = vadd.f32 %v11309, %v11451
        %11453 = vmatmul.f32.gmra.mxu0 %v11339
        %v11454 = vpop.f32.mrf.mxu0
        %v11455 = vadd.f32 %v11309, %v11454
        %11456 = vmatmul.f32.gmra.mxu0 %v11342
        %v11457 = vpop.f32.mrf.mxu0
        %v11458 = vadd.f32 %v11309, %v11457
        %11459 = vmatmul.f32.gmra.mxu0 %v11345
        %v11460 = vpop.f32.mrf.mxu0
        %v11461 = vadd.f32 %v11309, %v11460
        %11462 = vmatmul.f32.gmra.mxu0 %v11348
        %v11463 = vpop.f32.mrf.mxu0
        %v11464 = vadd.f32 %v11309, %v11463
        %11465 = vmatmul.f32.gmra.mxu0 %v11351
        %v11466 = vpop.f32.mrf.mxu0
        %v11467 = vadd.f32 %v11309, %v11466
        %11468 = vmatmul.f32.gmra.mxu0 %v11354
        %v11469 = vpop.f32.mrf.mxu0
        %v11470 = vadd.f32 %v11309, %v11469
        %11471 = vmatmul.f32.gmra.mxu0 %v11357
        %v11472 = vpop.f32.mrf.mxu0
        %v11473 = vadd.f32 %v11309, %v11472
        %11474 = vmatmul.f32.gmra.mxu0 %v11360
        %v11475 = vpop.f32.mrf.mxu0
        %v11476 = vadd.f32 %v11309, %v11475
        %11477 = vmatmul.f32.gmra.mxu0 %v11363
        %v11478 = vpop.f32.mrf.mxu0
        %v11479 = vadd.f32 %v11309, %v11478
        %11480 = vmatmul.f32.gmra.mxu0 %v11366
        %v11481 = vpop.f32.mrf.mxu0
        %v11482 = vadd.f32 %v11309, %v11481
        %11483 = vmatmul.f32.gmra.mxu0 %v11369
        %v11484 = vpop.f32.mrf.mxu0
        %v11485 = vadd.f32 %v11309, %v11484
        %11486 = vmatmul.f32.gmra.mxu0 %v11372
        %v11487 = vpop.f32.mrf.mxu0
        %v11488 = vadd.f32 %v11309, %v11487
        %11489 = vmatmul.f32.gmra.mxu0 %v11375
        %v11490 = vpop.f32.mrf.mxu0
        %v11491 = vadd.f32 %v11309, %v11490
        %11492 = vmatmul.f32.gmra.mxu0 %v11378
        %v11493 = vpop.f32.mrf.mxu0
        %v11494 = vadd.f32 %v11309, %v11493
        %11495 = vmatmul.f32.gmra.mxu0 %v11381
        %v11496 = vpop.f32.mrf.mxu0
        %v11497 = vadd.f32 %v11309, %v11496
        %11498 = vmatmul.f32.gmra.mxu0 %v11384
        %v11499 = vpop.f32.mrf.mxu0
        %v11500 = vadd.f32 %v11309, %v11499
        %11501 = vmatmul.f32.gmra.mxu0 %v11387
        %v11502 = vpop.f32.mrf.mxu0
        %v11503 = vadd.f32 %v11309, %v11502
        %11504 = vmatmul.f32.gmra.mxu0 %v11390
        %v11505 = vpop.f32.mrf.mxu0
        %v11506 = vadd.f32 %v11309, %v11505
        %11507 = vmatmul.f32.gmra.mxu0 %v11393
        %v11508 = vpop.f32.mrf.mxu0
        %v11509 = vadd.f32 %v11309, %v11508
        %11510 = vmatmul.f32.gmra.mxu0 %v11396
        %v11511 = vpop.f32.mrf.mxu0
        %v11512 = vadd.f32 %v11309, %v11511
        %11513 = vmatmul.f32.gmra.mxu0 %v11399
        %v11514 = vpop.f32.mrf.mxu0
        %v11515 = vadd.f32 %v11309, %v11514
        %11516 = vmatmul.f32.gmra.mxu0 %v11402
        %v11517 = vpop.f32.mrf.mxu0
        %v11518 = vadd.f32 %v11309, %v11517
        %11519 = vmatmul.f32.gmra.mxu0 %v11405
        %v11520 = vpop.f32.mrf.mxu0
        %v11521 = vadd.f32 %v11309, %v11520
        %11522 = vdwg.mxu0
        %v11523 = vmax.f32 %v11428, 0.0
        %v11524 = vmax.f32 %v11431, 0.0
        %v11525 = vmax.f32 %v11434, 0.0
        %v11526 = vmax.f32 %v11437, 0.0
        %v11527 = vmax.f32 %v11440, 0.0
        %v11528 = vmax.f32 %v11443, 0.0
        %v11529 = vmax.f32 %v11446, 0.0
        %v11530 = vmax.f32 %v11449, 0.0
        %v11531 = vmax.f32 %v11452, 0.0
        %v11532 = vmax.f32 %v11455, 0.0
        %v11533 = vmax.f32 %v11458, 0.0
        %v11534 = vmax.f32 %v11461, 0.0
        %v11535 = vmax.f32 %v11464, 0.0
        %v11536 = vmax.f32 %v11467, 0.0
        %v11537 = vmax.f32 %v11470, 0.0
        %v11538 = vmax.f32 %v11473, 0.0
        %v11539 = vmax.f32 %v11476, 0.0
        %v11540 = vmax.f32 %v11479, 0.0
        %v11541 = vmax.f32 %v11482, 0.0
        %v11542 = vmax.f32 %v11485, 0.0
        %v11543 = vmax.f32 %v11488, 0.0
        %v11544 = vmax.f32 %v11491, 0.0
        %v11545 = vmax.f32 %v11494, 0.0
        %v11546 = vmax.f32 %v11497, 0.0
        %v11547 = vmax.f32 %v11500, 0.0
        %v11548 = vmax.f32 %v11503, 0.0
        %v11549 = vmax.f32 %v11506, 0.0
        %v11550 = vmax.f32 %v11509, 0.0
        %v11551 = vmax.f32 %v11512, 0.0
        %v11552 = vmax.f32 %v11515, 0.0
        %v11553 = vmax.f32 %v11518, 0.0
        %v11554 = vmax.f32 %v11521, 0.0
        %11587 = vrot.lane.b32.xlu0 %v3437, 4
        %v11588 = vpop.permute.xlu0 %11587
        %11589 = vrot.lane.b32.xlu0 %v3438, 4
        %v11590 = vpop.permute.xlu0 %11589
        %11591 = vrot.lane.b32.xlu0 %v3439, 4
        %v11592 = vpop.permute.xlu0 %11591
        %11593 = vrot.lane.b32.xlu0 %v3440, 4
        %v11594 = vpop.permute.xlu0 %11593
        %11595 = vrot.lane.b32.xlu0 %v3441, 4
        %v11596 = vpop.permute.xlu0 %11595
        %11597 = vrot.lane.b32.xlu0 %v3442, 4
        %v11598 = vpop.permute.xlu0 %11597
        %11599 = vrot.lane.b32.xlu0 %v3443, 4
        %v11600 = vpop.permute.xlu0 %11599
        %11601 = vrot.lane.b32.xlu0 %v3444, 4
        %v11602 = vpop.permute.xlu0 %11601
        %11603 = vrot.lane.b32.xlu0 %v3445, 4
        %v11604 = vpop.permute.xlu0 %11603
        %11605 = vrot.lane.b32.xlu0 %v3446, 4
        %v11606 = vpop.permute.xlu0 %11605
        %11607 = vrot.lane.b32.xlu0 %v3447, 4
        %v11608 = vpop.permute.xlu0 %11607
        %11609 = vrot.lane.b32.xlu0 %v3448, 4
        %v11610 = vpop.permute.xlu0 %11609
        %11611 = vrot.lane.b32.xlu0 %v3449, 4
        %v11612 = vpop.permute.xlu0 %11611
        %11613 = vrot.lane.b32.xlu0 %v3450, 4
        %v11614 = vpop.permute.xlu0 %11613
        %11615 = vrot.lane.b32.xlu0 %v3451, 4
        %v11616 = vpop.permute.xlu0 %11615
        %11617 = vrot.lane.b32.xlu0 %v3452, 4
        %v11618 = vpop.permute.xlu0 %11617
        %11619 = vrot.lane.b32.xlu0 %v3453, 4
        %v11620 = vpop.permute.xlu0 %11619
        %11621 = vrot.lane.b32.xlu0 %v3454, 4
        %v11622 = vpop.permute.xlu0 %11621
        %11623 = vrot.lane.b32.xlu0 %v3455, 4
        %v11624 = vpop.permute.xlu0 %11623
        %11625 = vrot.lane.b32.xlu0 %v3456, 4
        %v11626 = vpop.permute.xlu0 %11625
        %11627 = vrot.lane.b32.xlu0 %v3457, 4
        %v11628 = vpop.permute.xlu0 %11627
        %11629 = vrot.lane.b32.xlu0 %v3458, 4
        %v11630 = vpop.permute.xlu0 %11629
        %11631 = vrot.lane.b32.xlu0 %v3459, 4
        %v11632 = vpop.permute.xlu0 %11631
        %11633 = vrot.lane.b32.xlu0 %v3460, 4
        %v11634 = vpop.permute.xlu0 %11633
        %11635 = vrot.lane.b32.xlu0 %v3461, 4
        %v11636 = vpop.permute.xlu0 %11635
        %11637 = vrot.lane.b32.xlu0 %v3462, 4
        %v11638 = vpop.permute.xlu0 %11637
        %11639 = vrot.lane.b32.xlu0 %v3463, 4
        %v11640 = vpop.permute.xlu0 %11639
        %11641 = vrot.lane.b32.xlu0 %v3464, 4
        %v11642 = vpop.permute.xlu0 %11641
        %11643 = vrot.lane.b32.xlu0 %v3465, 4
        %v11644 = vpop.permute.xlu0 %11643
        %11645 = vrot.lane.b32.xlu0 %v3466, 4
        %v11646 = vpop.permute.xlu0 %11645
        %11647 = vrot.lane.b32.xlu0 %v3467, 4
        %v11648 = vpop.permute.xlu0 %11647
        %11649 = vrot.lane.b32.xlu0 %v3468, 4
        %v11650 = vpop.permute.xlu0 %11649
        %11715 = vrot.lane.b32.xlu0 %v10642, 12
        %v11716 = vpop.permute.xlu0 %11715
        %11717 = vrot.lane.b32.xlu0 %v10643, 12
        %v11718 = vpop.permute.xlu0 %11717
        %11719 = vrot.lane.b32.xlu0 %v10644, 12
        %v11720 = vpop.permute.xlu0 %11719
        %11721 = vrot.lane.b32.xlu0 %v10645, 12
        %v11722 = vpop.permute.xlu0 %11721
        %11723 = vrot.lane.b32.xlu0 %v10646, 12
        %v11724 = vpop.permute.xlu0 %11723
        %11725 = vrot.lane.b32.xlu0 %v10647, 12
        %v11726 = vpop.permute.xlu0 %11725
        %11727 = vrot.lane.b32.xlu0 %v10648, 12
        %v11728 = vpop.permute.xlu0 %11727
        %11729 = vrot.lane.b32.xlu0 %v10649, 12
        %v11730 = vpop.permute.xlu0 %11729
        %11731 = vrot.lane.b32.xlu0 %v10650, 12
        %v11732 = vpop.permute.xlu0 %11731
        %11733 = vrot.lane.b32.xlu0 %v10651, 12
        %v11734 = vpop.permute.xlu0 %11733
        %11735 = vrot.lane.b32.xlu0 %v10652, 12
        %v11736 = vpop.permute.xlu0 %11735
        %11737 = vrot.lane.b32.xlu0 %v10653, 12
        %v11738 = vpop.permute.xlu0 %11737
        %11739 = vrot.lane.b32.xlu0 %v10654, 12
        %v11740 = vpop.permute.xlu0 %11739
        %11741 = vrot.lane.b32.xlu0 %v10655, 12
        %v11742 = vpop.permute.xlu0 %11741
        %11743 = vrot.lane.b32.xlu0 %v10656, 12
        %v11744 = vpop.permute.xlu0 %11743
        %11745 = vrot.lane.b32.xlu0 %v10657, 12
        %v11746 = vpop.permute.xlu0 %11745
        %11747 = vrot.lane.b32.xlu0 %v10658, 12
        %v11748 = vpop.permute.xlu0 %11747
        %11749 = vrot.lane.b32.xlu0 %v10659, 12
        %v11750 = vpop.permute.xlu0 %11749
        %11751 = vrot.lane.b32.xlu0 %v10660, 12
        %v11752 = vpop.permute.xlu0 %11751
        %11753 = vrot.lane.b32.xlu0 %v10661, 12
        %v11754 = vpop.permute.xlu0 %11753
        %11755 = vrot.lane.b32.xlu0 %v10662, 12
        %v11756 = vpop.permute.xlu0 %11755
        %11757 = vrot.lane.b32.xlu0 %v10663, 12
        %v11758 = vpop.permute.xlu0 %11757
        %11759 = vrot.lane.b32.xlu0 %v10664, 12
        %v11760 = vpop.permute.xlu0 %11759
        %11761 = vrot.lane.b32.xlu0 %v10665, 12
        %v11762 = vpop.permute.xlu0 %11761
        %11763 = vrot.lane.b32.xlu0 %v10666, 12
        %v11764 = vpop.permute.xlu0 %11763
        %11765 = vrot.lane.b32.xlu0 %v10667, 12
        %v11766 = vpop.permute.xlu0 %11765
        %11767 = vrot.lane.b32.xlu0 %v10668, 12
        %v11768 = vpop.permute.xlu0 %11767
        %11769 = vrot.lane.b32.xlu0 %v10669, 12
        %v11770 = vpop.permute.xlu0 %11769
        %11771 = vrot.lane.b32.xlu0 %v10670, 12
        %v11772 = vpop.permute.xlu0 %11771
        %11773 = vrot.lane.b32.xlu0 %v10671, 12
        %v11774 = vpop.permute.xlu0 %11773
        %11775 = vrot.lane.b32.xlu0 %v10672, 12
        %v11776 = vpop.permute.xlu0 %11775
        %11777 = vrot.lane.b32.xlu0 %v10673, 12
        %v11778 = vpop.permute.xlu0 %11777
        %11843 = vrot.lane.b32.xlu0 %v11523, 16
        %v11844 = vpop.permute.xlu0 %11843
        %11845 = vrot.lane.b32.xlu0 %v11524, 16
        %v11846 = vpop.permute.xlu0 %11845
        %11847 = vrot.lane.b32.xlu0 %v11525, 16
        %v11848 = vpop.permute.xlu0 %11847
        %11849 = vrot.lane.b32.xlu0 %v11526, 16
        %v11850 = vpop.permute.xlu0 %11849
        %11851 = vrot.lane.b32.xlu0 %v11527, 16
        %v11852 = vpop.permute.xlu0 %11851
        %11853 = vrot.lane.b32.xlu0 %v11528, 16
        %v11854 = vpop.permute.xlu0 %11853
        %11855 = vrot.lane.b32.xlu0 %v11529, 16
        %v11856 = vpop.permute.xlu0 %11855
        %11857 = vrot.lane.b32.xlu0 %v11530, 16
        %v11858 = vpop.permute.xlu0 %11857
        %11859 = vrot.lane.b32.xlu0 %v11531, 16
        %v11860 = vpop.permute.xlu0 %11859
        %11861 = vrot.lane.b32.xlu0 %v11532, 16
        %v11862 = vpop.permute.xlu0 %11861
        %11863 = vrot.lane.b32.xlu0 %v11533, 16
        %v11864 = vpop.permute.xlu0 %11863
        %11865 = vrot.lane.b32.xlu0 %v11534, 16
        %v11866 = vpop.permute.xlu0 %11865
        %11867 = vrot.lane.b32.xlu0 %v11535, 16
        %v11868 = vpop.permute.xlu0 %11867
        %11869 = vrot.lane.b32.xlu0 %v11536, 16
        %v11870 = vpop.permute.xlu0 %11869
        %11871 = vrot.lane.b32.xlu0 %v11537, 16
        %v11872 = vpop.permute.xlu0 %11871
        %11873 = vrot.lane.b32.xlu0 %v11538, 16
        %v11874 = vpop.permute.xlu0 %11873
        %11875 = vrot.lane.b32.xlu0 %v11539, 16
        %v11876 = vpop.permute.xlu0 %11875
        %11877 = vrot.lane.b32.xlu0 %v11540, 16
        %v11878 = vpop.permute.xlu0 %11877
        %11879 = vrot.lane.b32.xlu0 %v11541, 16
        %v11880 = vpop.permute.xlu0 %11879
        %11881 = vrot.lane.b32.xlu0 %v11542, 16
        %v11882 = vpop.permute.xlu0 %11881
        %11883 = vrot.lane.b32.xlu0 %v11543, 16
        %v11884 = vpop.permute.xlu0 %11883
        %11885 = vrot.lane.b32.xlu0 %v11544, 16
        %v11886 = vpop.permute.xlu0 %11885
        %11887 = vrot.lane.b32.xlu0 %v11545, 16
        %v11888 = vpop.permute.xlu0 %11887
        %11889 = vrot.lane.b32.xlu0 %v11546, 16
        %v11890 = vpop.permute.xlu0 %11889
        %11891 = vrot.lane.b32.xlu0 %v11547, 16
        %v11892 = vpop.permute.xlu0 %11891
        %11893 = vrot.lane.b32.xlu0 %v11548, 16
        %v11894 = vpop.permute.xlu0 %11893
        %11895 = vrot.lane.b32.xlu0 %v11549, 16
        %v11896 = vpop.permute.xlu0 %11895
        %11897 = vrot.lane.b32.xlu0 %v11550, 16
        %v11898 = vpop.permute.xlu0 %11897
        %11899 = vrot.lane.b32.xlu0 %v11551, 16
        %v11900 = vpop.permute.xlu0 %11899
        %11901 = vrot.lane.b32.xlu0 %v11552, 16
        %v11902 = vpop.permute.xlu0 %11901
        %11903 = vrot.lane.b32.xlu0 %v11553, 16
        %v11904 = vpop.permute.xlu0 %11903
        %11905 = vrot.lane.b32.xlu0 %v11554, 16
        %v11906 = vpop.permute.xlu0 %11905
        %v11939 = vsel %vm476, %v690, %v11588
        %v11940 = vsel %vm476, %v691, %v11590
        %v11941 = vsel %vm476, %v692, %v11592
        %v11942 = vsel %vm476, %v693, %v11594
        %v11943 = vsel %vm476, %v694, %v11596
        %v11944 = vsel %vm476, %v695, %v11598
        %v11945 = vsel %vm476, %v696, %v11600
        %v11946 = vsel %vm476, %v697, %v11602
        %v11947 = vsel %vm476, %v698, %v11604
        %v11948 = vsel %vm476, %v699, %v11606
        %v11949 = vsel %vm476, %v700, %v11608
        %v11950 = vsel %vm476, %v701, %v11610
        %v11951 = vsel %vm476, %v702, %v11612
        %v11952 = vsel %vm476, %v703, %v11614
        %v11953 = vsel %vm476, %v704, %v11616
        %v11954 = vsel %vm476, %v705, %v11618
        %v11955 = vsel %vm476, %v706, %v11620
        %v11956 = vsel %vm476, %v707, %v11622
        %v11957 = vsel %vm476, %v708, %v11624
        %v11958 = vsel %vm476, %v709, %v11626
        %v11959 = vsel %vm476, %v710, %v11628
        %v11960 = vsel %vm476, %v711, %v11630
        %v11961 = vsel %vm476, %v712, %v11632
        %v11962 = vsel %vm476, %v713, %v11634
        %v11963 = vsel %vm476, %v714, %v11636
        %v11964 = vsel %vm476, %v715, %v11638
        %v11965 = vsel %vm476, %v716, %v11640
        %v11966 = vsel %vm476, %v717, %v11642
        %v11967 = vsel %vm476, %v718, %v11644
        %v11968 = vsel %vm476, %v719, %v11646
        %v11969 = vsel %vm476, %v720, %v11648
        %v11970 = vsel %vm476, %v721, %v11650
        %vm11971 = vcmask 97280
        %v11972 = vsel %vm11971, %v11939, %v11716
        %v11973 = vsel %vm11971, %v11940, %v11718
        %v11974 = vsel %vm11971, %v11941, %v11720
        %v11975 = vsel %vm11971, %v11942, %v11722
        %v11976 = vsel %vm11971, %v11943, %v11724
        %v11977 = vsel %vm11971, %v11944, %v11726
        %v11978 = vsel %vm11971, %v11945, %v11728
        %v11979 = vsel %vm11971, %v11946, %v11730
        %v11980 = vsel %vm11971, %v11947, %v11732
        %v11981 = vsel %vm11971, %v11948, %v11734
        %v11982 = vsel %vm11971, %v11949, %v11736
        %v11983 = vsel %vm11971, %v11950, %v11738
        %v11984 = vsel %vm11971, %v11951, %v11740
        %v11985 = vsel %vm11971, %v11952, %v11742
        %v11986 = vsel %vm11971, %v11953, %v11744
        %v11987 = vsel %vm11971, %v11954, %v11746
        %v11988 = vsel %vm11971, %v11955, %v11748
        %v11989 = vsel %vm11971, %v11956, %v11750
        %v11990 = vsel %vm11971, %v11957, %v11752
        %v11991 = vsel %vm11971, %v11958, %v11754
        %v11992 = vsel %vm11971, %v11959, %v11756
        %v11993 = vsel %vm11971, %v11960, %v11758
        %v11994 = vsel %vm11971, %v11961, %v11760
        %v11995 = vsel %vm11971, %v11962, %v11762
        %v11996 = vsel %vm11971, %v11963, %v11764
        %v11997 = vsel %vm11971, %v11964, %v11766
        %v11998 = vsel %vm11971, %v11965, %v11768
        %v11999 = vsel %vm11971, %v11966, %v11770
        %v12000 = vsel %vm11971, %v11967, %v11772
        %v12001 = vsel %vm11971, %v11968, %v11774
        %v12002 = vsel %vm11971, %v11969, %v11776
        %v12003 = vsel %vm11971, %v11970, %v11778
        %vm12004 = vcmask 130048
        %v12005 = vsel %vm12004, %v11972, %v11844
        %v12006 = vsel %vm12004, %v11973, %v11846
        %v12007 = vsel %vm12004, %v11974, %v11848
        %v12008 = vsel %vm12004, %v11975, %v11850
        %v12009 = vsel %vm12004, %v11976, %v11852
        %v12010 = vsel %vm12004, %v11977, %v11854
        %v12011 = vsel %vm12004, %v11978, %v11856
        %v12012 = vsel %vm12004, %v11979, %v11858
        %v12013 = vsel %vm12004, %v11980, %v11860
        %v12014 = vsel %vm12004, %v11981, %v11862
        %v12015 = vsel %vm12004, %v11982, %v11864
        %v12016 = vsel %vm12004, %v11983, %v11866
        %v12017 = vsel %vm12004, %v11984, %v11868
        %v12018 = vsel %vm12004, %v11985, %v11870
        %v12019 = vsel %vm12004, %v11986, %v11872
        %v12020 = vsel %vm12004, %v11987, %v11874
        %v12021 = vsel %vm12004, %v11988, %v11876
        %v12022 = vsel %vm12004, %v11989, %v11878
        %v12023 = vsel %vm12004, %v11990, %v11880
        %v12024 = vsel %vm12004, %v11991, %v11882
        %v12025 = vsel %vm12004, %v11992, %v11884
        %v12026 = vsel %vm12004, %v11993, %v11886
        %v12027 = vsel %vm12004, %v11994, %v11888
        %v12028 = vsel %vm12004, %v11995, %v11890
        %v12029 = vsel %vm12004, %v11996, %v11892
        %v12030 = vsel %vm12004, %v11997, %v11894
        %v12031 = vsel %vm12004, %v11998, %v11896
        %v12032 = vsel %vm12004, %v11999, %v11898
        %v12033 = vsel %vm12004, %v12000, %v11900
        %v12034 = vsel %vm12004, %v12001, %v11902
        %v12035 = vsel %vm12004, %v12002, %v11904
        %v12036 = vsel %vm12004, %v12003, %v11906
        %vm12037 = vcmask 162816
        %12038 = vst.msk [vmem:[%s433] sm:$0xff] %vm12037, %v12005
        %12039 = vst.msk [vmem:[%s433 + $0x8] sm:$0xff] %vm12037, %v12006
        %12040 = vst.msk [vmem:[%s433 + $0x10] sm:$0xff] %vm12037, %v12007
        %12041 = vst.msk [vmem:[%s433 + $0x18] sm:$0xff] %vm12037, %v12008
        %12042 = vst.msk [vmem:[%s433 + $0x20] sm:$0xff] %vm12037, %v12009
        %12043 = vst.msk [vmem:[%s433 + $0x28] sm:$0xff] %vm12037, %v12010
        %12044 = vst.msk [vmem:[%s433 + $0x30] sm:$0xff] %vm12037, %v12011
        %12045 = vst.msk [vmem:[%s433 + $0x38] sm:$0xff] %vm12037, %v12012
        %12046 = vst.msk [vmem:[%s433 + $0x40] sm:$0xff] %vm12037, %v12013
        %12047 = vst.msk [vmem:[%s433 + $0x48] sm:$0xff] %vm12037, %v12014
        %12048 = vst.msk [vmem:[%s433 + $0x50] sm:$0xff] %vm12037, %v12015
        %12049 = vst.msk [vmem:[%s433 + $0x58] sm:$0xff] %vm12037, %v12016
        %12050 = vst.msk [vmem:[%s433 + $0x60] sm:$0xff] %vm12037, %v12017
        %12051 = vst.msk [vmem:[%s433 + $0x68] sm:$0xff] %vm12037, %v12018
        %12052 = vst.msk [vmem:[%s433 + $0x70] sm:$0xff] %vm12037, %v12019
        %12053 = vst.msk [vmem:[%s433 + $0x78] sm:$0xff] %vm12037, %v12020
        %12054 = vst.msk [vmem:[%s433 + $0x80] sm:$0xff] %vm12037, %v12021
        %12055 = vst.msk [vmem:[%s433 + $0x88] sm:$0xff] %vm12037, %v12022
        %12056 = vst.msk [vmem:[%s433 + $0x90] sm:$0xff] %vm12037, %v12023
        %12057 = vst.msk [vmem:[%s433 + $0x98] sm:$0xff] %vm12037, %v12024
        %12058 = vst.msk [vmem:[%s433 + $0xa0] sm:$0xff] %vm12037, %v12025
        %12059 = vst.msk [vmem:[%s433 + $0xa8] sm:$0xff] %vm12037, %v12026
        %12060 = vst.msk [vmem:[%s433 + $0xb0] sm:$0xff] %vm12037, %v12027
        %12061 = vst.msk [vmem:[%s433 + $0xb8] sm:$0xff] %vm12037, %v12028
        %12062 = vst.msk [vmem:[%s433 + $0xc0] sm:$0xff] %vm12037, %v12029
        %12063 = vst.msk [vmem:[%s433 + $0xc8] sm:$0xff] %vm12037, %v12030
        %12064 = vst.msk [vmem:[%s433 + $0xd0] sm:$0xff] %vm12037, %v12031
        %12065 = vst.msk [vmem:[%s433 + $0xd8] sm:$0xff] %vm12037, %v12032
        %12066 = vst.msk [vmem:[%s433 + $0xe0] sm:$0xff] %vm12037, %v12033
        %12067 = vst.msk [vmem:[%s433 + $0xe8] sm:$0xff] %vm12037, %v12034
        %12068 = vst.msk [vmem:[%s433 + $0xf0] sm:$0xff] %vm12037, %v12035
        %12069 = vst.msk [vmem:[%s433 + $0xf8] sm:$0xff] %vm12037, %v12036
        %s12070 = sand.u32 %s313, 1
        %s12071 = scalar_lea.sflag [#allocation6], %s12070
        %s12072 = sand.u32 %s313, 1
        %s12073 = smul.addr %s12072, 256
        %s12074 = scalar_lea.vmem [#allocation5], %s12073
        // Predicated region
        $region73: #{inception_forward.1} parent=71 // pred_check
          %p12075 = pneg %p323
        $region74: #{inception_forward.1} parent=71 // pred_check_branch
          %12077 = sbr.rel (%p12075) target = $region76
        $region75: #{inception_forward.1} parent=71 // pred_region
          %12079 = vsyncadd %s12071, 0
          %s12080 = smul.addr %s27, 32
          %s12081 = smul.addr %s12080, 8
          %s12082 = scalar_lea.hbm %s13, %s12081
          %s12083 = sshll.u32 %s12074, 4
          %s12084 = int_to_ptr.vmem [resolvable:$true] %s12083
          %s12085 = sshll.u32 %s12082, 4
          %s12086 = int_to_ptr.hbm [resolvable:$true] %s12085
          %12091 = dma.vmem_to_hbm [thread:$0]  %s12084, 4096, %s12086, %s12071, 128, 128, 8
        $region76: #{inception_forward.1} parent=71 // pred_fallthru
          _
      $region72: #{inception_forward.1} parent=5 // pred_fallthru
        _
      %p12092 = scmp.le.s32.totalorder 2, %s22
      // Predicated region
      $region77: #{inception_forward.1} parent=5 // pred_check
        %p12093 = pneg %p12092
      $region78: #{inception_forward.1} parent=5 // pred_check_branch
        %12095 = sbr.rel (%p12093) target = $region80
      $region79: #{inception_forward.1} parent=5 // pred_region
        %s12096 = ssub.s32 %s22, 2
        // Predicated region
        $region81: #{inception_forward.1} parent=79 // pred_check
          %p12097 = pneg %p329
        $region82: #{inception_forward.1} parent=79 // pred_check_branch
          %12099 = sbr.rel (%p12097) target = $region84
        $region83: #{inception_forward.1} parent=79 // pred_region
          %s12100 = sand.u32 %s314, 1
          %s12101 = scalar_lea.sflag [#allocation6], %s12100
          %s12102 = sand.u32 %s314, 1
          %s12103 = smul.addr %s12102, 256
          %s12104 = scalar_lea.vmem [#allocation5], %s12103
          %12106 = dma.done %s12101, 4096
        $region84: #{inception_forward.1} parent=79 // pred_fallthru
          _
      $region80: #{inception_forward.1} parent=5 // pred_fallthru
        _
    $region6: #{inception_forward.1} parent=1 // loop_footer
      %s26 = sadd.s32 1, %s22
    $region7: #{inception_forward.1} parent=1 // loop_footer_branch
      %21 = sbr.rel target = $region3
    $region8: #{inception_forward.1} parent=1 // loop_exit
      _
    %12107 = vsyncpa [#allocation6], 1
    %s12108 = scalar_lea.sflag [#allocation6], 1
    %12109 = vsyncpa %s12108, 1

</llo_original>
